<compile_context>
chip_gen: v5e
topology: v5e:2x2
jax: 0.10.0
libtpu: 0.0.40
codegen_flags: <defaults>
</compile_context>

<pallas_src>
import functools

import jax
import jax.numpy as jnp
from jax.experimental import pallas as pl
from jax.experimental.pallas import tpu as pltpu


N_NETS = 14          # 7 heads x (weights net, biases net)
G = 7                # decoder nets processed per grid step  (grid = (2,))
PAD4 = 64            # last-layer padded output width (== widest real head)
DEC_HIDDEN = (128, 256, 512)


def _head_layout(cfg):
    """(name, out_dim) for the 14 decoder nets, in a fixed order."""
    dhw = cfg["d_het_weights"]
    return [
        ("p_w", dhw * cfg["d_action"]), ("p_b", cfg["d_action"]),
        ("b_w", dhw * cfg["d_beliefs"]), ("b_b", cfg["d_beliefs"]),
        ("e_w", dhw * cfg["d_comm_state"]), ("e_b", cfg["d_comm_state"]),
        ("f_w", dhw * cfg["d_message"]), ("f_b", cfg["d_message"]),
        ("d_w", dhw * cfg["d_comm_state"]), ("d_b", cfg["d_comm_state"]),
        ("u_mean_w", dhw * cfg["d_relation"]), ("u_mean_b", cfg["d_relation"]),
        ("u_bias_w", dhw * cfg["d_relation"]), ("u_bias_b", cfg["d_relation"]),
    ]


# ----------------------------------------------------------------------------
# Fused decoder Pallas kernel: G=7 MLP heads per grid step
# ----------------------------------------------------------------------------
def _decoder_kernel(lv_ref,
                    dw1_ref, db1_ref, dw2_ref, db2_ref,
                    dw3_ref, db3_ref, dw4_ref, db4_ref,
                    out_ref, *, g_nets):
    bf16 = jnp.bfloat16
    f32 = jnp.float32

    # Shared latent (tiny, const across the grid).
    lv_b = lv_ref[...].astype(bf16)                       # (n_agents, d_lat)

    # Fused layer 1 across the g_nets nets of this tile: one (d_lat, G*128)
    # bf16 matmul from the shared latent.
    a1 = (jnp.dot(lv_b, dw1_ref[0], preferred_element_type=f32)
          + db1_ref[0])                                   # (n_agents, G*128)
    a1 = jnp.maximum(a1, 0.0)

    # Layers 2-4 per net (static Python unroll; traced once).
    for g in range(g_nets):
        a = a1[:, g * 128:(g + 1) * 128].astype(bf16)     # 128-lane aligned slice
        a = jnp.maximum(
            jnp.dot(a, dw2_ref[g], preferred_element_type=f32) + db2_ref[g], 0.0)
        a = jnp.maximum(
            jnp.dot(a.astype(bf16), dw3_ref[g], preferred_element_type=f32)
            + db3_ref[g], 0.0)
        out_ref[g] = (
            jnp.dot(a.astype(bf16), dw4_ref[g], preferred_element_type=f32)
            + db4_ref[g])


# ----------------------------------------------------------------------------
# Parameter construction + packing
# ----------------------------------------------------------------------------
def init_net(key, dims):
    """Build MLP params for layer sizes `dims` (equivalent of make_net)."""
    params = []
    for i in range(len(dims) - 1):
        key, kw, kb = jax.random.split(key, 3)
        w = jax.random.normal(kw, (dims[i], dims[i + 1]), jnp.float32) / jnp.sqrt(
            float(dims[i]))
        b = 0.01 * jax.random.normal(kb, (1, dims[i + 1]), jnp.float32)
        params.append((w, b))
    return params, key


def build_hypernetwork_params(key, cfg):
    params = {}
    enc_dims = [cfg["d_traits"] + cfg["d_beliefs"], 128, 64, 2 * cfg["d_het_latent"]]
    params["encoder"], key = init_net(key, enc_dims)
    for name, d_out in _head_layout(cfg):
        params[name], key = init_net(key, [cfg["d_het_latent"], *DEC_HIDDEN, d_out])
    return params


def pack_decoder_params(params, cfg):
    """Pack the 14 decoder nets for the kernel.

    * Layer 1 is pre-concatenated per grid step: (2, d_lat, G*128) bf16 weights,
      (2, 1, G*128) f32 biases.
    * Layers 2-4 are stacked per net: (14, K, N) bf16 weights, (14, 1, N) f32
      biases; layer 4 is zero-padded to PAD4=64 lanes (widest real head).
    """
    nets = [params[name] for name, _ in _head_layout(cfg)]
    n_blocks = N_NETS // G

    dw1 = jnp.stack([
        jnp.concatenate([nets[blk * G + g][0][0] for g in range(G)], axis=1)
        for blk in range(n_blocks)]).astype(jnp.bfloat16)          # (2, d_lat, 896)
    db1 = jnp.stack([
        jnp.concatenate([nets[blk * G + g][0][1] for g in range(G)], axis=1)
        for blk in range(n_blocks)])                               # (2, 1, 896) f32

    def stack_layer(idx, pad_to=None):
        ws, bs = [], []
        for net in nets:
            w, b = net[idx]
            if pad_to is not None:
                w = jnp.pad(w, ((0, 0), (0, pad_to - w.shape[1])))
                b = jnp.pad(b, ((0, 0), (0, pad_to - b.shape[1])))
            ws.append(w)
            bs.append(b)
        return jnp.stack(ws).astype(jnp.bfloat16), jnp.stack(bs)

    dw2, db2 = stack_layer(1)                                      # (14,128,256)
    dw3, db3 = stack_layer(2)                                      # (14,256,512)
    dw4, db4 = stack_layer(3, pad_to=PAD4)                         # (14,512,64)
    return [dw1, db1, dw2, db2, dw3, db3, dw4, db4]


# ----------------------------------------------------------------------------
# Forward pass (mirrors HyperNetwork.forward)
# ----------------------------------------------------------------------------
def hypernetwork_forward(enc_params, dec_packed, cfg, c, h, eps):
    n_agents = c.shape[0]
    d_lat = cfg["d_het_latent"]

    # ---- LatentEncoder + reparameterization (plain XLA; ~11K MACs) ----------
    x = jnp.concatenate([c, h], axis=1)
    (w1, b1), (w2, b2), (w3, b3) = enc_params
    e1 = jnp.maximum(x @ w1 + b1, 0.0)
    e2 = jnp.maximum(e1 @ w2 + b2, 0.0)
    e3 = e2 @ w3 + b3
    mu = e3[:, :d_lat]
    log_var = e3[:, d_lat:]
    # std = sqrt(exp(log_var)) == exp(0.5 * log_var)
    lv = mu + eps * jnp.exp(0.5 * log_var)

    # ---- LatentDecoder: one fused Pallas kernel, grid=(2,), 7 nets/step -----
    dw1, db1, dw2, db2, dw3, db3, dw4, db4 = dec_packed
    wide1 = dw1.shape[-1]                                 # G * 128

    def const_spec(a):
        nd = a.ndim
        return pl.BlockSpec(a.shape, lambda n, _nd=nd: (0,) * _nd)

    def step_spec(a, lead):
        """First `lead` nets (or pre-fused blocks) per grid step."""
        return pl.BlockSpec((lead,) + a.shape[1:], lambda n: (n, 0, 0))

    inputs = [lv, dw1, db1, dw2, db2, dw3, db3, dw4, db4]
    in_specs = [
        const_spec(lv),
        step_spec(dw1, 1), step_spec(db1, 1),
        step_spec(dw2, G), step_spec(db2, G),
        step_spec(dw3, G), step_spec(db3, G),
        step_spec(dw4, G), step_spec(db4, G),
    ]
    out_specs = pl.BlockSpec((G, n_agents, PAD4), lambda n: (n, 0, 0))
    out_shape = jax.ShapeDtypeStruct((N_NETS, n_agents, PAD4), jnp.float32)

    # Advisory cost: HBM-bound on ~5.5 MB of bf16 decoder weights.
    dec_flops = 2 * n_agents * N_NETS * (
        d_lat * DEC_HIDDEN[0] + DEC_HIDDEN[0] * DEC_HIDDEN[1]
        + DEC_HIDDEN[1] * DEC_HIDDEN[2] + DEC_HIDDEN[2] * PAD4)
    in_bytes = sum(int(a.size) * a.dtype.itemsize for a in inputs)
    out_bytes = 4 * N_NETS * n_agents * PAD4
    cost = pl.CostEstimate(flops=int(dec_flops), transcendentals=0,
                           bytes_accessed=int(in_bytes + out_bytes))

    kernel = functools.partial(_decoder_kernel, g_nets=G)
    dec_out = pl.pallas_call(
        kernel,
        out_shape=out_shape,
        grid_spec=pltpu.PrefetchScalarGridSpec(
            num_scalar_prefetch=0,
            grid=(N_NETS // G,),                 # (2,)
            in_specs=in_specs,
            out_specs=out_specs,
        ),
        compiler_params=pltpu.CompilerParams(
            dimension_semantics=("parallel",),   # v7x: one fat tile per TC
            vmem_limit_bytes=32 * 1024 * 1024,   # explicit; ~5.6 MB actually used
        ),
        cost_estimate=cost,
    )(*inputs)

    # ---- wrapper-side views only (no compute) --------------------------------
    dhw = cfg["d_het_weights"]
    heads = _head_layout(cfg)
    outs = {name: dec_out[i, :, :d_out] for i, (name, d_out) in enumerate(heads)}

    def wh(name, d_out):
        return outs[name].reshape((-1, d_out, dhw))

    weights = (
        (wh("p_w", cfg["d_action"]), outs["p_b"]),
        (wh("b_w", cfg["d_beliefs"]), outs["b_b"]),
        (wh("e_w", cfg["d_comm_state"]), outs["e_b"]),
        (wh("f_w", cfg["d_message"]), outs["f_b"]),
        (wh("d_w", cfg["d_comm_state"]), outs["d_b"]),
        (wh("u_mean_w", cfg["d_relation"]), outs["u_mean_b"],
         wh("u_bias_w", cfg["d_relation"]), outs["u_bias_b"]),
    )
    return lv, weights


# ----------------------------------------------------------------------------
# Pure-JAX reference with the SAME precision path (bf16 acts x bf16 weights,
# f32 accumulate) for a numerical check
# ----------------------------------------------------------------------------
def reference_forward(raw, cfg, c, h, eps):
    d_lat = cfg["d_het_latent"]
    x = jnp.concatenate([c, h], axis=1)
    for i, (w, b) in enumerate(raw["encoder"]):
        x = x @ w + b
        if i < len(raw["encoder"]) - 1:
            x = jnp.maximum(x, 0.0)
    mu, log_var = x[:, :d_lat], x[:, d_lat:]
    lv = mu + eps * jnp.sqrt(jnp.exp(log_var))

    outs = []
    for name, d_out in _head_layout(cfg):
        a = lv
        layers = raw[name]
        for j, (w, b) in enumerate(layers):
            a = jnp.dot(a.astype(jnp.bfloat16), w.astype(jnp.bfloat16),
                        preferred_element_type=jnp.float32) + b
            if j < len(layers) - 1:
                a = jnp.maximum(a, 0.0)
        outs.append(a)
    return lv, outs


# ----------------------------------------------------------------------------
# Main
# ----------------------------------------------------------------------------
if __name__ == "__main__":
    cfg = dict(
        d_traits=8, d_beliefs=8, d_het_latent=8, d_het_weights=8,
        d_action=4, d_comm_state=4, d_message=4, d_relation=4,
    )
    n_agents = 8

    root = jax.random.PRNGKey(0)
    k_params, k_c, k_h, k_eps = jax.random.split(root, 4)

    raw = build_hypernetwork_params(k_params, cfg)
    dec_packed = pack_decoder_params(raw, cfg)

    c = jax.random.normal(k_c, (n_agents, cfg["d_traits"]), jnp.float32)
    h = jax.random.normal(k_h, (n_agents, cfg["d_beliefs"]), jnp.float32)
    # TODO(synk): torch.randn_like draws eps from torch's global RNG inside
    # forward(); here eps is drawn deterministically in JAX and passed in.
    eps = jax.random.normal(k_eps, (n_agents, cfg["d_het_latent"]), jnp.float32)

    fwd = jax.jit(functools.partial(hypernetwork_forward, raw["encoder"],
                                    dec_packed, cfg))
    lv, weights = fwd(c, h, eps)
    jax.block_until_ready(lv)
    jax.block_until_ready(weights)

    # shape sanity checks
    assert lv.shape == (n_agents, cfg["d_het_latent"])
    assert weights[0][0].shape == (n_agents, cfg["d_action"], cfg["d_het_weights"])
    assert weights[0][1].shape == (n_agents, cfg["d_action"])
    assert weights[1][0].shape == (n_agents, cfg["d_beliefs"], cfg["d_het_weights"])
    assert weights[5][2].shape == (n_agents, cfg["d_relation"], cfg["d_het_weights"])

    # numerical check vs. a pure-JAX reference using an identical precision path
    lv_ref, outs_ref = jax.jit(
        functools.partial(reference_forward, raw, cfg))(c, h, eps)
    kflat = []
    for pair in weights[:5]:
        kflat += [pair[0].reshape(n_agents, -1), pair[1]]
    um_w, um_b, ub_w, ub_b = weights[5]
    kflat += [um_w.reshape(n_agents, -1), um_b, ub_w.reshape(n_agents, -1), ub_b]

    assert float(jnp.max(jnp.abs(lv - lv_ref))) < 1e-4
    for got, want in zip(kflat, outs_ref):
        assert float(jnp.max(jnp.abs(got - want))) < 5e-2

    print("KERNEL_OK")
</pallas_src>

<mosaic_0001>
module attributes {stable_mosaic.version = 11 : i64} {
  func.func @_decoder_kernel(%arg0: i32, %arg1: memref<8x8xf32, #tpu.memory_space<vmem>>, %arg2: memref<1x8x896xbf16, #tpu.memory_space<vmem>>, %arg3: memref<1x1x896xf32, #tpu.memory_space<vmem>>, %arg4: memref<7x128x256xbf16, #tpu.memory_space<vmem>>, %arg5: memref<7x1x256xf32, #tpu.memory_space<vmem>>, %arg6: memref<7x256x512xbf16, #tpu.memory_space<vmem>>, %arg7: memref<7x1x512xf32, #tpu.memory_space<vmem>>, %arg8: memref<7x512x64xbf16, #tpu.memory_space<vmem>>, %arg9: memref<7x1x64xf32, #tpu.memory_space<vmem>>, %arg10: memref<7x8x64xf32, #tpu.memory_space<vmem>>) attributes {dimension_semantics = [#tpu.dimension_semantics<parallel>], iteration_bounds = array<i64: 2>, scalar_prefetch = 0 : i64, scratch_operands = 0 : i64, tpu.core_type = #tpu.core_type<tc>, window_params = [{pipeline_mode = #tpu.pipeline_mode<synchronous>, transform_indices = @transform_0, window_bounds = array<i64: 8, 8>}, {transform_indices = @transform_1, window_bounds = array<i64: 1, 8, 896>}, {transform_indices = @transform_2, window_bounds = array<i64: 1, 1, 896>}, {transform_indices = @transform_3, window_bounds = array<i64: 7, 128, 256>}, {transform_indices = @transform_4, window_bounds = array<i64: 7, 1, 256>}, {transform_indices = @transform_5, window_bounds = array<i64: 7, 256, 512>}, {transform_indices = @transform_6, window_bounds = array<i64: 7, 1, 512>}, {transform_indices = @transform_7, window_bounds = array<i64: 7, 512, 64>}, {transform_indices = @transform_8, window_bounds = array<i64: 7, 1, 64>}, {transform_indices = @transform_9, window_bounds = array<i64: 7, 8, 64>}]} {
    %c0 = arith.constant 0 : index
    %c0_0 = arith.constant 0 : index
    %0 = vector.load %arg1[%c0, %c0_0] : memref<8x8xf32, #tpu.memory_space<vmem>>, vector<8x8xf32>
    %1 = arith.truncf %0 : vector<8x8xf32> to vector<8x8xbf16>
    %c0_1 = arith.constant 0 : index
    %c0_2 = arith.constant 0 : index
    %c0_3 = arith.constant 0 : index
    %2 = vector.load %arg2[%c0_1, %c0_2, %c0_3] : memref<1x8x896xbf16, #tpu.memory_space<vmem>>, vector<1x8x896xbf16>
    %3 = vector.shape_cast %2 : vector<1x8x896xbf16> to vector<8x896xbf16>
    %cst = arith.constant dense<0.000000e+00> : vector<8x896xf32>
    %4 = tpu.matmul %1, %3, %cst {dimension_numbers = #tpu.dot_dimension_numbers<[1], [0], [0], [1], [0, 0, 1, 1], [], []>} : vector<8x8xbf16>, vector<8x896xbf16>, vector<8x896xf32> -> vector<8x896xf32>
    %c0_4 = arith.constant 0 : index
    %c0_5 = arith.constant 0 : index
    %c0_6 = arith.constant 0 : index
    %5 = vector.load %arg3[%c0_4, %c0_5, %c0_6] : memref<1x1x896xf32, #tpu.memory_space<vmem>>, vector<1x1x896xf32>
    %6 = vector.shape_cast %5 : vector<1x1x896xf32> to vector<1x896xf32>
    %7 = vector.broadcast %6 : vector<1x896xf32> to vector<8x896xf32>
    %8 = arith.addf %4, %7 : vector<8x896xf32>
    %cst_7 = arith.constant 0.000000e+00 : f32
    %9 = vector.broadcast %cst_7 : f32 to vector<8x896xf32>
    %10 = arith.maximumf %8, %9 : vector<8x896xf32>
    %11 = vector.extract_strided_slice %10 {offsets = [0, 0], sizes = [8, 128], strides = [1, 1]} : vector<8x896xf32> to vector<8x128xf32>
    %12 = arith.truncf %11 : vector<8x128xf32> to vector<8x128xbf16>
    %c0_8 = arith.constant 0 : index
    %c0_9 = arith.constant 0 : index
    %c0_10 = arith.constant 0 : index
    %13 = vector.load %arg4[%c0_8, %c0_9, %c0_10] : memref<7x128x256xbf16, #tpu.memory_space<vmem>>, vector<1x128x256xbf16>
    %14 = vector.shape_cast %13 : vector<1x128x256xbf16> to vector<128x256xbf16>
    %cst_11 = arith.constant dense<0.000000e+00> : vector<8x256xf32>
    %15 = tpu.matmul %12, %14, %cst_11 {dimension_numbers = #tpu.dot_dimension_numbers<[1], [0], [0], [1], [0, 0, 1, 1], [], []>} : vector<8x128xbf16>, vector<128x256xbf16>, vector<8x256xf32> -> vector<8x256xf32>
    %c0_12 = arith.constant 0 : index
    %c0_13 = arith.constant 0 : index
    %c0_14 = arith.constant 0 : index
    %16 = vector.load %arg5[%c0_12, %c0_13, %c0_14] : memref<7x1x256xf32, #tpu.memory_space<vmem>>, vector<1x1x256xf32>
    %17 = vector.shape_cast %16 : vector<1x1x256xf32> to vector<1x256xf32>
    %18 = vector.broadcast %17 : vector<1x256xf32> to vector<8x256xf32>
    %19 = arith.addf %15, %18 : vector<8x256xf32>
    %cst_15 = arith.constant 0.000000e+00 : f32
    %20 = vector.broadcast %cst_15 : f32 to vector<8x256xf32>
    %21 = arith.maximumf %19, %20 : vector<8x256xf32>
    %22 = arith.truncf %21 : vector<8x256xf32> to vector<8x256xbf16>
    %c0_16 = arith.constant 0 : index
    %c0_17 = arith.constant 0 : index
    %c0_18 = arith.constant 0 : index
    %23 = vector.load %arg6[%c0_16, %c0_17, %c0_18] : memref<7x256x512xbf16, #tpu.memory_space<vmem>>, vector<1x256x512xbf16>
    %24 = vector.shape_cast %23 : vector<1x256x512xbf16> to vector<256x512xbf16>
    %cst_19 = arith.constant dense<0.000000e+00> : vector<8x512xf32>
    %25 = tpu.matmul %22, %24, %cst_19 {dimension_numbers = #tpu.dot_dimension_numbers<[1], [0], [0], [1], [0, 0, 1, 1], [], []>} : vector<8x256xbf16>, vector<256x512xbf16>, vector<8x512xf32> -> vector<8x512xf32>
    %c0_20 = arith.constant 0 : index
    %c0_21 = arith.constant 0 : index
    %c0_22 = arith.constant 0 : index
    %26 = vector.load %arg7[%c0_20, %c0_21, %c0_22] : memref<7x1x512xf32, #tpu.memory_space<vmem>>, vector<1x1x512xf32>
    %27 = vector.shape_cast %26 : vector<1x1x512xf32> to vector<1x512xf32>
    %28 = vector.broadcast %27 : vector<1x512xf32> to vector<8x512xf32>
    %29 = arith.addf %25, %28 : vector<8x512xf32>
    %cst_23 = arith.constant 0.000000e+00 : f32
    %30 = vector.broadcast %cst_23 : f32 to vector<8x512xf32>
    %31 = arith.maximumf %29, %30 : vector<8x512xf32>
    %32 = arith.truncf %31 : vector<8x512xf32> to vector<8x512xbf16>
    %c0_24 = arith.constant 0 : index
    %c0_25 = arith.constant 0 : index
    %c0_26 = arith.constant 0 : index
    %33 = vector.load %arg8[%c0_24, %c0_25, %c0_26] : memref<7x512x64xbf16, #tpu.memory_space<vmem>>, vector<1x512x64xbf16>
    %34 = vector.shape_cast %33 : vector<1x512x64xbf16> to vector<512x64xbf16>
    %cst_27 = arith.constant dense<0.000000e+00> : vector<8x64xf32>
    %35 = tpu.matmul %32, %34, %cst_27 {dimension_numbers = #tpu.dot_dimension_numbers<[1], [0], [0], [1], [0, 0, 1, 1], [], []>} : vector<8x512xbf16>, vector<512x64xbf16>, vector<8x64xf32> -> vector<8x64xf32>
    %c0_28 = arith.constant 0 : index
    %c0_29 = arith.constant 0 : index
    %c0_30 = arith.constant 0 : index
    %36 = vector.load %arg9[%c0_28, %c0_29, %c0_30] : memref<7x1x64xf32, #tpu.memory_space<vmem>>, vector<1x1x64xf32>
    %37 = vector.shape_cast %36 : vector<1x1x64xf32> to vector<1x64xf32>
    %38 = vector.broadcast %37 : vector<1x64xf32> to vector<8x64xf32>
    %39 = arith.addf %35, %38 : vector<8x64xf32>
    %c0_31 = arith.constant 0 : index
    %c0_32 = arith.constant 0 : index
    %c0_33 = arith.constant 0 : index
    %40 = vector.load %arg10[%c0_31, %c0_32, %c0_33] : memref<7x8x64xf32, #tpu.memory_space<vmem>>, vector<1x8x64xf32>
    %41 = vector.shape_cast %40 : vector<1x8x64xf32> to vector<8x64xf32>
    %42 = vector.shape_cast %39 : vector<8x64xf32> to vector<1x8x64xf32>
    tpu.vector_store %arg10[%c0_31, %c0_32, %c0_33], %42 {strides = array<i32>} : memref<7x8x64xf32, #tpu.memory_space<vmem>>, vector<1x8x64xf32>,
    %43 = vector.extract_strided_slice %10 {offsets = [0, 128], sizes = [8, 128], strides = [1, 1]} : vector<8x896xf32> to vector<8x128xf32>
    %44 = arith.truncf %43 : vector<8x128xf32> to vector<8x128xbf16>
    %c1 = arith.constant 1 : index
    %c0_34 = arith.constant 0 : index
    %c0_35 = arith.constant 0 : index
    %45 = vector.load %arg4[%c1, %c0_34, %c0_35] : memref<7x128x256xbf16, #tpu.memory_space<vmem>>, vector<1x128x256xbf16>
    %46 = vector.shape_cast %45 : vector<1x128x256xbf16> to vector<128x256xbf16>
    %cst_36 = arith.constant dense<0.000000e+00> : vector<8x256xf32>
    %47 = tpu.matmul %44, %46, %cst_36 {dimension_numbers = #tpu.dot_dimension_numbers<[1], [0], [0], [1], [0, 0, 1, 1], [], []>} : vector<8x128xbf16>, vector<128x256xbf16>, vector<8x256xf32> -> vector<8x256xf32>
    %c1_37 = arith.constant 1 : index
    %c0_38 = arith.constant 0 : index
    %c0_39 = arith.constant 0 : index
    %48 = vector.load %arg5[%c1_37, %c0_38, %c0_39] : memref<7x1x256xf32, #tpu.memory_space<vmem>>, vector<1x1x256xf32>
    %49 = vector.shape_cast %48 : vector<1x1x256xf32> to vector<1x256xf32>
    %50 = vector.broadcast %49 : vector<1x256xf32> to vector<8x256xf32>
    %51 = arith.addf %47, %50 : vector<8x256xf32>
    %cst_40 = arith.constant 0.000000e+00 : f32
    %52 = vector.broadcast %cst_40 : f32 to vector<8x256xf32>
    %53 = arith.maximumf %51, %52 : vector<8x256xf32>
    %54 = arith.truncf %53 : vector<8x256xf32> to vector<8x256xbf16>
    %c1_41 = arith.constant 1 : index
    %c0_42 = arith.constant 0 : index
    %c0_43 = arith.constant 0 : index
    %55 = vector.load %arg6[%c1_41, %c0_42, %c0_43] : memref<7x256x512xbf16, #tpu.memory_space<vmem>>, vector<1x256x512xbf16>
    %56 = vector.shape_cast %55 : vector<1x256x512xbf16> to vector<256x512xbf16>
    %cst_44 = arith.constant dense<0.000000e+00> : vector<8x512xf32>
    %57 = tpu.matmul %54, %56, %cst_44 {dimension_numbers = #tpu.dot_dimension_numbers<[1], [0], [0], [1], [0, 0, 1, 1], [], []>} : vector<8x256xbf16>, vector<256x512xbf16>, vector<8x512xf32> -> vector<8x512xf32>
    %c1_45 = arith.constant 1 : index
    %c0_46 = arith.constant 0 : index
    %c0_47 = arith.constant 0 : index
    %58 = vector.load %arg7[%c1_45, %c0_46, %c0_47] : memref<7x1x512xf32, #tpu.memory_space<vmem>>, vector<1x1x512xf32>
    %59 = vector.shape_cast %58 : vector<1x1x512xf32> to vector<1x512xf32>
    %60 = vector.broadcast %59 : vector<1x512xf32> to vector<8x512xf32>
    %61 = arith.addf %57, %60 : vector<8x512xf32>
    %cst_48 = arith.constant 0.000000e+00 : f32
    %62 = vector.broadcast %cst_48 : f32 to vector<8x512xf32>
    %63 = arith.maximumf %61, %62 : vector<8x512xf32>
    %64 = arith.truncf %63 : vector<8x512xf32> to vector<8x512xbf16>
    %c1_49 = arith.constant 1 : index
    %c0_50 = arith.constant 0 : index
    %c0_51 = arith.constant 0 : index
    %65 = vector.load %arg8[%c1_49, %c0_50, %c0_51] : memref<7x512x64xbf16, #tpu.memory_space<vmem>>, vector<1x512x64xbf16>
    %66 = vector.shape_cast %65 : vector<1x512x64xbf16> to vector<512x64xbf16>
    %cst_52 = arith.constant dense<0.000000e+00> : vector<8x64xf32>
    %67 = tpu.matmul %64, %66, %cst_52 {dimension_numbers = #tpu.dot_dimension_numbers<[1], [0], [0], [1], [0, 0, 1, 1], [], []>} : vector<8x512xbf16>, vector<512x64xbf16>, vector<8x64xf32> -> vector<8x64xf32>
    %c1_53 = arith.constant 1 : index
    %c0_54 = arith.constant 0 : index
    %c0_55 = arith.constant 0 : index
    %68 = vector.load %arg9[%c1_53, %c0_54, %c0_55] : memref<7x1x64xf32, #tpu.memory_space<vmem>>, vector<1x1x64xf32>
    %69 = vector.shape_cast %68 : vector<1x1x64xf32> to vector<1x64xf32>
    %70 = vector.broadcast %69 : vector<1x64xf32> to vector<8x64xf32>
    %71 = arith.addf %67, %70 : vector<8x64xf32>
    %c1_56 = arith.constant 1 : index
    %c0_57 = arith.constant 0 : index
    %c0_58 = arith.constant 0 : index
    %72 = vector.load %arg10[%c1_56, %c0_57, %c0_58] : memref<7x8x64xf32, #tpu.memory_space<vmem>>, vector<1x8x64xf32>
    %73 = vector.shape_cast %72 : vector<1x8x64xf32> to vector<8x64xf32>
    %74 = vector.shape_cast %71 : vector<8x64xf32> to vector<1x8x64xf32>
    tpu.vector_store %arg10[%c1_56, %c0_57, %c0_58], %74 {strides = array<i32>} : memref<7x8x64xf32, #tpu.memory_space<vmem>>, vector<1x8x64xf32>,
    %75 = vector.extract_strided_slice %10 {offsets = [0, 256], sizes = [8, 128], strides = [1, 1]} : vector<8x896xf32> to vector<8x128xf32>
    %76 = arith.truncf %75 : vector<8x128xf32> to vector<8x128xbf16>
    %c2 = arith.constant 2 : index
    %c0_59 = arith.constant 0 : index
    %c0_60 = arith.constant 0 : index
    %77 = vector.load %arg4[%c2, %c0_59, %c0_60] : memref<7x128x256xbf16, #tpu.memory_space<vmem>>, vector<1x128x256xbf16>
    %78 = vector.shape_cast %77 : vector<1x128x256xbf16> to vector<128x256xbf16>
    %cst_61 = arith.constant dense<0.000000e+00> : vector<8x256xf32>
    %79 = tpu.matmul %76, %78, %cst_61 {dimension_numbers = #tpu.dot_dimension_numbers<[1], [0], [0], [1], [0, 0, 1, 1], [], []>} : vector<8x128xbf16>, vector<128x256xbf16>, vector<8x256xf32> -> vector<8x256xf32>
    %c2_62 = arith.constant 2 : index
    %c0_63 = arith.constant 0 : index
    %c0_64 = arith.constant 0 : index
    %80 = vector.load %arg5[%c2_62, %c0_63, %c0_64] : memref<7x1x256xf32, #tpu.memory_space<vmem>>, vector<1x1x256xf32>
    %81 = vector.shape_cast %80 : vector<1x1x256xf32> to vector<1x256xf32>
    %82 = vector.broadcast %81 : vector<1x256xf32> to vector<8x256xf32>
    %83 = arith.addf %79, %82 : vector<8x256xf32>
    %cst_65 = arith.constant 0.000000e+00 : f32
    %84 = vector.broadcast %cst_65 : f32 to vector<8x256xf32>
    %85 = arith.maximumf %83, %84 : vector<8x256xf32>
    %86 = arith.truncf %85 : vector<8x256xf32> to vector<8x256xbf16>
    %c2_66 = arith.constant 2 : index
    %c0_67 = arith.constant 0 : index
    %c0_68 = arith.constant 0 : index
    %87 = vector.load %arg6[%c2_66, %c0_67, %c0_68] : memref<7x256x512xbf16, #tpu.memory_space<vmem>>, vector<1x256x512xbf16>
    %88 = vector.shape_cast %87 : vector<1x256x512xbf16> to vector<256x512xbf16>
    %cst_69 = arith.constant dense<0.000000e+00> : vector<8x512xf32>
    %89 = tpu.matmul %86, %88, %cst_69 {dimension_numbers = #tpu.dot_dimension_numbers<[1], [0], [0], [1], [0, 0, 1, 1], [], []>} : vector<8x256xbf16>, vector<256x512xbf16>, vector<8x512xf32> -> vector<8x512xf32>
    %c2_70 = arith.constant 2 : index
    %c0_71 = arith.constant 0 : index
    %c0_72 = arith.constant 0 : index
    %90 = vector.load %arg7[%c2_70, %c0_71, %c0_72] : memref<7x1x512xf32, #tpu.memory_space<vmem>>, vector<1x1x512xf32>
    %91 = vector.shape_cast %90 : vector<1x1x512xf32> to vector<1x512xf32>
    %92 = vector.broadcast %91 : vector<1x512xf32> to vector<8x512xf32>
    %93 = arith.addf %89, %92 : vector<8x512xf32>
    %cst_73 = arith.constant 0.000000e+00 : f32
    %94 = vector.broadcast %cst_73 : f32 to vector<8x512xf32>
    %95 = arith.maximumf %93, %94 : vector<8x512xf32>
    %96 = arith.truncf %95 : vector<8x512xf32> to vector<8x512xbf16>
    %c2_74 = arith.constant 2 : index
    %c0_75 = arith.constant 0 : index
    %c0_76 = arith.constant 0 : index
    %97 = vector.load %arg8[%c2_74, %c0_75, %c0_76] : memref<7x512x64xbf16, #tpu.memory_space<vmem>>, vector<1x512x64xbf16>
    %98 = vector.shape_cast %97 : vector<1x512x64xbf16> to vector<512x64xbf16>
    %cst_77 = arith.constant dense<0.000000e+00> : vector<8x64xf32>
    %99 = tpu.matmul %96, %98, %cst_77 {dimension_numbers = #tpu.dot_dimension_numbers<[1], [0], [0], [1], [0, 0, 1, 1], [], []>} : vector<8x512xbf16>, vector<512x64xbf16>, vector<8x64xf32> -> vector<8x64xf32>
    %c2_78 = arith.constant 2 : index
    %c0_79 = arith.constant 0 : index
    %c0_80 = arith.constant 0 : index
    %100 = vector.load %arg9[%c2_78, %c0_79, %c0_80] : memref<7x1x64xf32, #tpu.memory_space<vmem>>, vector<1x1x64xf32>
    %101 = vector.shape_cast %100 : vector<1x1x64xf32> to vector<1x64xf32>
    %102 = vector.broadcast %101 : vector<1x64xf32> to vector<8x64xf32>
    %103 = arith.addf %99, %102 : vector<8x64xf32>
    %c2_81 = arith.constant 2 : index
    %c0_82 = arith.constant 0 : index
    %c0_83 = arith.constant 0 : index
    %104 = vector.load %arg10[%c2_81, %c0_82, %c0_83] : memref<7x8x64xf32, #tpu.memory_space<vmem>>, vector<1x8x64xf32>
    %105 = vector.shape_cast %104 : vector<1x8x64xf32> to vector<8x64xf32>
    %106 = vector.shape_cast %103 : vector<8x64xf32> to vector<1x8x64xf32>
    tpu.vector_store %arg10[%c2_81, %c0_82, %c0_83], %106 {strides = array<i32>} : memref<7x8x64xf32, #tpu.memory_space<vmem>>, vector<1x8x64xf32>,
    %107 = vector.extract_strided_slice %10 {offsets = [0, 384], sizes = [8, 128], strides = [1, 1]} : vector<8x896xf32> to vector<8x128xf32>
    %108 = arith.truncf %107 : vector<8x128xf32> to vector<8x128xbf16>
    %c3 = arith.constant 3 : index
    %c0_84 = arith.constant 0 : index
    %c0_85 = arith.constant 0 : index
    %109 = vector.load %arg4[%c3, %c0_84, %c0_85] : memref<7x128x256xbf16, #tpu.memory_space<vmem>>, vector<1x128x256xbf16>
    %110 = vector.shape_cast %109 : vector<1x128x256xbf16> to vector<128x256xbf16>
    %cst_86 = arith.constant dense<0.000000e+00> : vector<8x256xf32>
    %111 = tpu.matmul %108, %110, %cst_86 {dimension_numbers = #tpu.dot_dimension_numbers<[1], [0], [0], [1], [0, 0, 1, 1], [], []>} : vector<8x128xbf16>, vector<128x256xbf16>, vector<8x256xf32> -> vector<8x256xf32>
    %c3_87 = arith.constant 3 : index
    %c0_88 = arith.constant 0 : index
    %c0_89 = arith.constant 0 : index
    %112 = vector.load %arg5[%c3_87, %c0_88, %c0_89] : memref<7x1x256xf32, #tpu.memory_space<vmem>>, vector<1x1x256xf32>
    %113 = vector.shape_cast %112 : vector<1x1x256xf32> to vector<1x256xf32>
    %114 = vector.broadcast %113 : vector<1x256xf32> to vector<8x256xf32>
    %115 = arith.addf %111, %114 : vector<8x256xf32>
    %cst_90 = arith.constant 0.000000e+00 : f32
    %116 = vector.broadcast %cst_90 : f32 to vector<8x256xf32>
    %117 = arith.maximumf %115, %116 : vector<8x256xf32>
    %118 = arith.truncf %117 : vector<8x256xf32> to vector<8x256xbf16>
    %c3_91 = arith.constant 3 : index
    %c0_92 = arith.constant 0 : index
    %c0_93 = arith.constant 0 : index
    %119 = vector.load %arg6[%c3_91, %c0_92, %c0_93] : memref<7x256x512xbf16, #tpu.memory_space<vmem>>, vector<1x256x512xbf16>
    %120 = vector.shape_cast %119 : vector<1x256x512xbf16> to vector<256x512xbf16>
    %cst_94 = arith.constant dense<0.000000e+00> : vector<8x512xf32>
    %121 = tpu.matmul %118, %120, %cst_94 {dimension_numbers = #tpu.dot_dimension_numbers<[1], [0], [0], [1], [0, 0, 1, 1], [], []>} : vector<8x256xbf16>, vector<256x512xbf16>, vector<8x512xf32> -> vector<8x512xf32>
    %c3_95 = arith.constant 3 : index
    %c0_96 = arith.constant 0 : index
    %c0_97 = arith.constant 0 : index
    %122 = vector.load %arg7[%c3_95, %c0_96, %c0_97] : memref<7x1x512xf32, #tpu.memory_space<vmem>>, vector<1x1x512xf32>
    %123 = vector.shape_cast %122 : vector<1x1x512xf32> to vector<1x512xf32>
    %124 = vector.broadcast %123 : vector<1x512xf32> to vector<8x512xf32>
    %125 = arith.addf %121, %124 : vector<8x512xf32>
    %cst_98 = arith.constant 0.000000e+00 : f32
    %126 = vector.broadcast %cst_98 : f32 to vector<8x512xf32>
    %127 = arith.maximumf %125, %126 : vector<8x512xf32>
    %128 = arith.truncf %127 : vector<8x512xf32> to vector<8x512xbf16>
    %c3_99 = arith.constant 3 : index
    %c0_100 = arith.constant 0 : index
    %c0_101 = arith.constant 0 : index
    %129 = vector.load %arg8[%c3_99, %c0_100, %c0_101] : memref<7x512x64xbf16, #tpu.memory_space<vmem>>, vector<1x512x64xbf16>
    %130 = vector.shape_cast %129 : vector<1x512x64xbf16> to vector<512x64xbf16>
    %cst_102 = arith.constant dense<0.000000e+00> : vector<8x64xf32>
    %131 = tpu.matmul %128, %130, %cst_102 {dimension_numbers = #tpu.dot_dimension_numbers<[1], [0], [0], [1], [0, 0, 1, 1], [], []>} : vector<8x512xbf16>, vector<512x64xbf16>, vector<8x64xf32> -> vector<8x64xf32>
    %c3_103 = arith.constant 3 : index
    %c0_104 = arith.constant 0 : index
    %c0_105 = arith.constant 0 : index
    %132 = vector.load %arg9[%c3_103, %c0_104, %c0_105] : memref<7x1x64xf32, #tpu.memory_space<vmem>>, vector<1x1x64xf32>
    %133 = vector.shape_cast %132 : vector<1x1x64xf32> to vector<1x64xf32>
    %134 = vector.broadcast %133 : vector<1x64xf32> to vector<8x64xf32>
    %135 = arith.addf %131, %134 : vector<8x64xf32>
    %c3_106 = arith.constant 3 : index
    %c0_107 = arith.constant 0 : index
    %c0_108 = arith.constant 0 : index
    %136 = vector.load %arg10[%c3_106, %c0_107, %c0_108] : memref<7x8x64xf32, #tpu.memory_space<vmem>>, vector<1x8x64xf32>
    %137 = vector.shape_cast %136 : vector<1x8x64xf32> to vector<8x64xf32>
    %138 = vector.shape_cast %135 : vector<8x64xf32> to vector<1x8x64xf32>
    tpu.vector_store %arg10[%c3_106, %c0_107, %c0_108], %138 {strides = array<i32>} : memref<7x8x64xf32, #tpu.memory_space<vmem>>, vector<1x8x64xf32>,
    %139 = vector.extract_strided_slice %10 {offsets = [0, 512], sizes = [8, 128], strides = [1, 1]} : vector<8x896xf32> to vector<8x128xf32>
    %140 = arith.truncf %139 : vector<8x128xf32> to vector<8x128xbf16>
    %c4 = arith.constant 4 : index
    %c0_109 = arith.constant 0 : index
    %c0_110 = arith.constant 0 : index
    %141 = vector.load %arg4[%c4, %c0_109, %c0_110] : memref<7x128x256xbf16, #tpu.memory_space<vmem>>, vector<1x128x256xbf16>
    %142 = vector.shape_cast %141 : vector<1x128x256xbf16> to vector<128x256xbf16>
    %cst_111 = arith.constant dense<0.000000e+00> : vector<8x256xf32>
    %143 = tpu.matmul %140, %142, %cst_111 {dimension_numbers = #tpu.dot_dimension_numbers<[1], [0], [0], [1], [0, 0, 1, 1], [], []>} : vector<8x128xbf16>, vector<128x256xbf16>, vector<8x256xf32> -> vector<8x256xf32>
    %c4_112 = arith.constant 4 : index
    %c0_113 = arith.constant 0 : index
    %c0_114 = arith.constant 0 : index
    %144 = vector.load %arg5[%c4_112, %c0_113, %c0_114] : memref<7x1x256xf32, #tpu.memory_space<vmem>>, vector<1x1x256xf32>
    %145 = vector.shape_cast %144 : vector<1x1x256xf32> to vector<1x256xf32>
    %146 = vector.broadcast %145 : vector<1x256xf32> to vector<8x256xf32>
    %147 = arith.addf %143, %146 : vector<8x256xf32>
    %cst_115 = arith.constant 0.000000e+00 : f32
    %148 = vector.broadcast %cst_115 : f32 to vector<8x256xf32>
    %149 = arith.maximumf %147, %148 : vector<8x256xf32>
    %150 = arith.truncf %149 : vector<8x256xf32> to vector<8x256xbf16>
    %c4_116 = arith.constant 4 : index
    %c0_117 = arith.constant 0 : index
    %c0_118 = arith.constant 0 : index
    %151 = vector.load %arg6[%c4_116, %c0_117, %c0_118] : memref<7x256x512xbf16, #tpu.memory_space<vmem>>, vector<1x256x512xbf16>
    %152 = vector.shape_cast %151 : vector<1x256x512xbf16> to vector<256x512xbf16>
    %cst_119 = arith.constant dense<0.000000e+00> : vector<8x512xf32>
    %153 = tpu.matmul %150, %152, %cst_119 {dimension_numbers = #tpu.dot_dimension_numbers<[1], [0], [0], [1], [0, 0, 1, 1], [], []>} : vector<8x256xbf16>, vector<256x512xbf16>, vector<8x512xf32> -> vector<8x512xf32>
    %c4_120 = arith.constant 4 : index
    %c0_121 = arith.constant 0 : index
    %c0_122 = arith.constant 0 : index
    %154 = vector.load %arg7[%c4_120, %c0_121, %c0_122] : memref<7x1x512xf32, #tpu.memory_space<vmem>>, vector<1x1x512xf32>
    %155 = vector.shape_cast %154 : vector<1x1x512xf32> to vector<1x512xf32>
    %156 = vector.broadcast %155 : vector<1x512xf32> to vector<8x512xf32>
    %157 = arith.addf %153, %156 : vector<8x512xf32>
    %cst_123 = arith.constant 0.000000e+00 : f32
    %158 = vector.broadcast %cst_123 : f32 to vector<8x512xf32>
    %159 = arith.maximumf %157, %158 : vector<8x512xf32>
    %160 = arith.truncf %159 : vector<8x512xf32> to vector<8x512xbf16>
    %c4_124 = arith.constant 4 : index
    %c0_125 = arith.constant 0 : index
    %c0_126 = arith.constant 0 : index
    %161 = vector.load %arg8[%c4_124, %c0_125, %c0_126] : memref<7x512x64xbf16, #tpu.memory_space<vmem>>, vector<1x512x64xbf16>
    %162 = vector.shape_cast %161 : vector<1x512x64xbf16> to vector<512x64xbf16>
    %cst_127 = arith.constant dense<0.000000e+00> : vector<8x64xf32>
    %163 = tpu.matmul %160, %162, %cst_127 {dimension_numbers = #tpu.dot_dimension_numbers<[1], [0], [0], [1], [0, 0, 1, 1], [], []>} : vector<8x512xbf16>, vector<512x64xbf16>, vector<8x64xf32> -> vector<8x64xf32>
    %c4_128 = arith.constant 4 : index
    %c0_129 = arith.constant 0 : index
    %c0_130 = arith.constant 0 : index
    %164 = vector.load %arg9[%c4_128, %c0_129, %c0_130] : memref<7x1x64xf32, #tpu.memory_space<vmem>>, vector<1x1x64xf32>
    %165 = vector.shape_cast %164 : vector<1x1x64xf32> to vector<1x64xf32>
    %166 = vector.broadcast %165 : vector<1x64xf32> to vector<8x64xf32>
    %167 = arith.addf %163, %166 : vector<8x64xf32>
    %c4_131 = arith.constant 4 : index
    %c0_132 = arith.constant 0 : index
    %c0_133 = arith.constant 0 : index
    %168 = vector.load %arg10[%c4_131, %c0_132, %c0_133] : memref<7x8x64xf32, #tpu.memory_space<vmem>>, vector<1x8x64xf32>
    %169 = vector.shape_cast %168 : vector<1x8x64xf32> to vector<8x64xf32>
    %170 = vector.shape_cast %167 : vector<8x64xf32> to vector<1x8x64xf32>
    tpu.vector_store %arg10[%c4_131, %c0_132, %c0_133], %170 {strides = array<i32>} : memref<7x8x64xf32, #tpu.memory_space<vmem>>, vector<1x8x64xf32>,
    %171 = vector.extract_strided_slice %10 {offsets = [0, 640], sizes = [8, 128], strides = [1, 1]} : vector<8x896xf32> to vector<8x128xf32>
    %172 = arith.truncf %171 : vector<8x128xf32> to vector<8x128xbf16>
    %c5 = arith.constant 5 : index
    %c0_134 = arith.constant 0 : index
    %c0_135 = arith.constant 0 : index
    %173 = vector.load %arg4[%c5, %c0_134, %c0_135] : memref<7x128x256xbf16, #tpu.memory_space<vmem>>, vector<1x128x256xbf16>
    %174 = vector.shape_cast %173 : vector<1x128x256xbf16> to vector<128x256xbf16>
    %cst_136 = arith.constant dense<0.000000e+00> : vector<8x256xf32>
    %175 = tpu.matmul %172, %174, %cst_136 {dimension_numbers = #tpu.dot_dimension_numbers<[1], [0], [0], [1], [0, 0, 1, 1], [], []>} : vector<8x128xbf16>, vector<128x256xbf16>, vector<8x256xf32> -> vector<8x256xf32>
    %c5_137 = arith.constant 5 : index
    %c0_138 = arith.constant 0 : index
    %c0_139 = arith.constant 0 : index
    %176 = vector.load %arg5[%c5_137, %c0_138, %c0_139] : memref<7x1x256xf32, #tpu.memory_space<vmem>>, vector<1x1x256xf32>
    %177 = vector.shape_cast %176 : vector<1x1x256xf32> to vector<1x256xf32>
    %178 = vector.broadcast %177 : vector<1x256xf32> to vector<8x256xf32>
    %179 = arith.addf %175, %178 : vector<8x256xf32>
    %cst_140 = arith.constant 0.000000e+00 : f32
    %180 = vector.broadcast %cst_140 : f32 to vector<8x256xf32>
    %181 = arith.maximumf %179, %180 : vector<8x256xf32>
    %182 = arith.truncf %181 : vector<8x256xf32> to vector<8x256xbf16>
    %c5_141 = arith.constant 5 : index
    %c0_142 = arith.constant 0 : index
    %c0_143 = arith.constant 0 : index
    %183 = vector.load %arg6[%c5_141, %c0_142, %c0_143] : memref<7x256x512xbf16, #tpu.memory_space<vmem>>, vector<1x256x512xbf16>
    %184 = vector.shape_cast %183 : vector<1x256x512xbf16> to vector<256x512xbf16>
    %cst_144 = arith.constant dense<0.000000e+00> : vector<8x512xf32>
    %185 = tpu.matmul %182, %184, %cst_144 {dimension_numbers = #tpu.dot_dimension_numbers<[1], [0], [0], [1], [0, 0, 1, 1], [], []>} : vector<8x256xbf16>, vector<256x512xbf16>, vector<8x512xf32> -> vector<8x512xf32>
    %c5_145 = arith.constant 5 : index
    %c0_146 = arith.constant 0 : index
    %c0_147 = arith.constant 0 : index
    %186 = vector.load %arg7[%c5_145, %c0_146, %c0_147] : memref<7x1x512xf32, #tpu.memory_space<vmem>>, vector<1x1x512xf32>
    %187 = vector.shape_cast %186 : vector<1x1x512xf32> to vector<1x512xf32>
    %188 = vector.broadcast %187 : vector<1x512xf32> to vector<8x512xf32>
    %189 = arith.addf %185, %188 : vector<8x512xf32>
    %cst_148 = arith.constant 0.000000e+00 : f32
    %190 = vector.broadcast %cst_148 : f32 to vector<8x512xf32>
    %191 = arith.maximumf %189, %190 : vector<8x512xf32>
    %192 = arith.truncf %191 : vector<8x512xf32> to vector<8x512xbf16>
    %c5_149 = arith.constant 5 : index
    %c0_150 = arith.constant 0 : index
    %c0_151 = arith.constant 0 : index
    %193 = vector.load %arg8[%c5_149, %c0_150, %c0_151] : memref<7x512x64xbf16, #tpu.memory_space<vmem>>, vector<1x512x64xbf16>
    %194 = vector.shape_cast %193 : vector<1x512x64xbf16> to vector<512x64xbf16>
    %cst_152 = arith.constant dense<0.000000e+00> : vector<8x64xf32>
    %195 = tpu.matmul %192, %194, %cst_152 {dimension_numbers = #tpu.dot_dimension_numbers<[1], [0], [0], [1], [0, 0, 1, 1], [], []>} : vector<8x512xbf16>, vector<512x64xbf16>, vector<8x64xf32> -> vector<8x64xf32>
    %c5_153 = arith.constant 5 : index
    %c0_154 = arith.constant 0 : index
    %c0_155 = arith.constant 0 : index
    %196 = vector.load %arg9[%c5_153, %c0_154, %c0_155] : memref<7x1x64xf32, #tpu.memory_space<vmem>>, vector<1x1x64xf32>
    %197 = vector.shape_cast %196 : vector<1x1x64xf32> to vector<1x64xf32>
    %198 = vector.broadcast %197 : vector<1x64xf32> to vector<8x64xf32>
    %199 = arith.addf %195, %198 : vector<8x64xf32>
    %c5_156 = arith.constant 5 : index
    %c0_157 = arith.constant 0 : index
    %c0_158 = arith.constant 0 : index
    %200 = vector.load %arg10[%c5_156, %c0_157, %c0_158] : memref<7x8x64xf32, #tpu.memory_space<vmem>>, vector<1x8x64xf32>
    %201 = vector.shape_cast %200 : vector<1x8x64xf32> to vector<8x64xf32>
    %202 = vector.shape_cast %199 : vector<8x64xf32> to vector<1x8x64xf32>
    tpu.vector_store %arg10[%c5_156, %c0_157, %c0_158], %202 {strides = array<i32>} : memref<7x8x64xf32, #tpu.memory_space<vmem>>, vector<1x8x64xf32>,
    %203 = vector.extract_strided_slice %10 {offsets = [0, 768], sizes = [8, 128], strides = [1, 1]} : vector<8x896xf32> to vector<8x128xf32>
    %204 = arith.truncf %203 : vector<8x128xf32> to vector<8x128xbf16>
    %c6 = arith.constant 6 : index
    %c0_159 = arith.constant 0 : index
    %c0_160 = arith.constant 0 : index
    %205 = vector.load %arg4[%c6, %c0_159, %c0_160] : memref<7x128x256xbf16, #tpu.memory_space<vmem>>, vector<1x128x256xbf16>
    %206 = vector.shape_cast %205 : vector<1x128x256xbf16> to vector<128x256xbf16>
    %cst_161 = arith.constant dense<0.000000e+00> : vector<8x256xf32>
    %207 = tpu.matmul %204, %206, %cst_161 {dimension_numbers = #tpu.dot_dimension_numbers<[1], [0], [0], [1], [0, 0, 1, 1], [], []>} : vector<8x128xbf16>, vector<128x256xbf16>, vector<8x256xf32> -> vector<8x256xf32>
    %c6_162 = arith.constant 6 : index
    %c0_163 = arith.constant 0 : index
    %c0_164 = arith.constant 0 : index
    %208 = vector.load %arg5[%c6_162, %c0_163, %c0_164] : memref<7x1x256xf32, #tpu.memory_space<vmem>>, vector<1x1x256xf32>
    %209 = vector.shape_cast %208 : vector<1x1x256xf32> to vector<1x256xf32>
    %210 = vector.broadcast %209 : vector<1x256xf32> to vector<8x256xf32>
    %211 = arith.addf %207, %210 : vector<8x256xf32>
    %cst_165 = arith.constant 0.000000e+00 : f32
    %212 = vector.broadcast %cst_165 : f32 to vector<8x256xf32>
    %213 = arith.maximumf %211, %212 : vector<8x256xf32>
    %214 = arith.truncf %213 : vector<8x256xf32> to vector<8x256xbf16>
    %c6_166 = arith.constant 6 : index
    %c0_167 = arith.constant 0 : index
    %c0_168 = arith.constant 0 : index
    %215 = vector.load %arg6[%c6_166, %c0_167, %c0_168] : memref<7x256x512xbf16, #tpu.memory_space<vmem>>, vector<1x256x512xbf16>
    %216 = vector.shape_cast %215 : vector<1x256x512xbf16> to vector<256x512xbf16>
    %cst_169 = arith.constant dense<0.000000e+00> : vector<8x512xf32>
    %217 = tpu.matmul %214, %216, %cst_169 {dimension_numbers = #tpu.dot_dimension_numbers<[1], [0], [0], [1], [0, 0, 1, 1], [], []>} : vector<8x256xbf16>, vector<256x512xbf16>, vector<8x512xf32> -> vector<8x512xf32>
    %c6_170 = arith.constant 6 : index
    %c0_171 = arith.constant 0 : index
    %c0_172 = arith.constant 0 : index
    %218 = vector.load %arg7[%c6_170, %c0_171, %c0_172] : memref<7x1x512xf32, #tpu.memory_space<vmem>>, vector<1x1x512xf32>
    %219 = vector.shape_cast %218 : vector<1x1x512xf32> to vector<1x512xf32>
    %220 = vector.broadcast %219 : vector<1x512xf32> to vector<8x512xf32>
    %221 = arith.addf %217, %220 : vector<8x512xf32>
    %cst_173 = arith.constant 0.000000e+00 : f32
    %222 = vector.broadcast %cst_173 : f32 to vector<8x512xf32>
    %223 = arith.maximumf %221, %222 : vector<8x512xf32>
    %224 = arith.truncf %223 : vector<8x512xf32> to vector<8x512xbf16>
    %c6_174 = arith.constant 6 : index
    %c0_175 = arith.constant 0 : index
    %c0_176 = arith.constant 0 : index
    %225 = vector.load %arg8[%c6_174, %c0_175, %c0_176] : memref<7x512x64xbf16, #tpu.memory_space<vmem>>, vector<1x512x64xbf16>
    %226 = vector.shape_cast %225 : vector<1x512x64xbf16> to vector<512x64xbf16>
    %cst_177 = arith.constant dense<0.000000e+00> : vector<8x64xf32>
    %227 = tpu.matmul %224, %226, %cst_177 {dimension_numbers = #tpu.dot_dimension_numbers<[1], [0], [0], [1], [0, 0, 1, 1], [], []>} : vector<8x512xbf16>, vector<512x64xbf16>, vector<8x64xf32> -> vector<8x64xf32>
    %c6_178 = arith.constant 6 : index
    %c0_179 = arith.constant 0 : index
    %c0_180 = arith.constant 0 : index
    %228 = vector.load %arg9[%c6_178, %c0_179, %c0_180] : memref<7x1x64xf32, #tpu.memory_space<vmem>>, vector<1x1x64xf32>
    %229 = vector.shape_cast %228 : vector<1x1x64xf32> to vector<1x64xf32>
    %230 = vector.broadcast %229 : vector<1x64xf32> to vector<8x64xf32>
    %231 = arith.addf %227, %230 : vector<8x64xf32>
    %c6_181 = arith.constant 6 : index
    %c0_182 = arith.constant 0 : index
    %c0_183 = arith.constant 0 : index
    %232 = vector.load %arg10[%c6_181, %c0_182, %c0_183] : memref<7x8x64xf32, #tpu.memory_space<vmem>>, vector<1x8x64xf32>
    %233 = vector.shape_cast %232 : vector<1x8x64xf32> to vector<8x64xf32>
    %234 = vector.shape_cast %231 : vector<8x64xf32> to vector<1x8x64xf32>
    tpu.vector_store %arg10[%c6_181, %c0_182, %c0_183], %234 {strides = array<i32>} : memref<7x8x64xf32, #tpu.memory_space<vmem>>, vector<1x8x64xf32>,
    return
  }
  func.func @transform_0(%arg0: i32) -> (i32, i32) {
    %c0_i32 = arith.constant 0 : i32
    %c0_i32_0 = arith.constant 0 : i32
    %c0_i32_1 = arith.constant 0 : i32
    return %c0_i32, %c0_i32_0 : i32, i32
  }
  func.func @transform_1(%arg0: i32) -> (i32, i32, i32) {
    %c0_i32 = arith.constant 0 : i32
    %c0_i32_0 = arith.constant 0 : i32
    %c0_i32_1 = arith.constant 0 : i32
    return %arg0, %c0_i32, %c0_i32_0 : i32, i32, i32
  }
  func.func @transform_2(%arg0: i32) -> (i32, i32, i32) {
    %c0_i32 = arith.constant 0 : i32
    %c0_i32_0 = arith.constant 0 : i32
    %c0_i32_1 = arith.constant 0 : i32
    return %arg0, %c0_i32, %c0_i32_0 : i32, i32, i32
  }
  func.func @transform_3(%arg0: i32) -> (i32, i32, i32) {
    %c0_i32 = arith.constant 0 : i32
    %c0_i32_0 = arith.constant 0 : i32
    %c0_i32_1 = arith.constant 0 : i32
    return %arg0, %c0_i32, %c0_i32_0 : i32, i32, i32
  }
  func.func @transform_4(%arg0: i32) -> (i32, i32, i32) {
    %c0_i32 = arith.constant 0 : i32
    %c0_i32_0 = arith.constant 0 : i32
    %c0_i32_1 = arith.constant 0 : i32
    return %arg0, %c0_i32, %c0_i32_0 : i32, i32, i32
  }
  func.func @transform_5(%arg0: i32) -> (i32, i32, i32) {
    %c0_i32 = arith.constant 0 : i32
    %c0_i32_0 = arith.constant 0 : i32
    %c0_i32_1 = arith.constant 0 : i32
    return %arg0, %c0_i32, %c0_i32_0 : i32, i32, i32
  }
  func.func @transform_6(%arg0: i32) -> (i32, i32, i32) {
    %c0_i32 = arith.constant 0 : i32
    %c0_i32_0 = arith.constant 0 : i32
    %c0_i32_1 = arith.constant 0 : i32
    return %arg0, %c0_i32, %c0_i32_0 : i32, i32, i32
  }
  func.func @transform_7(%arg0: i32) -> (i32, i32, i32) {
    %c0_i32 = arith.constant 0 : i32
    %c0_i32_0 = arith.constant 0 : i32
    %c0_i32_1 = arith.constant 0 : i32
    return %arg0, %c0_i32, %c0_i32_0 : i32, i32, i32
  }
  func.func @transform_8(%arg0: i32) -> (i32, i32, i32) {
    %c0_i32 = arith.constant 0 : i32
    %c0_i32_0 = arith.constant 0 : i32
    %c0_i32_1 = arith.constant 0 : i32
    return %arg0, %c0_i32, %c0_i32_0 : i32, i32, i32
  }
  func.func @transform_9(%arg0: i32) -> (i32, i32, i32) {
    %c0_i32 = arith.constant 0 : i32
    %c0_i32_0 = arith.constant 0 : i32
    %c0_i32_1 = arith.constant 0 : i32
    return %arg0, %c0_i32, %c0_i32_0 : i32, i32, i32
  }
}

</mosaic_0001>

<llo_original>
// kernel: squeeze.22
$region0: #{squeeze.22}
  %s0 = inlined_call_operand.vmem [shape: f32[1,8,64], index: 0, kind: input, shape index: {}]
  %s1 = inlined_call_operand.hbm [shape: f32[8,8,8], index: 1, kind: output, shape index: {}]
  $region1: #{squeeze.22} parent=0
    #allocation0 [shape = 'u8[32768]{0}', space=vmem, size = 0x8000, scoped, tag = 'operand span for operand 1']
    #allocation1 [shape = 's32[1]{0}', space=sflag, size = 0x4, scoped, tag = 'scoped memory for squeeze.22']
    %2 = vsyncpa [#allocation1], 0
    %v3 = vld [vmem:[%s0] sm:$0xff]
    %vm4 = vcmask 64512
    %5 = vst.msk [vmem:[#allocation0] ss:$8 sm:$0xf] %vm4, %v3
    %6 = vst.msk [vmem:[#allocation0] ss:$8 sm:$0xf0] %vm4, %v3
    %v7 = vld [vmem:[%s0] sm:$0xff]
    %8 = vrot.lane.b32.xlu0 %v7, 120
    %v9 = vpop.permute.xlu0 %8
    %vm10 = vcmask 64512
    %s11 = scalar_lea.vmem [#allocation0], 1
    %12 = vst.msk [vmem:[%s11] ss:$8 sm:$0xf] %vm10, %v9
    %s13 = scalar_lea.vmem [#allocation0], 1
    %14 = vst.msk [vmem:[%s13] ss:$8 sm:$0xf0] %vm10, %v9
    %v15 = vld [vmem:[%s0] sm:$0xff]
    %16 = vrot.lane.b32.xlu0 %v15, 112
    %v17 = vpop.permute.xlu0 %16
    %vm18 = vcmask 64512
    %s19 = scalar_lea.vmem [#allocation0], 2
    %20 = vst.msk [vmem:[%s19] ss:$8 sm:$0xf] %vm18, %v17
    %s21 = scalar_lea.vmem [#allocation0], 2
    %22 = vst.msk [vmem:[%s21] ss:$8 sm:$0xf0] %vm18, %v17
    %v23 = vld [vmem:[%s0] sm:$0xff]
    %24 = vrot.lane.b32.xlu0 %v23, 104
    %v25 = vpop.permute.xlu0 %24
    %vm26 = vcmask 64512
    %s27 = scalar_lea.vmem [#allocation0], 3
    %28 = vst.msk [vmem:[%s27] ss:$8 sm:$0xf] %vm26, %v25
    %s29 = scalar_lea.vmem [#allocation0], 3
    %30 = vst.msk [vmem:[%s29] ss:$8 sm:$0xf0] %vm26, %v25
    %v31 = vld [vmem:[%s0] sm:$0xff]
    %32 = vrot.lane.b32.xlu0 %v31, 96
    %v33 = vpop.permute.xlu0 %32
    %vm34 = vcmask 64512
    %s35 = scalar_lea.vmem [#allocation0], 4
    %36 = vst.msk [vmem:[%s35] ss:$8 sm:$0xf] %vm34, %v33
    %s37 = scalar_lea.vmem [#allocation0], 4
    %38 = vst.msk [vmem:[%s37] ss:$8 sm:$0xf0] %vm34, %v33
    %v39 = vld [vmem:[%s0] sm:$0xff]
    %40 = vrot.lane.b32.xlu0 %v39, 88
    %v41 = vpop.permute.xlu0 %40
    %vm42 = vcmask 64512
    %s43 = scalar_lea.vmem [#allocation0], 5
    %44 = vst.msk [vmem:[%s43] ss:$8 sm:$0xf] %vm42, %v41
    %s45 = scalar_lea.vmem [#allocation0], 5
    %46 = vst.msk [vmem:[%s45] ss:$8 sm:$0xf0] %vm42, %v41
    %v47 = vld [vmem:[%s0] sm:$0xff]
    %48 = vrot.lane.b32.xlu0 %v47, 80
    %v49 = vpop.permute.xlu0 %48
    %vm50 = vcmask 64512
    %s51 = scalar_lea.vmem [#allocation0], 6
    %52 = vst.msk [vmem:[%s51] ss:$8 sm:$0xf] %vm50, %v49
    %s53 = scalar_lea.vmem [#allocation0], 6
    %54 = vst.msk [vmem:[%s53] ss:$8 sm:$0xf0] %vm50, %v49
    %v55 = vld [vmem:[%s0] sm:$0xff]
    %56 = vrot.lane.b32.xlu0 %v55, 72
    %v57 = vpop.permute.xlu0 %56
    %vm58 = vcmask 64512
    %s59 = scalar_lea.vmem [#allocation0], 7
    %60 = vst.msk [vmem:[%s59] ss:$8 sm:$0xf] %vm58, %v57
    %s61 = scalar_lea.vmem [#allocation0], 7
    %62 = vst.msk [vmem:[%s61] ss:$8 sm:$0xf0] %vm58, %v57
    %64 = vsyncadd [#allocation1], 0
    %s66 = sshll.u32 [#allocation0], 4
    %s67 = int_to_ptr.vmem [resolvable:$true] %s66
    %s68 = sshll.u32 %s1, 4
    %s69 = int_to_ptr.hbm [resolvable:$true] %s68
    %71 = dma.vmem_to_hbm [thread:$0]  %s67, 1024, %s69, [#allocation1]
    %73 = dma.done [#allocation1], 1024
    %74 = vsyncpa [#allocation1], 1

// kernel: squeeze.27
$region0: #{squeeze.27}
  %s0 = inlined_call_operand.vmem [shape: f32[1,8,32], index: 0, kind: input, shape index: {}]
  %s1 = inlined_call_operand.hbm [shape: f32[8,4,8], index: 1, kind: output, shape index: {}]
  $region1: #{squeeze.27} parent=0
    #allocation0 [shape = 'u8[16384]{0}', space=vmem, size = 0x4000, scoped, tag = 'operand span for operand 1']
    #allocation1 [shape = 's32[1]{0}', space=sflag, size = 0x4, scoped, tag = 'scoped memory for squeeze.27']
    #allocation2 [shape = 'u8[32768]{0}', space=vmem, size = 0x8000, scoped, tag = 'scoped mem for output reshape']
    %2 = vsyncpa [#allocation1], 0
    %v3 = vld [vmem:[%s0] sm:$0xff]
    %vm4 = vcmask 64512
    %5 = vst.msk [vmem:[#allocation2] ss:$8 sm:$0xf] %vm4, %v3
    %6 = vst.msk [vmem:[#allocation2] ss:$8 sm:$0xf0] %vm4, %v3
    %v7 = vld [vmem:[%s0] sm:$0xff]
    %8 = vrot.lane.b32.xlu0 %v7, 120
    %v9 = vpop.permute.xlu0 %8
    %vm10 = vcmask 64512
    %s11 = scalar_lea.vmem [#allocation2], 1
    %12 = vst.msk [vmem:[%s11] ss:$8 sm:$0xf] %vm10, %v9
    %s13 = scalar_lea.vmem [#allocation2], 1
    %14 = vst.msk [vmem:[%s13] ss:$8 sm:$0xf0] %vm10, %v9
    %v15 = vld [vmem:[%s0] sm:$0xff]
    %16 = vrot.lane.b32.xlu0 %v15, 112
    %v17 = vpop.permute.xlu0 %16
    %vm18 = vcmask 64512
    %s19 = scalar_lea.vmem [#allocation2], 2
    %20 = vst.msk [vmem:[%s19] ss:$8 sm:$0xf] %vm18, %v17
    %s21 = scalar_lea.vmem [#allocation2], 2
    %22 = vst.msk [vmem:[%s21] ss:$8 sm:$0xf0] %vm18, %v17
    %v23 = vld [vmem:[%s0] sm:$0xff]
    %24 = vrot.lane.b32.xlu0 %v23, 104
    %v25 = vpop.permute.xlu0 %24
    %vm26 = vcmask 64512
    %s27 = scalar_lea.vmem [#allocation2], 3
    %28 = vst.msk [vmem:[%s27] ss:$8 sm:$0xf] %vm26, %v25
    %s29 = scalar_lea.vmem [#allocation2], 3
    %30 = vst.msk [vmem:[%s29] ss:$8 sm:$0xf0] %vm26, %v25
    %s32 = ssub.s32 16, 1
    %v33 = vld [vmem:[#allocation2] sm:%s32]
    %s35 = ssub.s32 16, 1
    %36 = vst [vmem:[#allocation0] sm:%s35] %v33
    %s37 = scalar_lea.vmem [#allocation2], 8
    %v38 = vld [vmem:[%s37] sm:%s32]
    %s40 = ssub.s32 16, 1
    %s41 = scalar_lea.vmem [#allocation0], 4
    %42 = vst [vmem:[%s41] sm:%s40] %v38
    %s43 = scalar_lea.vmem [#allocation2], 16
    %v44 = vld [vmem:[%s43] sm:%s32]
    %s46 = ssub.s32 16, 1
    %s47 = scalar_lea.vmem [#allocation0], 8
    %48 = vst [vmem:[%s47] sm:%s46] %v44
    %s49 = scalar_lea.vmem [#allocation2], 24
    %v50 = vld [vmem:[%s49] sm:%s32]
    %s52 = ssub.s32 16, 1
    %s53 = scalar_lea.vmem [#allocation0], 12
    %54 = vst [vmem:[%s53] sm:%s52] %v50
    %s55 = scalar_lea.vmem [#allocation2], 32
    %v56 = vld [vmem:[%s55] sm:%s32]
    %s58 = ssub.s32 16, 1
    %s59 = scalar_lea.vmem [#allocation0], 16
    %60 = vst [vmem:[%s59] sm:%s58] %v56
    %s61 = scalar_lea.vmem [#allocation2], 40
    %v62 = vld [vmem:[%s61] sm:%s32]
    %s64 = ssub.s32 16, 1
    %s65 = scalar_lea.vmem [#allocation0], 20
    %66 = vst [vmem:[%s65] sm:%s64] %v62
    %s67 = scalar_lea.vmem [#allocation2], 48
    %v68 = vld [vmem:[%s67] sm:%s32]
    %s70 = ssub.s32 16, 1
    %s71 = scalar_lea.vmem [#allocation0], 24
    %72 = vst [vmem:[%s71] sm:%s70] %v68
    %s73 = scalar_lea.vmem [#allocation2], 56
    %v74 = vld [vmem:[%s73] sm:%s32]
    %s76 = ssub.s32 16, 1
    %s77 = scalar_lea.vmem [#allocation0], 28
    %78 = vst [vmem:[%s77] sm:%s76] %v74
    %80 = vsyncadd [#allocation1], 0
    %s82 = sshll.u32 [#allocation0], 4
    %s83 = int_to_ptr.vmem [resolvable:$true] %s82
    %s84 = sshll.u32 %s1, 4
    %s85 = int_to_ptr.hbm [resolvable:$true] %s84
    %87 = dma.vmem_to_hbm [thread:$0]  %s83, 512, %s85, [#allocation1]
    %89 = dma.done [#allocation1], 512
    %90 = vsyncpa [#allocation1], 1

// kernel: hypernetwork_forward.1
$region0: #{hypernetwork_forward.1}
  #allocation0 [shape = 'u32[]', space=smem, size = 0x4, offset = 0x4, fixed_abs, tag = 'smem constant byte address 0x4 - core index']
  #allocation1 [shape = 'u32[72,128]{1,0:T(1,128)}', space=vmem, size = 0x9000, scoped, tag = 'internal scratch']
  %s0 = inlined_call_operand.vmem [shape: f32[8,8], index: 0, kind: input, shape index: {}]
  %s1 = inlined_call_operand.hbm [shape: bf16[2,8,896], index: 1, kind: input, shape index: {}]
  %s2 = inlined_call_operand.hbm [shape: f32[2,1,896], index: 2, kind: input, shape index: {}]
  %s3 = inlined_call_operand.hbm [shape: bf16[14,128,256], index: 3, kind: input, shape index: {}]
  %s4 = inlined_call_operand.hbm [shape: f32[14,1,256], index: 4, kind: input, shape index: {}]
  %s5 = inlined_call_operand.hbm [shape: bf16[14,256,512], index: 5, kind: input, shape index: {}]
  %s6 = inlined_call_operand.hbm [shape: f32[14,1,512], index: 6, kind: input, shape index: {}]
  %s7 = inlined_call_operand.hbm [shape: bf16[14,512,64], index: 7, kind: input, shape index: {}]
  %s8 = inlined_call_operand.hbm [shape: f32[14,1,64], index: 8, kind: input, shape index: {}]
  %s9 = inlined_call_operand.vmem [shape: f32[14,8,64], index: 9, kind: output, shape index: {}]
  %s10 = sld [smem:[#allocation0]]
  $region101: #{hypernetwork_forward.1} parent=0
    _
  %s12 = ssub.s32 1, %s10
  %s13 = scalar_select 0, %s12, %s10
  $region1: #{hypernetwork_forward.1} parent=0
    #allocation2 [shape = 'u8[28672]{0}', space=vmem, size = 0x7000, scoped, tag = 'input window, operand 1']
    #allocation3 [shape = 's32[2]{0}', space=sflag, size = 0x8, scoped, tag = 'scoped memory for hypernetwork_forward.1']
    #allocation4 [shape = 'u8[7168]{0}', space=vmem, size = 0x1c00, scoped, tag = 'input window, operand 2']
    #allocation5 [shape = 's32[2]{0}', space=sflag, size = 0x8, scoped, tag = 'scoped memory for hypernetwork_forward.1']
    #allocation6 [shape = 'u8[917504]{0}', space=vmem, size = 0xe0000, scoped, tag = 'input window, operand 3']
    #allocation7 [shape = 'u8[14336]{0}', space=vmem, size = 0x3800, scoped, tag = 'input window, operand 4']
    #allocation8 [shape = 's32[2]{0}', space=sflag, size = 0x8, scoped, tag = 'scoped memory for hypernetwork_forward.1']
    #allocation9 [shape = 'u8[3670016]{0}', space=vmem, size = 0x380000, scoped, tag = 'input window, operand 5']
    #allocation10 [shape = 'u8[28672]{0}', space=vmem, size = 0x7000, scoped, tag = 'input window, operand 6']
    #allocation11 [shape = 's32[2]{0}', space=sflag, size = 0x8, scoped, tag = 'scoped memory for hypernetwork_forward.1']
    #allocation12 [shape = 'u8[1835008]{0}', space=vmem, size = 0x1c0000, scoped, tag = 'input window, operand 7']
    #allocation13 [shape = 'u8[7168]{0}', space=vmem, size = 0x1c00, scoped, tag = 'input window, operand 8']
    #allocation14 [shape = 's32[2]{0}', space=sflag, size = 0x8, scoped, tag = 'scoped memory for hypernetwork_forward.1']
    %14 = vsyncpa [#allocation3], 0
    %s15 = scalar_lea.sflag [#allocation3], 1
    %16 = vsyncpa %s15, 0
    %17 = vsyncpa [#allocation5], 0
    %s18 = scalar_lea.sflag [#allocation5], 1
    %19 = vsyncpa %s18, 0
    %20 = vsyncpa [#allocation8], 0
    %s21 = scalar_lea.sflag [#allocation8], 1
    %22 = vsyncpa %s21, 0
    %23 = vsyncpa [#allocation11], 0
    %s24 = scalar_lea.sflag [#allocation11], 1
    %25 = vsyncpa %s24, 0
    %26 = vsyncpa [#allocation14], 0
    %s27 = scalar_lea.sflag [#allocation14], 1
    %28 = vsyncpa %s27, 0
    loop: start=0, step=1, limit=4
    $region2: #{hypernetwork_forward.1} parent=1 // loop_pre_header
      _
    $region3: #{hypernetwork_forward.1} parent=1 // loop_header
      %s30 = sphi 0, %s34
      %p31 = scmp.ge.s32.totalorder %s30, 4
      %s38 = sphi 0, %s38
      %s40 = sphi 0, %s38
      %s41 = sphi 0, %s40
      %s55 = sphi 0, %s41
      %s61 = sphi 0, %s63
      %s64 = sphi 0, %s61
      %s65 = sphi 0, %s64
      %s81 = sphi 0, %s65
      %s87 = sphi 0, %s89
      %s90 = sphi 0, %s87
      %s91 = sphi 0, %s90
      %s107 = sphi 0, %s91
      %s113 = sphi 0, %s115
      %s116 = sphi 0, %s113
      %s117 = sphi 0, %s116
      %s133 = sphi 0, %s117
      %s139 = sphi 0, %s141
      %s142 = sphi 0, %s139
      %s143 = sphi 0, %s142
      %s159 = sphi 0, %s143
      %s165 = sphi 0, %s167
      %s168 = sphi 0, %s165
      %s169 = sphi 0, %s168
      %s185 = sphi 0, %s169
      %s191 = sphi 0, %s193
      %s194 = sphi 0, %s191
      %s195 = sphi 0, %s194
      %s211 = sphi 0, %s195
      %s217 = sphi 0, %s219
      %s220 = sphi 0, %s217
      %s221 = sphi 0, %s220
      %s237 = sphi 0, %s221
      %s243 = sphi 0, %s245
      %s246 = sphi 0, %s243
      %s247 = sphi 0, %s246
      %s263 = sphi 0, %s247
      %s269 = sphi 0, %s271
      %s272 = sphi 0, %s269
      %s273 = sphi 0, %s272
      %s289 = sphi 0, %s273
    $region4: #{hypernetwork_forward.1} parent=1 // loop_header_branch
      %33 = sbr.rel (%p31) target = $region8
    $region5: #{hypernetwork_forward.1} parent=1 // loop_body
      %s35 = ssub.s32 %s30, 1
      %s36 = ssub.s32 %s30, 2
      %s37 = sadd.s32 %s30, 1
      %s39 = sadd.s32 %s38, 1
      %p42 = scmp.eq.s32.totalorder %s30, 1
      %p43 = scmp.ne.s32.totalorder %s38, %s40
      %p44 = scmp.eq.s32.totalorder %s30, 0
      %p45 = por %p43, %p44
      %p46 = scmp.ne.s32.totalorder %s38, %s40
      %p47 = scmp.eq.s32.totalorder %s35, 1
      %p48 = por %p46, %p47
      %p49 = scmp.ne.s32.totalorder %s40, %s41
      %p50 = scmp.eq.s32.totalorder %s35, 0
      %p51 = por %p49, %p50
      %p52 = scmp.ne.s32.totalorder %s40, %s41
      %p53 = scmp.eq.s32.totalorder %s36, 1
      %p54 = por %p52, %p53
      %p56 = scmp.ne.s32.totalorder %s41, %s55
      %p57 = scmp.eq.s32.totalorder %s36, 0
      %p58 = por %p56, %p57
      %s59 = ssub.s32 %s30, %s37
      %p60 = scmp.eq.s32.totalorder %s59, 0
      %s62 = sadd.s32 %s61, 1
      %s63 = scalar_select %p60, %s61, %s62
      %p66 = pneg %p60
      %p67 = scmp.eq.s32.totalorder %s30, 1
      %p68 = por %p66, %p67
      %p69 = scmp.ne.s32.totalorder %s61, %s64
      %p70 = scmp.eq.s32.totalorder %s30, 0
      %p71 = por %p69, %p70
      %p72 = scmp.ne.s32.totalorder %s61, %s64
      %p73 = scmp.eq.s32.totalorder %s35, 1
      %p74 = por %p72, %p73
      %p75 = scmp.ne.s32.totalorder %s64, %s65
      %p76 = scmp.eq.s32.totalorder %s35, 0
      %p77 = por %p75, %p76
      %p78 = scmp.ne.s32.totalorder %s64, %s65
      %p79 = scmp.eq.s32.totalorder %s36, 1
      %p80 = por %p78, %p79
      %p82 = scmp.ne.s32.totalorder %s65, %s81
      %p83 = scmp.eq.s32.totalorder %s36, 0
      %p84 = por %p82, %p83
      %s85 = ssub.s32 %s30, %s37
      %p86 = scmp.eq.s32.totalorder %s85, 0
      %s88 = sadd.s32 %s87, 1
      %s89 = scalar_select %p86, %s87, %s88
      %p92 = pneg %p86
      %p93 = scmp.eq.s32.totalorder %s30, 1
      %p94 = por %p92, %p93
      %p95 = scmp.ne.s32.totalorder %s87, %s90
      %p96 = scmp.eq.s32.totalorder %s30, 0
      %p97 = por %p95, %p96
      %p98 = scmp.ne.s32.totalorder %s87, %s90
      %p99 = scmp.eq.s32.totalorder %s35, 1
      %p100 = por %p98, %p99
      %p101 = scmp.ne.s32.totalorder %s90, %s91
      %p102 = scmp.eq.s32.totalorder %s35, 0
      %p103 = por %p101, %p102
      %p104 = scmp.ne.s32.totalorder %s90, %s91
      %p105 = scmp.eq.s32.totalorder %s36, 1
      %p106 = por %p104, %p105
      %p108 = scmp.ne.s32.totalorder %s91, %s107
      %p109 = scmp.eq.s32.totalorder %s36, 0
      %p110 = por %p108, %p109
      %s111 = ssub.s32 %s30, %s37
      %p112 = scmp.eq.s32.totalorder %s111, 0
      %s114 = sadd.s32 %s113, 1
      %s115 = scalar_select %p112, %s113, %s114
      %p118 = pneg %p112
      %p119 = scmp.eq.s32.totalorder %s30, 1
      %p120 = por %p118, %p119
      %p121 = scmp.ne.s32.totalorder %s113, %s116
      %p122 = scmp.eq.s32.totalorder %s30, 0
      %p123 = por %p121, %p122
      %p124 = scmp.ne.s32.totalorder %s113, %s116
      %p125 = scmp.eq.s32.totalorder %s35, 1
      %p126 = por %p124, %p125
      %p127 = scmp.ne.s32.totalorder %s116, %s117
      %p128 = scmp.eq.s32.totalorder %s35, 0
      %p129 = por %p127, %p128
      %p130 = scmp.ne.s32.totalorder %s116, %s117
      %p131 = scmp.eq.s32.totalorder %s36, 1
      %p132 = por %p130, %p131
      %p134 = scmp.ne.s32.totalorder %s117, %s133
      %p135 = scmp.eq.s32.totalorder %s36, 0
      %p136 = por %p134, %p135
      %s137 = ssub.s32 %s30, %s37
      %p138 = scmp.eq.s32.totalorder %s137, 0
      %s140 = sadd.s32 %s139, 1
      %s141 = scalar_select %p138, %s139, %s140
      %p144 = pneg %p138
      %p145 = scmp.eq.s32.totalorder %s30, 1
      %p146 = por %p144, %p145
      %p147 = scmp.ne.s32.totalorder %s139, %s142
      %p148 = scmp.eq.s32.totalorder %s30, 0
      %p149 = por %p147, %p148
      %p150 = scmp.ne.s32.totalorder %s139, %s142
      %p151 = scmp.eq.s32.totalorder %s35, 1
      %p152 = por %p150, %p151
      %p153 = scmp.ne.s32.totalorder %s142, %s143
      %p154 = scmp.eq.s32.totalorder %s35, 0
      %p155 = por %p153, %p154
      %p156 = scmp.ne.s32.totalorder %s142, %s143
      %p157 = scmp.eq.s32.totalorder %s36, 1
      %p158 = por %p156, %p157
      %p160 = scmp.ne.s32.totalorder %s143, %s159
      %p161 = scmp.eq.s32.totalorder %s36, 0
      %p162 = por %p160, %p161
      %s163 = ssub.s32 %s30, %s37
      %p164 = scmp.eq.s32.totalorder %s163, 0
      %s166 = sadd.s32 %s165, 1
      %s167 = scalar_select %p164, %s165, %s166
      %p170 = pneg %p164
      %p171 = scmp.eq.s32.totalorder %s30, 1
      %p172 = por %p170, %p171
      %p173 = scmp.ne.s32.totalorder %s165, %s168
      %p174 = scmp.eq.s32.totalorder %s30, 0
      %p175 = por %p173, %p174
      %p176 = scmp.ne.s32.totalorder %s165, %s168
      %p177 = scmp.eq.s32.totalorder %s35, 1
      %p178 = por %p176, %p177
      %p179 = scmp.ne.s32.totalorder %s168, %s169
      %p180 = scmp.eq.s32.totalorder %s35, 0
      %p181 = por %p179, %p180
      %p182 = scmp.ne.s32.totalorder %s168, %s169
      %p183 = scmp.eq.s32.totalorder %s36, 1
      %p184 = por %p182, %p183
      %p186 = scmp.ne.s32.totalorder %s169, %s185
      %p187 = scmp.eq.s32.totalorder %s36, 0
      %p188 = por %p186, %p187
      %s189 = ssub.s32 %s30, %s37
      %p190 = scmp.eq.s32.totalorder %s189, 0
      %s192 = sadd.s32 %s191, 1
      %s193 = scalar_select %p190, %s191, %s192
      %p196 = pneg %p190
      %p197 = scmp.eq.s32.totalorder %s30, 1
      %p198 = por %p196, %p197
      %p199 = scmp.ne.s32.totalorder %s191, %s194
      %p200 = scmp.eq.s32.totalorder %s30, 0
      %p201 = por %p199, %p200
      %p202 = scmp.ne.s32.totalorder %s191, %s194
      %p203 = scmp.eq.s32.totalorder %s35, 1
      %p204 = por %p202, %p203
      %p205 = scmp.ne.s32.totalorder %s194, %s195
      %p206 = scmp.eq.s32.totalorder %s35, 0
      %p207 = por %p205, %p206
      %p208 = scmp.ne.s32.totalorder %s194, %s195
      %p209 = scmp.eq.s32.totalorder %s36, 1
      %p210 = por %p208, %p209
      %p212 = scmp.ne.s32.totalorder %s195, %s211
      %p213 = scmp.eq.s32.totalorder %s36, 0
      %p214 = por %p212, %p213
      %s215 = ssub.s32 %s30, %s37
      %p216 = scmp.eq.s32.totalorder %s215, 0
      %s218 = sadd.s32 %s217, 1
      %s219 = scalar_select %p216, %s217, %s218
      %p222 = pneg %p216
      %p223 = scmp.eq.s32.totalorder %s30, 1
      %p224 = por %p222, %p223
      %p225 = scmp.ne.s32.totalorder %s217, %s220
      %p226 = scmp.eq.s32.totalorder %s30, 0
      %p227 = por %p225, %p226
      %p228 = scmp.ne.s32.totalorder %s217, %s220
      %p229 = scmp.eq.s32.totalorder %s35, 1
      %p230 = por %p228, %p229
      %p231 = scmp.ne.s32.totalorder %s220, %s221
      %p232 = scmp.eq.s32.totalorder %s35, 0
      %p233 = por %p231, %p232
      %p234 = scmp.ne.s32.totalorder %s220, %s221
      %p235 = scmp.eq.s32.totalorder %s36, 1
      %p236 = por %p234, %p235
      %p238 = scmp.ne.s32.totalorder %s221, %s237
      %p239 = scmp.eq.s32.totalorder %s36, 0
      %p240 = por %p238, %p239
      %s241 = ssub.s32 %s30, %s37
      %p242 = scmp.eq.s32.totalorder %s241, 0
      %s244 = sadd.s32 %s243, 1
      %s245 = scalar_select %p242, %s243, %s244
      %p248 = pneg %p242
      %p249 = scmp.eq.s32.totalorder %s30, 1
      %p250 = por %p248, %p249
      %p251 = scmp.ne.s32.totalorder %s243, %s246
      %p252 = scmp.eq.s32.totalorder %s30, 0
      %p253 = por %p251, %p252
      %p254 = scmp.ne.s32.totalorder %s243, %s246
      %p255 = scmp.eq.s32.totalorder %s35, 1
      %p256 = por %p254, %p255
      %p257 = scmp.ne.s32.totalorder %s246, %s247
      %p258 = scmp.eq.s32.totalorder %s35, 0
      %p259 = por %p257, %p258
      %p260 = scmp.ne.s32.totalorder %s246, %s247
      %p261 = scmp.eq.s32.totalorder %s36, 1
      %p262 = por %p260, %p261
      %p264 = scmp.ne.s32.totalorder %s247, %s263
      %p265 = scmp.eq.s32.totalorder %s36, 0
      %p266 = por %p264, %p265
      %s267 = ssub.s32 %s30, %s37
      %p268 = scmp.eq.s32.totalorder %s267, 0
      %s270 = sadd.s32 %s269, 1
      %s271 = scalar_select %p268, %s269, %s270
      %p274 = pneg %p268
      %p275 = scmp.eq.s32.totalorder %s30, 1
      %p276 = por %p274, %p275
      %p277 = scmp.ne.s32.totalorder %s269, %s272
      %p278 = scmp.eq.s32.totalorder %s30, 0
      %p279 = por %p277, %p278
      %p280 = scmp.ne.s32.totalorder %s269, %s272
      %p281 = scmp.eq.s32.totalorder %s35, 1
      %p282 = por %p280, %p281
      %p283 = scmp.ne.s32.totalorder %s272, %s273
      %p284 = scmp.eq.s32.totalorder %s35, 0
      %p285 = por %p283, %p284
      %p286 = scmp.ne.s32.totalorder %s272, %s273
      %p287 = scmp.eq.s32.totalorder %s36, 1
      %p288 = por %p286, %p287
      %p290 = scmp.ne.s32.totalorder %s273, %s289
      %p291 = scmp.eq.s32.totalorder %s36, 0
      %p292 = por %p290, %p291
      %p293 = scmp.le.s32.totalorder 1, %s30
      %p294 = scmp.lt.s32.totalorder %s30, 3
      %p295 = pnand %p293, %p294
      %p296 = pneg %p295
      // Predicated region
      $region9: #{hypernetwork_forward.1} parent=5 // pred_check
        _
      $region10: #{hypernetwork_forward.1} parent=5 // pred_check_branch
        %298 = sbr.rel (%p295) target = $region12
      $region11: #{hypernetwork_forward.1} parent=5 // pred_region
        %s299 = ssub.s32 %s30, 1
        // Predicated region
        $region13: #{hypernetwork_forward.1} parent=11 // pred_check
          %p300 = pneg %p51
        $region14: #{hypernetwork_forward.1} parent=11 // pred_check_branch
          %302 = sbr.rel (%p300) target = $region16
        $region15: #{hypernetwork_forward.1} parent=11 // pred_region
          _
        $region16: #{hypernetwork_forward.1} parent=11 // pred_fallthru
          _
      $region12: #{hypernetwork_forward.1} parent=5 // pred_fallthru
        _
      %p303 = scmp.lt.s32.totalorder %s30, 2
      // Predicated region
      $region17: #{hypernetwork_forward.1} parent=5 // pred_check
        %p304 = pneg %p303
      $region18: #{hypernetwork_forward.1} parent=5 // pred_check_branch
        %306 = sbr.rel (%p304) target = $region20
      $region19: #{hypernetwork_forward.1} parent=5 // pred_region
        // Predicated region
        $region21: #{hypernetwork_forward.1} parent=19 // pred_check
          %p307 = pneg %p71
        $region22: #{hypernetwork_forward.1} parent=19 // pred_check_branch
          %309 = sbr.rel (%p307) target = $region24
        $region23: #{hypernetwork_forward.1} parent=19 // pred_region
          %s310 = sand.u32 %s61, 1
          %s311 = scalar_lea.sflag [#allocation3], %s310
          %s312 = sand.u32 %s61, 1
          %s313 = smul.addr %s312, 28
          %s314 = scalar_lea.vmem [#allocation2], %s313
          %316 = vsyncadd %s311, 0
          %s317 = smul.addr %s30, 7
          %s318 = smul.addr %s317, 4
          %s319 = scalar_lea.hbm %s1, %s318
          %s321 = sshll.u32 %s319, 4
          %s322 = int_to_ptr.hbm [resolvable:$true] %s321
          %s323 = sshll.u32 %s314, 4
          %s324 = int_to_ptr.vmem [resolvable:$true] %s323
          %326 = dma.hbm_to_vmem [thread:$0]  %s322, 448, %s324, %s311
        $region24: #{hypernetwork_forward.1} parent=19 // pred_fallthru
          _
        // Predicated region
        $region25: #{hypernetwork_forward.1} parent=19 // pred_check
          %p327 = pneg %p97
        $region26: #{hypernetwork_forward.1} parent=19 // pred_check_branch
          %329 = sbr.rel (%p327) target = $region28
        $region27: #{hypernetwork_forward.1} parent=19 // pred_region
          %s330 = sand.u32 %s30, 1
          %s331 = scalar_lea.sflag [#allocation5], %s330
          %s332 = sand.u32 %s87, 1
          %s333 = smul.addr %s332, 7
          %s334 = scalar_lea.vmem [#allocation4], %s333
          %336 = vsyncadd %s331, 0
          %s337 = smul.addr %s30, 7
          %s338 = scalar_lea.hbm %s2, %s337
          %s340 = sshll.u32 %s338, 4
          %s341 = int_to_ptr.hbm [resolvable:$true] %s340
          %s342 = sshll.u32 %s334, 4
          %s343 = int_to_ptr.vmem [resolvable:$true] %s342
          %345 = dma.hbm_to_vmem [thread:$0]  %s341, 112, %s343, %s331
        $region28: #{hypernetwork_forward.1} parent=19 // pred_fallthru
          _
        // Predicated region
        $region29: #{hypernetwork_forward.1} parent=19 // pred_check
          %p346 = pneg %p123
        $region30: #{hypernetwork_forward.1} parent=19 // pred_check_branch
          %348 = sbr.rel (%p346) target = $region32
        $region31: #{hypernetwork_forward.1} parent=19 // pred_region
          %s349 = sand.u32 %s30, 1
          %s350 = scalar_lea.sflag [#allocation5], %s349
          %s351 = sand.u32 %s113, 1
          %s352 = smul.addr %s351, 896
          %s353 = scalar_lea.vmem [#allocation6], %s352
          %s354 = smul.u32 7, %s30
          %356 = vsyncadd %s350, 0
          %s357 = smul.addr %s354, 32
          %s358 = smul.addr %s357, 4
          %s359 = scalar_lea.hbm %s3, %s358
          %s360 = sshll.u32 %s359, 4
          %s361 = int_to_ptr.hbm [resolvable:$true] %s360
          %s362 = sshll.u32 %s353, 4
          %s363 = int_to_ptr.vmem [resolvable:$true] %s362
          %368 = dma.hbm_to_vmem [thread:$0]  %s361, 14336, %s363, %s350, 128, 128, 8
        $region32: #{hypernetwork_forward.1} parent=19 // pred_fallthru
          _
        // Predicated region
        $region33: #{hypernetwork_forward.1} parent=19 // pred_check
          %p369 = pneg %p149
        $region34: #{hypernetwork_forward.1} parent=19 // pred_check_branch
          %371 = sbr.rel (%p369) target = $region36
        $region35: #{hypernetwork_forward.1} parent=19 // pred_region
          %s372 = sand.u32 %s30, 1
          %s373 = scalar_lea.sflag [#allocation8], %s372
          %s374 = sand.u32 %s139, 1
          %s375 = smul.addr %s374, 14
          %s376 = scalar_lea.vmem [#allocation7], %s375
          %s377 = smul.u32 7, %s30
          %379 = vsyncadd %s373, 0
          %s380 = smul.addr %s377, 2
          %s381 = scalar_lea.hbm %s4, %s380
          %s382 = sshll.u32 %s381, 4
          %s383 = int_to_ptr.hbm [resolvable:$true] %s382
          %s384 = sshll.u32 %s376, 4
          %s385 = int_to_ptr.vmem [resolvable:$true] %s384
          %390 = dma.hbm_to_vmem [thread:$0]  %s383, 224, %s385, %s373, 32, 32, 2
        $region36: #{hypernetwork_forward.1} parent=19 // pred_fallthru
          _
        // Predicated region
        $region37: #{hypernetwork_forward.1} parent=19 // pred_check
          %p391 = pneg %p175
        $region38: #{hypernetwork_forward.1} parent=19 // pred_check_branch
          %393 = sbr.rel (%p391) target = $region40
        $region39: #{hypernetwork_forward.1} parent=19 // pred_region
          %s394 = sand.u32 %s30, 1
          %s395 = scalar_lea.sflag [#allocation8], %s394
          %s396 = sand.u32 %s165, 1
          %s397 = smul.addr %s396, 3584
          %s398 = scalar_lea.vmem [#allocation9], %s397
          %s399 = smul.u32 7, %s30
          %401 = vsyncadd %s395, 0
          %s402 = smul.addr %s399, 128
          %s403 = smul.addr %s402, 4
          %s404 = scalar_lea.hbm %s5, %s403
          %s405 = sshll.u32 %s404, 4
          %s406 = int_to_ptr.hbm [resolvable:$true] %s405
          %s407 = sshll.u32 %s398, 4
          %s408 = int_to_ptr.vmem [resolvable:$true] %s407
          %413 = dma.hbm_to_vmem [thread:$0]  %s406, 57344, %s408, %s395, 256, 256, 16
        $region40: #{hypernetwork_forward.1} parent=19 // pred_fallthru
          _
        // Predicated region
        $region41: #{hypernetwork_forward.1} parent=19 // pred_check
          %p414 = pneg %p201
        $region42: #{hypernetwork_forward.1} parent=19 // pred_check_branch
          %416 = sbr.rel (%p414) target = $region44
        $region43: #{hypernetwork_forward.1} parent=19 // pred_region
          %s417 = sand.u32 %s30, 1
          %s418 = scalar_lea.sflag [#allocation11], %s417
          %s419 = sand.u32 %s191, 1
          %s420 = smul.addr %s419, 28
          %s421 = scalar_lea.vmem [#allocation10], %s420
          %s422 = smul.u32 7, %s30
          %424 = vsyncadd %s418, 0
          %s425 = smul.addr %s422, 4
          %s426 = scalar_lea.hbm %s6, %s425
          %s427 = sshll.u32 %s426, 4
          %s428 = int_to_ptr.hbm [resolvable:$true] %s427
          %s429 = sshll.u32 %s421, 4
          %s430 = int_to_ptr.vmem [resolvable:$true] %s429
          %435 = dma.hbm_to_vmem [thread:$0]  %s428, 448, %s430, %s418, 64, 64, 4
        $region44: #{hypernetwork_forward.1} parent=19 // pred_fallthru
          _
        // Predicated region
        $region45: #{hypernetwork_forward.1} parent=19 // pred_check
          %p436 = pneg %p227
        $region46: #{hypernetwork_forward.1} parent=19 // pred_check_branch
          %438 = sbr.rel (%p436) target = $region48
        $region47: #{hypernetwork_forward.1} parent=19 // pred_region
          %s439 = sand.u32 %s30, 1
          %s440 = scalar_lea.sflag [#allocation11], %s439
          %s441 = sand.u32 %s217, 1
          %s442 = smul.addr %s441, 1792
          %s443 = scalar_lea.vmem [#allocation12], %s442
          %s444 = smul.u32 7, %s30
          %446 = vsyncadd %s440, 0
          %s447 = smul.addr %s444, 64
          %s448 = smul.addr %s447, 4
          %s449 = scalar_lea.hbm %s7, %s448
          %s450 = sshll.u32 %s449, 4
          %s451 = int_to_ptr.hbm [resolvable:$true] %s450
          %s452 = sshll.u32 %s443, 4
          %s453 = int_to_ptr.vmem [resolvable:$true] %s452
          %458 = dma.hbm_to_vmem [thread:$0]  %s451, 28672, %s453, %s440, 64, 64, 4
        $region48: #{hypernetwork_forward.1} parent=19 // pred_fallthru
          _
        // Predicated region
        $region49: #{hypernetwork_forward.1} parent=19 // pred_check
          %p459 = pneg %p253
        $region50: #{hypernetwork_forward.1} parent=19 // pred_check_branch
          %461 = sbr.rel (%p459) target = $region52
        $region51: #{hypernetwork_forward.1} parent=19 // pred_region
          %s462 = sand.u32 %s243, 1
          %s463 = scalar_lea.sflag [#allocation14], %s462
          %s464 = sand.u32 %s243, 1
          %s465 = smul.addr %s464, 7
          %s466 = scalar_lea.vmem [#allocation13], %s465
          %s467 = smul.u32 7, %s30
          %469 = vsyncadd %s463, 0
          %s470 = scalar_lea.hbm %s8, %s467
          %s471 = sshll.u32 %s470, 4
          %s472 = int_to_ptr.hbm [resolvable:$true] %s471
          %s473 = sshll.u32 %s466, 4
          %s474 = int_to_ptr.vmem [resolvable:$true] %s473
          %479 = dma.hbm_to_vmem [thread:$0]  %s472, 112, %s474, %s463, 16, 16, 1
        $region52: #{hypernetwork_forward.1} parent=19 // pred_fallthru
          _
      $region20: #{hypernetwork_forward.1} parent=5 // pred_fallthru
        _
      %p480 = scmp.le.s32.totalorder 1, %s30
      %p481 = scmp.lt.s32.totalorder %s30, 3
      %p482 = pnand %p480, %p481
      %p483 = pneg %p482
      // Predicated region
      $region53: #{hypernetwork_forward.1} parent=5 // pred_check
        _
      $region54: #{hypernetwork_forward.1} parent=5 // pred_check_branch
        %485 = sbr.rel (%p482) target = $region56
      $region55: #{hypernetwork_forward.1} parent=5 // pred_region
        %s486 = ssub.s32 %s30, 1
        %s487 = sand.u32 %s64, 1
        %s488 = scalar_lea.sflag [#allocation3], %s487
        %s489 = sand.u32 %s64, 1
        %s490 = smul.addr %s489, 28
        %s491 = scalar_lea.vmem [#allocation2], %s490
        // Predicated region
        $region57: #{hypernetwork_forward.1} parent=55 // pred_check
          %p492 = pneg %p77
        $region58: #{hypernetwork_forward.1} parent=55 // pred_check_branch
          %494 = sbr.rel (%p492) target = $region60
        $region59: #{hypernetwork_forward.1} parent=55 // pred_region
          %496 = dma.done %s488, 448
        $region60: #{hypernetwork_forward.1} parent=55 // pred_fallthru
          _
        %s497 = sand.u32 %s35, 1
        %s498 = scalar_lea.sflag [#allocation5], %s497
        %s499 = sand.u32 %s90, 1
        %s500 = smul.addr %s499, 7
        %s501 = scalar_lea.vmem [#allocation4], %s500
        // Predicated region
        $region61: #{hypernetwork_forward.1} parent=55 // pred_check
          %p502 = pneg %p103
        $region62: #{hypernetwork_forward.1} parent=55 // pred_check_branch
          %504 = sbr.rel (%p502) target = $region64
        $region63: #{hypernetwork_forward.1} parent=55 // pred_region
          %506 = dma.done %s498, 112
        $region64: #{hypernetwork_forward.1} parent=55 // pred_fallthru
          _
        %s507 = sand.u32 %s35, 1
        %s508 = scalar_lea.sflag [#allocation5], %s507
        %s509 = sand.u32 %s116, 1
        %s510 = smul.addr %s509, 896
        %s511 = scalar_lea.vmem [#allocation6], %s510
        // Predicated region
        $region65: #{hypernetwork_forward.1} parent=55 // pred_check
          %p512 = pneg %p129
        $region66: #{hypernetwork_forward.1} parent=55 // pred_check_branch
          %514 = sbr.rel (%p512) target = $region68
        $region67: #{hypernetwork_forward.1} parent=55 // pred_region
          %516 = dma.done %s508, 14336
        $region68: #{hypernetwork_forward.1} parent=55 // pred_fallthru
          _
        %s517 = sand.u32 %s35, 1
        %s518 = scalar_lea.sflag [#allocation8], %s517
        %s519 = sand.u32 %s142, 1
        %s520 = smul.addr %s519, 14
        %s521 = scalar_lea.vmem [#allocation7], %s520
        // Predicated region
        $region69: #{hypernetwork_forward.1} parent=55 // pred_check
          %p522 = pneg %p155
        $region70: #{hypernetwork_forward.1} parent=55 // pred_check_branch
          %524 = sbr.rel (%p522) target = $region72
        $region71: #{hypernetwork_forward.1} parent=55 // pred_region
          %526 = dma.done %s518, 224
        $region72: #{hypernetwork_forward.1} parent=55 // pred_fallthru
          _
        %s527 = sand.u32 %s35, 1
        %s528 = scalar_lea.sflag [#allocation8], %s527
        %s529 = sand.u32 %s168, 1
        %s530 = smul.addr %s529, 3584
        %s531 = scalar_lea.vmem [#allocation9], %s530
        // Predicated region
        $region73: #{hypernetwork_forward.1} parent=55 // pred_check
          %p532 = pneg %p181
        $region74: #{hypernetwork_forward.1} parent=55 // pred_check_branch
          %534 = sbr.rel (%p532) target = $region76
        $region75: #{hypernetwork_forward.1} parent=55 // pred_region
          %536 = dma.done %s528, 57344
        $region76: #{hypernetwork_forward.1} parent=55 // pred_fallthru
          _
        %s537 = sand.u32 %s35, 1
        %s538 = scalar_lea.sflag [#allocation11], %s537
        %s539 = sand.u32 %s194, 1
        %s540 = smul.addr %s539, 28
        %s541 = scalar_lea.vmem [#allocation10], %s540
        // Predicated region
        $region77: #{hypernetwork_forward.1} parent=55 // pred_check
          %p542 = pneg %p207
        $region78: #{hypernetwork_forward.1} parent=55 // pred_check_branch
          %544 = sbr.rel (%p542) target = $region80
        $region79: #{hypernetwork_forward.1} parent=55 // pred_region
          %546 = dma.done %s538, 448
        $region80: #{hypernetwork_forward.1} parent=55 // pred_fallthru
          _
        %s547 = sand.u32 %s35, 1
        %s548 = scalar_lea.sflag [#allocation11], %s547
        %s549 = sand.u32 %s220, 1
        %s550 = smul.addr %s549, 1792
        %s551 = scalar_lea.vmem [#allocation12], %s550
        // Predicated region
        $region81: #{hypernetwork_forward.1} parent=55 // pred_check
          %p552 = pneg %p233
        $region82: #{hypernetwork_forward.1} parent=55 // pred_check_branch
          %554 = sbr.rel (%p552) target = $region84
        $region83: #{hypernetwork_forward.1} parent=55 // pred_region
          %556 = dma.done %s548, 28672
        $region84: #{hypernetwork_forward.1} parent=55 // pred_fallthru
          _
        %s557 = sand.u32 %s246, 1
        %s558 = scalar_lea.sflag [#allocation14], %s557
        %s559 = sand.u32 %s246, 1
        %s560 = smul.addr %s559, 7
        %s561 = scalar_lea.vmem [#allocation13], %s560
        // Predicated region
        $region85: #{hypernetwork_forward.1} parent=55 // pred_check
          %p562 = pneg %p259
        $region86: #{hypernetwork_forward.1} parent=55 // pred_check_branch
          %564 = sbr.rel (%p562) target = $region88
        $region87: #{hypernetwork_forward.1} parent=55 // pred_region
          %566 = dma.done %s558, 112
        $region88: #{hypernetwork_forward.1} parent=55 // pred_fallthru
          _
        %p567 = pneg %p51
        %p568 = pneg %p48
        %s569 = sand.u32 %s64, 1
        %s570 = scalar_lea.sflag [#allocation3], %s569
        %s571 = sand.u32 %s64, 1
        %s572 = smul.addr %s571, 28
        %s573 = scalar_lea.vmem [#allocation2], %s572
        %p574 = pneg %p77
        %p575 = pneg %p74
        %s576 = sand.u32 %s35, 1
        %s577 = scalar_lea.sflag [#allocation5], %s576
        %s578 = sand.u32 %s90, 1
        %s579 = smul.addr %s578, 7
        %s580 = scalar_lea.vmem [#allocation4], %s579
        %p581 = pneg %p103
        %p582 = pneg %p100
        %s583 = sand.u32 %s35, 1
        %s584 = scalar_lea.sflag [#allocation5], %s583
        %s585 = sand.u32 %s116, 1
        %s586 = smul.addr %s585, 896
        %s587 = scalar_lea.vmem [#allocation6], %s586
        %p588 = pneg %p129
        %p589 = pneg %p126
        %s590 = sand.u32 %s35, 1
        %s591 = scalar_lea.sflag [#allocation8], %s590
        %s592 = sand.u32 %s142, 1
        %s593 = smul.addr %s592, 14
        %s594 = scalar_lea.vmem [#allocation7], %s593
        %p595 = pneg %p155
        %p596 = pneg %p152
        %s597 = sand.u32 %s35, 1
        %s598 = scalar_lea.sflag [#allocation8], %s597
        %s599 = sand.u32 %s168, 1
        %s600 = smul.addr %s599, 3584
        %s601 = scalar_lea.vmem [#allocation9], %s600
        %p602 = pneg %p181
        %p603 = pneg %p178
        %s604 = sand.u32 %s35, 1
        %s605 = scalar_lea.sflag [#allocation11], %s604
        %s606 = sand.u32 %s194, 1
        %s607 = smul.addr %s606, 28
        %s608 = scalar_lea.vmem [#allocation10], %s607
        %p609 = pneg %p207
        %p610 = pneg %p204
        %s611 = sand.u32 %s35, 1
        %s612 = scalar_lea.sflag [#allocation11], %s611
        %s613 = sand.u32 %s220, 1
        %s614 = smul.addr %s613, 1792
        %s615 = scalar_lea.vmem [#allocation12], %s614
        %p616 = pneg %p233
        %p617 = pneg %p230
        %s618 = sand.u32 %s246, 1
        %s619 = scalar_lea.sflag [#allocation14], %s618
        %s620 = sand.u32 %s246, 1
        %s621 = smul.addr %s620, 7
        %s622 = scalar_lea.vmem [#allocation13], %s621
        %p623 = pneg %p259
        %p624 = pneg %p256
        %p625 = pneg %p285
        %p626 = pneg %p282
        %s627 = smul.u32 7, %s35
        %p628 = scmp.lt.s32.totalorder %s627, 13
        %s629 = scalar_select %p628, %s627, 13
        %s630 = smul.addr %s629, 8
        %s631 = scalar_lea.vmem %s9, %s630
        %s632 = smul.u32 7, %s35
        %s633 = smul.u32 7, %s35
        %s634 = smul.u32 7, %s35
        %s635 = smul.u32 7, %s35
        %s636 = smul.u32 7, %s35
        %s637 = smul.u32 7, %s35
        %s638 = smul.u32 7, %s35
        %p639 = scmp.lt.s32.totalorder %s638, 13
        %s640 = scalar_select %p639, %s638, 13
        %s641 = smul.addr %s640, 8
        %s642 = scalar_lea.vmem %s9, %s641
        %s643 = smul.u32 7, %s35
        %v645 = vld [vmem:[%s0] sm:$0xff]
        %v646 = vpack.c.bf16 %v645, %v645
        %v647 = vld [vmem:[%s491] sm:$0xff]
        %v648 = vld [vmem:[%s491 + $0x8] sm:$0xff]
        %v649 = vld [vmem:[%s491 + $0x10] sm:$0xff]
        %v650 = vld [vmem:[%s491 + $0x18] sm:$0xf]
        %v651 = vld [vmem:[%s501] sm:$0xff]
        %v653 = vperm.slane %v651, 0
        %v654 = vperm.slane %v651, 1
        %v655 = vperm.slane %v651, 2
        %v656 = vperm.slane %v651, 3
        %v657 = vperm.slane %v651, 4
        %v658 = vperm.slane %v651, 5
        %v659 = vperm.slane %v651, 6
        %v671 = vunpack.c.l.b16 %v647
        %v672 = vunpack.c.h.b16 %v647
        %v673 = vunpack.c.l.b16 %v648
        %v674 = vunpack.c.h.b16 %v648
        %v675 = vunpack.c.l.b16 %v649
        %v676 = vunpack.c.h.b16 %v649
        %v677 = vunpack.c.l.b16 %v650
        %v678 = vpack.c.b16 %v671, %v671
        %v679 = vpack.c.b16 %v672, %v672
        %v680 = vpack.c.b16 %v673, %v673
        %v681 = vpack.c.b16 %v674, %v674
        %v682 = vpack.c.b16 %v675, %v675
        %v683 = vpack.c.b16 %v676, %v676
        %v684 = vpack.c.b16 %v677, %v677
        %vm685 = vcmask 64512
        %v687 = vsel %vm685, %v646, 0
        %vm689 = vcmask 1043456
        %v691 = vsel %vm689, %v678, 0
        %v694 = vsel %vm689, %v679, 0
        %v697 = vsel %vm689, %v680, 0
        %v700 = vsel %vm689, %v681, 0
        %v703 = vsel %vm689, %v682, 0
        %v706 = vsel %vm689, %v683, 0
        %v709 = vsel %vm689, %v684, 0
        %711 = vmatpush.bf16.msra.mxu0 0
        %712 = vmatpush.bf16.msra.mxu0 0
        %713 = vmatpush.bf16.msra.mxu0 0
        %714 = vmatpush.bf16.msra.mxu0 0
        %715 = vmatpush.bf16.msra.mxu0 0
        %716 = vmatpush.bf16.msra.mxu0 0
        %717 = vmatpush.bf16.msra.mxu0 0
        %718 = vmatpush.bf16.msra.mxu0 %v691
        %719 = vmatmul.bf16.gmra.mxu0 %v687
        %v720 = vpop.f32.mrf.mxu0
        %v721 = vadd.f32 %v653, %v720
        %v722 = vpop.f32.mrf.mxu0
        %723 = vdwg.mxu0
        %724 = vmatpush.bf16.msra.mxu0 0
        %725 = vmatpush.bf16.msra.mxu0 0
        %726 = vmatpush.bf16.msra.mxu0 0
        %727 = vmatpush.bf16.msra.mxu0 0
        %728 = vmatpush.bf16.msra.mxu0 0
        %729 = vmatpush.bf16.msra.mxu0 0
        %730 = vmatpush.bf16.msra.mxu0 0
        %731 = vmatpush.bf16.msra.mxu0 %v694
        %732 = vmatmul.bf16.gmra.mxu0 %v687
        %v733 = vpop.f32.mrf.mxu0
        %v734 = vadd.f32 %v654, %v733
        %v735 = vpop.f32.mrf.mxu0
        %736 = vdwg.mxu0
        %737 = vmatpush.bf16.msra.mxu0 0
        %738 = vmatpush.bf16.msra.mxu0 0
        %739 = vmatpush.bf16.msra.mxu0 0
        %740 = vmatpush.bf16.msra.mxu0 0
        %741 = vmatpush.bf16.msra.mxu0 0
        %742 = vmatpush.bf16.msra.mxu0 0
        %743 = vmatpush.bf16.msra.mxu0 0
        %744 = vmatpush.bf16.msra.mxu0 %v697
        %745 = vmatmul.bf16.gmra.mxu0 %v687
        %v746 = vpop.f32.mrf.mxu0
        %v747 = vadd.f32 %v655, %v746
        %v748 = vpop.f32.mrf.mxu0
        %749 = vdwg.mxu0
        %750 = vmatpush.bf16.msra.mxu0 0
        %751 = vmatpush.bf16.msra.mxu0 0
        %752 = vmatpush.bf16.msra.mxu0 0
        %753 = vmatpush.bf16.msra.mxu0 0
        %754 = vmatpush.bf16.msra.mxu0 0
        %755 = vmatpush.bf16.msra.mxu0 0
        %756 = vmatpush.bf16.msra.mxu0 0
        %757 = vmatpush.bf16.msra.mxu0 %v700
        %758 = vmatmul.bf16.gmra.mxu0 %v687
        %v759 = vpop.f32.mrf.mxu0
        %v760 = vadd.f32 %v656, %v759
        %v761 = vpop.f32.mrf.mxu0
        %762 = vdwg.mxu0
        %763 = vmatpush.bf16.msra.mxu0 0
        %764 = vmatpush.bf16.msra.mxu0 0
        %765 = vmatpush.bf16.msra.mxu0 0
        %766 = vmatpush.bf16.msra.mxu0 0
        %767 = vmatpush.bf16.msra.mxu0 0
        %768 = vmatpush.bf16.msra.mxu0 0
        %769 = vmatpush.bf16.msra.mxu0 0
        %770 = vmatpush.bf16.msra.mxu0 %v703
        %771 = vmatmul.bf16.gmra.mxu0 %v687
        %v772 = vpop.f32.mrf.mxu0
        %v773 = vadd.f32 %v657, %v772
        %v774 = vpop.f32.mrf.mxu0
        %775 = vdwg.mxu0
        %776 = vmatpush.bf16.msra.mxu0 0
        %777 = vmatpush.bf16.msra.mxu0 0
        %778 = vmatpush.bf16.msra.mxu0 0
        %779 = vmatpush.bf16.msra.mxu0 0
        %780 = vmatpush.bf16.msra.mxu0 0
        %781 = vmatpush.bf16.msra.mxu0 0
        %782 = vmatpush.bf16.msra.mxu0 0
        %783 = vmatpush.bf16.msra.mxu0 %v706
        %784 = vmatmul.bf16.gmra.mxu0 %v687
        %v785 = vpop.f32.mrf.mxu0
        %v786 = vadd.f32 %v658, %v785
        %v787 = vpop.f32.mrf.mxu0
        %788 = vdwg.mxu0
        %789 = vmatpush.bf16.msra.mxu0 0
        %790 = vmatpush.bf16.msra.mxu0 0
        %791 = vmatpush.bf16.msra.mxu0 0
        %792 = vmatpush.bf16.msra.mxu0 0
        %793 = vmatpush.bf16.msra.mxu0 0
        %794 = vmatpush.bf16.msra.mxu0 0
        %795 = vmatpush.bf16.msra.mxu0 0
        %796 = vmatpush.bf16.msra.mxu0 %v709
        %797 = vmatmul.bf16.gmra.mxu0 %v687
        %v798 = vpop.f32.mrf.mxu0
        %v799 = vadd.f32 %v659, %v798
        %v800 = vpop.f32.mrf.mxu0
        %801 = vdwg.mxu0
        %v802 = vmax.f32 %v721, 0.0
        %v803 = vmax.f32 %v734, 0.0
        %v804 = vmax.f32 %v747, 0.0
        %v805 = vmax.f32 %v760, 0.0
        %v806 = vmax.f32 %v773, 0.0
        %v807 = vmax.f32 %v786, 0.0
        %v808 = vmax.f32 %v799, 0.0
        %v809 = vpack.c.bf16 %v802, %v802
        %v810 = vld [vmem:[%s511] sm:$0xff]
        %v811 = vld [vmem:[%s511 + $0x8] sm:$0xff]
        %v812 = vld [vmem:[%s511 + $0x10] sm:$0xff]
        %v813 = vld [vmem:[%s511 + $0x18] sm:$0xff]
        %v814 = vld [vmem:[%s511 + $0x20] sm:$0xff]
        %v815 = vld [vmem:[%s511 + $0x28] sm:$0xff]
        %v816 = vld [vmem:[%s511 + $0x30] sm:$0xff]
        %v817 = vld [vmem:[%s511 + $0x38] sm:$0xff]
        %v818 = vld [vmem:[%s511 + $0x40] sm:$0xff]
        %v819 = vld [vmem:[%s511 + $0x48] sm:$0xff]
        %v820 = vld [vmem:[%s511 + $0x50] sm:$0xff]
        %v821 = vld [vmem:[%s511 + $0x58] sm:$0xff]
        %v822 = vld [vmem:[%s511 + $0x60] sm:$0xff]
        %v823 = vld [vmem:[%s511 + $0x68] sm:$0xff]
        %v824 = vld [vmem:[%s511 + $0x70] sm:$0xff]
        %v825 = vld [vmem:[%s511 + $0x78] sm:$0xff]
        %v826 = vld [vmem:[%s521] sm:$0x3]
        %v828 = vperm.slane %v826, 0
        %v829 = vperm.slane %v826, 1
        %v848 = vunpack.c.l.b16 %v810
        %v849 = vunpack.c.h.b16 %v810
        %v850 = vunpack.c.l.b16 %v811
        %v851 = vunpack.c.h.b16 %v811
        %v852 = vunpack.c.l.b16 %v812
        %v853 = vunpack.c.h.b16 %v812
        %v854 = vunpack.c.l.b16 %v813
        %v855 = vunpack.c.h.b16 %v813
        %v856 = vunpack.c.l.b16 %v814
        %v857 = vunpack.c.h.b16 %v814
        %v858 = vunpack.c.l.b16 %v815
        %v859 = vunpack.c.h.b16 %v815
        %v860 = vunpack.c.l.b16 %v816
        %v861 = vunpack.c.h.b16 %v816
        %v862 = vunpack.c.l.b16 %v817
        %v863 = vunpack.c.h.b16 %v817
        %v864 = vunpack.c.l.b16 %v818
        %v865 = vunpack.c.h.b16 %v818
        %v866 = vunpack.c.l.b16 %v819
        %v867 = vunpack.c.h.b16 %v819
        %v868 = vunpack.c.l.b16 %v820
        %v869 = vunpack.c.h.b16 %v820
        %v870 = vunpack.c.l.b16 %v821
        %v871 = vunpack.c.h.b16 %v821
        %v872 = vunpack.c.l.b16 %v822
        %v873 = vunpack.c.h.b16 %v822
        %v874 = vunpack.c.l.b16 %v823
        %v875 = vunpack.c.h.b16 %v823
        %v876 = vunpack.c.l.b16 %v824
        %v877 = vunpack.c.h.b16 %v824
        %v878 = vunpack.c.l.b16 %v825
        %v879 = vunpack.c.h.b16 %v825
        %v880 = vpack.c.b16 %v850, %v848
        %v881 = vpack.c.b16 %v851, %v849
        %v882 = vpack.c.b16 %v854, %v852
        %v883 = vpack.c.b16 %v855, %v853
        %v884 = vpack.c.b16 %v858, %v856
        %v885 = vpack.c.b16 %v859, %v857
        %v886 = vpack.c.b16 %v862, %v860
        %v887 = vpack.c.b16 %v863, %v861
        %v888 = vpack.c.b16 %v866, %v864
        %v889 = vpack.c.b16 %v867, %v865
        %v890 = vpack.c.b16 %v870, %v868
        %v891 = vpack.c.b16 %v871, %v869
        %v892 = vpack.c.b16 %v874, %v872
        %v893 = vpack.c.b16 %v875, %v873
        %v894 = vpack.c.b16 %v878, %v876
        %v895 = vpack.c.b16 %v879, %v877
        %912 = vmatpush.bf16.msra.mxu0 %v894
        %913 = vmatpush.bf16.msra.mxu0 %v892
        %914 = vmatpush.bf16.msra.mxu0 %v890
        %915 = vmatpush.bf16.msra.mxu0 %v888
        %916 = vmatpush.bf16.msra.mxu0 %v886
        %917 = vmatpush.bf16.msra.mxu0 %v884
        %918 = vmatpush.bf16.msra.mxu0 %v882
        %919 = vmatpush.bf16.msra.mxu0 %v880
        %920 = vmatmul.bf16.gmra.mxu0 %v809
        %v921 = vpop.f32.mrf.mxu0
        %v922 = vadd.f32 %v828, %v921
        %v923 = vpop.f32.mrf.mxu0
        %924 = vdwg.mxu0
        %925 = vmatpush.bf16.msra.mxu0 %v895
        %926 = vmatpush.bf16.msra.mxu0 %v893
        %927 = vmatpush.bf16.msra.mxu0 %v891
        %928 = vmatpush.bf16.msra.mxu0 %v889
        %929 = vmatpush.bf16.msra.mxu0 %v887
        %930 = vmatpush.bf16.msra.mxu0 %v885
        %931 = vmatpush.bf16.msra.mxu0 %v883
        %932 = vmatpush.bf16.msra.mxu0 %v881
        %933 = vmatmul.bf16.gmra.mxu0 %v809
        %v934 = vpop.f32.mrf.mxu0
        %v935 = vadd.f32 %v829, %v934
        %v936 = vpop.f32.mrf.mxu0
        %937 = vdwg.mxu0
        %v938 = vmax.f32 %v922, 0.0
        %v939 = vmax.f32 %v935, 0.0
        %v940 = vpack.c.bf16 %v938, %v938
        %v941 = vpack.c.bf16 %v939, %v939
        %v942 = vld [vmem:[%s531] sm:$0xff]
        %v943 = vld [vmem:[%s531 + $0x8] sm:$0xff]
        %v944 = vld [vmem:[%s531 + $0x10] sm:$0xff]
        %v945 = vld [vmem:[%s531 + $0x18] sm:$0xff]
        %v946 = vld [vmem:[%s531 + $0x20] sm:$0xff]
        %v947 = vld [vmem:[%s531 + $0x28] sm:$0xff]
        %v948 = vld [vmem:[%s531 + $0x30] sm:$0xff]
        %v949 = vld [vmem:[%s531 + $0x38] sm:$0xff]
        %v950 = vld [vmem:[%s531 + $0x40] sm:$0xff]
        %v951 = vld [vmem:[%s531 + $0x48] sm:$0xff]
        %v952 = vld [vmem:[%s531 + $0x50] sm:$0xff]
        %v953 = vld [vmem:[%s531 + $0x58] sm:$0xff]
        %v954 = vld [vmem:[%s531 + $0x60] sm:$0xff]
        %v955 = vld [vmem:[%s531 + $0x68] sm:$0xff]
        %v956 = vld [vmem:[%s531 + $0x70] sm:$0xff]
        %v957 = vld [vmem:[%s531 + $0x78] sm:$0xff]
        %v958 = vld [vmem:[%s531 + $0x80] sm:$0xff]
        %v959 = vld [vmem:[%s531 + $0x88] sm:$0xff]
        %v960 = vld [vmem:[%s531 + $0x90] sm:$0xff]
        %v961 = vld [vmem:[%s531 + $0x98] sm:$0xff]
        %v962 = vld [vmem:[%s531 + $0xa0] sm:$0xff]
        %v963 = vld [vmem:[%s531 + $0xa8] sm:$0xff]
        %v964 = vld [vmem:[%s531 + $0xb0] sm:$0xff]
        %v965 = vld [vmem:[%s531 + $0xb8] sm:$0xff]
        %v966 = vld [vmem:[%s531 + $0xc0] sm:$0xff]
        %v967 = vld [vmem:[%s531 + $0xc8] sm:$0xff]
        %v968 = vld [vmem:[%s531 + $0xd0] sm:$0xff]
        %v969 = vld [vmem:[%s531 + $0xd8] sm:$0xff]
        %v970 = vld [vmem:[%s531 + $0xe0] sm:$0xff]
        %v971 = vld [vmem:[%s531 + $0xe8] sm:$0xff]
        %v972 = vld [vmem:[%s531 + $0xf0] sm:$0xff]
        %v973 = vld [vmem:[%s531 + $0xf8] sm:$0xff]
        %v974 = vld [vmem:[%s531 + $0x100] sm:$0xff]
        %v975 = vld [vmem:[%s531 + $0x108] sm:$0xff]
        %v976 = vld [vmem:[%s531 + $0x110] sm:$0xff]
        %v977 = vld [vmem:[%s531 + $0x118] sm:$0xff]
        %v978 = vld [vmem:[%s531 + $0x120] sm:$0xff]
        %v979 = vld [vmem:[%s531 + $0x128] sm:$0xff]
        %v980 = vld [vmem:[%s531 + $0x130] sm:$0xff]
        %v981 = vld [vmem:[%s531 + $0x138] sm:$0xff]
        %v982 = vld [vmem:[%s531 + $0x140] sm:$0xff]
        %v983 = vld [vmem:[%s531 + $0x148] sm:$0xff]
        %v984 = vld [vmem:[%s531 + $0x150] sm:$0xff]
        %v985 = vld [vmem:[%s531 + $0x158] sm:$0xff]
        %v986 = vld [vmem:[%s531 + $0x160] sm:$0xff]
        %v987 = vld [vmem:[%s531 + $0x168] sm:$0xff]
        %v988 = vld [vmem:[%s531 + $0x170] sm:$0xff]
        %v989 = vld [vmem:[%s531 + $0x178] sm:$0xff]
        %v990 = vld [vmem:[%s531 + $0x180] sm:$0xff]
        %v991 = vld [vmem:[%s531 + $0x188] sm:$0xff]
        %v992 = vld [vmem:[%s531 + $0x190] sm:$0xff]
        %v993 = vld [vmem:[%s531 + $0x198] sm:$0xff]
        %v994 = vld [vmem:[%s531 + $0x1a0] sm:$0xff]
        %v995 = vld [vmem:[%s531 + $0x1a8] sm:$0xff]
        %v996 = vld [vmem:[%s531 + $0x1b0] sm:$0xff]
        %v997 = vld [vmem:[%s531 + $0x1b8] sm:$0xff]
        %v998 = vld [vmem:[%s531 + $0x1c0] sm:$0xff]
        %v999 = vld [vmem:[%s531 + $0x1c8] sm:$0xff]
        %v1000 = vld [vmem:[%s531 + $0x1d0] sm:$0xff]
        %v1001 = vld [vmem:[%s531 + $0x1d8] sm:$0xff]
        %v1002 = vld [vmem:[%s531 + $0x1e0] sm:$0xff]
        %v1003 = vld [vmem:[%s531 + $0x1e8] sm:$0xff]
        %v1004 = vld [vmem:[%s531 + $0x1f0] sm:$0xff]
        %v1005 = vld [vmem:[%s531 + $0x1f8] sm:$0xff]
        %v1006 = vld [vmem:[%s541] sm:$0xf]
        %v1008 = vperm.slane %v1006, 0
        %v1009 = vperm.slane %v1006, 1
        %v1010 = vperm.slane %v1006, 2
        %v1011 = vperm.slane %v1006, 3
        %v1080 = vunpack.c.l.b16 %v942
        %v1081 = vunpack.c.h.b16 %v942
        %v1082 = vunpack.c.l.b16 %v943
        %v1083 = vunpack.c.h.b16 %v943
        %v1084 = vunpack.c.l.b16 %v944
        %v1085 = vunpack.c.h.b16 %v944
        %v1086 = vunpack.c.l.b16 %v945
        %v1087 = vunpack.c.h.b16 %v945
        %v1088 = vunpack.c.l.b16 %v946
        %v1089 = vunpack.c.h.b16 %v946
        %v1090 = vunpack.c.l.b16 %v947
        %v1091 = vunpack.c.h.b16 %v947
        %v1092 = vunpack.c.l.b16 %v948
        %v1093 = vunpack.c.h.b16 %v948
        %v1094 = vunpack.c.l.b16 %v949
        %v1095 = vunpack.c.h.b16 %v949
        %v1096 = vunpack.c.l.b16 %v950
        %v1097 = vunpack.c.h.b16 %v950
        %v1098 = vunpack.c.l.b16 %v951
        %v1099 = vunpack.c.h.b16 %v951
        %v1100 = vunpack.c.l.b16 %v952
        %v1101 = vunpack.c.h.b16 %v952
        %v1102 = vunpack.c.l.b16 %v953
        %v1103 = vunpack.c.h.b16 %v953
        %v1104 = vunpack.c.l.b16 %v954
        %v1105 = vunpack.c.h.b16 %v954
        %v1106 = vunpack.c.l.b16 %v955
        %v1107 = vunpack.c.h.b16 %v955
        %v1108 = vunpack.c.l.b16 %v956
        %v1109 = vunpack.c.h.b16 %v956
        %v1110 = vunpack.c.l.b16 %v957
        %v1111 = vunpack.c.h.b16 %v957
        %v1112 = vunpack.c.l.b16 %v958
        %v1113 = vunpack.c.h.b16 %v958
        %v1114 = vunpack.c.l.b16 %v959
        %v1115 = vunpack.c.h.b16 %v959
        %v1116 = vunpack.c.l.b16 %v960
        %v1117 = vunpack.c.h.b16 %v960
        %v1118 = vunpack.c.l.b16 %v961
        %v1119 = vunpack.c.h.b16 %v961
        %v1120 = vunpack.c.l.b16 %v962
        %v1121 = vunpack.c.h.b16 %v962
        %v1122 = vunpack.c.l.b16 %v963
        %v1123 = vunpack.c.h.b16 %v963
        %v1124 = vunpack.c.l.b16 %v964
        %v1125 = vunpack.c.h.b16 %v964
        %v1126 = vunpack.c.l.b16 %v965
        %v1127 = vunpack.c.h.b16 %v965
        %v1128 = vunpack.c.l.b16 %v966
        %v1129 = vunpack.c.h.b16 %v966
        %v1130 = vunpack.c.l.b16 %v967
        %v1131 = vunpack.c.h.b16 %v967
        %v1132 = vunpack.c.l.b16 %v968
        %v1133 = vunpack.c.h.b16 %v968
        %v1134 = vunpack.c.l.b16 %v969
        %v1135 = vunpack.c.h.b16 %v969
        %v1136 = vunpack.c.l.b16 %v970
        %v1137 = vunpack.c.h.b16 %v970
        %v1138 = vunpack.c.l.b16 %v971
        %v1139 = vunpack.c.h.b16 %v971
        %v1140 = vunpack.c.l.b16 %v972
        %v1141 = vunpack.c.h.b16 %v972
        %v1142 = vunpack.c.l.b16 %v973
        %v1143 = vunpack.c.h.b16 %v973
        %v1144 = vunpack.c.l.b16 %v974
        %v1145 = vunpack.c.h.b16 %v974
        %v1146 = vunpack.c.l.b16 %v975
        %v1147 = vunpack.c.h.b16 %v975
        %v1148 = vunpack.c.l.b16 %v976
        %v1149 = vunpack.c.h.b16 %v976
        %v1150 = vunpack.c.l.b16 %v977
        %v1151 = vunpack.c.h.b16 %v977
        %v1152 = vunpack.c.l.b16 %v978
        %v1153 = vunpack.c.h.b16 %v978
        %v1154 = vunpack.c.l.b16 %v979
        %v1155 = vunpack.c.h.b16 %v979
        %v1156 = vunpack.c.l.b16 %v980
        %v1157 = vunpack.c.h.b16 %v980
        %v1158 = vunpack.c.l.b16 %v981
        %v1159 = vunpack.c.h.b16 %v981
        %v1160 = vunpack.c.l.b16 %v982
        %v1161 = vunpack.c.h.b16 %v982
        %v1162 = vunpack.c.l.b16 %v983
        %v1163 = vunpack.c.h.b16 %v983
        %v1164 = vunpack.c.l.b16 %v984
        %v1165 = vunpack.c.h.b16 %v984
        %v1166 = vunpack.c.l.b16 %v985
        %v1167 = vunpack.c.h.b16 %v985
        %v1168 = vunpack.c.l.b16 %v986
        %v1169 = vunpack.c.h.b16 %v986
        %v1170 = vunpack.c.l.b16 %v987
        %v1171 = vunpack.c.h.b16 %v987
        %v1172 = vunpack.c.l.b16 %v988
        %v1173 = vunpack.c.h.b16 %v988
        %v1174 = vunpack.c.l.b16 %v989
        %v1175 = vunpack.c.h.b16 %v989
        %v1176 = vunpack.c.l.b16 %v990
        %v1177 = vunpack.c.h.b16 %v990
        %v1178 = vunpack.c.l.b16 %v991
        %v1179 = vunpack.c.h.b16 %v991
        %v1180 = vunpack.c.l.b16 %v992
        %v1181 = vunpack.c.h.b16 %v992
        %v1182 = vunpack.c.l.b16 %v993
        %v1183 = vunpack.c.h.b16 %v993
        %v1184 = vunpack.c.l.b16 %v994
        %v1185 = vunpack.c.h.b16 %v994
        %v1186 = vunpack.c.l.b16 %v995
        %v1187 = vunpack.c.h.b16 %v995
        %v1188 = vunpack.c.l.b16 %v996
        %v1189 = vunpack.c.h.b16 %v996
        %v1190 = vunpack.c.l.b16 %v997
        %v1191 = vunpack.c.h.b16 %v997
        %v1192 = vunpack.c.l.b16 %v998
        %v1193 = vunpack.c.h.b16 %v998
        %v1194 = vunpack.c.l.b16 %v999
        %v1195 = vunpack.c.h.b16 %v999
        %v1196 = vunpack.c.l.b16 %v1000
        %v1197 = vunpack.c.h.b16 %v1000
        %v1198 = vunpack.c.l.b16 %v1001
        %v1199 = vunpack.c.h.b16 %v1001
        %v1200 = vunpack.c.l.b16 %v1002
        %v1201 = vunpack.c.h.b16 %v1002
        %v1202 = vunpack.c.l.b16 %v1003
        %v1203 = vunpack.c.h.b16 %v1003
        %v1204 = vunpack.c.l.b16 %v1004
        %v1205 = vunpack.c.h.b16 %v1004
        %v1206 = vunpack.c.l.b16 %v1005
        %v1207 = vunpack.c.h.b16 %v1005
        %v1208 = vpack.c.b16 %v1084, %v1080
        %v1209 = vpack.c.b16 %v1085, %v1081
        %v1210 = vpack.c.b16 %v1086, %v1082
        %v1211 = vpack.c.b16 %v1087, %v1083
        %v1212 = vpack.c.b16 %v1092, %v1088
        %v1213 = vpack.c.b16 %v1093, %v1089
        %v1214 = vpack.c.b16 %v1094, %v1090
        %v1215 = vpack.c.b16 %v1095, %v1091
        %v1216 = vpack.c.b16 %v1100, %v1096
        %v1217 = vpack.c.b16 %v1101, %v1097
        %v1218 = vpack.c.b16 %v1102, %v1098
        %v1219 = vpack.c.b16 %v1103, %v1099
        %v1220 = vpack.c.b16 %v1108, %v1104
        %v1221 = vpack.c.b16 %v1109, %v1105
        %v1222 = vpack.c.b16 %v1110, %v1106
        %v1223 = vpack.c.b16 %v1111, %v1107
        %v1224 = vpack.c.b16 %v1116, %v1112
        %v1225 = vpack.c.b16 %v1117, %v1113
        %v1226 = vpack.c.b16 %v1118, %v1114
        %v1227 = vpack.c.b16 %v1119, %v1115
        %v1228 = vpack.c.b16 %v1124, %v1120
        %v1229 = vpack.c.b16 %v1125, %v1121
        %v1230 = vpack.c.b16 %v1126, %v1122
        %v1231 = vpack.c.b16 %v1127, %v1123
        %v1232 = vpack.c.b16 %v1132, %v1128
        %v1233 = vpack.c.b16 %v1133, %v1129
        %v1234 = vpack.c.b16 %v1134, %v1130
        %v1235 = vpack.c.b16 %v1135, %v1131
        %v1236 = vpack.c.b16 %v1140, %v1136
        %v1237 = vpack.c.b16 %v1141, %v1137
        %v1238 = vpack.c.b16 %v1142, %v1138
        %v1239 = vpack.c.b16 %v1143, %v1139
        %v1240 = vpack.c.b16 %v1148, %v1144
        %v1241 = vpack.c.b16 %v1149, %v1145
        %v1242 = vpack.c.b16 %v1150, %v1146
        %v1243 = vpack.c.b16 %v1151, %v1147
        %v1244 = vpack.c.b16 %v1156, %v1152
        %v1245 = vpack.c.b16 %v1157, %v1153
        %v1246 = vpack.c.b16 %v1158, %v1154
        %v1247 = vpack.c.b16 %v1159, %v1155
        %v1248 = vpack.c.b16 %v1164, %v1160
        %v1249 = vpack.c.b16 %v1165, %v1161
        %v1250 = vpack.c.b16 %v1166, %v1162
        %v1251 = vpack.c.b16 %v1167, %v1163
        %v1252 = vpack.c.b16 %v1172, %v1168
        %v1253 = vpack.c.b16 %v1173, %v1169
        %v1254 = vpack.c.b16 %v1174, %v1170
        %v1255 = vpack.c.b16 %v1175, %v1171
        %v1256 = vpack.c.b16 %v1180, %v1176
        %v1257 = vpack.c.b16 %v1181, %v1177
        %v1258 = vpack.c.b16 %v1182, %v1178
        %v1259 = vpack.c.b16 %v1183, %v1179
        %v1260 = vpack.c.b16 %v1188, %v1184
        %v1261 = vpack.c.b16 %v1189, %v1185
        %v1262 = vpack.c.b16 %v1190, %v1186
        %v1263 = vpack.c.b16 %v1191, %v1187
        %v1264 = vpack.c.b16 %v1196, %v1192
        %v1265 = vpack.c.b16 %v1197, %v1193
        %v1266 = vpack.c.b16 %v1198, %v1194
        %v1267 = vpack.c.b16 %v1199, %v1195
        %v1268 = vpack.c.b16 %v1204, %v1200
        %v1269 = vpack.c.b16 %v1205, %v1201
        %v1270 = vpack.c.b16 %v1206, %v1202
        %v1271 = vpack.c.b16 %v1207, %v1203
        %1336 = vmatpush.bf16.msra.mxu0 %v1236
        %1337 = vmatpush.bf16.msra.mxu0 %v1232
        %1338 = vmatpush.bf16.msra.mxu0 %v1228
        %1339 = vmatpush.bf16.msra.mxu0 %v1224
        %1340 = vmatpush.bf16.msra.mxu0 %v1220
        %1341 = vmatpush.bf16.msra.mxu0 %v1216
        %1342 = vmatpush.bf16.msra.mxu0 %v1212
        %1343 = vmatpush.bf16.msra.mxu0 %v1208
        %1344 = vmatmul.bf16.gmra.mxu0 %v940
        %v1345 = vpop.f32.mrf.mxu0
        %v1346 = vadd.f32 %v1008, %v1345
        %v1347 = vpop.f32.mrf.mxu0
        %1348 = vdwg.mxu0
        %1349 = vmatpush.bf16.msra.mxu0 %v1268
        %1350 = vmatpush.bf16.msra.mxu0 %v1264
        %1351 = vmatpush.bf16.msra.mxu0 %v1260
        %1352 = vmatpush.bf16.msra.mxu0 %v1256
        %1353 = vmatpush.bf16.msra.mxu0 %v1252
        %1354 = vmatpush.bf16.msra.mxu0 %v1248
        %1355 = vmatpush.bf16.msra.mxu0 %v1244
        %1356 = vmatpush.bf16.msra.mxu0 %v1240
        %1357 = vmatmul.bf16.gmra.mxu0 %v941
        %v1358 = vpop.f32.mrf.mxu0
        %v1359 = vadd.f32 %v1346, %v1358
        %v1360 = vpop.f32.mrf.mxu0
        %1361 = vdwg.mxu0
        %1362 = vmatpush.bf16.msra.mxu0 %v1237
        %1363 = vmatpush.bf16.msra.mxu0 %v1233
        %1364 = vmatpush.bf16.msra.mxu0 %v1229
        %1365 = vmatpush.bf16.msra.mxu0 %v1225
        %1366 = vmatpush.bf16.msra.mxu0 %v1221
        %1367 = vmatpush.bf16.msra.mxu0 %v1217
        %1368 = vmatpush.bf16.msra.mxu0 %v1213
        %1369 = vmatpush.bf16.msra.mxu0 %v1209
        %1370 = vmatmul.bf16.gmra.mxu0 %v940
        %v1371 = vpop.f32.mrf.mxu0
        %v1372 = vadd.f32 %v1009, %v1371
        %v1373 = vpop.f32.mrf.mxu0
        %1374 = vdwg.mxu0
        %1375 = vmatpush.bf16.msra.mxu0 %v1269
        %1376 = vmatpush.bf16.msra.mxu0 %v1265
        %1377 = vmatpush.bf16.msra.mxu0 %v1261
        %1378 = vmatpush.bf16.msra.mxu0 %v1257
        %1379 = vmatpush.bf16.msra.mxu0 %v1253
        %1380 = vmatpush.bf16.msra.mxu0 %v1249
        %1381 = vmatpush.bf16.msra.mxu0 %v1245
        %1382 = vmatpush.bf16.msra.mxu0 %v1241
        %1383 = vmatmul.bf16.gmra.mxu0 %v941
        %v1384 = vpop.f32.mrf.mxu0
        %v1385 = vadd.f32 %v1372, %v1384
        %v1386 = vpop.f32.mrf.mxu0
        %1387 = vdwg.mxu0
        %1388 = vmatpush.bf16.msra.mxu0 %v1238
        %1389 = vmatpush.bf16.msra.mxu0 %v1234
        %1390 = vmatpush.bf16.msra.mxu0 %v1230
        %1391 = vmatpush.bf16.msra.mxu0 %v1226
        %1392 = vmatpush.bf16.msra.mxu0 %v1222
        %1393 = vmatpush.bf16.msra.mxu0 %v1218
        %1394 = vmatpush.bf16.msra.mxu0 %v1214
        %1395 = vmatpush.bf16.msra.mxu0 %v1210
        %1396 = vmatmul.bf16.gmra.mxu0 %v940
        %v1397 = vpop.f32.mrf.mxu0
        %v1398 = vadd.f32 %v1010, %v1397
        %v1399 = vpop.f32.mrf.mxu0
        %1400 = vdwg.mxu0
        %1401 = vmatpush.bf16.msra.mxu0 %v1270
        %1402 = vmatpush.bf16.msra.mxu0 %v1266
        %1403 = vmatpush.bf16.msra.mxu0 %v1262
        %1404 = vmatpush.bf16.msra.mxu0 %v1258
        %1405 = vmatpush.bf16.msra.mxu0 %v1254
        %1406 = vmatpush.bf16.msra.mxu0 %v1250
        %1407 = vmatpush.bf16.msra.mxu0 %v1246
        %1408 = vmatpush.bf16.msra.mxu0 %v1242
        %1409 = vmatmul.bf16.gmra.mxu0 %v941
        %v1410 = vpop.f32.mrf.mxu0
        %v1411 = vadd.f32 %v1398, %v1410
        %v1412 = vpop.f32.mrf.mxu0
        %1413 = vdwg.mxu0
        %1414 = vmatpush.bf16.msra.mxu0 %v1239
        %1415 = vmatpush.bf16.msra.mxu0 %v1235
        %1416 = vmatpush.bf16.msra.mxu0 %v1231
        %1417 = vmatpush.bf16.msra.mxu0 %v1227
        %1418 = vmatpush.bf16.msra.mxu0 %v1223
        %1419 = vmatpush.bf16.msra.mxu0 %v1219
        %1420 = vmatpush.bf16.msra.mxu0 %v1215
        %1421 = vmatpush.bf16.msra.mxu0 %v1211
        %1422 = vmatmul.bf16.gmra.mxu0 %v940
        %v1423 = vpop.f32.mrf.mxu0
        %v1424 = vadd.f32 %v1011, %v1423
        %v1425 = vpop.f32.mrf.mxu0
        %1426 = vdwg.mxu0
        %1427 = vmatpush.bf16.msra.mxu0 %v1271
        %1428 = vmatpush.bf16.msra.mxu0 %v1267
        %1429 = vmatpush.bf16.msra.mxu0 %v1263
        %1430 = vmatpush.bf16.msra.mxu0 %v1259
        %1431 = vmatpush.bf16.msra.mxu0 %v1255
        %1432 = vmatpush.bf16.msra.mxu0 %v1251
        %1433 = vmatpush.bf16.msra.mxu0 %v1247
        %1434 = vmatpush.bf16.msra.mxu0 %v1243
        %1435 = vmatmul.bf16.gmra.mxu0 %v941
        %v1436 = vpop.f32.mrf.mxu0
        %v1437 = vadd.f32 %v1424, %v1436
        %v1438 = vpop.f32.mrf.mxu0
        %1439 = vdwg.mxu0
        %v1440 = vmax.f32 %v1359, 0.0
        %v1441 = vmax.f32 %v1385, 0.0
        %v1442 = vmax.f32 %v1411, 0.0
        %v1443 = vmax.f32 %v1437, 0.0
        %v1444 = vpack.c.bf16 %v1440, %v1440
        %v1445 = vpack.c.bf16 %v1441, %v1441
        %v1446 = vpack.c.bf16 %v1442, %v1442
        %v1447 = vpack.c.bf16 %v1443, %v1443
        %v1448 = vld [vmem:[%s551] sm:$0xf]
        %v1449 = vld [vmem:[%s551 + $0x4] sm:$0xf]
        %v1450 = vld [vmem:[%s551 + $0x8] sm:$0xf]
        %v1451 = vld [vmem:[%s551 + $0xc] sm:$0xf]
        %v1452 = vld [vmem:[%s551 + $0x10] sm:$0xf]
        %v1453 = vld [vmem:[%s551 + $0x14] sm:$0xf]
        %v1454 = vld [vmem:[%s551 + $0x18] sm:$0xf]
        %v1455 = vld [vmem:[%s551 + $0x1c] sm:$0xf]
        %v1456 = vld [vmem:[%s551 + $0x20] sm:$0xf]
        %v1457 = vld [vmem:[%s551 + $0x24] sm:$0xf]
        %v1458 = vld [vmem:[%s551 + $0x28] sm:$0xf]
        %v1459 = vld [vmem:[%s551 + $0x2c] sm:$0xf]
        %v1460 = vld [vmem:[%s551 + $0x30] sm:$0xf]
        %v1461 = vld [vmem:[%s551 + $0x34] sm:$0xf]
        %v1462 = vld [vmem:[%s551 + $0x38] sm:$0xf]
        %v1463 = vld [vmem:[%s551 + $0x3c] sm:$0xf]
        %v1464 = vld [vmem:[%s551 + $0x40] sm:$0xf]
        %v1465 = vld [vmem:[%s551 + $0x44] sm:$0xf]
        %v1466 = vld [vmem:[%s551 + $0x48] sm:$0xf]
        %v1467 = vld [vmem:[%s551 + $0x4c] sm:$0xf]
        %v1468 = vld [vmem:[%s551 + $0x50] sm:$0xf]
        %v1469 = vld [vmem:[%s551 + $0x54] sm:$0xf]
        %v1470 = vld [vmem:[%s551 + $0x58] sm:$0xf]
        %v1471 = vld [vmem:[%s551 + $0x5c] sm:$0xf]
        %v1472 = vld [vmem:[%s551 + $0x60] sm:$0xf]
        %v1473 = vld [vmem:[%s551 + $0x64] sm:$0xf]
        %v1474 = vld [vmem:[%s551 + $0x68] sm:$0xf]
        %v1475 = vld [vmem:[%s551 + $0x6c] sm:$0xf]
        %v1476 = vld [vmem:[%s551 + $0x70] sm:$0xf]
        %v1477 = vld [vmem:[%s551 + $0x74] sm:$0xf]
        %v1478 = vld [vmem:[%s551 + $0x78] sm:$0xf]
        %v1479 = vld [vmem:[%s551 + $0x7c] sm:$0xf]
        %v1480 = vld [vmem:[%s551 + $0x80] sm:$0xf]
        %v1481 = vld [vmem:[%s551 + $0x84] sm:$0xf]
        %v1482 = vld [vmem:[%s551 + $0x88] sm:$0xf]
        %v1483 = vld [vmem:[%s551 + $0x8c] sm:$0xf]
        %v1484 = vld [vmem:[%s551 + $0x90] sm:$0xf]
        %v1485 = vld [vmem:[%s551 + $0x94] sm:$0xf]
        %v1486 = vld [vmem:[%s551 + $0x98] sm:$0xf]
        %v1487 = vld [vmem:[%s551 + $0x9c] sm:$0xf]
        %v1488 = vld [vmem:[%s551 + $0xa0] sm:$0xf]
        %v1489 = vld [vmem:[%s551 + $0xa4] sm:$0xf]
        %v1490 = vld [vmem:[%s551 + $0xa8] sm:$0xf]
        %v1491 = vld [vmem:[%s551 + $0xac] sm:$0xf]
        %v1492 = vld [vmem:[%s551 + $0xb0] sm:$0xf]
        %v1493 = vld [vmem:[%s551 + $0xb4] sm:$0xf]
        %v1494 = vld [vmem:[%s551 + $0xb8] sm:$0xf]
        %v1495 = vld [vmem:[%s551 + $0xbc] sm:$0xf]
        %v1496 = vld [vmem:[%s551 + $0xc0] sm:$0xf]
        %v1497 = vld [vmem:[%s551 + $0xc4] sm:$0xf]
        %v1498 = vld [vmem:[%s551 + $0xc8] sm:$0xf]
        %v1499 = vld [vmem:[%s551 + $0xcc] sm:$0xf]
        %v1500 = vld [vmem:[%s551 + $0xd0] sm:$0xf]
        %v1501 = vld [vmem:[%s551 + $0xd4] sm:$0xf]
        %v1502 = vld [vmem:[%s551 + $0xd8] sm:$0xf]
        %v1503 = vld [vmem:[%s551 + $0xdc] sm:$0xf]
        %v1504 = vld [vmem:[%s551 + $0xe0] sm:$0xf]
        %v1505 = vld [vmem:[%s551 + $0xe4] sm:$0xf]
        %v1506 = vld [vmem:[%s551 + $0xe8] sm:$0xf]
        %v1507 = vld [vmem:[%s551 + $0xec] sm:$0xf]
        %v1508 = vld [vmem:[%s551 + $0xf0] sm:$0xf]
        %v1509 = vld [vmem:[%s551 + $0xf4] sm:$0xf]
        %v1510 = vld [vmem:[%s551 + $0xf8] sm:$0xf]
        %v1511 = vld [vmem:[%s551 + $0xfc] sm:$0xf]
        %v1512 = vld [vmem:[%s561] sm:$0x1]
        %v1514 = vperm.slane %v1512, 0
        %v1580 = vunpack.c.l.b16 %v1448
        %v1581 = vunpack.c.l.b16 %v1449
        %v1582 = vunpack.c.l.b16 %v1450
        %v1583 = vunpack.c.l.b16 %v1451
        %v1584 = vunpack.c.l.b16 %v1452
        %v1585 = vunpack.c.l.b16 %v1453
        %v1586 = vunpack.c.l.b16 %v1454
        %v1587 = vunpack.c.l.b16 %v1455
        %v1588 = vunpack.c.l.b16 %v1456
        %v1589 = vunpack.c.l.b16 %v1457
        %v1590 = vunpack.c.l.b16 %v1458
        %v1591 = vunpack.c.l.b16 %v1459
        %v1592 = vunpack.c.l.b16 %v1460
        %v1593 = vunpack.c.l.b16 %v1461
        %v1594 = vunpack.c.l.b16 %v1462
        %v1595 = vunpack.c.l.b16 %v1463
        %v1596 = vunpack.c.l.b16 %v1464
        %v1597 = vunpack.c.l.b16 %v1465
        %v1598 = vunpack.c.l.b16 %v1466
        %v1599 = vunpack.c.l.b16 %v1467
        %v1600 = vunpack.c.l.b16 %v1468
        %v1601 = vunpack.c.l.b16 %v1469
        %v1602 = vunpack.c.l.b16 %v1470
        %v1603 = vunpack.c.l.b16 %v1471
        %v1604 = vunpack.c.l.b16 %v1472
        %v1605 = vunpack.c.l.b16 %v1473
        %v1606 = vunpack.c.l.b16 %v1474
        %v1607 = vunpack.c.l.b16 %v1475
        %v1608 = vunpack.c.l.b16 %v1476
        %v1609 = vunpack.c.l.b16 %v1477
        %v1610 = vunpack.c.l.b16 %v1478
        %v1611 = vunpack.c.l.b16 %v1479
        %v1612 = vunpack.c.l.b16 %v1480
        %v1613 = vunpack.c.l.b16 %v1481
        %v1614 = vunpack.c.l.b16 %v1482
        %v1615 = vunpack.c.l.b16 %v1483
        %v1616 = vunpack.c.l.b16 %v1484
        %v1617 = vunpack.c.l.b16 %v1485
        %v1618 = vunpack.c.l.b16 %v1486
        %v1619 = vunpack.c.l.b16 %v1487
        %v1620 = vunpack.c.l.b16 %v1488
        %v1621 = vunpack.c.l.b16 %v1489
        %v1622 = vunpack.c.l.b16 %v1490
        %v1623 = vunpack.c.l.b16 %v1491
        %v1624 = vunpack.c.l.b16 %v1492
        %v1625 = vunpack.c.l.b16 %v1493
        %v1626 = vunpack.c.l.b16 %v1494
        %v1627 = vunpack.c.l.b16 %v1495
        %v1628 = vunpack.c.l.b16 %v1496
        %v1629 = vunpack.c.l.b16 %v1497
        %v1630 = vunpack.c.l.b16 %v1498
        %v1631 = vunpack.c.l.b16 %v1499
        %v1632 = vunpack.c.l.b16 %v1500
        %v1633 = vunpack.c.l.b16 %v1501
        %v1634 = vunpack.c.l.b16 %v1502
        %v1635 = vunpack.c.l.b16 %v1503
        %v1636 = vunpack.c.l.b16 %v1504
        %v1637 = vunpack.c.l.b16 %v1505
        %v1638 = vunpack.c.l.b16 %v1506
        %v1639 = vunpack.c.l.b16 %v1507
        %v1640 = vunpack.c.l.b16 %v1508
        %v1641 = vunpack.c.l.b16 %v1509
        %v1642 = vunpack.c.l.b16 %v1510
        %v1643 = vunpack.c.l.b16 %v1511
        %v1644 = vpack.c.b16 %v1581, %v1580
        %v1645 = vpack.c.b16 %v1583, %v1582
        %v1646 = vpack.c.b16 %v1585, %v1584
        %v1647 = vpack.c.b16 %v1587, %v1586
        %v1648 = vpack.c.b16 %v1589, %v1588
        %v1649 = vpack.c.b16 %v1591, %v1590
        %v1650 = vpack.c.b16 %v1593, %v1592
        %v1651 = vpack.c.b16 %v1595, %v1594
        %v1652 = vpack.c.b16 %v1597, %v1596
        %v1653 = vpack.c.b16 %v1599, %v1598
        %v1654 = vpack.c.b16 %v1601, %v1600
        %v1655 = vpack.c.b16 %v1603, %v1602
        %v1656 = vpack.c.b16 %v1605, %v1604
        %v1657 = vpack.c.b16 %v1607, %v1606
        %v1658 = vpack.c.b16 %v1609, %v1608
        %v1659 = vpack.c.b16 %v1611, %v1610
        %v1660 = vpack.c.b16 %v1613, %v1612
        %v1661 = vpack.c.b16 %v1615, %v1614
        %v1662 = vpack.c.b16 %v1617, %v1616
        %v1663 = vpack.c.b16 %v1619, %v1618
        %v1664 = vpack.c.b16 %v1621, %v1620
        %v1665 = vpack.c.b16 %v1623, %v1622
        %v1666 = vpack.c.b16 %v1625, %v1624
        %v1667 = vpack.c.b16 %v1627, %v1626
        %v1668 = vpack.c.b16 %v1629, %v1628
        %v1669 = vpack.c.b16 %v1631, %v1630
        %v1670 = vpack.c.b16 %v1633, %v1632
        %v1671 = vpack.c.b16 %v1635, %v1634
        %v1672 = vpack.c.b16 %v1637, %v1636
        %v1673 = vpack.c.b16 %v1639, %v1638
        %v1674 = vpack.c.b16 %v1641, %v1640
        %v1675 = vpack.c.b16 %v1643, %v1642
        %1708 = vmatpush.bf16.msra.mxu0 %v1651
        %1709 = vmatpush.bf16.msra.mxu0 %v1650
        %1710 = vmatpush.bf16.msra.mxu0 %v1649
        %1711 = vmatpush.bf16.msra.mxu0 %v1648
        %1712 = vmatpush.bf16.msra.mxu0 %v1647
        %1713 = vmatpush.bf16.msra.mxu0 %v1646
        %1714 = vmatpush.bf16.msra.mxu0 %v1645
        %1715 = vmatpush.bf16.msra.mxu0 %v1644
        %1716 = vmatmul.bf16.gmra.mxu0 %v1444
        %v1717 = vpop.f32.mrf.mxu0
        %v1718 = vadd.f32 %v1514, %v1717
        %v1719 = vpop.f32.mrf.mxu0
        %1720 = vdwg.mxu0
        %1721 = vmatpush.bf16.msra.mxu0 %v1659
        %1722 = vmatpush.bf16.msra.mxu0 %v1658
        %1723 = vmatpush.bf16.msra.mxu0 %v1657
        %1724 = vmatpush.bf16.msra.mxu0 %v1656
        %1725 = vmatpush.bf16.msra.mxu0 %v1655
        %1726 = vmatpush.bf16.msra.mxu0 %v1654
        %1727 = vmatpush.bf16.msra.mxu0 %v1653
        %1728 = vmatpush.bf16.msra.mxu0 %v1652
        %1729 = vmatmul.bf16.gmra.mxu0 %v1445
        %v1730 = vpop.f32.mrf.mxu0
        %v1731 = vadd.f32 %v1718, %v1730
        %v1732 = vpop.f32.mrf.mxu0
        %1733 = vdwg.mxu0
        %1734 = vmatpush.bf16.msra.mxu0 %v1667
        %1735 = vmatpush.bf16.msra.mxu0 %v1666
        %1736 = vmatpush.bf16.msra.mxu0 %v1665
        %1737 = vmatpush.bf16.msra.mxu0 %v1664
        %1738 = vmatpush.bf16.msra.mxu0 %v1663
        %1739 = vmatpush.bf16.msra.mxu0 %v1662
        %1740 = vmatpush.bf16.msra.mxu0 %v1661
        %1741 = vmatpush.bf16.msra.mxu0 %v1660
        %1742 = vmatmul.bf16.gmra.mxu0 %v1446
        %v1743 = vpop.f32.mrf.mxu0
        %v1744 = vadd.f32 %v1731, %v1743
        %v1745 = vpop.f32.mrf.mxu0
        %1746 = vdwg.mxu0
        %1747 = vmatpush.bf16.msra.mxu0 %v1675
        %1748 = vmatpush.bf16.msra.mxu0 %v1674
        %1749 = vmatpush.bf16.msra.mxu0 %v1673
        %1750 = vmatpush.bf16.msra.mxu0 %v1672
        %1751 = vmatpush.bf16.msra.mxu0 %v1671
        %1752 = vmatpush.bf16.msra.mxu0 %v1670
        %1753 = vmatpush.bf16.msra.mxu0 %v1669
        %1754 = vmatpush.bf16.msra.mxu0 %v1668
        %1755 = vmatmul.bf16.gmra.mxu0 %v1447
        %v1756 = vpop.f32.mrf.mxu0
        %v1757 = vadd.f32 %v1744, %v1756
        %v1758 = vpop.f32.mrf.mxu0
        %1759 = vdwg.mxu0
        %vm1760 = vcmask 523264
        %1761 = vst.msk [vmem:[%s642] sm:$0xff] %vm1760, %v1757
        %v1762 = vpack.c.bf16 %v803, %v803
        %s1763 = scalar_lea.vmem %s511, 128 [#allocation6]
        %v1764 = vld [vmem:[%s1763] sm:$0xff]
        %v1765 = vld [vmem:[%s1763 + $0x8] sm:$0xff]
        %v1766 = vld [vmem:[%s1763 + $0x10] sm:$0xff]
        %v1767 = vld [vmem:[%s1763 + $0x18] sm:$0xff]
        %v1768 = vld [vmem:[%s1763 + $0x20] sm:$0xff]
        %v1769 = vld [vmem:[%s1763 + $0x28] sm:$0xff]
        %v1770 = vld [vmem:[%s1763 + $0x30] sm:$0xff]
        %v1771 = vld [vmem:[%s1763 + $0x38] sm:$0xff]
        %v1772 = vld [vmem:[%s1763 + $0x40] sm:$0xff]
        %v1773 = vld [vmem:[%s1763 + $0x48] sm:$0xff]
        %v1774 = vld [vmem:[%s1763 + $0x50] sm:$0xff]
        %v1775 = vld [vmem:[%s1763 + $0x58] sm:$0xff]
        %v1776 = vld [vmem:[%s1763 + $0x60] sm:$0xff]
        %v1777 = vld [vmem:[%s1763 + $0x68] sm:$0xff]
        %v1778 = vld [vmem:[%s1763 + $0x70] sm:$0xff]
        %v1779 = vld [vmem:[%s1763 + $0x78] sm:$0xff]
        %s1780 = scalar_lea.vmem %s521, 2 [#allocation7]
        %v1781 = vld [vmem:[%s1780] sm:$0x3]
        %v1783 = vperm.slane %v1781, 0
        %v1784 = vperm.slane %v1781, 1
        %v1803 = vunpack.c.l.b16 %v1764
        %v1804 = vunpack.c.h.b16 %v1764
        %v1805 = vunpack.c.l.b16 %v1765
        %v1806 = vunpack.c.h.b16 %v1765
        %v1807 = vunpack.c.l.b16 %v1766
        %v1808 = vunpack.c.h.b16 %v1766
        %v1809 = vunpack.c.l.b16 %v1767
        %v1810 = vunpack.c.h.b16 %v1767
        %v1811 = vunpack.c.l.b16 %v1768
        %v1812 = vunpack.c.h.b16 %v1768
        %v1813 = vunpack.c.l.b16 %v1769
        %v1814 = vunpack.c.h.b16 %v1769
        %v1815 = vunpack.c.l.b16 %v1770
        %v1816 = vunpack.c.h.b16 %v1770
        %v1817 = vunpack.c.l.b16 %v1771
        %v1818 = vunpack.c.h.b16 %v1771
        %v1819 = vunpack.c.l.b16 %v1772
        %v1820 = vunpack.c.h.b16 %v1772
        %v1821 = vunpack.c.l.b16 %v1773
        %v1822 = vunpack.c.h.b16 %v1773
        %v1823 = vunpack.c.l.b16 %v1774
        %v1824 = vunpack.c.h.b16 %v1774
        %v1825 = vunpack.c.l.b16 %v1775
        %v1826 = vunpack.c.h.b16 %v1775
        %v1827 = vunpack.c.l.b16 %v1776
        %v1828 = vunpack.c.h.b16 %v1776
        %v1829 = vunpack.c.l.b16 %v1777
        %v1830 = vunpack.c.h.b16 %v1777
        %v1831 = vunpack.c.l.b16 %v1778
        %v1832 = vunpack.c.h.b16 %v1778
        %v1833 = vunpack.c.l.b16 %v1779
        %v1834 = vunpack.c.h.b16 %v1779
        %v1835 = vpack.c.b16 %v1805, %v1803
        %v1836 = vpack.c.b16 %v1806, %v1804
        %v1837 = vpack.c.b16 %v1809, %v1807
        %v1838 = vpack.c.b16 %v1810, %v1808
        %v1839 = vpack.c.b16 %v1813, %v1811
        %v1840 = vpack.c.b16 %v1814, %v1812
        %v1841 = vpack.c.b16 %v1817, %v1815
        %v1842 = vpack.c.b16 %v1818, %v1816
        %v1843 = vpack.c.b16 %v1821, %v1819
        %v1844 = vpack.c.b16 %v1822, %v1820
        %v1845 = vpack.c.b16 %v1825, %v1823
        %v1846 = vpack.c.b16 %v1826, %v1824
        %v1847 = vpack.c.b16 %v1829, %v1827
        %v1848 = vpack.c.b16 %v1830, %v1828
        %v1849 = vpack.c.b16 %v1833, %v1831
        %v1850 = vpack.c.b16 %v1834, %v1832
        %1867 = vmatpush.bf16.msra.mxu0 %v1849
        %1868 = vmatpush.bf16.msra.mxu0 %v1847
        %1869 = vmatpush.bf16.msra.mxu0 %v1845
        %1870 = vmatpush.bf16.msra.mxu0 %v1843
        %1871 = vmatpush.bf16.msra.mxu0 %v1841
        %1872 = vmatpush.bf16.msra.mxu0 %v1839
        %1873 = vmatpush.bf16.msra.mxu0 %v1837
        %1874 = vmatpush.bf16.msra.mxu0 %v1835
        %1875 = vmatmul.bf16.gmra.mxu0 %v1762
        %v1876 = vpop.f32.mrf.mxu0
        %v1877 = vadd.f32 %v1783, %v1876
        %v1878 = vpop.f32.mrf.mxu0
        %1879 = vdwg.mxu0
        %1880 = vmatpush.bf16.msra.mxu0 %v1850
        %1881 = vmatpush.bf16.msra.mxu0 %v1848
        %1882 = vmatpush.bf16.msra.mxu0 %v1846
        %1883 = vmatpush.bf16.msra.mxu0 %v1844
        %1884 = vmatpush.bf16.msra.mxu0 %v1842
        %1885 = vmatpush.bf16.msra.mxu0 %v1840
        %1886 = vmatpush.bf16.msra.mxu0 %v1838
        %1887 = vmatpush.bf16.msra.mxu0 %v1836
        %1888 = vmatmul.bf16.gmra.mxu0 %v1762
        %v1889 = vpop.f32.mrf.mxu0
        %v1890 = vadd.f32 %v1784, %v1889
        %v1891 = vpop.f32.mrf.mxu0
        %1892 = vdwg.mxu0
        %v1893 = vmax.f32 %v1877, 0.0
        %v1894 = vmax.f32 %v1890, 0.0
        %v1895 = vpack.c.bf16 %v1893, %v1893
        %v1896 = vpack.c.bf16 %v1894, %v1894
        %s1897 = scalar_lea.vmem %s531, 512 [#allocation9]
        %v1898 = vld [vmem:[%s1897] sm:$0xff]
        %v1899 = vld [vmem:[%s1897 + $0x8] sm:$0xff]
        %v1900 = vld [vmem:[%s1897 + $0x10] sm:$0xff]
        %v1901 = vld [vmem:[%s1897 + $0x18] sm:$0xff]
        %v1902 = vld [vmem:[%s1897 + $0x20] sm:$0xff]
        %v1903 = vld [vmem:[%s1897 + $0x28] sm:$0xff]
        %v1904 = vld [vmem:[%s1897 + $0x30] sm:$0xff]
        %v1905 = vld [vmem:[%s1897 + $0x38] sm:$0xff]
        %v1906 = vld [vmem:[%s1897 + $0x40] sm:$0xff]
        %v1907 = vld [vmem:[%s1897 + $0x48] sm:$0xff]
        %v1908 = vld [vmem:[%s1897 + $0x50] sm:$0xff]
        %v1909 = vld [vmem:[%s1897 + $0x58] sm:$0xff]
        %v1910 = vld [vmem:[%s1897 + $0x60] sm:$0xff]
        %v1911 = vld [vmem:[%s1897 + $0x68] sm:$0xff]
        %v1912 = vld [vmem:[%s1897 + $0x70] sm:$0xff]
        %v1913 = vld [vmem:[%s1897 + $0x78] sm:$0xff]
        %v1914 = vld [vmem:[%s1897 + $0x80] sm:$0xff]
        %v1915 = vld [vmem:[%s1897 + $0x88] sm:$0xff]
        %v1916 = vld [vmem:[%s1897 + $0x90] sm:$0xff]
        %v1917 = vld [vmem:[%s1897 + $0x98] sm:$0xff]
        %v1918 = vld [vmem:[%s1897 + $0xa0] sm:$0xff]
        %v1919 = vld [vmem:[%s1897 + $0xa8] sm:$0xff]
        %v1920 = vld [vmem:[%s1897 + $0xb0] sm:$0xff]
        %v1921 = vld [vmem:[%s1897 + $0xb8] sm:$0xff]
        %v1922 = vld [vmem:[%s1897 + $0xc0] sm:$0xff]
        %v1923 = vld [vmem:[%s1897 + $0xc8] sm:$0xff]
        %v1924 = vld [vmem:[%s1897 + $0xd0] sm:$0xff]
        %v1925 = vld [vmem:[%s1897 + $0xd8] sm:$0xff]
        %v1926 = vld [vmem:[%s1897 + $0xe0] sm:$0xff]
        %v1927 = vld [vmem:[%s1897 + $0xe8] sm:$0xff]
        %v1928 = vld [vmem:[%s1897 + $0xf0] sm:$0xff]
        %v1929 = vld [vmem:[%s1897 + $0xf8] sm:$0xff]
        %v1930 = vld [vmem:[%s1897 + $0x100] sm:$0xff]
        %v1931 = vld [vmem:[%s1897 + $0x108] sm:$0xff]
        %v1932 = vld [vmem:[%s1897 + $0x110] sm:$0xff]
        %v1933 = vld [vmem:[%s1897 + $0x118] sm:$0xff]
        %v1934 = vld [vmem:[%s1897 + $0x120] sm:$0xff]
        %v1935 = vld [vmem:[%s1897 + $0x128] sm:$0xff]
        %v1936 = vld [vmem:[%s1897 + $0x130] sm:$0xff]
        %v1937 = vld [vmem:[%s1897 + $0x138] sm:$0xff]
        %v1938 = vld [vmem:[%s1897 + $0x140] sm:$0xff]
        %v1939 = vld [vmem:[%s1897 + $0x148] sm:$0xff]
        %v1940 = vld [vmem:[%s1897 + $0x150] sm:$0xff]
        %v1941 = vld [vmem:[%s1897 + $0x158] sm:$0xff]
        %v1942 = vld [vmem:[%s1897 + $0x160] sm:$0xff]
        %v1943 = vld [vmem:[%s1897 + $0x168] sm:$0xff]
        %v1944 = vld [vmem:[%s1897 + $0x170] sm:$0xff]
        %v1945 = vld [vmem:[%s1897 + $0x178] sm:$0xff]
        %v1946 = vld [vmem:[%s1897 + $0x180] sm:$0xff]
        %v1947 = vld [vmem:[%s1897 + $0x188] sm:$0xff]
        %v1948 = vld [vmem:[%s1897 + $0x190] sm:$0xff]
        %v1949 = vld [vmem:[%s1897 + $0x198] sm:$0xff]
        %v1950 = vld [vmem:[%s1897 + $0x1a0] sm:$0xff]
        %v1951 = vld [vmem:[%s1897 + $0x1a8] sm:$0xff]
        %v1952 = vld [vmem:[%s1897 + $0x1b0] sm:$0xff]
        %v1953 = vld [vmem:[%s1897 + $0x1b8] sm:$0xff]
        %v1954 = vld [vmem:[%s1897 + $0x1c0] sm:$0xff]
        %v1955 = vld [vmem:[%s1897 + $0x1c8] sm:$0xff]
        %v1956 = vld [vmem:[%s1897 + $0x1d0] sm:$0xff]
        %v1957 = vld [vmem:[%s1897 + $0x1d8] sm:$0xff]
        %v1958 = vld [vmem:[%s1897 + $0x1e0] sm:$0xff]
        %v1959 = vld [vmem:[%s1897 + $0x1e8] sm:$0xff]
        %v1960 = vld [vmem:[%s1897 + $0x1f0] sm:$0xff]
        %v1961 = vld [vmem:[%s1897 + $0x1f8] sm:$0xff]
        %s1962 = scalar_lea.vmem %s541, 4 [#allocation10]
        %v1963 = vld [vmem:[%s1962] sm:$0xf]
        %v1965 = vperm.slane %v1963, 0
        %v1966 = vperm.slane %v1963, 1
        %v1967 = vperm.slane %v1963, 2
        %v1968 = vperm.slane %v1963, 3
        %v2037 = vunpack.c.l.b16 %v1898
        %v2038 = vunpack.c.h.b16 %v1898
        %v2039 = vunpack.c.l.b16 %v1899
        %v2040 = vunpack.c.h.b16 %v1899
        %v2041 = vunpack.c.l.b16 %v1900
        %v2042 = vunpack.c.h.b16 %v1900
        %v2043 = vunpack.c.l.b16 %v1901
        %v2044 = vunpack.c.h.b16 %v1901
        %v2045 = vunpack.c.l.b16 %v1902
        %v2046 = vunpack.c.h.b16 %v1902
        %v2047 = vunpack.c.l.b16 %v1903
        %v2048 = vunpack.c.h.b16 %v1903
        %v2049 = vunpack.c.l.b16 %v1904
        %v2050 = vunpack.c.h.b16 %v1904
        %v2051 = vunpack.c.l.b16 %v1905
        %v2052 = vunpack.c.h.b16 %v1905
        %v2053 = vunpack.c.l.b16 %v1906
        %v2054 = vunpack.c.h.b16 %v1906
        %v2055 = vunpack.c.l.b16 %v1907
        %v2056 = vunpack.c.h.b16 %v1907
        %v2057 = vunpack.c.l.b16 %v1908
        %v2058 = vunpack.c.h.b16 %v1908
        %v2059 = vunpack.c.l.b16 %v1909
        %v2060 = vunpack.c.h.b16 %v1909
        %v2061 = vunpack.c.l.b16 %v1910
        %v2062 = vunpack.c.h.b16 %v1910
        %v2063 = vunpack.c.l.b16 %v1911
        %v2064 = vunpack.c.h.b16 %v1911
        %v2065 = vunpack.c.l.b16 %v1912
        %v2066 = vunpack.c.h.b16 %v1912
        %v2067 = vunpack.c.l.b16 %v1913
        %v2068 = vunpack.c.h.b16 %v1913
        %v2069 = vunpack.c.l.b16 %v1914
        %v2070 = vunpack.c.h.b16 %v1914
        %v2071 = vunpack.c.l.b16 %v1915
        %v2072 = vunpack.c.h.b16 %v1915
        %v2073 = vunpack.c.l.b16 %v1916
        %v2074 = vunpack.c.h.b16 %v1916
        %v2075 = vunpack.c.l.b16 %v1917
        %v2076 = vunpack.c.h.b16 %v1917
        %v2077 = vunpack.c.l.b16 %v1918
        %v2078 = vunpack.c.h.b16 %v1918
        %v2079 = vunpack.c.l.b16 %v1919
        %v2080 = vunpack.c.h.b16 %v1919
        %v2081 = vunpack.c.l.b16 %v1920
        %v2082 = vunpack.c.h.b16 %v1920
        %v2083 = vunpack.c.l.b16 %v1921
        %v2084 = vunpack.c.h.b16 %v1921
        %v2085 = vunpack.c.l.b16 %v1922
        %v2086 = vunpack.c.h.b16 %v1922
        %v2087 = vunpack.c.l.b16 %v1923
        %v2088 = vunpack.c.h.b16 %v1923
        %v2089 = vunpack.c.l.b16 %v1924
        %v2090 = vunpack.c.h.b16 %v1924
        %v2091 = vunpack.c.l.b16 %v1925
        %v2092 = vunpack.c.h.b16 %v1925
        %v2093 = vunpack.c.l.b16 %v1926
        %v2094 = vunpack.c.h.b16 %v1926
        %v2095 = vunpack.c.l.b16 %v1927
        %v2096 = vunpack.c.h.b16 %v1927
        %v2097 = vunpack.c.l.b16 %v1928
        %v2098 = vunpack.c.h.b16 %v1928
        %v2099 = vunpack.c.l.b16 %v1929
        %v2100 = vunpack.c.h.b16 %v1929
        %v2101 = vunpack.c.l.b16 %v1930
        %v2102 = vunpack.c.h.b16 %v1930
        %v2103 = vunpack.c.l.b16 %v1931
        %v2104 = vunpack.c.h.b16 %v1931
        %v2105 = vunpack.c.l.b16 %v1932
        %v2106 = vunpack.c.h.b16 %v1932
        %v2107 = vunpack.c.l.b16 %v1933
        %v2108 = vunpack.c.h.b16 %v1933
        %v2109 = vunpack.c.l.b16 %v1934
        %v2110 = vunpack.c.h.b16 %v1934
        %v2111 = vunpack.c.l.b16 %v1935
        %v2112 = vunpack.c.h.b16 %v1935
        %v2113 = vunpack.c.l.b16 %v1936
        %v2114 = vunpack.c.h.b16 %v1936
        %v2115 = vunpack.c.l.b16 %v1937
        %v2116 = vunpack.c.h.b16 %v1937
        %v2117 = vunpack.c.l.b16 %v1938
        %v2118 = vunpack.c.h.b16 %v1938
        %v2119 = vunpack.c.l.b16 %v1939
        %v2120 = vunpack.c.h.b16 %v1939
        %v2121 = vunpack.c.l.b16 %v1940
        %v2122 = vunpack.c.h.b16 %v1940
        %v2123 = vunpack.c.l.b16 %v1941
        %v2124 = vunpack.c.h.b16 %v1941
        %v2125 = vunpack.c.l.b16 %v1942
        %v2126 = vunpack.c.h.b16 %v1942
        %v2127 = vunpack.c.l.b16 %v1943
        %v2128 = vunpack.c.h.b16 %v1943
        %v2129 = vunpack.c.l.b16 %v1944
        %v2130 = vunpack.c.h.b16 %v1944
        %v2131 = vunpack.c.l.b16 %v1945
        %v2132 = vunpack.c.h.b16 %v1945
        %v2133 = vunpack.c.l.b16 %v1946
        %v2134 = vunpack.c.h.b16 %v1946
        %v2135 = vunpack.c.l.b16 %v1947
        %v2136 = vunpack.c.h.b16 %v1947
        %v2137 = vunpack.c.l.b16 %v1948
        %v2138 = vunpack.c.h.b16 %v1948
        %v2139 = vunpack.c.l.b16 %v1949
        %v2140 = vunpack.c.h.b16 %v1949
        %v2141 = vunpack.c.l.b16 %v1950
        %v2142 = vunpack.c.h.b16 %v1950
        %v2143 = vunpack.c.l.b16 %v1951
        %v2144 = vunpack.c.h.b16 %v1951
        %v2145 = vunpack.c.l.b16 %v1952
        %v2146 = vunpack.c.h.b16 %v1952
        %v2147 = vunpack.c.l.b16 %v1953
        %v2148 = vunpack.c.h.b16 %v1953
        %v2149 = vunpack.c.l.b16 %v1954
        %v2150 = vunpack.c.h.b16 %v1954
        %v2151 = vunpack.c.l.b16 %v1955
        %v2152 = vunpack.c.h.b16 %v1955
        %v2153 = vunpack.c.l.b16 %v1956
        %v2154 = vunpack.c.h.b16 %v1956
        %v2155 = vunpack.c.l.b16 %v1957
        %v2156 = vunpack.c.h.b16 %v1957
        %v2157 = vunpack.c.l.b16 %v1958
        %v2158 = vunpack.c.h.b16 %v1958
        %v2159 = vunpack.c.l.b16 %v1959
        %v2160 = vunpack.c.h.b16 %v1959
        %v2161 = vunpack.c.l.b16 %v1960
        %v2162 = vunpack.c.h.b16 %v1960
        %v2163 = vunpack.c.l.b16 %v1961
        %v2164 = vunpack.c.h.b16 %v1961
        %v2165 = vpack.c.b16 %v2041, %v2037
        %v2166 = vpack.c.b16 %v2042, %v2038
        %v2167 = vpack.c.b16 %v2043, %v2039
        %v2168 = vpack.c.b16 %v2044, %v2040
        %v2169 = vpack.c.b16 %v2049, %v2045
        %v2170 = vpack.c.b16 %v2050, %v2046
        %v2171 = vpack.c.b16 %v2051, %v2047
        %v2172 = vpack.c.b16 %v2052, %v2048
        %v2173 = vpack.c.b16 %v2057, %v2053
        %v2174 = vpack.c.b16 %v2058, %v2054
        %v2175 = vpack.c.b16 %v2059, %v2055
        %v2176 = vpack.c.b16 %v2060, %v2056
        %v2177 = vpack.c.b16 %v2065, %v2061
        %v2178 = vpack.c.b16 %v2066, %v2062
        %v2179 = vpack.c.b16 %v2067, %v2063
        %v2180 = vpack.c.b16 %v2068, %v2064
        %v2181 = vpack.c.b16 %v2073, %v2069
        %v2182 = vpack.c.b16 %v2074, %v2070
        %v2183 = vpack.c.b16 %v2075, %v2071
        %v2184 = vpack.c.b16 %v2076, %v2072
        %v2185 = vpack.c.b16 %v2081, %v2077
        %v2186 = vpack.c.b16 %v2082, %v2078
        %v2187 = vpack.c.b16 %v2083, %v2079
        %v2188 = vpack.c.b16 %v2084, %v2080
        %v2189 = vpack.c.b16 %v2089, %v2085
        %v2190 = vpack.c.b16 %v2090, %v2086
        %v2191 = vpack.c.b16 %v2091, %v2087
        %v2192 = vpack.c.b16 %v2092, %v2088
        %v2193 = vpack.c.b16 %v2097, %v2093
        %v2194 = vpack.c.b16 %v2098, %v2094
        %v2195 = vpack.c.b16 %v2099, %v2095
        %v2196 = vpack.c.b16 %v2100, %v2096
        %v2197 = vpack.c.b16 %v2105, %v2101
        %v2198 = vpack.c.b16 %v2106, %v2102
        %v2199 = vpack.c.b16 %v2107, %v2103
        %v2200 = vpack.c.b16 %v2108, %v2104
        %v2201 = vpack.c.b16 %v2113, %v2109
        %v2202 = vpack.c.b16 %v2114, %v2110
        %v2203 = vpack.c.b16 %v2115, %v2111
        %v2204 = vpack.c.b16 %v2116, %v2112
        %v2205 = vpack.c.b16 %v2121, %v2117
        %v2206 = vpack.c.b16 %v2122, %v2118
        %v2207 = vpack.c.b16 %v2123, %v2119
        %v2208 = vpack.c.b16 %v2124, %v2120
        %v2209 = vpack.c.b16 %v2129, %v2125
        %v2210 = vpack.c.b16 %v2130, %v2126
        %v2211 = vpack.c.b16 %v2131, %v2127
        %v2212 = vpack.c.b16 %v2132, %v2128
        %v2213 = vpack.c.b16 %v2137, %v2133
        %v2214 = vpack.c.b16 %v2138, %v2134
        %v2215 = vpack.c.b16 %v2139, %v2135
        %v2216 = vpack.c.b16 %v2140, %v2136
        %v2217 = vpack.c.b16 %v2145, %v2141
        %v2218 = vpack.c.b16 %v2146, %v2142
        %v2219 = vpack.c.b16 %v2147, %v2143
        %v2220 = vpack.c.b16 %v2148, %v2144
        %v2221 = vpack.c.b16 %v2153, %v2149
        %v2222 = vpack.c.b16 %v2154, %v2150
        %v2223 = vpack.c.b16 %v2155, %v2151
        %v2224 = vpack.c.b16 %v2156, %v2152
        %v2225 = vpack.c.b16 %v2161, %v2157
        %v2226 = vpack.c.b16 %v2162, %v2158
        %v2227 = vpack.c.b16 %v2163, %v2159
        %v2228 = vpack.c.b16 %v2164, %v2160
        %2293 = vmatpush.bf16.msra.mxu0 %v2193
        %2294 = vmatpush.bf16.msra.mxu0 %v2189
        %2295 = vmatpush.bf16.msra.mxu0 %v2185
        %2296 = vmatpush.bf16.msra.mxu0 %v2181
        %2297 = vmatpush.bf16.msra.mxu0 %v2177
        %2298 = vmatpush.bf16.msra.mxu0 %v2173
        %2299 = vmatpush.bf16.msra.mxu0 %v2169
        %2300 = vmatpush.bf16.msra.mxu0 %v2165
        %2301 = vmatmul.bf16.gmra.mxu0 %v1895
        %v2302 = vpop.f32.mrf.mxu0
        %v2303 = vadd.f32 %v1965, %v2302
        %v2304 = vpop.f32.mrf.mxu0
        %2305 = vdwg.mxu0
        %2306 = vmatpush.bf16.msra.mxu0 %v2225
        %2307 = vmatpush.bf16.msra.mxu0 %v2221
        %2308 = vmatpush.bf16.msra.mxu0 %v2217
        %2309 = vmatpush.bf16.msra.mxu0 %v2213
        %2310 = vmatpush.bf16.msra.mxu0 %v2209
        %2311 = vmatpush.bf16.msra.mxu0 %v2205
        %2312 = vmatpush.bf16.msra.mxu0 %v2201
        %2313 = vmatpush.bf16.msra.mxu0 %v2197
        %2314 = vmatmul.bf16.gmra.mxu0 %v1896
        %v2315 = vpop.f32.mrf.mxu0
        %v2316 = vadd.f32 %v2303, %v2315
        %v2317 = vpop.f32.mrf.mxu0
        %2318 = vdwg.mxu0
        %2319 = vmatpush.bf16.msra.mxu0 %v2194
        %2320 = vmatpush.bf16.msra.mxu0 %v2190
        %2321 = vmatpush.bf16.msra.mxu0 %v2186
        %2322 = vmatpush.bf16.msra.mxu0 %v2182
        %2323 = vmatpush.bf16.msra.mxu0 %v2178
        %2324 = vmatpush.bf16.msra.mxu0 %v2174
        %2325 = vmatpush.bf16.msra.mxu0 %v2170
        %2326 = vmatpush.bf16.msra.mxu0 %v2166
        %2327 = vmatmul.bf16.gmra.mxu0 %v1895
        %v2328 = vpop.f32.mrf.mxu0
        %v2329 = vadd.f32 %v1966, %v2328
        %v2330 = vpop.f32.mrf.mxu0
        %2331 = vdwg.mxu0
        %2332 = vmatpush.bf16.msra.mxu0 %v2226
        %2333 = vmatpush.bf16.msra.mxu0 %v2222
        %2334 = vmatpush.bf16.msra.mxu0 %v2218
        %2335 = vmatpush.bf16.msra.mxu0 %v2214
        %2336 = vmatpush.bf16.msra.mxu0 %v2210
        %2337 = vmatpush.bf16.msra.mxu0 %v2206
        %2338 = vmatpush.bf16.msra.mxu0 %v2202
        %2339 = vmatpush.bf16.msra.mxu0 %v2198
        %2340 = vmatmul.bf16.gmra.mxu0 %v1896
        %v2341 = vpop.f32.mrf.mxu0
        %v2342 = vadd.f32 %v2329, %v2341
        %v2343 = vpop.f32.mrf.mxu0
        %2344 = vdwg.mxu0
        %2345 = vmatpush.bf16.msra.mxu0 %v2195
        %2346 = vmatpush.bf16.msra.mxu0 %v2191
        %2347 = vmatpush.bf16.msra.mxu0 %v2187
        %2348 = vmatpush.bf16.msra.mxu0 %v2183
        %2349 = vmatpush.bf16.msra.mxu0 %v2179
        %2350 = vmatpush.bf16.msra.mxu0 %v2175
        %2351 = vmatpush.bf16.msra.mxu0 %v2171
        %2352 = vmatpush.bf16.msra.mxu0 %v2167
        %2353 = vmatmul.bf16.gmra.mxu0 %v1895
        %v2354 = vpop.f32.mrf.mxu0
        %v2355 = vadd.f32 %v1967, %v2354
        %v2356 = vpop.f32.mrf.mxu0
        %2357 = vdwg.mxu0
        %2358 = vmatpush.bf16.msra.mxu0 %v2227
        %2359 = vmatpush.bf16.msra.mxu0 %v2223
        %2360 = vmatpush.bf16.msra.mxu0 %v2219
        %2361 = vmatpush.bf16.msra.mxu0 %v2215
        %2362 = vmatpush.bf16.msra.mxu0 %v2211
        %2363 = vmatpush.bf16.msra.mxu0 %v2207
        %2364 = vmatpush.bf16.msra.mxu0 %v2203
        %2365 = vmatpush.bf16.msra.mxu0 %v2199
        %2366 = vmatmul.bf16.gmra.mxu0 %v1896
        %v2367 = vpop.f32.mrf.mxu0
        %v2368 = vadd.f32 %v2355, %v2367
        %v2369 = vpop.f32.mrf.mxu0
        %2370 = vdwg.mxu0
        %2371 = vmatpush.bf16.msra.mxu0 %v2196
        %2372 = vmatpush.bf16.msra.mxu0 %v2192
        %2373 = vmatpush.bf16.msra.mxu0 %v2188
        %2374 = vmatpush.bf16.msra.mxu0 %v2184
        %2375 = vmatpush.bf16.msra.mxu0 %v2180
        %2376 = vmatpush.bf16.msra.mxu0 %v2176
        %2377 = vmatpush.bf16.msra.mxu0 %v2172
        %2378 = vmatpush.bf16.msra.mxu0 %v2168
        %2379 = vmatmul.bf16.gmra.mxu0 %v1895
        %v2380 = vpop.f32.mrf.mxu0
        %v2381 = vadd.f32 %v1968, %v2380
        %v2382 = vpop.f32.mrf.mxu0
        %2383 = vdwg.mxu0
        %2384 = vmatpush.bf16.msra.mxu0 %v2228
        %2385 = vmatpush.bf16.msra.mxu0 %v2224
        %2386 = vmatpush.bf16.msra.mxu0 %v2220
        %2387 = vmatpush.bf16.msra.mxu0 %v2216
        %2388 = vmatpush.bf16.msra.mxu0 %v2212
        %2389 = vmatpush.bf16.msra.mxu0 %v2208
        %2390 = vmatpush.bf16.msra.mxu0 %v2204
        %2391 = vmatpush.bf16.msra.mxu0 %v2200
        %2392 = vmatmul.bf16.gmra.mxu0 %v1896
        %v2393 = vpop.f32.mrf.mxu0
        %v2394 = vadd.f32 %v2381, %v2393
        %v2395 = vpop.f32.mrf.mxu0
        %2396 = vdwg.mxu0
        %v2397 = vmax.f32 %v2316, 0.0
        %v2398 = vmax.f32 %v2342, 0.0
        %v2399 = vmax.f32 %v2368, 0.0
        %v2400 = vmax.f32 %v2394, 0.0
        %v2401 = vpack.c.bf16 %v2397, %v2397
        %v2402 = vpack.c.bf16 %v2398, %v2398
        %v2403 = vpack.c.bf16 %v2399, %v2399
        %v2404 = vpack.c.bf16 %v2400, %v2400
        %s2405 = scalar_lea.vmem %s551, 256 [#allocation12]
        %v2406 = vld [vmem:[%s2405] sm:$0xf]
        %v2407 = vld [vmem:[%s2405 + $0x4] sm:$0xf]
        %v2408 = vld [vmem:[%s2405 + $0x8] sm:$0xf]
        %v2409 = vld [vmem:[%s2405 + $0xc] sm:$0xf]
        %v2410 = vld [vmem:[%s2405 + $0x10] sm:$0xf]
        %v2411 = vld [vmem:[%s2405 + $0x14] sm:$0xf]
        %v2412 = vld [vmem:[%s2405 + $0x18] sm:$0xf]
        %v2413 = vld [vmem:[%s2405 + $0x1c] sm:$0xf]
        %v2414 = vld [vmem:[%s2405 + $0x20] sm:$0xf]
        %v2415 = vld [vmem:[%s2405 + $0x24] sm:$0xf]
        %v2416 = vld [vmem:[%s2405 + $0x28] sm:$0xf]
        %v2417 = vld [vmem:[%s2405 + $0x2c] sm:$0xf]
        %v2418 = vld [vmem:[%s2405 + $0x30] sm:$0xf]
        %v2419 = vld [vmem:[%s2405 + $0x34] sm:$0xf]
        %v2420 = vld [vmem:[%s2405 + $0x38] sm:$0xf]
        %v2421 = vld [vmem:[%s2405 + $0x3c] sm:$0xf]
        %v2422 = vld [vmem:[%s2405 + $0x40] sm:$0xf]
        %v2423 = vld [vmem:[%s2405 + $0x44] sm:$0xf]
        %v2424 = vld [vmem:[%s2405 + $0x48] sm:$0xf]
        %v2425 = vld [vmem:[%s2405 + $0x4c] sm:$0xf]
        %v2426 = vld [vmem:[%s2405 + $0x50] sm:$0xf]
        %v2427 = vld [vmem:[%s2405 + $0x54] sm:$0xf]
        %v2428 = vld [vmem:[%s2405 + $0x58] sm:$0xf]
        %v2429 = vld [vmem:[%s2405 + $0x5c] sm:$0xf]
        %v2430 = vld [vmem:[%s2405 + $0x60] sm:$0xf]
        %v2431 = vld [vmem:[%s2405 + $0x64] sm:$0xf]
        %v2432 = vld [vmem:[%s2405 + $0x68] sm:$0xf]
        %v2433 = vld [vmem:[%s2405 + $0x6c] sm:$0xf]
        %v2434 = vld [vmem:[%s2405 + $0x70] sm:$0xf]
        %v2435 = vld [vmem:[%s2405 + $0x74] sm:$0xf]
        %v2436 = vld [vmem:[%s2405 + $0x78] sm:$0xf]
        %v2437 = vld [vmem:[%s2405 + $0x7c] sm:$0xf]
        %v2438 = vld [vmem:[%s2405 + $0x80] sm:$0xf]
        %v2439 = vld [vmem:[%s2405 + $0x84] sm:$0xf]
        %v2440 = vld [vmem:[%s2405 + $0x88] sm:$0xf]
        %v2441 = vld [vmem:[%s2405 + $0x8c] sm:$0xf]
        %v2442 = vld [vmem:[%s2405 + $0x90] sm:$0xf]
        %v2443 = vld [vmem:[%s2405 + $0x94] sm:$0xf]
        %v2444 = vld [vmem:[%s2405 + $0x98] sm:$0xf]
        %v2445 = vld [vmem:[%s2405 + $0x9c] sm:$0xf]
        %v2446 = vld [vmem:[%s2405 + $0xa0] sm:$0xf]
        %v2447 = vld [vmem:[%s2405 + $0xa4] sm:$0xf]
        %v2448 = vld [vmem:[%s2405 + $0xa8] sm:$0xf]
        %v2449 = vld [vmem:[%s2405 + $0xac] sm:$0xf]
        %v2450 = vld [vmem:[%s2405 + $0xb0] sm:$0xf]
        %v2451 = vld [vmem:[%s2405 + $0xb4] sm:$0xf]
        %v2452 = vld [vmem:[%s2405 + $0xb8] sm:$0xf]
        %v2453 = vld [vmem:[%s2405 + $0xbc] sm:$0xf]
        %v2454 = vld [vmem:[%s2405 + $0xc0] sm:$0xf]
        %v2455 = vld [vmem:[%s2405 + $0xc4] sm:$0xf]
        %v2456 = vld [vmem:[%s2405 + $0xc8] sm:$0xf]
        %v2457 = vld [vmem:[%s2405 + $0xcc] sm:$0xf]
        %v2458 = vld [vmem:[%s2405 + $0xd0] sm:$0xf]
        %v2459 = vld [vmem:[%s2405 + $0xd4] sm:$0xf]
        %v2460 = vld [vmem:[%s2405 + $0xd8] sm:$0xf]
        %v2461 = vld [vmem:[%s2405 + $0xdc] sm:$0xf]
        %v2462 = vld [vmem:[%s2405 + $0xe0] sm:$0xf]
        %v2463 = vld [vmem:[%s2405 + $0xe4] sm:$0xf]
        %v2464 = vld [vmem:[%s2405 + $0xe8] sm:$0xf]
        %v2465 = vld [vmem:[%s2405 + $0xec] sm:$0xf]
        %v2466 = vld [vmem:[%s2405 + $0xf0] sm:$0xf]
        %v2467 = vld [vmem:[%s2405 + $0xf4] sm:$0xf]
        %v2468 = vld [vmem:[%s2405 + $0xf8] sm:$0xf]
        %v2469 = vld [vmem:[%s2405 + $0xfc] sm:$0xf]
        %s2470 = scalar_lea.vmem %s561, 1 [#allocation13]
        %v2471 = vld [vmem:[%s2470] sm:$0x1]
        %v2473 = vperm.slane %v2471, 0
        %v2539 = vunpack.c.l.b16 %v2406
        %v2540 = vunpack.c.l.b16 %v2407
        %v2541 = vunpack.c.l.b16 %v2408
        %v2542 = vunpack.c.l.b16 %v2409
        %v2543 = vunpack.c.l.b16 %v2410
        %v2544 = vunpack.c.l.b16 %v2411
        %v2545 = vunpack.c.l.b16 %v2412
        %v2546 = vunpack.c.l.b16 %v2413
        %v2547 = vunpack.c.l.b16 %v2414
        %v2548 = vunpack.c.l.b16 %v2415
        %v2549 = vunpack.c.l.b16 %v2416
        %v2550 = vunpack.c.l.b16 %v2417
        %v2551 = vunpack.c.l.b16 %v2418
        %v2552 = vunpack.c.l.b16 %v2419
        %v2553 = vunpack.c.l.b16 %v2420
        %v2554 = vunpack.c.l.b16 %v2421
        %v2555 = vunpack.c.l.b16 %v2422
        %v2556 = vunpack.c.l.b16 %v2423
        %v2557 = vunpack.c.l.b16 %v2424
        %v2558 = vunpack.c.l.b16 %v2425
        %v2559 = vunpack.c.l.b16 %v2426
        %v2560 = vunpack.c.l.b16 %v2427
        %v2561 = vunpack.c.l.b16 %v2428
        %v2562 = vunpack.c.l.b16 %v2429
        %v2563 = vunpack.c.l.b16 %v2430
        %v2564 = vunpack.c.l.b16 %v2431
        %v2565 = vunpack.c.l.b16 %v2432
        %v2566 = vunpack.c.l.b16 %v2433
        %v2567 = vunpack.c.l.b16 %v2434
        %v2568 = vunpack.c.l.b16 %v2435
        %v2569 = vunpack.c.l.b16 %v2436
        %v2570 = vunpack.c.l.b16 %v2437
        %v2571 = vunpack.c.l.b16 %v2438
        %v2572 = vunpack.c.l.b16 %v2439
        %v2573 = vunpack.c.l.b16 %v2440
        %v2574 = vunpack.c.l.b16 %v2441
        %v2575 = vunpack.c.l.b16 %v2442
        %v2576 = vunpack.c.l.b16 %v2443
        %v2577 = vunpack.c.l.b16 %v2444
        %v2578 = vunpack.c.l.b16 %v2445
        %v2579 = vunpack.c.l.b16 %v2446
        %v2580 = vunpack.c.l.b16 %v2447
        %v2581 = vunpack.c.l.b16 %v2448
        %v2582 = vunpack.c.l.b16 %v2449
        %v2583 = vunpack.c.l.b16 %v2450
        %v2584 = vunpack.c.l.b16 %v2451
        %v2585 = vunpack.c.l.b16 %v2452
        %v2586 = vunpack.c.l.b16 %v2453
        %v2587 = vunpack.c.l.b16 %v2454
        %v2588 = vunpack.c.l.b16 %v2455
        %v2589 = vunpack.c.l.b16 %v2456
        %v2590 = vunpack.c.l.b16 %v2457
        %v2591 = vunpack.c.l.b16 %v2458
        %v2592 = vunpack.c.l.b16 %v2459
        %v2593 = vunpack.c.l.b16 %v2460
        %v2594 = vunpack.c.l.b16 %v2461
        %v2595 = vunpack.c.l.b16 %v2462
        %v2596 = vunpack.c.l.b16 %v2463
        %v2597 = vunpack.c.l.b16 %v2464
        %v2598 = vunpack.c.l.b16 %v2465
        %v2599 = vunpack.c.l.b16 %v2466
        %v2600 = vunpack.c.l.b16 %v2467
        %v2601 = vunpack.c.l.b16 %v2468
        %v2602 = vunpack.c.l.b16 %v2469
        %v2603 = vpack.c.b16 %v2540, %v2539
        %v2604 = vpack.c.b16 %v2542, %v2541
        %v2605 = vpack.c.b16 %v2544, %v2543
        %v2606 = vpack.c.b16 %v2546, %v2545
        %v2607 = vpack.c.b16 %v2548, %v2547
        %v2608 = vpack.c.b16 %v2550, %v2549
        %v2609 = vpack.c.b16 %v2552, %v2551
        %v2610 = vpack.c.b16 %v2554, %v2553
        %v2611 = vpack.c.b16 %v2556, %v2555
        %v2612 = vpack.c.b16 %v2558, %v2557
        %v2613 = vpack.c.b16 %v2560, %v2559
        %v2614 = vpack.c.b16 %v2562, %v2561
        %v2615 = vpack.c.b16 %v2564, %v2563
        %v2616 = vpack.c.b16 %v2566, %v2565
        %v2617 = vpack.c.b16 %v2568, %v2567
        %v2618 = vpack.c.b16 %v2570, %v2569
        %v2619 = vpack.c.b16 %v2572, %v2571
        %v2620 = vpack.c.b16 %v2574, %v2573
        %v2621 = vpack.c.b16 %v2576, %v2575
        %v2622 = vpack.c.b16 %v2578, %v2577
        %v2623 = vpack.c.b16 %v2580, %v2579
        %v2624 = vpack.c.b16 %v2582, %v2581
        %v2625 = vpack.c.b16 %v2584, %v2583
        %v2626 = vpack.c.b16 %v2586, %v2585
        %v2627 = vpack.c.b16 %v2588, %v2587
        %v2628 = vpack.c.b16 %v2590, %v2589
        %v2629 = vpack.c.b16 %v2592, %v2591
        %v2630 = vpack.c.b16 %v2594, %v2593
        %v2631 = vpack.c.b16 %v2596, %v2595
        %v2632 = vpack.c.b16 %v2598, %v2597
        %v2633 = vpack.c.b16 %v2600, %v2599
        %v2634 = vpack.c.b16 %v2602, %v2601
        %2667 = vmatpush.bf16.msra.mxu0 %v2610
        %2668 = vmatpush.bf16.msra.mxu0 %v2609
        %2669 = vmatpush.bf16.msra.mxu0 %v2608
        %2670 = vmatpush.bf16.msra.mxu0 %v2607
        %2671 = vmatpush.bf16.msra.mxu0 %v2606
        %2672 = vmatpush.bf16.msra.mxu0 %v2605
        %2673 = vmatpush.bf16.msra.mxu0 %v2604
        %2674 = vmatpush.bf16.msra.mxu0 %v2603
        %2675 = vmatmul.bf16.gmra.mxu0 %v2401
        %v2676 = vpop.f32.mrf.mxu0
        %v2677 = vadd.f32 %v2473, %v2676
        %v2678 = vpop.f32.mrf.mxu0
        %2679 = vdwg.mxu0
        %2680 = vmatpush.bf16.msra.mxu0 %v2618
        %2681 = vmatpush.bf16.msra.mxu0 %v2617
        %2682 = vmatpush.bf16.msra.mxu0 %v2616
        %2683 = vmatpush.bf16.msra.mxu0 %v2615
        %2684 = vmatpush.bf16.msra.mxu0 %v2614
        %2685 = vmatpush.bf16.msra.mxu0 %v2613
        %2686 = vmatpush.bf16.msra.mxu0 %v2612
        %2687 = vmatpush.bf16.msra.mxu0 %v2611
        %2688 = vmatmul.bf16.gmra.mxu0 %v2402
        %v2689 = vpop.f32.mrf.mxu0
        %v2690 = vadd.f32 %v2677, %v2689
        %v2691 = vpop.f32.mrf.mxu0
        %2692 = vdwg.mxu0
        %2693 = vmatpush.bf16.msra.mxu0 %v2626
        %2694 = vmatpush.bf16.msra.mxu0 %v2625
        %2695 = vmatpush.bf16.msra.mxu0 %v2624
        %2696 = vmatpush.bf16.msra.mxu0 %v2623
        %2697 = vmatpush.bf16.msra.mxu0 %v2622
        %2698 = vmatpush.bf16.msra.mxu0 %v2621
        %2699 = vmatpush.bf16.msra.mxu0 %v2620
        %2700 = vmatpush.bf16.msra.mxu0 %v2619
        %2701 = vmatmul.bf16.gmra.mxu0 %v2403
        %v2702 = vpop.f32.mrf.mxu0
        %v2703 = vadd.f32 %v2690, %v2702
        %v2704 = vpop.f32.mrf.mxu0
        %2705 = vdwg.mxu0
        %2706 = vmatpush.bf16.msra.mxu0 %v2634
        %2707 = vmatpush.bf16.msra.mxu0 %v2633
        %2708 = vmatpush.bf16.msra.mxu0 %v2632
        %2709 = vmatpush.bf16.msra.mxu0 %v2631
        %2710 = vmatpush.bf16.msra.mxu0 %v2630
        %2711 = vmatpush.bf16.msra.mxu0 %v2629
        %2712 = vmatpush.bf16.msra.mxu0 %v2628
        %2713 = vmatpush.bf16.msra.mxu0 %v2627
        %2714 = vmatmul.bf16.gmra.mxu0 %v2404
        %v2715 = vpop.f32.mrf.mxu0
        %v2716 = vadd.f32 %v2703, %v2715
        %v2717 = vpop.f32.mrf.mxu0
        %2718 = vdwg.mxu0
        %s2719 = scalar_lea.vmem %s642, 8
        %2720 = vst.msk [vmem:[%s2719] sm:$0xff] %vm1760, %v2716
        %v2721 = vpack.c.bf16 %v804, %v804
        %s2722 = scalar_lea.vmem %s511, 256 [#allocation6]
        %v2723 = vld [vmem:[%s2722] sm:$0xff]
        %v2724 = vld [vmem:[%s2722 + $0x8] sm:$0xff]
        %v2725 = vld [vmem:[%s2722 + $0x10] sm:$0xff]
        %v2726 = vld [vmem:[%s2722 + $0x18] sm:$0xff]
        %v2727 = vld [vmem:[%s2722 + $0x20] sm:$0xff]
        %v2728 = vld [vmem:[%s2722 + $0x28] sm:$0xff]
        %v2729 = vld [vmem:[%s2722 + $0x30] sm:$0xff]
        %v2730 = vld [vmem:[%s2722 + $0x38] sm:$0xff]
        %v2731 = vld [vmem:[%s2722 + $0x40] sm:$0xff]
        %v2732 = vld [vmem:[%s2722 + $0x48] sm:$0xff]
        %v2733 = vld [vmem:[%s2722 + $0x50] sm:$0xff]
        %v2734 = vld [vmem:[%s2722 + $0x58] sm:$0xff]
        %v2735 = vld [vmem:[%s2722 + $0x60] sm:$0xff]
        %v2736 = vld [vmem:[%s2722 + $0x68] sm:$0xff]
        %v2737 = vld [vmem:[%s2722 + $0x70] sm:$0xff]
        %v2738 = vld [vmem:[%s2722 + $0x78] sm:$0xff]
        %s2739 = scalar_lea.vmem %s521, 4 [#allocation7]
        %v2740 = vld [vmem:[%s2739] sm:$0x3]
        %v2742 = vperm.slane %v2740, 0
        %v2743 = vperm.slane %v2740, 1
        %v2762 = vunpack.c.l.b16 %v2723
        %v2763 = vunpack.c.h.b16 %v2723
        %v2764 = vunpack.c.l.b16 %v2724
        %v2765 = vunpack.c.h.b16 %v2724
        %v2766 = vunpack.c.l.b16 %v2725
        %v2767 = vunpack.c.h.b16 %v2725
        %v2768 = vunpack.c.l.b16 %v2726
        %v2769 = vunpack.c.h.b16 %v2726
        %v2770 = vunpack.c.l.b16 %v2727
        %v2771 = vunpack.c.h.b16 %v2727
        %v2772 = vunpack.c.l.b16 %v2728
        %v2773 = vunpack.c.h.b16 %v2728
        %v2774 = vunpack.c.l.b16 %v2729
        %v2775 = vunpack.c.h.b16 %v2729
        %v2776 = vunpack.c.l.b16 %v2730
        %v2777 = vunpack.c.h.b16 %v2730
        %v2778 = vunpack.c.l.b16 %v2731
        %v2779 = vunpack.c.h.b16 %v2731
        %v2780 = vunpack.c.l.b16 %v2732
        %v2781 = vunpack.c.h.b16 %v2732
        %v2782 = vunpack.c.l.b16 %v2733
        %v2783 = vunpack.c.h.b16 %v2733
        %v2784 = vunpack.c.l.b16 %v2734
        %v2785 = vunpack.c.h.b16 %v2734
        %v2786 = vunpack.c.l.b16 %v2735
        %v2787 = vunpack.c.h.b16 %v2735
        %v2788 = vunpack.c.l.b16 %v2736
        %v2789 = vunpack.c.h.b16 %v2736
        %v2790 = vunpack.c.l.b16 %v2737
        %v2791 = vunpack.c.h.b16 %v2737
        %v2792 = vunpack.c.l.b16 %v2738
        %v2793 = vunpack.c.h.b16 %v2738
        %v2794 = vpack.c.b16 %v2764, %v2762
        %v2795 = vpack.c.b16 %v2765, %v2763
        %v2796 = vpack.c.b16 %v2768, %v2766
        %v2797 = vpack.c.b16 %v2769, %v2767
        %v2798 = vpack.c.b16 %v2772, %v2770
        %v2799 = vpack.c.b16 %v2773, %v2771
        %v2800 = vpack.c.b16 %v2776, %v2774
        %v2801 = vpack.c.b16 %v2777, %v2775
        %v2802 = vpack.c.b16 %v2780, %v2778
        %v2803 = vpack.c.b16 %v2781, %v2779
        %v2804 = vpack.c.b16 %v2784, %v2782
        %v2805 = vpack.c.b16 %v2785, %v2783
        %v2806 = vpack.c.b16 %v2788, %v2786
        %v2807 = vpack.c.b16 %v2789, %v2787
        %v2808 = vpack.c.b16 %v2792, %v2790
        %v2809 = vpack.c.b16 %v2793, %v2791
        %2826 = vmatpush.bf16.msra.mxu0 %v2808
        %2827 = vmatpush.bf16.msra.mxu0 %v2806
        %2828 = vmatpush.bf16.msra.mxu0 %v2804
        %2829 = vmatpush.bf16.msra.mxu0 %v2802
        %2830 = vmatpush.bf16.msra.mxu0 %v2800
        %2831 = vmatpush.bf16.msra.mxu0 %v2798
        %2832 = vmatpush.bf16.msra.mxu0 %v2796
        %2833 = vmatpush.bf16.msra.mxu0 %v2794
        %2834 = vmatmul.bf16.gmra.mxu0 %v2721
        %v2835 = vpop.f32.mrf.mxu0
        %v2836 = vadd.f32 %v2742, %v2835
        %v2837 = vpop.f32.mrf.mxu0
        %2838 = vdwg.mxu0
        %2839 = vmatpush.bf16.msra.mxu0 %v2809
        %2840 = vmatpush.bf16.msra.mxu0 %v2807
        %2841 = vmatpush.bf16.msra.mxu0 %v2805
        %2842 = vmatpush.bf16.msra.mxu0 %v2803
        %2843 = vmatpush.bf16.msra.mxu0 %v2801
        %2844 = vmatpush.bf16.msra.mxu0 %v2799
        %2845 = vmatpush.bf16.msra.mxu0 %v2797
        %2846 = vmatpush.bf16.msra.mxu0 %v2795
        %2847 = vmatmul.bf16.gmra.mxu0 %v2721
        %v2848 = vpop.f32.mrf.mxu0
        %v2849 = vadd.f32 %v2743, %v2848
        %v2850 = vpop.f32.mrf.mxu0
        %2851 = vdwg.mxu0
        %v2852 = vmax.f32 %v2836, 0.0
        %v2853 = vmax.f32 %v2849, 0.0
        %v2854 = vpack.c.bf16 %v2852, %v2852
        %v2855 = vpack.c.bf16 %v2853, %v2853
        %s2856 = scalar_lea.vmem %s531, 1024 [#allocation9]
        %v2857 = vld [vmem:[%s2856] sm:$0xff]
        %v2858 = vld [vmem:[%s2856 + $0x8] sm:$0xff]
        %v2859 = vld [vmem:[%s2856 + $0x10] sm:$0xff]
        %v2860 = vld [vmem:[%s2856 + $0x18] sm:$0xff]
        %v2861 = vld [vmem:[%s2856 + $0x20] sm:$0xff]
        %v2862 = vld [vmem:[%s2856 + $0x28] sm:$0xff]
        %v2863 = vld [vmem:[%s2856 + $0x30] sm:$0xff]
        %v2864 = vld [vmem:[%s2856 + $0x38] sm:$0xff]
        %v2865 = vld [vmem:[%s2856 + $0x40] sm:$0xff]
        %v2866 = vld [vmem:[%s2856 + $0x48] sm:$0xff]
        %v2867 = vld [vmem:[%s2856 + $0x50] sm:$0xff]
        %v2868 = vld [vmem:[%s2856 + $0x58] sm:$0xff]
        %v2869 = vld [vmem:[%s2856 + $0x60] sm:$0xff]
        %v2870 = vld [vmem:[%s2856 + $0x68] sm:$0xff]
        %v2871 = vld [vmem:[%s2856 + $0x70] sm:$0xff]
        %v2872 = vld [vmem:[%s2856 + $0x78] sm:$0xff]
        %v2873 = vld [vmem:[%s2856 + $0x80] sm:$0xff]
        %v2874 = vld [vmem:[%s2856 + $0x88] sm:$0xff]
        %v2875 = vld [vmem:[%s2856 + $0x90] sm:$0xff]
        %v2876 = vld [vmem:[%s2856 + $0x98] sm:$0xff]
        %v2877 = vld [vmem:[%s2856 + $0xa0] sm:$0xff]
        %v2878 = vld [vmem:[%s2856 + $0xa8] sm:$0xff]
        %v2879 = vld [vmem:[%s2856 + $0xb0] sm:$0xff]
        %v2880 = vld [vmem:[%s2856 + $0xb8] sm:$0xff]
        %v2881 = vld [vmem:[%s2856 + $0xc0] sm:$0xff]
        %v2882 = vld [vmem:[%s2856 + $0xc8] sm:$0xff]
        %v2883 = vld [vmem:[%s2856 + $0xd0] sm:$0xff]
        %v2884 = vld [vmem:[%s2856 + $0xd8] sm:$0xff]
        %v2885 = vld [vmem:[%s2856 + $0xe0] sm:$0xff]
        %v2886 = vld [vmem:[%s2856 + $0xe8] sm:$0xff]
        %v2887 = vld [vmem:[%s2856 + $0xf0] sm:$0xff]
        %v2888 = vld [vmem:[%s2856 + $0xf8] sm:$0xff]
        %v2889 = vld [vmem:[%s2856 + $0x100] sm:$0xff]
        %v2890 = vld [vmem:[%s2856 + $0x108] sm:$0xff]
        %v2891 = vld [vmem:[%s2856 + $0x110] sm:$0xff]
        %v2892 = vld [vmem:[%s2856 + $0x118] sm:$0xff]
        %v2893 = vld [vmem:[%s2856 + $0x120] sm:$0xff]
        %v2894 = vld [vmem:[%s2856 + $0x128] sm:$0xff]
        %v2895 = vld [vmem:[%s2856 + $0x130] sm:$0xff]
        %v2896 = vld [vmem:[%s2856 + $0x138] sm:$0xff]
        %v2897 = vld [vmem:[%s2856 + $0x140] sm:$0xff]
        %v2898 = vld [vmem:[%s2856 + $0x148] sm:$0xff]
        %v2899 = vld [vmem:[%s2856 + $0x150] sm:$0xff]
        %v2900 = vld [vmem:[%s2856 + $0x158] sm:$0xff]
        %v2901 = vld [vmem:[%s2856 + $0x160] sm:$0xff]
        %v2902 = vld [vmem:[%s2856 + $0x168] sm:$0xff]
        %v2903 = vld [vmem:[%s2856 + $0x170] sm:$0xff]
        %v2904 = vld [vmem:[%s2856 + $0x178] sm:$0xff]
        %v2905 = vld [vmem:[%s2856 + $0x180] sm:$0xff]
        %v2906 = vld [vmem:[%s2856 + $0x188] sm:$0xff]
        %v2907 = vld [vmem:[%s2856 + $0x190] sm:$0xff]
        %v2908 = vld [vmem:[%s2856 + $0x198] sm:$0xff]
        %v2909 = vld [vmem:[%s2856 + $0x1a0] sm:$0xff]
        %v2910 = vld [vmem:[%s2856 + $0x1a8] sm:$0xff]
        %v2911 = vld [vmem:[%s2856 + $0x1b0] sm:$0xff]
        %v2912 = vld [vmem:[%s2856 + $0x1b8] sm:$0xff]
        %v2913 = vld [vmem:[%s2856 + $0x1c0] sm:$0xff]
        %v2914 = vld [vmem:[%s2856 + $0x1c8] sm:$0xff]
        %v2915 = vld [vmem:[%s2856 + $0x1d0] sm:$0xff]
        %v2916 = vld [vmem:[%s2856 + $0x1d8] sm:$0xff]
        %v2917 = vld [vmem:[%s2856 + $0x1e0] sm:$0xff]
        %v2918 = vld [vmem:[%s2856 + $0x1e8] sm:$0xff]
        %v2919 = vld [vmem:[%s2856 + $0x1f0] sm:$0xff]
        %v2920 = vld [vmem:[%s2856 + $0x1f8] sm:$0xff]
        %s2921 = scalar_lea.vmem %s541, 8 [#allocation10]
        %v2922 = vld [vmem:[%s2921] sm:$0xf]
        %v2924 = vperm.slane %v2922, 0
        %v2925 = vperm.slane %v2922, 1
        %v2926 = vperm.slane %v2922, 2
        %v2927 = vperm.slane %v2922, 3
        %v2996 = vunpack.c.l.b16 %v2857
        %v2997 = vunpack.c.h.b16 %v2857
        %v2998 = vunpack.c.l.b16 %v2858
        %v2999 = vunpack.c.h.b16 %v2858
        %v3000 = vunpack.c.l.b16 %v2859
        %v3001 = vunpack.c.h.b16 %v2859
        %v3002 = vunpack.c.l.b16 %v2860
        %v3003 = vunpack.c.h.b16 %v2860
        %v3004 = vunpack.c.l.b16 %v2861
        %v3005 = vunpack.c.h.b16 %v2861
        %v3006 = vunpack.c.l.b16 %v2862
        %v3007 = vunpack.c.h.b16 %v2862
        %v3008 = vunpack.c.l.b16 %v2863
        %v3009 = vunpack.c.h.b16 %v2863
        %v3010 = vunpack.c.l.b16 %v2864
        %v3011 = vunpack.c.h.b16 %v2864
        %v3012 = vunpack.c.l.b16 %v2865
        %v3013 = vunpack.c.h.b16 %v2865
        %v3014 = vunpack.c.l.b16 %v2866
        %v3015 = vunpack.c.h.b16 %v2866
        %v3016 = vunpack.c.l.b16 %v2867
        %v3017 = vunpack.c.h.b16 %v2867
        %v3018 = vunpack.c.l.b16 %v2868
        %v3019 = vunpack.c.h.b16 %v2868
        %v3020 = vunpack.c.l.b16 %v2869
        %v3021 = vunpack.c.h.b16 %v2869
        %v3022 = vunpack.c.l.b16 %v2870
        %v3023 = vunpack.c.h.b16 %v2870
        %v3024 = vunpack.c.l.b16 %v2871
        %v3025 = vunpack.c.h.b16 %v2871
        %v3026 = vunpack.c.l.b16 %v2872
        %v3027 = vunpack.c.h.b16 %v2872
        %v3028 = vunpack.c.l.b16 %v2873
        %v3029 = vunpack.c.h.b16 %v2873
        %v3030 = vunpack.c.l.b16 %v2874
        %v3031 = vunpack.c.h.b16 %v2874
        %v3032 = vunpack.c.l.b16 %v2875
        %v3033 = vunpack.c.h.b16 %v2875
        %v3034 = vunpack.c.l.b16 %v2876
        %v3035 = vunpack.c.h.b16 %v2876
        %v3036 = vunpack.c.l.b16 %v2877
        %v3037 = vunpack.c.h.b16 %v2877
        %v3038 = vunpack.c.l.b16 %v2878
        %v3039 = vunpack.c.h.b16 %v2878
        %v3040 = vunpack.c.l.b16 %v2879
        %v3041 = vunpack.c.h.b16 %v2879
        %v3042 = vunpack.c.l.b16 %v2880
        %v3043 = vunpack.c.h.b16 %v2880
        %v3044 = vunpack.c.l.b16 %v2881
        %v3045 = vunpack.c.h.b16 %v2881
        %v3046 = vunpack.c.l.b16 %v2882
        %v3047 = vunpack.c.h.b16 %v2882
        %v3048 = vunpack.c.l.b16 %v2883
        %v3049 = vunpack.c.h.b16 %v2883
        %v3050 = vunpack.c.l.b16 %v2884
        %v3051 = vunpack.c.h.b16 %v2884
        %v3052 = vunpack.c.l.b16 %v2885
        %v3053 = vunpack.c.h.b16 %v2885
        %v3054 = vunpack.c.l.b16 %v2886
        %v3055 = vunpack.c.h.b16 %v2886
        %v3056 = vunpack.c.l.b16 %v2887
        %v3057 = vunpack.c.h.b16 %v2887
        %v3058 = vunpack.c.l.b16 %v2888
        %v3059 = vunpack.c.h.b16 %v2888
        %v3060 = vunpack.c.l.b16 %v2889
        %v3061 = vunpack.c.h.b16 %v2889
        %v3062 = vunpack.c.l.b16 %v2890
        %v3063 = vunpack.c.h.b16 %v2890
        %v3064 = vunpack.c.l.b16 %v2891
        %v3065 = vunpack.c.h.b16 %v2891
        %v3066 = vunpack.c.l.b16 %v2892
        %v3067 = vunpack.c.h.b16 %v2892
        %v3068 = vunpack.c.l.b16 %v2893
        %v3069 = vunpack.c.h.b16 %v2893
        %v3070 = vunpack.c.l.b16 %v2894
        %v3071 = vunpack.c.h.b16 %v2894
        %v3072 = vunpack.c.l.b16 %v2895
        %v3073 = vunpack.c.h.b16 %v2895
        %v3074 = vunpack.c.l.b16 %v2896
        %v3075 = vunpack.c.h.b16 %v2896
        %v3076 = vunpack.c.l.b16 %v2897
        %v3077 = vunpack.c.h.b16 %v2897
        %v3078 = vunpack.c.l.b16 %v2898
        %v3079 = vunpack.c.h.b16 %v2898
        %v3080 = vunpack.c.l.b16 %v2899
        %v3081 = vunpack.c.h.b16 %v2899
        %v3082 = vunpack.c.l.b16 %v2900
        %v3083 = vunpack.c.h.b16 %v2900
        %v3084 = vunpack.c.l.b16 %v2901
        %v3085 = vunpack.c.h.b16 %v2901
        %v3086 = vunpack.c.l.b16 %v2902
        %v3087 = vunpack.c.h.b16 %v2902
        %v3088 = vunpack.c.l.b16 %v2903
        %v3089 = vunpack.c.h.b16 %v2903
        %v3090 = vunpack.c.l.b16 %v2904
        %v3091 = vunpack.c.h.b16 %v2904
        %v3092 = vunpack.c.l.b16 %v2905
        %v3093 = vunpack.c.h.b16 %v2905
        %v3094 = vunpack.c.l.b16 %v2906
        %v3095 = vunpack.c.h.b16 %v2906
        %v3096 = vunpack.c.l.b16 %v2907
        %v3097 = vunpack.c.h.b16 %v2907
        %v3098 = vunpack.c.l.b16 %v2908
        %v3099 = vunpack.c.h.b16 %v2908
        %v3100 = vunpack.c.l.b16 %v2909
        %v3101 = vunpack.c.h.b16 %v2909
        %v3102 = vunpack.c.l.b16 %v2910
        %v3103 = vunpack.c.h.b16 %v2910
        %v3104 = vunpack.c.l.b16 %v2911
        %v3105 = vunpack.c.h.b16 %v2911
        %v3106 = vunpack.c.l.b16 %v2912
        %v3107 = vunpack.c.h.b16 %v2912
        %v3108 = vunpack.c.l.b16 %v2913
        %v3109 = vunpack.c.h.b16 %v2913
        %v3110 = vunpack.c.l.b16 %v2914
        %v3111 = vunpack.c.h.b16 %v2914
        %v3112 = vunpack.c.l.b16 %v2915
        %v3113 = vunpack.c.h.b16 %v2915
        %v3114 = vunpack.c.l.b16 %v2916
        %v3115 = vunpack.c.h.b16 %v2916
        %v3116 = vunpack.c.l.b16 %v2917
        %v3117 = vunpack.c.h.b16 %v2917
        %v3118 = vunpack.c.l.b16 %v2918
        %v3119 = vunpack.c.h.b16 %v2918
        %v3120 = vunpack.c.l.b16 %v2919
        %v3121 = vunpack.c.h.b16 %v2919
        %v3122 = vunpack.c.l.b16 %v2920
        %v3123 = vunpack.c.h.b16 %v2920
        %v3124 = vpack.c.b16 %v3000, %v2996
        %v3125 = vpack.c.b16 %v3001, %v2997
        %v3126 = vpack.c.b16 %v3002, %v2998
        %v3127 = vpack.c.b16 %v3003, %v2999
        %v3128 = vpack.c.b16 %v3008, %v3004
        %v3129 = vpack.c.b16 %v3009, %v3005
        %v3130 = vpack.c.b16 %v3010, %v3006
        %v3131 = vpack.c.b16 %v3011, %v3007
        %v3132 = vpack.c.b16 %v3016, %v3012
        %v3133 = vpack.c.b16 %v3017, %v3013
        %v3134 = vpack.c.b16 %v3018, %v3014
        %v3135 = vpack.c.b16 %v3019, %v3015
        %v3136 = vpack.c.b16 %v3024, %v3020
        %v3137 = vpack.c.b16 %v3025, %v3021
        %v3138 = vpack.c.b16 %v3026, %v3022
        %v3139 = vpack.c.b16 %v3027, %v3023
        %v3140 = vpack.c.b16 %v3032, %v3028
        %v3141 = vpack.c.b16 %v3033, %v3029
        %v3142 = vpack.c.b16 %v3034, %v3030
        %v3143 = vpack.c.b16 %v3035, %v3031
        %v3144 = vpack.c.b16 %v3040, %v3036
        %v3145 = vpack.c.b16 %v3041, %v3037
        %v3146 = vpack.c.b16 %v3042, %v3038
        %v3147 = vpack.c.b16 %v3043, %v3039
        %v3148 = vpack.c.b16 %v3048, %v3044
        %v3149 = vpack.c.b16 %v3049, %v3045
        %v3150 = vpack.c.b16 %v3050, %v3046
        %v3151 = vpack.c.b16 %v3051, %v3047
        %v3152 = vpack.c.b16 %v3056, %v3052
        %v3153 = vpack.c.b16 %v3057, %v3053
        %v3154 = vpack.c.b16 %v3058, %v3054
        %v3155 = vpack.c.b16 %v3059, %v3055
        %v3156 = vpack.c.b16 %v3064, %v3060
        %v3157 = vpack.c.b16 %v3065, %v3061
        %v3158 = vpack.c.b16 %v3066, %v3062
        %v3159 = vpack.c.b16 %v3067, %v3063
        %v3160 = vpack.c.b16 %v3072, %v3068
        %v3161 = vpack.c.b16 %v3073, %v3069
        %v3162 = vpack.c.b16 %v3074, %v3070
        %v3163 = vpack.c.b16 %v3075, %v3071
        %v3164 = vpack.c.b16 %v3080, %v3076
        %v3165 = vpack.c.b16 %v3081, %v3077
        %v3166 = vpack.c.b16 %v3082, %v3078
        %v3167 = vpack.c.b16 %v3083, %v3079
        %v3168 = vpack.c.b16 %v3088, %v3084
        %v3169 = vpack.c.b16 %v3089, %v3085
        %v3170 = vpack.c.b16 %v3090, %v3086
        %v3171 = vpack.c.b16 %v3091, %v3087
        %v3172 = vpack.c.b16 %v3096, %v3092
        %v3173 = vpack.c.b16 %v3097, %v3093
        %v3174 = vpack.c.b16 %v3098, %v3094
        %v3175 = vpack.c.b16 %v3099, %v3095
        %v3176 = vpack.c.b16 %v3104, %v3100
        %v3177 = vpack.c.b16 %v3105, %v3101
        %v3178 = vpack.c.b16 %v3106, %v3102
        %v3179 = vpack.c.b16 %v3107, %v3103
        %v3180 = vpack.c.b16 %v3112, %v3108
        %v3181 = vpack.c.b16 %v3113, %v3109
        %v3182 = vpack.c.b16 %v3114, %v3110
        %v3183 = vpack.c.b16 %v3115, %v3111
        %v3184 = vpack.c.b16 %v3120, %v3116
        %v3185 = vpack.c.b16 %v3121, %v3117
        %v3186 = vpack.c.b16 %v3122, %v3118
        %v3187 = vpack.c.b16 %v3123, %v3119
        %3252 = vmatpush.bf16.msra.mxu0 %v3152
        %3253 = vmatpush.bf16.msra.mxu0 %v3148
        %3254 = vmatpush.bf16.msra.mxu0 %v3144
        %3255 = vmatpush.bf16.msra.mxu0 %v3140
        %3256 = vmatpush.bf16.msra.mxu0 %v3136
        %3257 = vmatpush.bf16.msra.mxu0 %v3132
        %3258 = vmatpush.bf16.msra.mxu0 %v3128
        %3259 = vmatpush.bf16.msra.mxu0 %v3124
        %3260 = vmatmul.bf16.gmra.mxu0 %v2854
        %v3261 = vpop.f32.mrf.mxu0
        %v3262 = vadd.f32 %v2924, %v3261
        %v3263 = vpop.f32.mrf.mxu0
        %3264 = vdwg.mxu0
        %3265 = vmatpush.bf16.msra.mxu0 %v3184
        %3266 = vmatpush.bf16.msra.mxu0 %v3180
        %3267 = vmatpush.bf16.msra.mxu0 %v3176
        %3268 = vmatpush.bf16.msra.mxu0 %v3172
        %3269 = vmatpush.bf16.msra.mxu0 %v3168
        %3270 = vmatpush.bf16.msra.mxu0 %v3164
        %3271 = vmatpush.bf16.msra.mxu0 %v3160
        %3272 = vmatpush.bf16.msra.mxu0 %v3156
        %3273 = vmatmul.bf16.gmra.mxu0 %v2855
        %v3274 = vpop.f32.mrf.mxu0
        %v3275 = vadd.f32 %v3262, %v3274
        %v3276 = vpop.f32.mrf.mxu0
        %3277 = vdwg.mxu0
        %3278 = vmatpush.bf16.msra.mxu0 %v3153
        %3279 = vmatpush.bf16.msra.mxu0 %v3149
        %3280 = vmatpush.bf16.msra.mxu0 %v3145
        %3281 = vmatpush.bf16.msra.mxu0 %v3141
        %3282 = vmatpush.bf16.msra.mxu0 %v3137
        %3283 = vmatpush.bf16.msra.mxu0 %v3133
        %3284 = vmatpush.bf16.msra.mxu0 %v3129
        %3285 = vmatpush.bf16.msra.mxu0 %v3125
        %3286 = vmatmul.bf16.gmra.mxu0 %v2854
        %v3287 = vpop.f32.mrf.mxu0
        %v3288 = vadd.f32 %v2925, %v3287
        %v3289 = vpop.f32.mrf.mxu0
        %3290 = vdwg.mxu0
        %3291 = vmatpush.bf16.msra.mxu0 %v3185
        %3292 = vmatpush.bf16.msra.mxu0 %v3181
        %3293 = vmatpush.bf16.msra.mxu0 %v3177
        %3294 = vmatpush.bf16.msra.mxu0 %v3173
        %3295 = vmatpush.bf16.msra.mxu0 %v3169
        %3296 = vmatpush.bf16.msra.mxu0 %v3165
        %3297 = vmatpush.bf16.msra.mxu0 %v3161
        %3298 = vmatpush.bf16.msra.mxu0 %v3157
        %3299 = vmatmul.bf16.gmra.mxu0 %v2855
        %v3300 = vpop.f32.mrf.mxu0
        %v3301 = vadd.f32 %v3288, %v3300
        %v3302 = vpop.f32.mrf.mxu0
        %3303 = vdwg.mxu0
        %3304 = vmatpush.bf16.msra.mxu0 %v3154
        %3305 = vmatpush.bf16.msra.mxu0 %v3150
        %3306 = vmatpush.bf16.msra.mxu0 %v3146
        %3307 = vmatpush.bf16.msra.mxu0 %v3142
        %3308 = vmatpush.bf16.msra.mxu0 %v3138
        %3309 = vmatpush.bf16.msra.mxu0 %v3134
        %3310 = vmatpush.bf16.msra.mxu0 %v3130
        %3311 = vmatpush.bf16.msra.mxu0 %v3126
        %3312 = vmatmul.bf16.gmra.mxu0 %v2854
        %v3313 = vpop.f32.mrf.mxu0
        %v3314 = vadd.f32 %v2926, %v3313
        %v3315 = vpop.f32.mrf.mxu0
        %3316 = vdwg.mxu0
        %3317 = vmatpush.bf16.msra.mxu0 %v3186
        %3318 = vmatpush.bf16.msra.mxu0 %v3182
        %3319 = vmatpush.bf16.msra.mxu0 %v3178
        %3320 = vmatpush.bf16.msra.mxu0 %v3174
        %3321 = vmatpush.bf16.msra.mxu0 %v3170
        %3322 = vmatpush.bf16.msra.mxu0 %v3166
        %3323 = vmatpush.bf16.msra.mxu0 %v3162
        %3324 = vmatpush.bf16.msra.mxu0 %v3158
        %3325 = vmatmul.bf16.gmra.mxu0 %v2855
        %v3326 = vpop.f32.mrf.mxu0
        %v3327 = vadd.f32 %v3314, %v3326
        %v3328 = vpop.f32.mrf.mxu0
        %3329 = vdwg.mxu0
        %3330 = vmatpush.bf16.msra.mxu0 %v3155
        %3331 = vmatpush.bf16.msra.mxu0 %v3151
        %3332 = vmatpush.bf16.msra.mxu0 %v3147
        %3333 = vmatpush.bf16.msra.mxu0 %v3143
        %3334 = vmatpush.bf16.msra.mxu0 %v3139
        %3335 = vmatpush.bf16.msra.mxu0 %v3135
        %3336 = vmatpush.bf16.msra.mxu0 %v3131
        %3337 = vmatpush.bf16.msra.mxu0 %v3127
        %3338 = vmatmul.bf16.gmra.mxu0 %v2854
        %v3339 = vpop.f32.mrf.mxu0
        %v3340 = vadd.f32 %v2927, %v3339
        %v3341 = vpop.f32.mrf.mxu0
        %3342 = vdwg.mxu0
        %3343 = vmatpush.bf16.msra.mxu0 %v3187
        %3344 = vmatpush.bf16.msra.mxu0 %v3183
        %3345 = vmatpush.bf16.msra.mxu0 %v3179
        %3346 = vmatpush.bf16.msra.mxu0 %v3175
        %3347 = vmatpush.bf16.msra.mxu0 %v3171
        %3348 = vmatpush.bf16.msra.mxu0 %v3167
        %3349 = vmatpush.bf16.msra.mxu0 %v3163
        %3350 = vmatpush.bf16.msra.mxu0 %v3159
        %3351 = vmatmul.bf16.gmra.mxu0 %v2855
        %v3352 = vpop.f32.mrf.mxu0
        %v3353 = vadd.f32 %v3340, %v3352
        %v3354 = vpop.f32.mrf.mxu0
        %3355 = vdwg.mxu0
        %v3356 = vmax.f32 %v3275, 0.0
        %v3357 = vmax.f32 %v3301, 0.0
        %v3358 = vmax.f32 %v3327, 0.0
        %v3359 = vmax.f32 %v3353, 0.0
        %v3360 = vpack.c.bf16 %v3356, %v3356
        %v3361 = vpack.c.bf16 %v3357, %v3357
        %v3362 = vpack.c.bf16 %v3358, %v3358
        %v3363 = vpack.c.bf16 %v3359, %v3359
        %s3364 = scalar_lea.vmem %s551, 512 [#allocation12]
        %v3365 = vld [vmem:[%s3364] sm:$0xf]
        %v3366 = vld [vmem:[%s3364 + $0x4] sm:$0xf]
        %v3367 = vld [vmem:[%s3364 + $0x8] sm:$0xf]
        %v3368 = vld [vmem:[%s3364 + $0xc] sm:$0xf]
        %v3369 = vld [vmem:[%s3364 + $0x10] sm:$0xf]
        %v3370 = vld [vmem:[%s3364 + $0x14] sm:$0xf]
        %v3371 = vld [vmem:[%s3364 + $0x18] sm:$0xf]
        %v3372 = vld [vmem:[%s3364 + $0x1c] sm:$0xf]
        %v3373 = vld [vmem:[%s3364 + $0x20] sm:$0xf]
        %v3374 = vld [vmem:[%s3364 + $0x24] sm:$0xf]
        %v3375 = vld [vmem:[%s3364 + $0x28] sm:$0xf]
        %v3376 = vld [vmem:[%s3364 + $0x2c] sm:$0xf]
        %v3377 = vld [vmem:[%s3364 + $0x30] sm:$0xf]
        %v3378 = vld [vmem:[%s3364 + $0x34] sm:$0xf]
        %v3379 = vld [vmem:[%s3364 + $0x38] sm:$0xf]
        %v3380 = vld [vmem:[%s3364 + $0x3c] sm:$0xf]
        %v3381 = vld [vmem:[%s3364 + $0x40] sm:$0xf]
        %v3382 = vld [vmem:[%s3364 + $0x44] sm:$0xf]
        %v3383 = vld [vmem:[%s3364 + $0x48] sm:$0xf]
        %v3384 = vld [vmem:[%s3364 + $0x4c] sm:$0xf]
        %v3385 = vld [vmem:[%s3364 + $0x50] sm:$0xf]
        %v3386 = vld [vmem:[%s3364 + $0x54] sm:$0xf]
        %v3387 = vld [vmem:[%s3364 + $0x58] sm:$0xf]
        %v3388 = vld [vmem:[%s3364 + $0x5c] sm:$0xf]
        %v3389 = vld [vmem:[%s3364 + $0x60] sm:$0xf]
        %v3390 = vld [vmem:[%s3364 + $0x64] sm:$0xf]
        %v3391 = vld [vmem:[%s3364 + $0x68] sm:$0xf]
        %v3392 = vld [vmem:[%s3364 + $0x6c] sm:$0xf]
        %v3393 = vld [vmem:[%s3364 + $0x70] sm:$0xf]
        %v3394 = vld [vmem:[%s3364 + $0x74] sm:$0xf]
        %v3395 = vld [vmem:[%s3364 + $0x78] sm:$0xf]
        %v3396 = vld [vmem:[%s3364 + $0x7c] sm:$0xf]
        %v3397 = vld [vmem:[%s3364 + $0x80] sm:$0xf]
        %v3398 = vld [vmem:[%s3364 + $0x84] sm:$0xf]
        %v3399 = vld [vmem:[%s3364 + $0x88] sm:$0xf]
        %v3400 = vld [vmem:[%s3364 + $0x8c] sm:$0xf]
        %v3401 = vld [vmem:[%s3364 + $0x90] sm:$0xf]
        %v3402 = vld [vmem:[%s3364 + $0x94] sm:$0xf]
        %v3403 = vld [vmem:[%s3364 + $0x98] sm:$0xf]
        %v3404 = vld [vmem:[%s3364 + $0x9c] sm:$0xf]
        %v3405 = vld [vmem:[%s3364 + $0xa0] sm:$0xf]
        %v3406 = vld [vmem:[%s3364 + $0xa4] sm:$0xf]
        %v3407 = vld [vmem:[%s3364 + $0xa8] sm:$0xf]
        %v3408 = vld [vmem:[%s3364 + $0xac] sm:$0xf]
        %v3409 = vld [vmem:[%s3364 + $0xb0] sm:$0xf]
        %v3410 = vld [vmem:[%s3364 + $0xb4] sm:$0xf]
        %v3411 = vld [vmem:[%s3364 + $0xb8] sm:$0xf]
        %v3412 = vld [vmem:[%s3364 + $0xbc] sm:$0xf]
        %v3413 = vld [vmem:[%s3364 + $0xc0] sm:$0xf]
        %v3414 = vld [vmem:[%s3364 + $0xc4] sm:$0xf]
        %v3415 = vld [vmem:[%s3364 + $0xc8] sm:$0xf]
        %v3416 = vld [vmem:[%s3364 + $0xcc] sm:$0xf]
        %v3417 = vld [vmem:[%s3364 + $0xd0] sm:$0xf]
        %v3418 = vld [vmem:[%s3364 + $0xd4] sm:$0xf]
        %v3419 = vld [vmem:[%s3364 + $0xd8] sm:$0xf]
        %v3420 = vld [vmem:[%s3364 + $0xdc] sm:$0xf]
        %v3421 = vld [vmem:[%s3364 + $0xe0] sm:$0xf]
        %v3422 = vld [vmem:[%s3364 + $0xe4] sm:$0xf]
        %v3423 = vld [vmem:[%s3364 + $0xe8] sm:$0xf]
        %v3424 = vld [vmem:[%s3364 + $0xec] sm:$0xf]
        %v3425 = vld [vmem:[%s3364 + $0xf0] sm:$0xf]
        %v3426 = vld [vmem:[%s3364 + $0xf4] sm:$0xf]
        %v3427 = vld [vmem:[%s3364 + $0xf8] sm:$0xf]
        %v3428 = vld [vmem:[%s3364 + $0xfc] sm:$0xf]
        %s3429 = scalar_lea.vmem %s561, 2 [#allocation13]
        %v3430 = vld [vmem:[%s3429] sm:$0x1]
        %v3432 = vperm.slane %v3430, 0
        %v3498 = vunpack.c.l.b16 %v3365
        %v3499 = vunpack.c.l.b16 %v3366
        %v3500 = vunpack.c.l.b16 %v3367
        %v3501 = vunpack.c.l.b16 %v3368
        %v3502 = vunpack.c.l.b16 %v3369
        %v3503 = vunpack.c.l.b16 %v3370
        %v3504 = vunpack.c.l.b16 %v3371
        %v3505 = vunpack.c.l.b16 %v3372
        %v3506 = vunpack.c.l.b16 %v3373
        %v3507 = vunpack.c.l.b16 %v3374
        %v3508 = vunpack.c.l.b16 %v3375
        %v3509 = vunpack.c.l.b16 %v3376
        %v3510 = vunpack.c.l.b16 %v3377
        %v3511 = vunpack.c.l.b16 %v3378
        %v3512 = vunpack.c.l.b16 %v3379
        %v3513 = vunpack.c.l.b16 %v3380
        %v3514 = vunpack.c.l.b16 %v3381
        %v3515 = vunpack.c.l.b16 %v3382
        %v3516 = vunpack.c.l.b16 %v3383
        %v3517 = vunpack.c.l.b16 %v3384
        %v3518 = vunpack.c.l.b16 %v3385
        %v3519 = vunpack.c.l.b16 %v3386
        %v3520 = vunpack.c.l.b16 %v3387
        %v3521 = vunpack.c.l.b16 %v3388
        %v3522 = vunpack.c.l.b16 %v3389
        %v3523 = vunpack.c.l.b16 %v3390
        %v3524 = vunpack.c.l.b16 %v3391
        %v3525 = vunpack.c.l.b16 %v3392
        %v3526 = vunpack.c.l.b16 %v3393
        %v3527 = vunpack.c.l.b16 %v3394
        %v3528 = vunpack.c.l.b16 %v3395
        %v3529 = vunpack.c.l.b16 %v3396
        %v3530 = vunpack.c.l.b16 %v3397
        %v3531 = vunpack.c.l.b16 %v3398
        %v3532 = vunpack.c.l.b16 %v3399
        %v3533 = vunpack.c.l.b16 %v3400
        %v3534 = vunpack.c.l.b16 %v3401
        %v3535 = vunpack.c.l.b16 %v3402
        %v3536 = vunpack.c.l.b16 %v3403
        %v3537 = vunpack.c.l.b16 %v3404
        %v3538 = vunpack.c.l.b16 %v3405
        %v3539 = vunpack.c.l.b16 %v3406
        %v3540 = vunpack.c.l.b16 %v3407
        %v3541 = vunpack.c.l.b16 %v3408
        %v3542 = vunpack.c.l.b16 %v3409
        %v3543 = vunpack.c.l.b16 %v3410
        %v3544 = vunpack.c.l.b16 %v3411
        %v3545 = vunpack.c.l.b16 %v3412
        %v3546 = vunpack.c.l.b16 %v3413
        %v3547 = vunpack.c.l.b16 %v3414
        %v3548 = vunpack.c.l.b16 %v3415
        %v3549 = vunpack.c.l.b16 %v3416
        %v3550 = vunpack.c.l.b16 %v3417
        %v3551 = vunpack.c.l.b16 %v3418
        %v3552 = vunpack.c.l.b16 %v3419
        %v3553 = vunpack.c.l.b16 %v3420
        %v3554 = vunpack.c.l.b16 %v3421
        %v3555 = vunpack.c.l.b16 %v3422
        %v3556 = vunpack.c.l.b16 %v3423
        %v3557 = vunpack.c.l.b16 %v3424
        %v3558 = vunpack.c.l.b16 %v3425
        %v3559 = vunpack.c.l.b16 %v3426
        %v3560 = vunpack.c.l.b16 %v3427
        %v3561 = vunpack.c.l.b16 %v3428
        %v3562 = vpack.c.b16 %v3499, %v3498
        %v3563 = vpack.c.b16 %v3501, %v3500
        %v3564 = vpack.c.b16 %v3503, %v3502
        %v3565 = vpack.c.b16 %v3505, %v3504
        %v3566 = vpack.c.b16 %v3507, %v3506
        %v3567 = vpack.c.b16 %v3509, %v3508
        %v3568 = vpack.c.b16 %v3511, %v3510
        %v3569 = vpack.c.b16 %v3513, %v3512
        %v3570 = vpack.c.b16 %v3515, %v3514
        %v3571 = vpack.c.b16 %v3517, %v3516
        %v3572 = vpack.c.b16 %v3519, %v3518
        %v3573 = vpack.c.b16 %v3521, %v3520
        %v3574 = vpack.c.b16 %v3523, %v3522
        %v3575 = vpack.c.b16 %v3525, %v3524
        %v3576 = vpack.c.b16 %v3527, %v3526
        %v3577 = vpack.c.b16 %v3529, %v3528
        %v3578 = vpack.c.b16 %v3531, %v3530
        %v3579 = vpack.c.b16 %v3533, %v3532
        %v3580 = vpack.c.b16 %v3535, %v3534
        %v3581 = vpack.c.b16 %v3537, %v3536
        %v3582 = vpack.c.b16 %v3539, %v3538
        %v3583 = vpack.c.b16 %v3541, %v3540
        %v3584 = vpack.c.b16 %v3543, %v3542
        %v3585 = vpack.c.b16 %v3545, %v3544
        %v3586 = vpack.c.b16 %v3547, %v3546
        %v3587 = vpack.c.b16 %v3549, %v3548
        %v3588 = vpack.c.b16 %v3551, %v3550
        %v3589 = vpack.c.b16 %v3553, %v3552
        %v3590 = vpack.c.b16 %v3555, %v3554
        %v3591 = vpack.c.b16 %v3557, %v3556
        %v3592 = vpack.c.b16 %v3559, %v3558
        %v3593 = vpack.c.b16 %v3561, %v3560
        %3626 = vmatpush.bf16.msra.mxu0 %v3569
        %3627 = vmatpush.bf16.msra.mxu0 %v3568
        %3628 = vmatpush.bf16.msra.mxu0 %v3567
        %3629 = vmatpush.bf16.msra.mxu0 %v3566
        %3630 = vmatpush.bf16.msra.mxu0 %v3565
        %3631 = vmatpush.bf16.msra.mxu0 %v3564
        %3632 = vmatpush.bf16.msra.mxu0 %v3563
        %3633 = vmatpush.bf16.msra.mxu0 %v3562
        %3634 = vmatmul.bf16.gmra.mxu0 %v3360
        %v3635 = vpop.f32.mrf.mxu0
        %v3636 = vadd.f32 %v3432, %v3635
        %v3637 = vpop.f32.mrf.mxu0
        %3638 = vdwg.mxu0
        %3639 = vmatpush.bf16.msra.mxu0 %v3577
        %3640 = vmatpush.bf16.msra.mxu0 %v3576
        %3641 = vmatpush.bf16.msra.mxu0 %v3575
        %3642 = vmatpush.bf16.msra.mxu0 %v3574
        %3643 = vmatpush.bf16.msra.mxu0 %v3573
        %3644 = vmatpush.bf16.msra.mxu0 %v3572
        %3645 = vmatpush.bf16.msra.mxu0 %v3571
        %3646 = vmatpush.bf16.msra.mxu0 %v3570
        %3647 = vmatmul.bf16.gmra.mxu0 %v3361
        %v3648 = vpop.f32.mrf.mxu0
        %v3649 = vadd.f32 %v3636, %v3648
        %v3650 = vpop.f32.mrf.mxu0
        %3651 = vdwg.mxu0
        %3652 = vmatpush.bf16.msra.mxu0 %v3585
        %3653 = vmatpush.bf16.msra.mxu0 %v3584
        %3654 = vmatpush.bf16.msra.mxu0 %v3583
        %3655 = vmatpush.bf16.msra.mxu0 %v3582
        %3656 = vmatpush.bf16.msra.mxu0 %v3581
        %3657 = vmatpush.bf16.msra.mxu0 %v3580
        %3658 = vmatpush.bf16.msra.mxu0 %v3579
        %3659 = vmatpush.bf16.msra.mxu0 %v3578
        %3660 = vmatmul.bf16.gmra.mxu0 %v3362
        %v3661 = vpop.f32.mrf.mxu0
        %v3662 = vadd.f32 %v3649, %v3661
        %v3663 = vpop.f32.mrf.mxu0
        %3664 = vdwg.mxu0
        %3665 = vmatpush.bf16.msra.mxu0 %v3593
        %3666 = vmatpush.bf16.msra.mxu0 %v3592
        %3667 = vmatpush.bf16.msra.mxu0 %v3591
        %3668 = vmatpush.bf16.msra.mxu0 %v3590
        %3669 = vmatpush.bf16.msra.mxu0 %v3589
        %3670 = vmatpush.bf16.msra.mxu0 %v3588
        %3671 = vmatpush.bf16.msra.mxu0 %v3587
        %3672 = vmatpush.bf16.msra.mxu0 %v3586
        %3673 = vmatmul.bf16.gmra.mxu0 %v3363
        %v3674 = vpop.f32.mrf.mxu0
        %v3675 = vadd.f32 %v3662, %v3674
        %v3676 = vpop.f32.mrf.mxu0
        %3677 = vdwg.mxu0
        %s3678 = scalar_lea.vmem %s642, 16
        %3679 = vst.msk [vmem:[%s3678] sm:$0xff] %vm1760, %v3675
        %v3680 = vpack.c.bf16 %v805, %v805
        %s3681 = scalar_lea.vmem %s511, 384 [#allocation6]
        %v3682 = vld [vmem:[%s3681] sm:$0xff]
        %v3683 = vld [vmem:[%s3681 + $0x8] sm:$0xff]
        %v3684 = vld [vmem:[%s3681 + $0x10] sm:$0xff]
        %v3685 = vld [vmem:[%s3681 + $0x18] sm:$0xff]
        %v3686 = vld [vmem:[%s3681 + $0x20] sm:$0xff]
        %v3687 = vld [vmem:[%s3681 + $0x28] sm:$0xff]
        %v3688 = vld [vmem:[%s3681 + $0x30] sm:$0xff]
        %v3689 = vld [vmem:[%s3681 + $0x38] sm:$0xff]
        %v3690 = vld [vmem:[%s3681 + $0x40] sm:$0xff]
        %v3691 = vld [vmem:[%s3681 + $0x48] sm:$0xff]
        %v3692 = vld [vmem:[%s3681 + $0x50] sm:$0xff]
        %v3693 = vld [vmem:[%s3681 + $0x58] sm:$0xff]
        %v3694 = vld [vmem:[%s3681 + $0x60] sm:$0xff]
        %v3695 = vld [vmem:[%s3681 + $0x68] sm:$0xff]
        %v3696 = vld [vmem:[%s3681 + $0x70] sm:$0xff]
        %v3697 = vld [vmem:[%s3681 + $0x78] sm:$0xff]
        %s3698 = scalar_lea.vmem %s521, 6 [#allocation7]
        %v3699 = vld [vmem:[%s3698] sm:$0x3]
        %v3701 = vperm.slane %v3699, 0
        %v3702 = vperm.slane %v3699, 1
        %v3721 = vunpack.c.l.b16 %v3682
        %v3722 = vunpack.c.h.b16 %v3682
        %v3723 = vunpack.c.l.b16 %v3683
        %v3724 = vunpack.c.h.b16 %v3683
        %v3725 = vunpack.c.l.b16 %v3684
        %v3726 = vunpack.c.h.b16 %v3684
        %v3727 = vunpack.c.l.b16 %v3685
        %v3728 = vunpack.c.h.b16 %v3685
        %v3729 = vunpack.c.l.b16 %v3686
        %v3730 = vunpack.c.h.b16 %v3686
        %v3731 = vunpack.c.l.b16 %v3687
        %v3732 = vunpack.c.h.b16 %v3687
        %v3733 = vunpack.c.l.b16 %v3688
        %v3734 = vunpack.c.h.b16 %v3688
        %v3735 = vunpack.c.l.b16 %v3689
        %v3736 = vunpack.c.h.b16 %v3689
        %v3737 = vunpack.c.l.b16 %v3690
        %v3738 = vunpack.c.h.b16 %v3690
        %v3739 = vunpack.c.l.b16 %v3691
        %v3740 = vunpack.c.h.b16 %v3691
        %v3741 = vunpack.c.l.b16 %v3692
        %v3742 = vunpack.c.h.b16 %v3692
        %v3743 = vunpack.c.l.b16 %v3693
        %v3744 = vunpack.c.h.b16 %v3693
        %v3745 = vunpack.c.l.b16 %v3694
        %v3746 = vunpack.c.h.b16 %v3694
        %v3747 = vunpack.c.l.b16 %v3695
        %v3748 = vunpack.c.h.b16 %v3695
        %v3749 = vunpack.c.l.b16 %v3696
        %v3750 = vunpack.c.h.b16 %v3696
        %v3751 = vunpack.c.l.b16 %v3697
        %v3752 = vunpack.c.h.b16 %v3697
        %v3753 = vpack.c.b16 %v3723, %v3721
        %v3754 = vpack.c.b16 %v3724, %v3722
        %v3755 = vpack.c.b16 %v3727, %v3725
        %v3756 = vpack.c.b16 %v3728, %v3726
        %v3757 = vpack.c.b16 %v3731, %v3729
        %v3758 = vpack.c.b16 %v3732, %v3730
        %v3759 = vpack.c.b16 %v3735, %v3733
        %v3760 = vpack.c.b16 %v3736, %v3734
        %v3761 = vpack.c.b16 %v3739, %v3737
        %v3762 = vpack.c.b16 %v3740, %v3738
        %v3763 = vpack.c.b16 %v3743, %v3741
        %v3764 = vpack.c.b16 %v3744, %v3742
        %v3765 = vpack.c.b16 %v3747, %v3745
        %v3766 = vpack.c.b16 %v3748, %v3746
        %v3767 = vpack.c.b16 %v3751, %v3749
        %v3768 = vpack.c.b16 %v3752, %v3750
        %3785 = vmatpush.bf16.msra.mxu0 %v3767
        %3786 = vmatpush.bf16.msra.mxu0 %v3765
        %3787 = vmatpush.bf16.msra.mxu0 %v3763
        %3788 = vmatpush.bf16.msra.mxu0 %v3761
        %3789 = vmatpush.bf16.msra.mxu0 %v3759
        %3790 = vmatpush.bf16.msra.mxu0 %v3757
        %3791 = vmatpush.bf16.msra.mxu0 %v3755
        %3792 = vmatpush.bf16.msra.mxu0 %v3753
        %3793 = vmatmul.bf16.gmra.mxu0 %v3680
        %v3794 = vpop.f32.mrf.mxu0
        %v3795 = vadd.f32 %v3701, %v3794
        %v3796 = vpop.f32.mrf.mxu0
        %3797 = vdwg.mxu0
        %3798 = vmatpush.bf16.msra.mxu0 %v3768
        %3799 = vmatpush.bf16.msra.mxu0 %v3766
        %3800 = vmatpush.bf16.msra.mxu0 %v3764
        %3801 = vmatpush.bf16.msra.mxu0 %v3762
        %3802 = vmatpush.bf16.msra.mxu0 %v3760
        %3803 = vmatpush.bf16.msra.mxu0 %v3758
        %3804 = vmatpush.bf16.msra.mxu0 %v3756
        %3805 = vmatpush.bf16.msra.mxu0 %v3754
        %3806 = vmatmul.bf16.gmra.mxu0 %v3680
        %v3807 = vpop.f32.mrf.mxu0
        %v3808 = vadd.f32 %v3702, %v3807
        %v3809 = vpop.f32.mrf.mxu0
        %3810 = vdwg.mxu0
        %v3811 = vmax.f32 %v3795, 0.0
        %v3812 = vmax.f32 %v3808, 0.0
        %v3813 = vpack.c.bf16 %v3811, %v3811
        %v3814 = vpack.c.bf16 %v3812, %v3812
        %s3815 = scalar_lea.vmem %s531, 1536 [#allocation9]
        %v3816 = vld [vmem:[%s3815] sm:$0xff]
        %v3817 = vld [vmem:[%s3815 + $0x8] sm:$0xff]
        %v3818 = vld [vmem:[%s3815 + $0x10] sm:$0xff]
        %v3819 = vld [vmem:[%s3815 + $0x18] sm:$0xff]
        %v3820 = vld [vmem:[%s3815 + $0x20] sm:$0xff]
        %v3821 = vld [vmem:[%s3815 + $0x28] sm:$0xff]
        %v3822 = vld [vmem:[%s3815 + $0x30] sm:$0xff]
        %v3823 = vld [vmem:[%s3815 + $0x38] sm:$0xff]
        %v3824 = vld [vmem:[%s3815 + $0x40] sm:$0xff]
        %v3825 = vld [vmem:[%s3815 + $0x48] sm:$0xff]
        %v3826 = vld [vmem:[%s3815 + $0x50] sm:$0xff]
        %v3827 = vld [vmem:[%s3815 + $0x58] sm:$0xff]
        %v3828 = vld [vmem:[%s3815 + $0x60] sm:$0xff]
        %v3829 = vld [vmem:[%s3815 + $0x68] sm:$0xff]
        %v3830 = vld [vmem:[%s3815 + $0x70] sm:$0xff]
        %v3831 = vld [vmem:[%s3815 + $0x78] sm:$0xff]
        %v3832 = vld [vmem:[%s3815 + $0x80] sm:$0xff]
        %v3833 = vld [vmem:[%s3815 + $0x88] sm:$0xff]
        %v3834 = vld [vmem:[%s3815 + $0x90] sm:$0xff]
        %v3835 = vld [vmem:[%s3815 + $0x98] sm:$0xff]
        %v3836 = vld [vmem:[%s3815 + $0xa0] sm:$0xff]
        %v3837 = vld [vmem:[%s3815 + $0xa8] sm:$0xff]
        %v3838 = vld [vmem:[%s3815 + $0xb0] sm:$0xff]
        %v3839 = vld [vmem:[%s3815 + $0xb8] sm:$0xff]
        %v3840 = vld [vmem:[%s3815 + $0xc0] sm:$0xff]
        %v3841 = vld [vmem:[%s3815 + $0xc8] sm:$0xff]
        %v3842 = vld [vmem:[%s3815 + $0xd0] sm:$0xff]
        %v3843 = vld [vmem:[%s3815 + $0xd8] sm:$0xff]
        %v3844 = vld [vmem:[%s3815 + $0xe0] sm:$0xff]
        %v3845 = vld [vmem:[%s3815 + $0xe8] sm:$0xff]
        %v3846 = vld [vmem:[%s3815 + $0xf0] sm:$0xff]
        %v3847 = vld [vmem:[%s3815 + $0xf8] sm:$0xff]
        %v3848 = vld [vmem:[%s3815 + $0x100] sm:$0xff]
        %v3849 = vld [vmem:[%s3815 + $0x108] sm:$0xff]
        %v3850 = vld [vmem:[%s3815 + $0x110] sm:$0xff]
        %v3851 = vld [vmem:[%s3815 + $0x118] sm:$0xff]
        %v3852 = vld [vmem:[%s3815 + $0x120] sm:$0xff]
        %v3853 = vld [vmem:[%s3815 + $0x128] sm:$0xff]
        %v3854 = vld [vmem:[%s3815 + $0x130] sm:$0xff]
        %v3855 = vld [vmem:[%s3815 + $0x138] sm:$0xff]
        %v3856 = vld [vmem:[%s3815 + $0x140] sm:$0xff]
        %v3857 = vld [vmem:[%s3815 + $0x148] sm:$0xff]
        %v3858 = vld [vmem:[%s3815 + $0x150] sm:$0xff]
        %v3859 = vld [vmem:[%s3815 + $0x158] sm:$0xff]
        %v3860 = vld [vmem:[%s3815 + $0x160] sm:$0xff]
        %v3861 = vld [vmem:[%s3815 + $0x168] sm:$0xff]
        %v3862 = vld [vmem:[%s3815 + $0x170] sm:$0xff]
        %v3863 = vld [vmem:[%s3815 + $0x178] sm:$0xff]
        %v3864 = vld [vmem:[%s3815 + $0x180] sm:$0xff]
        %v3865 = vld [vmem:[%s3815 + $0x188] sm:$0xff]
        %v3866 = vld [vmem:[%s3815 + $0x190] sm:$0xff]
        %v3867 = vld [vmem:[%s3815 + $0x198] sm:$0xff]
        %v3868 = vld [vmem:[%s3815 + $0x1a0] sm:$0xff]
        %v3869 = vld [vmem:[%s3815 + $0x1a8] sm:$0xff]
        %v3870 = vld [vmem:[%s3815 + $0x1b0] sm:$0xff]
        %v3871 = vld [vmem:[%s3815 + $0x1b8] sm:$0xff]
        %v3872 = vld [vmem:[%s3815 + $0x1c0] sm:$0xff]
        %v3873 = vld [vmem:[%s3815 + $0x1c8] sm:$0xff]
        %v3874 = vld [vmem:[%s3815 + $0x1d0] sm:$0xff]
        %v3875 = vld [vmem:[%s3815 + $0x1d8] sm:$0xff]
        %v3876 = vld [vmem:[%s3815 + $0x1e0] sm:$0xff]
        %v3877 = vld [vmem:[%s3815 + $0x1e8] sm:$0xff]
        %v3878 = vld [vmem:[%s3815 + $0x1f0] sm:$0xff]
        %v3879 = vld [vmem:[%s3815 + $0x1f8] sm:$0xff]
        %s3880 = scalar_lea.vmem %s541, 12 [#allocation10]
        %v3881 = vld [vmem:[%s3880] sm:$0xf]
        %v3883 = vperm.slane %v3881, 0
        %v3884 = vperm.slane %v3881, 1
        %v3885 = vperm.slane %v3881, 2
        %v3886 = vperm.slane %v3881, 3
        %v3955 = vunpack.c.l.b16 %v3816
        %v3956 = vunpack.c.h.b16 %v3816
        %v3957 = vunpack.c.l.b16 %v3817
        %v3958 = vunpack.c.h.b16 %v3817
        %v3959 = vunpack.c.l.b16 %v3818
        %v3960 = vunpack.c.h.b16 %v3818
        %v3961 = vunpack.c.l.b16 %v3819
        %v3962 = vunpack.c.h.b16 %v3819
        %v3963 = vunpack.c.l.b16 %v3820
        %v3964 = vunpack.c.h.b16 %v3820
        %v3965 = vunpack.c.l.b16 %v3821
        %v3966 = vunpack.c.h.b16 %v3821
        %v3967 = vunpack.c.l.b16 %v3822
        %v3968 = vunpack.c.h.b16 %v3822
        %v3969 = vunpack.c.l.b16 %v3823
        %v3970 = vunpack.c.h.b16 %v3823
        %v3971 = vunpack.c.l.b16 %v3824
        %v3972 = vunpack.c.h.b16 %v3824
        %v3973 = vunpack.c.l.b16 %v3825
        %v3974 = vunpack.c.h.b16 %v3825
        %v3975 = vunpack.c.l.b16 %v3826
        %v3976 = vunpack.c.h.b16 %v3826
        %v3977 = vunpack.c.l.b16 %v3827
        %v3978 = vunpack.c.h.b16 %v3827
        %v3979 = vunpack.c.l.b16 %v3828
        %v3980 = vunpack.c.h.b16 %v3828
        %v3981 = vunpack.c.l.b16 %v3829
        %v3982 = vunpack.c.h.b16 %v3829
        %v3983 = vunpack.c.l.b16 %v3830
        %v3984 = vunpack.c.h.b16 %v3830
        %v3985 = vunpack.c.l.b16 %v3831
        %v3986 = vunpack.c.h.b16 %v3831
        %v3987 = vunpack.c.l.b16 %v3832
        %v3988 = vunpack.c.h.b16 %v3832
        %v3989 = vunpack.c.l.b16 %v3833
        %v3990 = vunpack.c.h.b16 %v3833
        %v3991 = vunpack.c.l.b16 %v3834
        %v3992 = vunpack.c.h.b16 %v3834
        %v3993 = vunpack.c.l.b16 %v3835
        %v3994 = vunpack.c.h.b16 %v3835
        %v3995 = vunpack.c.l.b16 %v3836
        %v3996 = vunpack.c.h.b16 %v3836
        %v3997 = vunpack.c.l.b16 %v3837
        %v3998 = vunpack.c.h.b16 %v3837
        %v3999 = vunpack.c.l.b16 %v3838
        %v4000 = vunpack.c.h.b16 %v3838
        %v4001 = vunpack.c.l.b16 %v3839
        %v4002 = vunpack.c.h.b16 %v3839
        %v4003 = vunpack.c.l.b16 %v3840
        %v4004 = vunpack.c.h.b16 %v3840
        %v4005 = vunpack.c.l.b16 %v3841
        %v4006 = vunpack.c.h.b16 %v3841
        %v4007 = vunpack.c.l.b16 %v3842
        %v4008 = vunpack.c.h.b16 %v3842
        %v4009 = vunpack.c.l.b16 %v3843
        %v4010 = vunpack.c.h.b16 %v3843
        %v4011 = vunpack.c.l.b16 %v3844
        %v4012 = vunpack.c.h.b16 %v3844
        %v4013 = vunpack.c.l.b16 %v3845
        %v4014 = vunpack.c.h.b16 %v3845
        %v4015 = vunpack.c.l.b16 %v3846
        %v4016 = vunpack.c.h.b16 %v3846
        %v4017 = vunpack.c.l.b16 %v3847
        %v4018 = vunpack.c.h.b16 %v3847
        %v4019 = vunpack.c.l.b16 %v3848
        %v4020 = vunpack.c.h.b16 %v3848
        %v4021 = vunpack.c.l.b16 %v3849
        %v4022 = vunpack.c.h.b16 %v3849
        %v4023 = vunpack.c.l.b16 %v3850
        %v4024 = vunpack.c.h.b16 %v3850
        %v4025 = vunpack.c.l.b16 %v3851
        %v4026 = vunpack.c.h.b16 %v3851
        %v4027 = vunpack.c.l.b16 %v3852
        %v4028 = vunpack.c.h.b16 %v3852
        %v4029 = vunpack.c.l.b16 %v3853
        %v4030 = vunpack.c.h.b16 %v3853
        %v4031 = vunpack.c.l.b16 %v3854
        %v4032 = vunpack.c.h.b16 %v3854
        %v4033 = vunpack.c.l.b16 %v3855
        %v4034 = vunpack.c.h.b16 %v3855
        %v4035 = vunpack.c.l.b16 %v3856
        %v4036 = vunpack.c.h.b16 %v3856
        %v4037 = vunpack.c.l.b16 %v3857
        %v4038 = vunpack.c.h.b16 %v3857
        %v4039 = vunpack.c.l.b16 %v3858
        %v4040 = vunpack.c.h.b16 %v3858
        %v4041 = vunpack.c.l.b16 %v3859
        %v4042 = vunpack.c.h.b16 %v3859
        %v4043 = vunpack.c.l.b16 %v3860
        %v4044 = vunpack.c.h.b16 %v3860
        %v4045 = vunpack.c.l.b16 %v3861
        %v4046 = vunpack.c.h.b16 %v3861
        %v4047 = vunpack.c.l.b16 %v3862
        %v4048 = vunpack.c.h.b16 %v3862
        %v4049 = vunpack.c.l.b16 %v3863
        %v4050 = vunpack.c.h.b16 %v3863
        %v4051 = vunpack.c.l.b16 %v3864
        %v4052 = vunpack.c.h.b16 %v3864
        %v4053 = vunpack.c.l.b16 %v3865
        %v4054 = vunpack.c.h.b16 %v3865
        %v4055 = vunpack.c.l.b16 %v3866
        %v4056 = vunpack.c.h.b16 %v3866
        %v4057 = vunpack.c.l.b16 %v3867
        %v4058 = vunpack.c.h.b16 %v3867
        %v4059 = vunpack.c.l.b16 %v3868
        %v4060 = vunpack.c.h.b16 %v3868
        %v4061 = vunpack.c.l.b16 %v3869
        %v4062 = vunpack.c.h.b16 %v3869
        %v4063 = vunpack.c.l.b16 %v3870
        %v4064 = vunpack.c.h.b16 %v3870
        %v4065 = vunpack.c.l.b16 %v3871
        %v4066 = vunpack.c.h.b16 %v3871
        %v4067 = vunpack.c.l.b16 %v3872
        %v4068 = vunpack.c.h.b16 %v3872
        %v4069 = vunpack.c.l.b16 %v3873
        %v4070 = vunpack.c.h.b16 %v3873
        %v4071 = vunpack.c.l.b16 %v3874
        %v4072 = vunpack.c.h.b16 %v3874
        %v4073 = vunpack.c.l.b16 %v3875
        %v4074 = vunpack.c.h.b16 %v3875
        %v4075 = vunpack.c.l.b16 %v3876
        %v4076 = vunpack.c.h.b16 %v3876
        %v4077 = vunpack.c.l.b16 %v3877
        %v4078 = vunpack.c.h.b16 %v3877
        %v4079 = vunpack.c.l.b16 %v3878
        %v4080 = vunpack.c.h.b16 %v3878
        %v4081 = vunpack.c.l.b16 %v3879
        %v4082 = vunpack.c.h.b16 %v3879
        %v4083 = vpack.c.b16 %v3959, %v3955
        %v4084 = vpack.c.b16 %v3960, %v3956
        %v4085 = vpack.c.b16 %v3961, %v3957
        %v4086 = vpack.c.b16 %v3962, %v3958
        %v4087 = vpack.c.b16 %v3967, %v3963
        %v4088 = vpack.c.b16 %v3968, %v3964
        %v4089 = vpack.c.b16 %v3969, %v3965
        %v4090 = vpack.c.b16 %v3970, %v3966
        %v4091 = vpack.c.b16 %v3975, %v3971
        %v4092 = vpack.c.b16 %v3976, %v3972
        %v4093 = vpack.c.b16 %v3977, %v3973
        %v4094 = vpack.c.b16 %v3978, %v3974
        %v4095 = vpack.c.b16 %v3983, %v3979
        %v4096 = vpack.c.b16 %v3984, %v3980
        %v4097 = vpack.c.b16 %v3985, %v3981
        %v4098 = vpack.c.b16 %v3986, %v3982
        %v4099 = vpack.c.b16 %v3991, %v3987
        %v4100 = vpack.c.b16 %v3992, %v3988
        %v4101 = vpack.c.b16 %v3993, %v3989
        %v4102 = vpack.c.b16 %v3994, %v3990
        %v4103 = vpack.c.b16 %v3999, %v3995
        %v4104 = vpack.c.b16 %v4000, %v3996
        %v4105 = vpack.c.b16 %v4001, %v3997
        %v4106 = vpack.c.b16 %v4002, %v3998
        %v4107 = vpack.c.b16 %v4007, %v4003
        %v4108 = vpack.c.b16 %v4008, %v4004
        %v4109 = vpack.c.b16 %v4009, %v4005
        %v4110 = vpack.c.b16 %v4010, %v4006
        %v4111 = vpack.c.b16 %v4015, %v4011
        %v4112 = vpack.c.b16 %v4016, %v4012
        %v4113 = vpack.c.b16 %v4017, %v4013
        %v4114 = vpack.c.b16 %v4018, %v4014
        %v4115 = vpack.c.b16 %v4023, %v4019
        %v4116 = vpack.c.b16 %v4024, %v4020
        %v4117 = vpack.c.b16 %v4025, %v4021
        %v4118 = vpack.c.b16 %v4026, %v4022
        %v4119 = vpack.c.b16 %v4031, %v4027
        %v4120 = vpack.c.b16 %v4032, %v4028
        %v4121 = vpack.c.b16 %v4033, %v4029
        %v4122 = vpack.c.b16 %v4034, %v4030
        %v4123 = vpack.c.b16 %v4039, %v4035
        %v4124 = vpack.c.b16 %v4040, %v4036
        %v4125 = vpack.c.b16 %v4041, %v4037
        %v4126 = vpack.c.b16 %v4042, %v4038
        %v4127 = vpack.c.b16 %v4047, %v4043
        %v4128 = vpack.c.b16 %v4048, %v4044
        %v4129 = vpack.c.b16 %v4049, %v4045
        %v4130 = vpack.c.b16 %v4050, %v4046
        %v4131 = vpack.c.b16 %v4055, %v4051
        %v4132 = vpack.c.b16 %v4056, %v4052
        %v4133 = vpack.c.b16 %v4057, %v4053
        %v4134 = vpack.c.b16 %v4058, %v4054
        %v4135 = vpack.c.b16 %v4063, %v4059
        %v4136 = vpack.c.b16 %v4064, %v4060
        %v4137 = vpack.c.b16 %v4065, %v4061
        %v4138 = vpack.c.b16 %v4066, %v4062
        %v4139 = vpack.c.b16 %v4071, %v4067
        %v4140 = vpack.c.b16 %v4072, %v4068
        %v4141 = vpack.c.b16 %v4073, %v4069
        %v4142 = vpack.c.b16 %v4074, %v4070
        %v4143 = vpack.c.b16 %v4079, %v4075
        %v4144 = vpack.c.b16 %v4080, %v4076
        %v4145 = vpack.c.b16 %v4081, %v4077
        %v4146 = vpack.c.b16 %v4082, %v4078
        %4211 = vmatpush.bf16.msra.mxu0 %v4111
        %4212 = vmatpush.bf16.msra.mxu0 %v4107
        %4213 = vmatpush.bf16.msra.mxu0 %v4103
        %4214 = vmatpush.bf16.msra.mxu0 %v4099
        %4215 = vmatpush.bf16.msra.mxu0 %v4095
        %4216 = vmatpush.bf16.msra.mxu0 %v4091
        %4217 = vmatpush.bf16.msra.mxu0 %v4087
        %4218 = vmatpush.bf16.msra.mxu0 %v4083
        %4219 = vmatmul.bf16.gmra.mxu0 %v3813
        %v4220 = vpop.f32.mrf.mxu0
        %v4221 = vadd.f32 %v3883, %v4220
        %v4222 = vpop.f32.mrf.mxu0
        %4223 = vdwg.mxu0
        %4224 = vmatpush.bf16.msra.mxu0 %v4143
        %4225 = vmatpush.bf16.msra.mxu0 %v4139
        %4226 = vmatpush.bf16.msra.mxu0 %v4135
        %4227 = vmatpush.bf16.msra.mxu0 %v4131
        %4228 = vmatpush.bf16.msra.mxu0 %v4127
        %4229 = vmatpush.bf16.msra.mxu0 %v4123
        %4230 = vmatpush.bf16.msra.mxu0 %v4119
        %4231 = vmatpush.bf16.msra.mxu0 %v4115
        %4232 = vmatmul.bf16.gmra.mxu0 %v3814
        %v4233 = vpop.f32.mrf.mxu0
        %v4234 = vadd.f32 %v4221, %v4233
        %v4235 = vpop.f32.mrf.mxu0
        %4236 = vdwg.mxu0
        %4237 = vmatpush.bf16.msra.mxu0 %v4112
        %4238 = vmatpush.bf16.msra.mxu0 %v4108
        %4239 = vmatpush.bf16.msra.mxu0 %v4104
        %4240 = vmatpush.bf16.msra.mxu0 %v4100
        %4241 = vmatpush.bf16.msra.mxu0 %v4096
        %4242 = vmatpush.bf16.msra.mxu0 %v4092
        %4243 = vmatpush.bf16.msra.mxu0 %v4088
        %4244 = vmatpush.bf16.msra.mxu0 %v4084
        %4245 = vmatmul.bf16.gmra.mxu0 %v3813
        %v4246 = vpop.f32.mrf.mxu0
        %v4247 = vadd.f32 %v3884, %v4246
        %v4248 = vpop.f32.mrf.mxu0
        %4249 = vdwg.mxu0
        %4250 = vmatpush.bf16.msra.mxu0 %v4144
        %4251 = vmatpush.bf16.msra.mxu0 %v4140
        %4252 = vmatpush.bf16.msra.mxu0 %v4136
        %4253 = vmatpush.bf16.msra.mxu0 %v4132
        %4254 = vmatpush.bf16.msra.mxu0 %v4128
        %4255 = vmatpush.bf16.msra.mxu0 %v4124
        %4256 = vmatpush.bf16.msra.mxu0 %v4120
        %4257 = vmatpush.bf16.msra.mxu0 %v4116
        %4258 = vmatmul.bf16.gmra.mxu0 %v3814
        %v4259 = vpop.f32.mrf.mxu0
        %v4260 = vadd.f32 %v4247, %v4259
        %v4261 = vpop.f32.mrf.mxu0
        %4262 = vdwg.mxu0
        %4263 = vmatpush.bf16.msra.mxu0 %v4113
        %4264 = vmatpush.bf16.msra.mxu0 %v4109
        %4265 = vmatpush.bf16.msra.mxu0 %v4105
        %4266 = vmatpush.bf16.msra.mxu0 %v4101
        %4267 = vmatpush.bf16.msra.mxu0 %v4097
        %4268 = vmatpush.bf16.msra.mxu0 %v4093
        %4269 = vmatpush.bf16.msra.mxu0 %v4089
        %4270 = vmatpush.bf16.msra.mxu0 %v4085
        %4271 = vmatmul.bf16.gmra.mxu0 %v3813
        %v4272 = vpop.f32.mrf.mxu0
        %v4273 = vadd.f32 %v3885, %v4272
        %v4274 = vpop.f32.mrf.mxu0
        %4275 = vdwg.mxu0
        %4276 = vmatpush.bf16.msra.mxu0 %v4145
        %4277 = vmatpush.bf16.msra.mxu0 %v4141
        %4278 = vmatpush.bf16.msra.mxu0 %v4137
        %4279 = vmatpush.bf16.msra.mxu0 %v4133
        %4280 = vmatpush.bf16.msra.mxu0 %v4129
        %4281 = vmatpush.bf16.msra.mxu0 %v4125
        %4282 = vmatpush.bf16.msra.mxu0 %v4121
        %4283 = vmatpush.bf16.msra.mxu0 %v4117
        %4284 = vmatmul.bf16.gmra.mxu0 %v3814
        %v4285 = vpop.f32.mrf.mxu0
        %v4286 = vadd.f32 %v4273, %v4285
        %v4287 = vpop.f32.mrf.mxu0
        %4288 = vdwg.mxu0
        %4289 = vmatpush.bf16.msra.mxu0 %v4114
        %4290 = vmatpush.bf16.msra.mxu0 %v4110
        %4291 = vmatpush.bf16.msra.mxu0 %v4106
        %4292 = vmatpush.bf16.msra.mxu0 %v4102
        %4293 = vmatpush.bf16.msra.mxu0 %v4098
        %4294 = vmatpush.bf16.msra.mxu0 %v4094
        %4295 = vmatpush.bf16.msra.mxu0 %v4090
        %4296 = vmatpush.bf16.msra.mxu0 %v4086
        %4297 = vmatmul.bf16.gmra.mxu0 %v3813
        %v4298 = vpop.f32.mrf.mxu0
        %v4299 = vadd.f32 %v3886, %v4298
        %v4300 = vpop.f32.mrf.mxu0
        %4301 = vdwg.mxu0
        %4302 = vmatpush.bf16.msra.mxu0 %v4146
        %4303 = vmatpush.bf16.msra.mxu0 %v4142
        %4304 = vmatpush.bf16.msra.mxu0 %v4138
        %4305 = vmatpush.bf16.msra.mxu0 %v4134
        %4306 = vmatpush.bf16.msra.mxu0 %v4130
        %4307 = vmatpush.bf16.msra.mxu0 %v4126
        %4308 = vmatpush.bf16.msra.mxu0 %v4122
        %4309 = vmatpush.bf16.msra.mxu0 %v4118
        %4310 = vmatmul.bf16.gmra.mxu0 %v3814
        %v4311 = vpop.f32.mrf.mxu0
        %v4312 = vadd.f32 %v4299, %v4311
        %v4313 = vpop.f32.mrf.mxu0
        %4314 = vdwg.mxu0
        %v4315 = vmax.f32 %v4234, 0.0
        %v4316 = vmax.f32 %v4260, 0.0
        %v4317 = vmax.f32 %v4286, 0.0
        %v4318 = vmax.f32 %v4312, 0.0
        %v4319 = vpack.c.bf16 %v4315, %v4315
        %v4320 = vpack.c.bf16 %v4316, %v4316
        %v4321 = vpack.c.bf16 %v4317, %v4317
        %v4322 = vpack.c.bf16 %v4318, %v4318
        %s4323 = scalar_lea.vmem %s551, 768 [#allocation12]
        %v4324 = vld [vmem:[%s4323] sm:$0xf]
        %v4325 = vld [vmem:[%s4323 + $0x4] sm:$0xf]
        %v4326 = vld [vmem:[%s4323 + $0x8] sm:$0xf]
        %v4327 = vld [vmem:[%s4323 + $0xc] sm:$0xf]
        %v4328 = vld [vmem:[%s4323 + $0x10] sm:$0xf]
        %v4329 = vld [vmem:[%s4323 + $0x14] sm:$0xf]
        %v4330 = vld [vmem:[%s4323 + $0x18] sm:$0xf]
        %v4331 = vld [vmem:[%s4323 + $0x1c] sm:$0xf]
        %v4332 = vld [vmem:[%s4323 + $0x20] sm:$0xf]
        %v4333 = vld [vmem:[%s4323 + $0x24] sm:$0xf]
        %v4334 = vld [vmem:[%s4323 + $0x28] sm:$0xf]
        %v4335 = vld [vmem:[%s4323 + $0x2c] sm:$0xf]
        %v4336 = vld [vmem:[%s4323 + $0x30] sm:$0xf]
        %v4337 = vld [vmem:[%s4323 + $0x34] sm:$0xf]
        %v4338 = vld [vmem:[%s4323 + $0x38] sm:$0xf]
        %v4339 = vld [vmem:[%s4323 + $0x3c] sm:$0xf]
        %v4340 = vld [vmem:[%s4323 + $0x40] sm:$0xf]
        %v4341 = vld [vmem:[%s4323 + $0x44] sm:$0xf]
        %v4342 = vld [vmem:[%s4323 + $0x48] sm:$0xf]
        %v4343 = vld [vmem:[%s4323 + $0x4c] sm:$0xf]
        %v4344 = vld [vmem:[%s4323 + $0x50] sm:$0xf]
        %v4345 = vld [vmem:[%s4323 + $0x54] sm:$0xf]
        %v4346 = vld [vmem:[%s4323 + $0x58] sm:$0xf]
        %v4347 = vld [vmem:[%s4323 + $0x5c] sm:$0xf]
        %v4348 = vld [vmem:[%s4323 + $0x60] sm:$0xf]
        %v4349 = vld [vmem:[%s4323 + $0x64] sm:$0xf]
        %v4350 = vld [vmem:[%s4323 + $0x68] sm:$0xf]
        %v4351 = vld [vmem:[%s4323 + $0x6c] sm:$0xf]
        %v4352 = vld [vmem:[%s4323 + $0x70] sm:$0xf]
        %v4353 = vld [vmem:[%s4323 + $0x74] sm:$0xf]
        %v4354 = vld [vmem:[%s4323 + $0x78] sm:$0xf]
        %v4355 = vld [vmem:[%s4323 + $0x7c] sm:$0xf]
        %v4356 = vld [vmem:[%s4323 + $0x80] sm:$0xf]
        %v4357 = vld [vmem:[%s4323 + $0x84] sm:$0xf]
        %v4358 = vld [vmem:[%s4323 + $0x88] sm:$0xf]
        %v4359 = vld [vmem:[%s4323 + $0x8c] sm:$0xf]
        %v4360 = vld [vmem:[%s4323 + $0x90] sm:$0xf]
        %v4361 = vld [vmem:[%s4323 + $0x94] sm:$0xf]
        %v4362 = vld [vmem:[%s4323 + $0x98] sm:$0xf]
        %v4363 = vld [vmem:[%s4323 + $0x9c] sm:$0xf]
        %v4364 = vld [vmem:[%s4323 + $0xa0] sm:$0xf]
        %v4365 = vld [vmem:[%s4323 + $0xa4] sm:$0xf]
        %v4366 = vld [vmem:[%s4323 + $0xa8] sm:$0xf]
        %v4367 = vld [vmem:[%s4323 + $0xac] sm:$0xf]
        %v4368 = vld [vmem:[%s4323 + $0xb0] sm:$0xf]
        %v4369 = vld [vmem:[%s4323 + $0xb4] sm:$0xf]
        %v4370 = vld [vmem:[%s4323 + $0xb8] sm:$0xf]
        %v4371 = vld [vmem:[%s4323 + $0xbc] sm:$0xf]
        %v4372 = vld [vmem:[%s4323 + $0xc0] sm:$0xf]
        %v4373 = vld [vmem:[%s4323 + $0xc4] sm:$0xf]
        %v4374 = vld [vmem:[%s4323 + $0xc8] sm:$0xf]
        %v4375 = vld [vmem:[%s4323 + $0xcc] sm:$0xf]
        %v4376 = vld [vmem:[%s4323 + $0xd0] sm:$0xf]
        %v4377 = vld [vmem:[%s4323 + $0xd4] sm:$0xf]
        %v4378 = vld [vmem:[%s4323 + $0xd8] sm:$0xf]
        %v4379 = vld [vmem:[%s4323 + $0xdc] sm:$0xf]
        %v4380 = vld [vmem:[%s4323 + $0xe0] sm:$0xf]
        %v4381 = vld [vmem:[%s4323 + $0xe4] sm:$0xf]
        %v4382 = vld [vmem:[%s4323 + $0xe8] sm:$0xf]
        %v4383 = vld [vmem:[%s4323 + $0xec] sm:$0xf]
        %v4384 = vld [vmem:[%s4323 + $0xf0] sm:$0xf]
        %v4385 = vld [vmem:[%s4323 + $0xf4] sm:$0xf]
        %v4386 = vld [vmem:[%s4323 + $0xf8] sm:$0xf]
        %v4387 = vld [vmem:[%s4323 + $0xfc] sm:$0xf]
        %s4388 = scalar_lea.vmem %s561, 3 [#allocation13]
        %v4389 = vld [vmem:[%s4388] sm:$0x1]
        %v4391 = vperm.slane %v4389, 0
        %v4457 = vunpack.c.l.b16 %v4324
        %v4458 = vunpack.c.l.b16 %v4325
        %v4459 = vunpack.c.l.b16 %v4326
        %v4460 = vunpack.c.l.b16 %v4327
        %v4461 = vunpack.c.l.b16 %v4328
        %v4462 = vunpack.c.l.b16 %v4329
        %v4463 = vunpack.c.l.b16 %v4330
        %v4464 = vunpack.c.l.b16 %v4331
        %v4465 = vunpack.c.l.b16 %v4332
        %v4466 = vunpack.c.l.b16 %v4333
        %v4467 = vunpack.c.l.b16 %v4334
        %v4468 = vunpack.c.l.b16 %v4335
        %v4469 = vunpack.c.l.b16 %v4336
        %v4470 = vunpack.c.l.b16 %v4337
        %v4471 = vunpack.c.l.b16 %v4338
        %v4472 = vunpack.c.l.b16 %v4339
        %v4473 = vunpack.c.l.b16 %v4340
        %v4474 = vunpack.c.l.b16 %v4341
        %v4475 = vunpack.c.l.b16 %v4342
        %v4476 = vunpack.c.l.b16 %v4343
        %v4477 = vunpack.c.l.b16 %v4344
        %v4478 = vunpack.c.l.b16 %v4345
        %v4479 = vunpack.c.l.b16 %v4346
        %v4480 = vunpack.c.l.b16 %v4347
        %v4481 = vunpack.c.l.b16 %v4348
        %v4482 = vunpack.c.l.b16 %v4349
        %v4483 = vunpack.c.l.b16 %v4350
        %v4484 = vunpack.c.l.b16 %v4351
        %v4485 = vunpack.c.l.b16 %v4352
        %v4486 = vunpack.c.l.b16 %v4353
        %v4487 = vunpack.c.l.b16 %v4354
        %v4488 = vunpack.c.l.b16 %v4355
        %v4489 = vunpack.c.l.b16 %v4356
        %v4490 = vunpack.c.l.b16 %v4357
        %v4491 = vunpack.c.l.b16 %v4358
        %v4492 = vunpack.c.l.b16 %v4359
        %v4493 = vunpack.c.l.b16 %v4360
        %v4494 = vunpack.c.l.b16 %v4361
        %v4495 = vunpack.c.l.b16 %v4362
        %v4496 = vunpack.c.l.b16 %v4363
        %v4497 = vunpack.c.l.b16 %v4364
        %v4498 = vunpack.c.l.b16 %v4365
        %v4499 = vunpack.c.l.b16 %v4366
        %v4500 = vunpack.c.l.b16 %v4367
        %v4501 = vunpack.c.l.b16 %v4368
        %v4502 = vunpack.c.l.b16 %v4369
        %v4503 = vunpack.c.l.b16 %v4370
        %v4504 = vunpack.c.l.b16 %v4371
        %v4505 = vunpack.c.l.b16 %v4372
        %v4506 = vunpack.c.l.b16 %v4373
        %v4507 = vunpack.c.l.b16 %v4374
        %v4508 = vunpack.c.l.b16 %v4375
        %v4509 = vunpack.c.l.b16 %v4376
        %v4510 = vunpack.c.l.b16 %v4377
        %v4511 = vunpack.c.l.b16 %v4378
        %v4512 = vunpack.c.l.b16 %v4379
        %v4513 = vunpack.c.l.b16 %v4380
        %v4514 = vunpack.c.l.b16 %v4381
        %v4515 = vunpack.c.l.b16 %v4382
        %v4516 = vunpack.c.l.b16 %v4383
        %v4517 = vunpack.c.l.b16 %v4384
        %v4518 = vunpack.c.l.b16 %v4385
        %v4519 = vunpack.c.l.b16 %v4386
        %v4520 = vunpack.c.l.b16 %v4387
        %v4521 = vpack.c.b16 %v4458, %v4457
        %v4522 = vpack.c.b16 %v4460, %v4459
        %v4523 = vpack.c.b16 %v4462, %v4461
        %v4524 = vpack.c.b16 %v4464, %v4463
        %v4525 = vpack.c.b16 %v4466, %v4465
        %v4526 = vpack.c.b16 %v4468, %v4467
        %v4527 = vpack.c.b16 %v4470, %v4469
        %v4528 = vpack.c.b16 %v4472, %v4471
        %v4529 = vpack.c.b16 %v4474, %v4473
        %v4530 = vpack.c.b16 %v4476, %v4475
        %v4531 = vpack.c.b16 %v4478, %v4477
        %v4532 = vpack.c.b16 %v4480, %v4479
        %v4533 = vpack.c.b16 %v4482, %v4481
        %v4534 = vpack.c.b16 %v4484, %v4483
        %v4535 = vpack.c.b16 %v4486, %v4485
        %v4536 = vpack.c.b16 %v4488, %v4487
        %v4537 = vpack.c.b16 %v4490, %v4489
        %v4538 = vpack.c.b16 %v4492, %v4491
        %v4539 = vpack.c.b16 %v4494, %v4493
        %v4540 = vpack.c.b16 %v4496, %v4495
        %v4541 = vpack.c.b16 %v4498, %v4497
        %v4542 = vpack.c.b16 %v4500, %v4499
        %v4543 = vpack.c.b16 %v4502, %v4501
        %v4544 = vpack.c.b16 %v4504, %v4503
        %v4545 = vpack.c.b16 %v4506, %v4505
        %v4546 = vpack.c.b16 %v4508, %v4507
        %v4547 = vpack.c.b16 %v4510, %v4509
        %v4548 = vpack.c.b16 %v4512, %v4511
        %v4549 = vpack.c.b16 %v4514, %v4513
        %v4550 = vpack.c.b16 %v4516, %v4515
        %v4551 = vpack.c.b16 %v4518, %v4517
        %v4552 = vpack.c.b16 %v4520, %v4519
        %4585 = vmatpush.bf16.msra.mxu0 %v4528
        %4586 = vmatpush.bf16.msra.mxu0 %v4527
        %4587 = vmatpush.bf16.msra.mxu0 %v4526
        %4588 = vmatpush.bf16.msra.mxu0 %v4525
        %4589 = vmatpush.bf16.msra.mxu0 %v4524
        %4590 = vmatpush.bf16.msra.mxu0 %v4523
        %4591 = vmatpush.bf16.msra.mxu0 %v4522
        %4592 = vmatpush.bf16.msra.mxu0 %v4521
        %4593 = vmatmul.bf16.gmra.mxu0 %v4319
        %v4594 = vpop.f32.mrf.mxu0
        %v4595 = vadd.f32 %v4391, %v4594
        %v4596 = vpop.f32.mrf.mxu0
        %4597 = vdwg.mxu0
        %4598 = vmatpush.bf16.msra.mxu0 %v4536
        %4599 = vmatpush.bf16.msra.mxu0 %v4535
        %4600 = vmatpush.bf16.msra.mxu0 %v4534
        %4601 = vmatpush.bf16.msra.mxu0 %v4533
        %4602 = vmatpush.bf16.msra.mxu0 %v4532
        %4603 = vmatpush.bf16.msra.mxu0 %v4531
        %4604 = vmatpush.bf16.msra.mxu0 %v4530
        %4605 = vmatpush.bf16.msra.mxu0 %v4529
        %4606 = vmatmul.bf16.gmra.mxu0 %v4320
        %v4607 = vpop.f32.mrf.mxu0
        %v4608 = vadd.f32 %v4595, %v4607
        %v4609 = vpop.f32.mrf.mxu0
        %4610 = vdwg.mxu0
        %4611 = vmatpush.bf16.msra.mxu0 %v4544
        %4612 = vmatpush.bf16.msra.mxu0 %v4543
        %4613 = vmatpush.bf16.msra.mxu0 %v4542
        %4614 = vmatpush.bf16.msra.mxu0 %v4541
        %4615 = vmatpush.bf16.msra.mxu0 %v4540
        %4616 = vmatpush.bf16.msra.mxu0 %v4539
        %4617 = vmatpush.bf16.msra.mxu0 %v4538
        %4618 = vmatpush.bf16.msra.mxu0 %v4537
        %4619 = vmatmul.bf16.gmra.mxu0 %v4321
        %v4620 = vpop.f32.mrf.mxu0
        %v4621 = vadd.f32 %v4608, %v4620
        %v4622 = vpop.f32.mrf.mxu0
        %4623 = vdwg.mxu0
        %4624 = vmatpush.bf16.msra.mxu0 %v4552
        %4625 = vmatpush.bf16.msra.mxu0 %v4551
        %4626 = vmatpush.bf16.msra.mxu0 %v4550
        %4627 = vmatpush.bf16.msra.mxu0 %v4549
        %4628 = vmatpush.bf16.msra.mxu0 %v4548
        %4629 = vmatpush.bf16.msra.mxu0 %v4547
        %4630 = vmatpush.bf16.msra.mxu0 %v4546
        %4631 = vmatpush.bf16.msra.mxu0 %v4545
        %4632 = vmatmul.bf16.gmra.mxu0 %v4322
        %v4633 = vpop.f32.mrf.mxu0
        %v4634 = vadd.f32 %v4621, %v4633
        %v4635 = vpop.f32.mrf.mxu0
        %4636 = vdwg.mxu0
        %s4637 = scalar_lea.vmem %s642, 24
        %4638 = vst.msk [vmem:[%s4637] sm:$0xff] %vm1760, %v4634
        %v4639 = vpack.c.bf16 %v806, %v806
        %s4640 = scalar_lea.vmem %s511, 512 [#allocation6]
        %v4641 = vld [vmem:[%s4640] sm:$0xff]
        %v4642 = vld [vmem:[%s4640 + $0x8] sm:$0xff]
        %v4643 = vld [vmem:[%s4640 + $0x10] sm:$0xff]
        %v4644 = vld [vmem:[%s4640 + $0x18] sm:$0xff]
        %v4645 = vld [vmem:[%s4640 + $0x20] sm:$0xff]
        %v4646 = vld [vmem:[%s4640 + $0x28] sm:$0xff]
        %v4647 = vld [vmem:[%s4640 + $0x30] sm:$0xff]
        %v4648 = vld [vmem:[%s4640 + $0x38] sm:$0xff]
        %v4649 = vld [vmem:[%s4640 + $0x40] sm:$0xff]
        %v4650 = vld [vmem:[%s4640 + $0x48] sm:$0xff]
        %v4651 = vld [vmem:[%s4640 + $0x50] sm:$0xff]
        %v4652 = vld [vmem:[%s4640 + $0x58] sm:$0xff]
        %v4653 = vld [vmem:[%s4640 + $0x60] sm:$0xff]
        %v4654 = vld [vmem:[%s4640 + $0x68] sm:$0xff]
        %v4655 = vld [vmem:[%s4640 + $0x70] sm:$0xff]
        %v4656 = vld [vmem:[%s4640 + $0x78] sm:$0xff]
        %s4657 = scalar_lea.vmem %s521, 8 [#allocation7]
        %v4658 = vld [vmem:[%s4657] sm:$0x3]
        %v4660 = vperm.slane %v4658, 0
        %v4661 = vperm.slane %v4658, 1
        %v4680 = vunpack.c.l.b16 %v4641
        %v4681 = vunpack.c.h.b16 %v4641
        %v4682 = vunpack.c.l.b16 %v4642
        %v4683 = vunpack.c.h.b16 %v4642
        %v4684 = vunpack.c.l.b16 %v4643
        %v4685 = vunpack.c.h.b16 %v4643
        %v4686 = vunpack.c.l.b16 %v4644
        %v4687 = vunpack.c.h.b16 %v4644
        %v4688 = vunpack.c.l.b16 %v4645
        %v4689 = vunpack.c.h.b16 %v4645
        %v4690 = vunpack.c.l.b16 %v4646
        %v4691 = vunpack.c.h.b16 %v4646
        %v4692 = vunpack.c.l.b16 %v4647
        %v4693 = vunpack.c.h.b16 %v4647
        %v4694 = vunpack.c.l.b16 %v4648
        %v4695 = vunpack.c.h.b16 %v4648
        %v4696 = vunpack.c.l.b16 %v4649
        %v4697 = vunpack.c.h.b16 %v4649
        %v4698 = vunpack.c.l.b16 %v4650
        %v4699 = vunpack.c.h.b16 %v4650
        %v4700 = vunpack.c.l.b16 %v4651
        %v4701 = vunpack.c.h.b16 %v4651
        %v4702 = vunpack.c.l.b16 %v4652
        %v4703 = vunpack.c.h.b16 %v4652
        %v4704 = vunpack.c.l.b16 %v4653
        %v4705 = vunpack.c.h.b16 %v4653
        %v4706 = vunpack.c.l.b16 %v4654
        %v4707 = vunpack.c.h.b16 %v4654
        %v4708 = vunpack.c.l.b16 %v4655
        %v4709 = vunpack.c.h.b16 %v4655
        %v4710 = vunpack.c.l.b16 %v4656
        %v4711 = vunpack.c.h.b16 %v4656
        %v4712 = vpack.c.b16 %v4682, %v4680
        %v4713 = vpack.c.b16 %v4683, %v4681
        %v4714 = vpack.c.b16 %v4686, %v4684
        %v4715 = vpack.c.b16 %v4687, %v4685
        %v4716 = vpack.c.b16 %v4690, %v4688
        %v4717 = vpack.c.b16 %v4691, %v4689
        %v4718 = vpack.c.b16 %v4694, %v4692
        %v4719 = vpack.c.b16 %v4695, %v4693
        %v4720 = vpack.c.b16 %v4698, %v4696
        %v4721 = vpack.c.b16 %v4699, %v4697
        %v4722 = vpack.c.b16 %v4702, %v4700
        %v4723 = vpack.c.b16 %v4703, %v4701
        %v4724 = vpack.c.b16 %v4706, %v4704
        %v4725 = vpack.c.b16 %v4707, %v4705
        %v4726 = vpack.c.b16 %v4710, %v4708
        %v4727 = vpack.c.b16 %v4711, %v4709
        %4744 = vmatpush.bf16.msra.mxu0 %v4726
        %4745 = vmatpush.bf16.msra.mxu0 %v4724
        %4746 = vmatpush.bf16.msra.mxu0 %v4722
        %4747 = vmatpush.bf16.msra.mxu0 %v4720
        %4748 = vmatpush.bf16.msra.mxu0 %v4718
        %4749 = vmatpush.bf16.msra.mxu0 %v4716
        %4750 = vmatpush.bf16.msra.mxu0 %v4714
        %4751 = vmatpush.bf16.msra.mxu0 %v4712
        %4752 = vmatmul.bf16.gmra.mxu0 %v4639
        %v4753 = vpop.f32.mrf.mxu0
        %v4754 = vadd.f32 %v4660, %v4753
        %v4755 = vpop.f32.mrf.mxu0
        %4756 = vdwg.mxu0
        %4757 = vmatpush.bf16.msra.mxu0 %v4727
        %4758 = vmatpush.bf16.msra.mxu0 %v4725
        %4759 = vmatpush.bf16.msra.mxu0 %v4723
        %4760 = vmatpush.bf16.msra.mxu0 %v4721
        %4761 = vmatpush.bf16.msra.mxu0 %v4719
        %4762 = vmatpush.bf16.msra.mxu0 %v4717
        %4763 = vmatpush.bf16.msra.mxu0 %v4715
        %4764 = vmatpush.bf16.msra.mxu0 %v4713
        %4765 = vmatmul.bf16.gmra.mxu0 %v4639
        %v4766 = vpop.f32.mrf.mxu0
        %v4767 = vadd.f32 %v4661, %v4766
        %v4768 = vpop.f32.mrf.mxu0
        %4769 = vdwg.mxu0
        %v4770 = vmax.f32 %v4754, 0.0
        %v4771 = vmax.f32 %v4767, 0.0
        %v4772 = vpack.c.bf16 %v4770, %v4770
        %v4773 = vpack.c.bf16 %v4771, %v4771
        %s4774 = scalar_lea.vmem %s531, 2048 [#allocation9]
        %v4775 = vld [vmem:[%s4774] sm:$0xff]
        %v4776 = vld [vmem:[%s4774 + $0x8] sm:$0xff]
        %v4777 = vld [vmem:[%s4774 + $0x10] sm:$0xff]
        %v4778 = vld [vmem:[%s4774 + $0x18] sm:$0xff]
        %v4779 = vld [vmem:[%s4774 + $0x20] sm:$0xff]
        %v4780 = vld [vmem:[%s4774 + $0x28] sm:$0xff]
        %v4781 = vld [vmem:[%s4774 + $0x30] sm:$0xff]
        %v4782 = vld [vmem:[%s4774 + $0x38] sm:$0xff]
        %v4783 = vld [vmem:[%s4774 + $0x40] sm:$0xff]
        %v4784 = vld [vmem:[%s4774 + $0x48] sm:$0xff]
        %v4785 = vld [vmem:[%s4774 + $0x50] sm:$0xff]
        %v4786 = vld [vmem:[%s4774 + $0x58] sm:$0xff]
        %v4787 = vld [vmem:[%s4774 + $0x60] sm:$0xff]
        %v4788 = vld [vmem:[%s4774 + $0x68] sm:$0xff]
        %v4789 = vld [vmem:[%s4774 + $0x70] sm:$0xff]
        %v4790 = vld [vmem:[%s4774 + $0x78] sm:$0xff]
        %v4791 = vld [vmem:[%s4774 + $0x80] sm:$0xff]
        %v4792 = vld [vmem:[%s4774 + $0x88] sm:$0xff]
        %v4793 = vld [vmem:[%s4774 + $0x90] sm:$0xff]
        %v4794 = vld [vmem:[%s4774 + $0x98] sm:$0xff]
        %v4795 = vld [vmem:[%s4774 + $0xa0] sm:$0xff]
        %v4796 = vld [vmem:[%s4774 + $0xa8] sm:$0xff]
        %v4797 = vld [vmem:[%s4774 + $0xb0] sm:$0xff]
        %v4798 = vld [vmem:[%s4774 + $0xb8] sm:$0xff]
        %v4799 = vld [vmem:[%s4774 + $0xc0] sm:$0xff]
        %v4800 = vld [vmem:[%s4774 + $0xc8] sm:$0xff]
        %v4801 = vld [vmem:[%s4774 + $0xd0] sm:$0xff]
        %v4802 = vld [vmem:[%s4774 + $0xd8] sm:$0xff]
        %v4803 = vld [vmem:[%s4774 + $0xe0] sm:$0xff]
        %v4804 = vld [vmem:[%s4774 + $0xe8] sm:$0xff]
        %v4805 = vld [vmem:[%s4774 + $0xf0] sm:$0xff]
        %v4806 = vld [vmem:[%s4774 + $0xf8] sm:$0xff]
        %v4807 = vld [vmem:[%s4774 + $0x100] sm:$0xff]
        %v4808 = vld [vmem:[%s4774 + $0x108] sm:$0xff]
        %v4809 = vld [vmem:[%s4774 + $0x110] sm:$0xff]
        %v4810 = vld [vmem:[%s4774 + $0x118] sm:$0xff]
        %v4811 = vld [vmem:[%s4774 + $0x120] sm:$0xff]
        %v4812 = vld [vmem:[%s4774 + $0x128] sm:$0xff]
        %v4813 = vld [vmem:[%s4774 + $0x130] sm:$0xff]
        %v4814 = vld [vmem:[%s4774 + $0x138] sm:$0xff]
        %v4815 = vld [vmem:[%s4774 + $0x140] sm:$0xff]
        %v4816 = vld [vmem:[%s4774 + $0x148] sm:$0xff]
        %v4817 = vld [vmem:[%s4774 + $0x150] sm:$0xff]
        %v4818 = vld [vmem:[%s4774 + $0x158] sm:$0xff]
        %v4819 = vld [vmem:[%s4774 + $0x160] sm:$0xff]
        %v4820 = vld [vmem:[%s4774 + $0x168] sm:$0xff]
        %v4821 = vld [vmem:[%s4774 + $0x170] sm:$0xff]
        %v4822 = vld [vmem:[%s4774 + $0x178] sm:$0xff]
        %v4823 = vld [vmem:[%s4774 + $0x180] sm:$0xff]
        %v4824 = vld [vmem:[%s4774 + $0x188] sm:$0xff]
        %v4825 = vld [vmem:[%s4774 + $0x190] sm:$0xff]
        %v4826 = vld [vmem:[%s4774 + $0x198] sm:$0xff]
        %v4827 = vld [vmem:[%s4774 + $0x1a0] sm:$0xff]
        %v4828 = vld [vmem:[%s4774 + $0x1a8] sm:$0xff]
        %v4829 = vld [vmem:[%s4774 + $0x1b0] sm:$0xff]
        %v4830 = vld [vmem:[%s4774 + $0x1b8] sm:$0xff]
        %v4831 = vld [vmem:[%s4774 + $0x1c0] sm:$0xff]
        %v4832 = vld [vmem:[%s4774 + $0x1c8] sm:$0xff]
        %v4833 = vld [vmem:[%s4774 + $0x1d0] sm:$0xff]
        %v4834 = vld [vmem:[%s4774 + $0x1d8] sm:$0xff]
        %v4835 = vld [vmem:[%s4774 + $0x1e0] sm:$0xff]
        %v4836 = vld [vmem:[%s4774 + $0x1e8] sm:$0xff]
        %v4837 = vld [vmem:[%s4774 + $0x1f0] sm:$0xff]
        %v4838 = vld [vmem:[%s4774 + $0x1f8] sm:$0xff]
        %s4839 = scalar_lea.vmem %s541, 16 [#allocation10]
        %v4840 = vld [vmem:[%s4839] sm:$0xf]
        %v4842 = vperm.slane %v4840, 0
        %v4843 = vperm.slane %v4840, 1
        %v4844 = vperm.slane %v4840, 2
        %v4845 = vperm.slane %v4840, 3
        %v4914 = vunpack.c.l.b16 %v4775
        %v4915 = vunpack.c.h.b16 %v4775
        %v4916 = vunpack.c.l.b16 %v4776
        %v4917 = vunpack.c.h.b16 %v4776
        %v4918 = vunpack.c.l.b16 %v4777
        %v4919 = vunpack.c.h.b16 %v4777
        %v4920 = vunpack.c.l.b16 %v4778
        %v4921 = vunpack.c.h.b16 %v4778
        %v4922 = vunpack.c.l.b16 %v4779
        %v4923 = vunpack.c.h.b16 %v4779
        %v4924 = vunpack.c.l.b16 %v4780
        %v4925 = vunpack.c.h.b16 %v4780
        %v4926 = vunpack.c.l.b16 %v4781
        %v4927 = vunpack.c.h.b16 %v4781
        %v4928 = vunpack.c.l.b16 %v4782
        %v4929 = vunpack.c.h.b16 %v4782
        %v4930 = vunpack.c.l.b16 %v4783
        %v4931 = vunpack.c.h.b16 %v4783
        %v4932 = vunpack.c.l.b16 %v4784
        %v4933 = vunpack.c.h.b16 %v4784
        %v4934 = vunpack.c.l.b16 %v4785
        %v4935 = vunpack.c.h.b16 %v4785
        %v4936 = vunpack.c.l.b16 %v4786
        %v4937 = vunpack.c.h.b16 %v4786
        %v4938 = vunpack.c.l.b16 %v4787
        %v4939 = vunpack.c.h.b16 %v4787
        %v4940 = vunpack.c.l.b16 %v4788
        %v4941 = vunpack.c.h.b16 %v4788
        %v4942 = vunpack.c.l.b16 %v4789
        %v4943 = vunpack.c.h.b16 %v4789
        %v4944 = vunpack.c.l.b16 %v4790
        %v4945 = vunpack.c.h.b16 %v4790
        %v4946 = vunpack.c.l.b16 %v4791
        %v4947 = vunpack.c.h.b16 %v4791
        %v4948 = vunpack.c.l.b16 %v4792
        %v4949 = vunpack.c.h.b16 %v4792
        %v4950 = vunpack.c.l.b16 %v4793
        %v4951 = vunpack.c.h.b16 %v4793
        %v4952 = vunpack.c.l.b16 %v4794
        %v4953 = vunpack.c.h.b16 %v4794
        %v4954 = vunpack.c.l.b16 %v4795
        %v4955 = vunpack.c.h.b16 %v4795
        %v4956 = vunpack.c.l.b16 %v4796
        %v4957 = vunpack.c.h.b16 %v4796
        %v4958 = vunpack.c.l.b16 %v4797
        %v4959 = vunpack.c.h.b16 %v4797
        %v4960 = vunpack.c.l.b16 %v4798
        %v4961 = vunpack.c.h.b16 %v4798
        %v4962 = vunpack.c.l.b16 %v4799
        %v4963 = vunpack.c.h.b16 %v4799
        %v4964 = vunpack.c.l.b16 %v4800
        %v4965 = vunpack.c.h.b16 %v4800
        %v4966 = vunpack.c.l.b16 %v4801
        %v4967 = vunpack.c.h.b16 %v4801
        %v4968 = vunpack.c.l.b16 %v4802
        %v4969 = vunpack.c.h.b16 %v4802
        %v4970 = vunpack.c.l.b16 %v4803
        %v4971 = vunpack.c.h.b16 %v4803
        %v4972 = vunpack.c.l.b16 %v4804
        %v4973 = vunpack.c.h.b16 %v4804
        %v4974 = vunpack.c.l.b16 %v4805
        %v4975 = vunpack.c.h.b16 %v4805
        %v4976 = vunpack.c.l.b16 %v4806
        %v4977 = vunpack.c.h.b16 %v4806
        %v4978 = vunpack.c.l.b16 %v4807
        %v4979 = vunpack.c.h.b16 %v4807
        %v4980 = vunpack.c.l.b16 %v4808
        %v4981 = vunpack.c.h.b16 %v4808
        %v4982 = vunpack.c.l.b16 %v4809
        %v4983 = vunpack.c.h.b16 %v4809
        %v4984 = vunpack.c.l.b16 %v4810
        %v4985 = vunpack.c.h.b16 %v4810
        %v4986 = vunpack.c.l.b16 %v4811
        %v4987 = vunpack.c.h.b16 %v4811
        %v4988 = vunpack.c.l.b16 %v4812
        %v4989 = vunpack.c.h.b16 %v4812
        %v4990 = vunpack.c.l.b16 %v4813
        %v4991 = vunpack.c.h.b16 %v4813
        %v4992 = vunpack.c.l.b16 %v4814
        %v4993 = vunpack.c.h.b16 %v4814
        %v4994 = vunpack.c.l.b16 %v4815
        %v4995 = vunpack.c.h.b16 %v4815
        %v4996 = vunpack.c.l.b16 %v4816
        %v4997 = vunpack.c.h.b16 %v4816
        %v4998 = vunpack.c.l.b16 %v4817
        %v4999 = vunpack.c.h.b16 %v4817
        %v5000 = vunpack.c.l.b16 %v4818
        %v5001 = vunpack.c.h.b16 %v4818
        %v5002 = vunpack.c.l.b16 %v4819
        %v5003 = vunpack.c.h.b16 %v4819
        %v5004 = vunpack.c.l.b16 %v4820
        %v5005 = vunpack.c.h.b16 %v4820
        %v5006 = vunpack.c.l.b16 %v4821
        %v5007 = vunpack.c.h.b16 %v4821
        %v5008 = vunpack.c.l.b16 %v4822
        %v5009 = vunpack.c.h.b16 %v4822
        %v5010 = vunpack.c.l.b16 %v4823
        %v5011 = vunpack.c.h.b16 %v4823
        %v5012 = vunpack.c.l.b16 %v4824
        %v5013 = vunpack.c.h.b16 %v4824
        %v5014 = vunpack.c.l.b16 %v4825
        %v5015 = vunpack.c.h.b16 %v4825
        %v5016 = vunpack.c.l.b16 %v4826
        %v5017 = vunpack.c.h.b16 %v4826
        %v5018 = vunpack.c.l.b16 %v4827
        %v5019 = vunpack.c.h.b16 %v4827
        %v5020 = vunpack.c.l.b16 %v4828
        %v5021 = vunpack.c.h.b16 %v4828
        %v5022 = vunpack.c.l.b16 %v4829
        %v5023 = vunpack.c.h.b16 %v4829
        %v5024 = vunpack.c.l.b16 %v4830
        %v5025 = vunpack.c.h.b16 %v4830
        %v5026 = vunpack.c.l.b16 %v4831
        %v5027 = vunpack.c.h.b16 %v4831
        %v5028 = vunpack.c.l.b16 %v4832
        %v5029 = vunpack.c.h.b16 %v4832
        %v5030 = vunpack.c.l.b16 %v4833
        %v5031 = vunpack.c.h.b16 %v4833
        %v5032 = vunpack.c.l.b16 %v4834
        %v5033 = vunpack.c.h.b16 %v4834
        %v5034 = vunpack.c.l.b16 %v4835
        %v5035 = vunpack.c.h.b16 %v4835
        %v5036 = vunpack.c.l.b16 %v4836
        %v5037 = vunpack.c.h.b16 %v4836
        %v5038 = vunpack.c.l.b16 %v4837
        %v5039 = vunpack.c.h.b16 %v4837
        %v5040 = vunpack.c.l.b16 %v4838
        %v5041 = vunpack.c.h.b16 %v4838
        %v5042 = vpack.c.b16 %v4918, %v4914
        %v5043 = vpack.c.b16 %v4919, %v4915
        %v5044 = vpack.c.b16 %v4920, %v4916
        %v5045 = vpack.c.b16 %v4921, %v4917
        %v5046 = vpack.c.b16 %v4926, %v4922
        %v5047 = vpack.c.b16 %v4927, %v4923
        %v5048 = vpack.c.b16 %v4928, %v4924
        %v5049 = vpack.c.b16 %v4929, %v4925
        %v5050 = vpack.c.b16 %v4934, %v4930
        %v5051 = vpack.c.b16 %v4935, %v4931
        %v5052 = vpack.c.b16 %v4936, %v4932
        %v5053 = vpack.c.b16 %v4937, %v4933
        %v5054 = vpack.c.b16 %v4942, %v4938
        %v5055 = vpack.c.b16 %v4943, %v4939
        %v5056 = vpack.c.b16 %v4944, %v4940
        %v5057 = vpack.c.b16 %v4945, %v4941
        %v5058 = vpack.c.b16 %v4950, %v4946
        %v5059 = vpack.c.b16 %v4951, %v4947
        %v5060 = vpack.c.b16 %v4952, %v4948
        %v5061 = vpack.c.b16 %v4953, %v4949
        %v5062 = vpack.c.b16 %v4958, %v4954
        %v5063 = vpack.c.b16 %v4959, %v4955
        %v5064 = vpack.c.b16 %v4960, %v4956
        %v5065 = vpack.c.b16 %v4961, %v4957
        %v5066 = vpack.c.b16 %v4966, %v4962
        %v5067 = vpack.c.b16 %v4967, %v4963
        %v5068 = vpack.c.b16 %v4968, %v4964
        %v5069 = vpack.c.b16 %v4969, %v4965
        %v5070 = vpack.c.b16 %v4974, %v4970
        %v5071 = vpack.c.b16 %v4975, %v4971
        %v5072 = vpack.c.b16 %v4976, %v4972
        %v5073 = vpack.c.b16 %v4977, %v4973
        %v5074 = vpack.c.b16 %v4982, %v4978
        %v5075 = vpack.c.b16 %v4983, %v4979
        %v5076 = vpack.c.b16 %v4984, %v4980
        %v5077 = vpack.c.b16 %v4985, %v4981
        %v5078 = vpack.c.b16 %v4990, %v4986
        %v5079 = vpack.c.b16 %v4991, %v4987
        %v5080 = vpack.c.b16 %v4992, %v4988
        %v5081 = vpack.c.b16 %v4993, %v4989
        %v5082 = vpack.c.b16 %v4998, %v4994
        %v5083 = vpack.c.b16 %v4999, %v4995
        %v5084 = vpack.c.b16 %v5000, %v4996
        %v5085 = vpack.c.b16 %v5001, %v4997
        %v5086 = vpack.c.b16 %v5006, %v5002
        %v5087 = vpack.c.b16 %v5007, %v5003
        %v5088 = vpack.c.b16 %v5008, %v5004
        %v5089 = vpack.c.b16 %v5009, %v5005
        %v5090 = vpack.c.b16 %v5014, %v5010
        %v5091 = vpack.c.b16 %v5015, %v5011
        %v5092 = vpack.c.b16 %v5016, %v5012
        %v5093 = vpack.c.b16 %v5017, %v5013
        %v5094 = vpack.c.b16 %v5022, %v5018
        %v5095 = vpack.c.b16 %v5023, %v5019
        %v5096 = vpack.c.b16 %v5024, %v5020
        %v5097 = vpack.c.b16 %v5025, %v5021
        %v5098 = vpack.c.b16 %v5030, %v5026
        %v5099 = vpack.c.b16 %v5031, %v5027
        %v5100 = vpack.c.b16 %v5032, %v5028
        %v5101 = vpack.c.b16 %v5033, %v5029
        %v5102 = vpack.c.b16 %v5038, %v5034
        %v5103 = vpack.c.b16 %v5039, %v5035
        %v5104 = vpack.c.b16 %v5040, %v5036
        %v5105 = vpack.c.b16 %v5041, %v5037
        %5170 = vmatpush.bf16.msra.mxu0 %v5070
        %5171 = vmatpush.bf16.msra.mxu0 %v5066
        %5172 = vmatpush.bf16.msra.mxu0 %v5062
        %5173 = vmatpush.bf16.msra.mxu0 %v5058
        %5174 = vmatpush.bf16.msra.mxu0 %v5054
        %5175 = vmatpush.bf16.msra.mxu0 %v5050
        %5176 = vmatpush.bf16.msra.mxu0 %v5046
        %5177 = vmatpush.bf16.msra.mxu0 %v5042
        %5178 = vmatmul.bf16.gmra.mxu0 %v4772
        %v5179 = vpop.f32.mrf.mxu0
        %v5180 = vadd.f32 %v4842, %v5179
        %v5181 = vpop.f32.mrf.mxu0
        %5182 = vdwg.mxu0
        %5183 = vmatpush.bf16.msra.mxu0 %v5102
        %5184 = vmatpush.bf16.msra.mxu0 %v5098
        %5185 = vmatpush.bf16.msra.mxu0 %v5094
        %5186 = vmatpush.bf16.msra.mxu0 %v5090
        %5187 = vmatpush.bf16.msra.mxu0 %v5086
        %5188 = vmatpush.bf16.msra.mxu0 %v5082
        %5189 = vmatpush.bf16.msra.mxu0 %v5078
        %5190 = vmatpush.bf16.msra.mxu0 %v5074
        %5191 = vmatmul.bf16.gmra.mxu0 %v4773
        %v5192 = vpop.f32.mrf.mxu0
        %v5193 = vadd.f32 %v5180, %v5192
        %v5194 = vpop.f32.mrf.mxu0
        %5195 = vdwg.mxu0
        %5196 = vmatpush.bf16.msra.mxu0 %v5071
        %5197 = vmatpush.bf16.msra.mxu0 %v5067
        %5198 = vmatpush.bf16.msra.mxu0 %v5063
        %5199 = vmatpush.bf16.msra.mxu0 %v5059
        %5200 = vmatpush.bf16.msra.mxu0 %v5055
        %5201 = vmatpush.bf16.msra.mxu0 %v5051
        %5202 = vmatpush.bf16.msra.mxu0 %v5047
        %5203 = vmatpush.bf16.msra.mxu0 %v5043
        %5204 = vmatmul.bf16.gmra.mxu0 %v4772
        %v5205 = vpop.f32.mrf.mxu0
        %v5206 = vadd.f32 %v4843, %v5205
        %v5207 = vpop.f32.mrf.mxu0
        %5208 = vdwg.mxu0
        %5209 = vmatpush.bf16.msra.mxu0 %v5103
        %5210 = vmatpush.bf16.msra.mxu0 %v5099
        %5211 = vmatpush.bf16.msra.mxu0 %v5095
        %5212 = vmatpush.bf16.msra.mxu0 %v5091
        %5213 = vmatpush.bf16.msra.mxu0 %v5087
        %5214 = vmatpush.bf16.msra.mxu0 %v5083
        %5215 = vmatpush.bf16.msra.mxu0 %v5079
        %5216 = vmatpush.bf16.msra.mxu0 %v5075
        %5217 = vmatmul.bf16.gmra.mxu0 %v4773
        %v5218 = vpop.f32.mrf.mxu0
        %v5219 = vadd.f32 %v5206, %v5218
        %v5220 = vpop.f32.mrf.mxu0
        %5221 = vdwg.mxu0
        %5222 = vmatpush.bf16.msra.mxu0 %v5072
        %5223 = vmatpush.bf16.msra.mxu0 %v5068
        %5224 = vmatpush.bf16.msra.mxu0 %v5064
        %5225 = vmatpush.bf16.msra.mxu0 %v5060
        %5226 = vmatpush.bf16.msra.mxu0 %v5056
        %5227 = vmatpush.bf16.msra.mxu0 %v5052
        %5228 = vmatpush.bf16.msra.mxu0 %v5048
        %5229 = vmatpush.bf16.msra.mxu0 %v5044
        %5230 = vmatmul.bf16.gmra.mxu0 %v4772
        %v5231 = vpop.f32.mrf.mxu0
        %v5232 = vadd.f32 %v4844, %v5231
        %v5233 = vpop.f32.mrf.mxu0
        %5234 = vdwg.mxu0
        %5235 = vmatpush.bf16.msra.mxu0 %v5104
        %5236 = vmatpush.bf16.msra.mxu0 %v5100
        %5237 = vmatpush.bf16.msra.mxu0 %v5096
        %5238 = vmatpush.bf16.msra.mxu0 %v5092
        %5239 = vmatpush.bf16.msra.mxu0 %v5088
        %5240 = vmatpush.bf16.msra.mxu0 %v5084
        %5241 = vmatpush.bf16.msra.mxu0 %v5080
        %5242 = vmatpush.bf16.msra.mxu0 %v5076
        %5243 = vmatmul.bf16.gmra.mxu0 %v4773
        %v5244 = vpop.f32.mrf.mxu0
        %v5245 = vadd.f32 %v5232, %v5244
        %v5246 = vpop.f32.mrf.mxu0
        %5247 = vdwg.mxu0
        %5248 = vmatpush.bf16.msra.mxu0 %v5073
        %5249 = vmatpush.bf16.msra.mxu0 %v5069
        %5250 = vmatpush.bf16.msra.mxu0 %v5065
        %5251 = vmatpush.bf16.msra.mxu0 %v5061
        %5252 = vmatpush.bf16.msra.mxu0 %v5057
        %5253 = vmatpush.bf16.msra.mxu0 %v5053
        %5254 = vmatpush.bf16.msra.mxu0 %v5049
        %5255 = vmatpush.bf16.msra.mxu0 %v5045
        %5256 = vmatmul.bf16.gmra.mxu0 %v4772
        %v5257 = vpop.f32.mrf.mxu0
        %v5258 = vadd.f32 %v4845, %v5257
        %v5259 = vpop.f32.mrf.mxu0
        %5260 = vdwg.mxu0
        %5261 = vmatpush.bf16.msra.mxu0 %v5105
        %5262 = vmatpush.bf16.msra.mxu0 %v5101
        %5263 = vmatpush.bf16.msra.mxu0 %v5097
        %5264 = vmatpush.bf16.msra.mxu0 %v5093
        %5265 = vmatpush.bf16.msra.mxu0 %v5089
        %5266 = vmatpush.bf16.msra.mxu0 %v5085
        %5267 = vmatpush.bf16.msra.mxu0 %v5081
        %5268 = vmatpush.bf16.msra.mxu0 %v5077
        %5269 = vmatmul.bf16.gmra.mxu0 %v4773
        %v5270 = vpop.f32.mrf.mxu0
        %v5271 = vadd.f32 %v5258, %v5270
        %v5272 = vpop.f32.mrf.mxu0
        %5273 = vdwg.mxu0
        %v5274 = vmax.f32 %v5193, 0.0
        %v5275 = vmax.f32 %v5219, 0.0
        %v5276 = vmax.f32 %v5245, 0.0
        %v5277 = vmax.f32 %v5271, 0.0
        %v5278 = vpack.c.bf16 %v5274, %v5274
        %v5279 = vpack.c.bf16 %v5275, %v5275
        %v5280 = vpack.c.bf16 %v5276, %v5276
        %v5281 = vpack.c.bf16 %v5277, %v5277
        %s5282 = scalar_lea.vmem %s551, 1024 [#allocation12]
        %v5283 = vld [vmem:[%s5282] sm:$0xf]
        %v5284 = vld [vmem:[%s5282 + $0x4] sm:$0xf]
        %v5285 = vld [vmem:[%s5282 + $0x8] sm:$0xf]
        %v5286 = vld [vmem:[%s5282 + $0xc] sm:$0xf]
        %v5287 = vld [vmem:[%s5282 + $0x10] sm:$0xf]
        %v5288 = vld [vmem:[%s5282 + $0x14] sm:$0xf]
        %v5289 = vld [vmem:[%s5282 + $0x18] sm:$0xf]
        %v5290 = vld [vmem:[%s5282 + $0x1c] sm:$0xf]
        %v5291 = vld [vmem:[%s5282 + $0x20] sm:$0xf]
        %v5292 = vld [vmem:[%s5282 + $0x24] sm:$0xf]
        %v5293 = vld [vmem:[%s5282 + $0x28] sm:$0xf]
        %v5294 = vld [vmem:[%s5282 + $0x2c] sm:$0xf]
        %v5295 = vld [vmem:[%s5282 + $0x30] sm:$0xf]
        %v5296 = vld [vmem:[%s5282 + $0x34] sm:$0xf]
        %v5297 = vld [vmem:[%s5282 + $0x38] sm:$0xf]
        %v5298 = vld [vmem:[%s5282 + $0x3c] sm:$0xf]
        %v5299 = vld [vmem:[%s5282 + $0x40] sm:$0xf]
        %v5300 = vld [vmem:[%s5282 + $0x44] sm:$0xf]
        %v5301 = vld [vmem:[%s5282 + $0x48] sm:$0xf]
        %v5302 = vld [vmem:[%s5282 + $0x4c] sm:$0xf]
        %v5303 = vld [vmem:[%s5282 + $0x50] sm:$0xf]
        %v5304 = vld [vmem:[%s5282 + $0x54] sm:$0xf]
        %v5305 = vld [vmem:[%s5282 + $0x58] sm:$0xf]
        %v5306 = vld [vmem:[%s5282 + $0x5c] sm:$0xf]
        %v5307 = vld [vmem:[%s5282 + $0x60] sm:$0xf]
        %v5308 = vld [vmem:[%s5282 + $0x64] sm:$0xf]
        %v5309 = vld [vmem:[%s5282 + $0x68] sm:$0xf]
        %v5310 = vld [vmem:[%s5282 + $0x6c] sm:$0xf]
        %v5311 = vld [vmem:[%s5282 + $0x70] sm:$0xf]
        %v5312 = vld [vmem:[%s5282 + $0x74] sm:$0xf]
        %v5313 = vld [vmem:[%s5282 + $0x78] sm:$0xf]
        %v5314 = vld [vmem:[%s5282 + $0x7c] sm:$0xf]
        %v5315 = vld [vmem:[%s5282 + $0x80] sm:$0xf]
        %v5316 = vld [vmem:[%s5282 + $0x84] sm:$0xf]
        %v5317 = vld [vmem:[%s5282 + $0x88] sm:$0xf]
        %v5318 = vld [vmem:[%s5282 + $0x8c] sm:$0xf]
        %v5319 = vld [vmem:[%s5282 + $0x90] sm:$0xf]
        %v5320 = vld [vmem:[%s5282 + $0x94] sm:$0xf]
        %v5321 = vld [vmem:[%s5282 + $0x98] sm:$0xf]
        %v5322 = vld [vmem:[%s5282 + $0x9c] sm:$0xf]
        %v5323 = vld [vmem:[%s5282 + $0xa0] sm:$0xf]
        %v5324 = vld [vmem:[%s5282 + $0xa4] sm:$0xf]
        %v5325 = vld [vmem:[%s5282 + $0xa8] sm:$0xf]
        %v5326 = vld [vmem:[%s5282 + $0xac] sm:$0xf]
        %v5327 = vld [vmem:[%s5282 + $0xb0] sm:$0xf]
        %v5328 = vld [vmem:[%s5282 + $0xb4] sm:$0xf]
        %v5329 = vld [vmem:[%s5282 + $0xb8] sm:$0xf]
        %v5330 = vld [vmem:[%s5282 + $0xbc] sm:$0xf]
        %v5331 = vld [vmem:[%s5282 + $0xc0] sm:$0xf]
        %v5332 = vld [vmem:[%s5282 + $0xc4] sm:$0xf]
        %v5333 = vld [vmem:[%s5282 + $0xc8] sm:$0xf]
        %v5334 = vld [vmem:[%s5282 + $0xcc] sm:$0xf]
        %v5335 = vld [vmem:[%s5282 + $0xd0] sm:$0xf]
        %v5336 = vld [vmem:[%s5282 + $0xd4] sm:$0xf]
        %v5337 = vld [vmem:[%s5282 + $0xd8] sm:$0xf]
        %v5338 = vld [vmem:[%s5282 + $0xdc] sm:$0xf]
        %v5339 = vld [vmem:[%s5282 + $0xe0] sm:$0xf]
        %v5340 = vld [vmem:[%s5282 + $0xe4] sm:$0xf]
        %v5341 = vld [vmem:[%s5282 + $0xe8] sm:$0xf]
        %v5342 = vld [vmem:[%s5282 + $0xec] sm:$0xf]
        %v5343 = vld [vmem:[%s5282 + $0xf0] sm:$0xf]
        %v5344 = vld [vmem:[%s5282 + $0xf4] sm:$0xf]
        %v5345 = vld [vmem:[%s5282 + $0xf8] sm:$0xf]
        %v5346 = vld [vmem:[%s5282 + $0xfc] sm:$0xf]
        %s5347 = scalar_lea.vmem %s561, 4 [#allocation13]
        %v5348 = vld [vmem:[%s5347] sm:$0x1]
        %v5350 = vperm.slane %v5348, 0
        %v5416 = vunpack.c.l.b16 %v5283
        %v5417 = vunpack.c.l.b16 %v5284
        %v5418 = vunpack.c.l.b16 %v5285
        %v5419 = vunpack.c.l.b16 %v5286
        %v5420 = vunpack.c.l.b16 %v5287
        %v5421 = vunpack.c.l.b16 %v5288
        %v5422 = vunpack.c.l.b16 %v5289
        %v5423 = vunpack.c.l.b16 %v5290
        %v5424 = vunpack.c.l.b16 %v5291
        %v5425 = vunpack.c.l.b16 %v5292
        %v5426 = vunpack.c.l.b16 %v5293
        %v5427 = vunpack.c.l.b16 %v5294
        %v5428 = vunpack.c.l.b16 %v5295
        %v5429 = vunpack.c.l.b16 %v5296
        %v5430 = vunpack.c.l.b16 %v5297
        %v5431 = vunpack.c.l.b16 %v5298
        %v5432 = vunpack.c.l.b16 %v5299
        %v5433 = vunpack.c.l.b16 %v5300
        %v5434 = vunpack.c.l.b16 %v5301
        %v5435 = vunpack.c.l.b16 %v5302
        %v5436 = vunpack.c.l.b16 %v5303
        %v5437 = vunpack.c.l.b16 %v5304
        %v5438 = vunpack.c.l.b16 %v5305
        %v5439 = vunpack.c.l.b16 %v5306
        %v5440 = vunpack.c.l.b16 %v5307
        %v5441 = vunpack.c.l.b16 %v5308
        %v5442 = vunpack.c.l.b16 %v5309
        %v5443 = vunpack.c.l.b16 %v5310
        %v5444 = vunpack.c.l.b16 %v5311
        %v5445 = vunpack.c.l.b16 %v5312
        %v5446 = vunpack.c.l.b16 %v5313
        %v5447 = vunpack.c.l.b16 %v5314
        %v5448 = vunpack.c.l.b16 %v5315
        %v5449 = vunpack.c.l.b16 %v5316
        %v5450 = vunpack.c.l.b16 %v5317
        %v5451 = vunpack.c.l.b16 %v5318
        %v5452 = vunpack.c.l.b16 %v5319
        %v5453 = vunpack.c.l.b16 %v5320
        %v5454 = vunpack.c.l.b16 %v5321
        %v5455 = vunpack.c.l.b16 %v5322
        %v5456 = vunpack.c.l.b16 %v5323
        %v5457 = vunpack.c.l.b16 %v5324
        %v5458 = vunpack.c.l.b16 %v5325
        %v5459 = vunpack.c.l.b16 %v5326
        %v5460 = vunpack.c.l.b16 %v5327
        %v5461 = vunpack.c.l.b16 %v5328
        %v5462 = vunpack.c.l.b16 %v5329
        %v5463 = vunpack.c.l.b16 %v5330
        %v5464 = vunpack.c.l.b16 %v5331
        %v5465 = vunpack.c.l.b16 %v5332
        %v5466 = vunpack.c.l.b16 %v5333
        %v5467 = vunpack.c.l.b16 %v5334
        %v5468 = vunpack.c.l.b16 %v5335
        %v5469 = vunpack.c.l.b16 %v5336
        %v5470 = vunpack.c.l.b16 %v5337
        %v5471 = vunpack.c.l.b16 %v5338
        %v5472 = vunpack.c.l.b16 %v5339
        %v5473 = vunpack.c.l.b16 %v5340
        %v5474 = vunpack.c.l.b16 %v5341
        %v5475 = vunpack.c.l.b16 %v5342
        %v5476 = vunpack.c.l.b16 %v5343
        %v5477 = vunpack.c.l.b16 %v5344
        %v5478 = vunpack.c.l.b16 %v5345
        %v5479 = vunpack.c.l.b16 %v5346
        %v5480 = vpack.c.b16 %v5417, %v5416
        %v5481 = vpack.c.b16 %v5419, %v5418
        %v5482 = vpack.c.b16 %v5421, %v5420
        %v5483 = vpack.c.b16 %v5423, %v5422
        %v5484 = vpack.c.b16 %v5425, %v5424
        %v5485 = vpack.c.b16 %v5427, %v5426
        %v5486 = vpack.c.b16 %v5429, %v5428
        %v5487 = vpack.c.b16 %v5431, %v5430
        %v5488 = vpack.c.b16 %v5433, %v5432
        %v5489 = vpack.c.b16 %v5435, %v5434
        %v5490 = vpack.c.b16 %v5437, %v5436
        %v5491 = vpack.c.b16 %v5439, %v5438
        %v5492 = vpack.c.b16 %v5441, %v5440
        %v5493 = vpack.c.b16 %v5443, %v5442
        %v5494 = vpack.c.b16 %v5445, %v5444
        %v5495 = vpack.c.b16 %v5447, %v5446
        %v5496 = vpack.c.b16 %v5449, %v5448
        %v5497 = vpack.c.b16 %v5451, %v5450
        %v5498 = vpack.c.b16 %v5453, %v5452
        %v5499 = vpack.c.b16 %v5455, %v5454
        %v5500 = vpack.c.b16 %v5457, %v5456
        %v5501 = vpack.c.b16 %v5459, %v5458
        %v5502 = vpack.c.b16 %v5461, %v5460
        %v5503 = vpack.c.b16 %v5463, %v5462
        %v5504 = vpack.c.b16 %v5465, %v5464
        %v5505 = vpack.c.b16 %v5467, %v5466
        %v5506 = vpack.c.b16 %v5469, %v5468
        %v5507 = vpack.c.b16 %v5471, %v5470
        %v5508 = vpack.c.b16 %v5473, %v5472
        %v5509 = vpack.c.b16 %v5475, %v5474
        %v5510 = vpack.c.b16 %v5477, %v5476
        %v5511 = vpack.c.b16 %v5479, %v5478
        %5544 = vmatpush.bf16.msra.mxu0 %v5487
        %5545 = vmatpush.bf16.msra.mxu0 %v5486
        %5546 = vmatpush.bf16.msra.mxu0 %v5485
        %5547 = vmatpush.bf16.msra.mxu0 %v5484
        %5548 = vmatpush.bf16.msra.mxu0 %v5483
        %5549 = vmatpush.bf16.msra.mxu0 %v5482
        %5550 = vmatpush.bf16.msra.mxu0 %v5481
        %5551 = vmatpush.bf16.msra.mxu0 %v5480
        %5552 = vmatmul.bf16.gmra.mxu0 %v5278
        %v5553 = vpop.f32.mrf.mxu0
        %v5554 = vadd.f32 %v5350, %v5553
        %v5555 = vpop.f32.mrf.mxu0
        %5556 = vdwg.mxu0
        %5557 = vmatpush.bf16.msra.mxu0 %v5495
        %5558 = vmatpush.bf16.msra.mxu0 %v5494
        %5559 = vmatpush.bf16.msra.mxu0 %v5493
        %5560 = vmatpush.bf16.msra.mxu0 %v5492
        %5561 = vmatpush.bf16.msra.mxu0 %v5491
        %5562 = vmatpush.bf16.msra.mxu0 %v5490
        %5563 = vmatpush.bf16.msra.mxu0 %v5489
        %5564 = vmatpush.bf16.msra.mxu0 %v5488
        %5565 = vmatmul.bf16.gmra.mxu0 %v5279
        %v5566 = vpop.f32.mrf.mxu0
        %v5567 = vadd.f32 %v5554, %v5566
        %v5568 = vpop.f32.mrf.mxu0
        %5569 = vdwg.mxu0
        %5570 = vmatpush.bf16.msra.mxu0 %v5503
        %5571 = vmatpush.bf16.msra.mxu0 %v5502
        %5572 = vmatpush.bf16.msra.mxu0 %v5501
        %5573 = vmatpush.bf16.msra.mxu0 %v5500
        %5574 = vmatpush.bf16.msra.mxu0 %v5499
        %5575 = vmatpush.bf16.msra.mxu0 %v5498
        %5576 = vmatpush.bf16.msra.mxu0 %v5497
        %5577 = vmatpush.bf16.msra.mxu0 %v5496
        %5578 = vmatmul.bf16.gmra.mxu0 %v5280
        %v5579 = vpop.f32.mrf.mxu0
        %v5580 = vadd.f32 %v5567, %v5579
        %v5581 = vpop.f32.mrf.mxu0
        %5582 = vdwg.mxu0
        %5583 = vmatpush.bf16.msra.mxu0 %v5511
        %5584 = vmatpush.bf16.msra.mxu0 %v5510
        %5585 = vmatpush.bf16.msra.mxu0 %v5509
        %5586 = vmatpush.bf16.msra.mxu0 %v5508
        %5587 = vmatpush.bf16.msra.mxu0 %v5507
        %5588 = vmatpush.bf16.msra.mxu0 %v5506
        %5589 = vmatpush.bf16.msra.mxu0 %v5505
        %5590 = vmatpush.bf16.msra.mxu0 %v5504
        %5591 = vmatmul.bf16.gmra.mxu0 %v5281
        %v5592 = vpop.f32.mrf.mxu0
        %v5593 = vadd.f32 %v5580, %v5592
        %v5594 = vpop.f32.mrf.mxu0
        %5595 = vdwg.mxu0
        %s5596 = scalar_lea.vmem %s642, 32
        %5597 = vst.msk [vmem:[%s5596] sm:$0xff] %vm1760, %v5593
        %v5598 = vpack.c.bf16 %v807, %v807
        %s5599 = scalar_lea.vmem %s511, 640 [#allocation6]
        %v5600 = vld [vmem:[%s5599] sm:$0xff]
        %v5601 = vld [vmem:[%s5599 + $0x8] sm:$0xff]
        %v5602 = vld [vmem:[%s5599 + $0x10] sm:$0xff]
        %v5603 = vld [vmem:[%s5599 + $0x18] sm:$0xff]
        %v5604 = vld [vmem:[%s5599 + $0x20] sm:$0xff]
        %v5605 = vld [vmem:[%s5599 + $0x28] sm:$0xff]
        %v5606 = vld [vmem:[%s5599 + $0x30] sm:$0xff]
        %v5607 = vld [vmem:[%s5599 + $0x38] sm:$0xff]
        %v5608 = vld [vmem:[%s5599 + $0x40] sm:$0xff]
        %v5609 = vld [vmem:[%s5599 + $0x48] sm:$0xff]
        %v5610 = vld [vmem:[%s5599 + $0x50] sm:$0xff]
        %v5611 = vld [vmem:[%s5599 + $0x58] sm:$0xff]
        %v5612 = vld [vmem:[%s5599 + $0x60] sm:$0xff]
        %v5613 = vld [vmem:[%s5599 + $0x68] sm:$0xff]
        %v5614 = vld [vmem:[%s5599 + $0x70] sm:$0xff]
        %v5615 = vld [vmem:[%s5599 + $0x78] sm:$0xff]
        %s5616 = scalar_lea.vmem %s521, 10 [#allocation7]
        %v5617 = vld [vmem:[%s5616] sm:$0x3]
        %v5619 = vperm.slane %v5617, 0
        %v5620 = vperm.slane %v5617, 1
        %v5639 = vunpack.c.l.b16 %v5600
        %v5640 = vunpack.c.h.b16 %v5600
        %v5641 = vunpack.c.l.b16 %v5601
        %v5642 = vunpack.c.h.b16 %v5601
        %v5643 = vunpack.c.l.b16 %v5602
        %v5644 = vunpack.c.h.b16 %v5602
        %v5645 = vunpack.c.l.b16 %v5603
        %v5646 = vunpack.c.h.b16 %v5603
        %v5647 = vunpack.c.l.b16 %v5604
        %v5648 = vunpack.c.h.b16 %v5604
        %v5649 = vunpack.c.l.b16 %v5605
        %v5650 = vunpack.c.h.b16 %v5605
        %v5651 = vunpack.c.l.b16 %v5606
        %v5652 = vunpack.c.h.b16 %v5606
        %v5653 = vunpack.c.l.b16 %v5607
        %v5654 = vunpack.c.h.b16 %v5607
        %v5655 = vunpack.c.l.b16 %v5608
        %v5656 = vunpack.c.h.b16 %v5608
        %v5657 = vunpack.c.l.b16 %v5609
        %v5658 = vunpack.c.h.b16 %v5609
        %v5659 = vunpack.c.l.b16 %v5610
        %v5660 = vunpack.c.h.b16 %v5610
        %v5661 = vunpack.c.l.b16 %v5611
        %v5662 = vunpack.c.h.b16 %v5611
        %v5663 = vunpack.c.l.b16 %v5612
        %v5664 = vunpack.c.h.b16 %v5612
        %v5665 = vunpack.c.l.b16 %v5613
        %v5666 = vunpack.c.h.b16 %v5613
        %v5667 = vunpack.c.l.b16 %v5614
        %v5668 = vunpack.c.h.b16 %v5614
        %v5669 = vunpack.c.l.b16 %v5615
        %v5670 = vunpack.c.h.b16 %v5615
        %v5671 = vpack.c.b16 %v5641, %v5639
        %v5672 = vpack.c.b16 %v5642, %v5640
        %v5673 = vpack.c.b16 %v5645, %v5643
        %v5674 = vpack.c.b16 %v5646, %v5644
        %v5675 = vpack.c.b16 %v5649, %v5647
        %v5676 = vpack.c.b16 %v5650, %v5648
        %v5677 = vpack.c.b16 %v5653, %v5651
        %v5678 = vpack.c.b16 %v5654, %v5652
        %v5679 = vpack.c.b16 %v5657, %v5655
        %v5680 = vpack.c.b16 %v5658, %v5656
        %v5681 = vpack.c.b16 %v5661, %v5659
        %v5682 = vpack.c.b16 %v5662, %v5660
        %v5683 = vpack.c.b16 %v5665, %v5663
        %v5684 = vpack.c.b16 %v5666, %v5664
        %v5685 = vpack.c.b16 %v5669, %v5667
        %v5686 = vpack.c.b16 %v5670, %v5668
        %5703 = vmatpush.bf16.msra.mxu0 %v5685
        %5704 = vmatpush.bf16.msra.mxu0 %v5683
        %5705 = vmatpush.bf16.msra.mxu0 %v5681
        %5706 = vmatpush.bf16.msra.mxu0 %v5679
        %5707 = vmatpush.bf16.msra.mxu0 %v5677
        %5708 = vmatpush.bf16.msra.mxu0 %v5675
        %5709 = vmatpush.bf16.msra.mxu0 %v5673
        %5710 = vmatpush.bf16.msra.mxu0 %v5671
        %5711 = vmatmul.bf16.gmra.mxu0 %v5598
        %v5712 = vpop.f32.mrf.mxu0
        %v5713 = vadd.f32 %v5619, %v5712
        %v5714 = vpop.f32.mrf.mxu0
        %5715 = vdwg.mxu0
        %5716 = vmatpush.bf16.msra.mxu0 %v5686
        %5717 = vmatpush.bf16.msra.mxu0 %v5684
        %5718 = vmatpush.bf16.msra.mxu0 %v5682
        %5719 = vmatpush.bf16.msra.mxu0 %v5680
        %5720 = vmatpush.bf16.msra.mxu0 %v5678
        %5721 = vmatpush.bf16.msra.mxu0 %v5676
        %5722 = vmatpush.bf16.msra.mxu0 %v5674
        %5723 = vmatpush.bf16.msra.mxu0 %v5672
        %5724 = vmatmul.bf16.gmra.mxu0 %v5598
        %v5725 = vpop.f32.mrf.mxu0
        %v5726 = vadd.f32 %v5620, %v5725
        %v5727 = vpop.f32.mrf.mxu0
        %5728 = vdwg.mxu0
        %v5729 = vmax.f32 %v5713, 0.0
        %v5730 = vmax.f32 %v5726, 0.0
        %v5731 = vpack.c.bf16 %v5729, %v5729
        %v5732 = vpack.c.bf16 %v5730, %v5730
        %s5733 = scalar_lea.vmem %s531, 2560 [#allocation9]
        %v5734 = vld [vmem:[%s5733] sm:$0xff]
        %v5735 = vld [vmem:[%s5733 + $0x8] sm:$0xff]
        %v5736 = vld [vmem:[%s5733 + $0x10] sm:$0xff]
        %v5737 = vld [vmem:[%s5733 + $0x18] sm:$0xff]
        %v5738 = vld [vmem:[%s5733 + $0x20] sm:$0xff]
        %v5739 = vld [vmem:[%s5733 + $0x28] sm:$0xff]
        %v5740 = vld [vmem:[%s5733 + $0x30] sm:$0xff]
        %v5741 = vld [vmem:[%s5733 + $0x38] sm:$0xff]
        %v5742 = vld [vmem:[%s5733 + $0x40] sm:$0xff]
        %v5743 = vld [vmem:[%s5733 + $0x48] sm:$0xff]
        %v5744 = vld [vmem:[%s5733 + $0x50] sm:$0xff]
        %v5745 = vld [vmem:[%s5733 + $0x58] sm:$0xff]
        %v5746 = vld [vmem:[%s5733 + $0x60] sm:$0xff]
        %v5747 = vld [vmem:[%s5733 + $0x68] sm:$0xff]
        %v5748 = vld [vmem:[%s5733 + $0x70] sm:$0xff]
        %v5749 = vld [vmem:[%s5733 + $0x78] sm:$0xff]
        %v5750 = vld [vmem:[%s5733 + $0x80] sm:$0xff]
        %v5751 = vld [vmem:[%s5733 + $0x88] sm:$0xff]
        %v5752 = vld [vmem:[%s5733 + $0x90] sm:$0xff]
        %v5753 = vld [vmem:[%s5733 + $0x98] sm:$0xff]
        %v5754 = vld [vmem:[%s5733 + $0xa0] sm:$0xff]
        %v5755 = vld [vmem:[%s5733 + $0xa8] sm:$0xff]
        %v5756 = vld [vmem:[%s5733 + $0xb0] sm:$0xff]
        %v5757 = vld [vmem:[%s5733 + $0xb8] sm:$0xff]
        %v5758 = vld [vmem:[%s5733 + $0xc0] sm:$0xff]
        %v5759 = vld [vmem:[%s5733 + $0xc8] sm:$0xff]
        %v5760 = vld [vmem:[%s5733 + $0xd0] sm:$0xff]
        %v5761 = vld [vmem:[%s5733 + $0xd8] sm:$0xff]
        %v5762 = vld [vmem:[%s5733 + $0xe0] sm:$0xff]
        %v5763 = vld [vmem:[%s5733 + $0xe8] sm:$0xff]
        %v5764 = vld [vmem:[%s5733 + $0xf0] sm:$0xff]
        %v5765 = vld [vmem:[%s5733 + $0xf8] sm:$0xff]
        %v5766 = vld [vmem:[%s5733 + $0x100] sm:$0xff]
        %v5767 = vld [vmem:[%s5733 + $0x108] sm:$0xff]
        %v5768 = vld [vmem:[%s5733 + $0x110] sm:$0xff]
        %v5769 = vld [vmem:[%s5733 + $0x118] sm:$0xff]
        %v5770 = vld [vmem:[%s5733 + $0x120] sm:$0xff]
        %v5771 = vld [vmem:[%s5733 + $0x128] sm:$0xff]
        %v5772 = vld [vmem:[%s5733 + $0x130] sm:$0xff]
        %v5773 = vld [vmem:[%s5733 + $0x138] sm:$0xff]
        %v5774 = vld [vmem:[%s5733 + $0x140] sm:$0xff]
        %v5775 = vld [vmem:[%s5733 + $0x148] sm:$0xff]
        %v5776 = vld [vmem:[%s5733 + $0x150] sm:$0xff]
        %v5777 = vld [vmem:[%s5733 + $0x158] sm:$0xff]
        %v5778 = vld [vmem:[%s5733 + $0x160] sm:$0xff]
        %v5779 = vld [vmem:[%s5733 + $0x168] sm:$0xff]
        %v5780 = vld [vmem:[%s5733 + $0x170] sm:$0xff]
        %v5781 = vld [vmem:[%s5733 + $0x178] sm:$0xff]
        %v5782 = vld [vmem:[%s5733 + $0x180] sm:$0xff]
        %v5783 = vld [vmem:[%s5733 + $0x188] sm:$0xff]
        %v5784 = vld [vmem:[%s5733 + $0x190] sm:$0xff]
        %v5785 = vld [vmem:[%s5733 + $0x198] sm:$0xff]
        %v5786 = vld [vmem:[%s5733 + $0x1a0] sm:$0xff]
        %v5787 = vld [vmem:[%s5733 + $0x1a8] sm:$0xff]
        %v5788 = vld [vmem:[%s5733 + $0x1b0] sm:$0xff]
        %v5789 = vld [vmem:[%s5733 + $0x1b8] sm:$0xff]
        %v5790 = vld [vmem:[%s5733 + $0x1c0] sm:$0xff]
        %v5791 = vld [vmem:[%s5733 + $0x1c8] sm:$0xff]
        %v5792 = vld [vmem:[%s5733 + $0x1d0] sm:$0xff]
        %v5793 = vld [vmem:[%s5733 + $0x1d8] sm:$0xff]
        %v5794 = vld [vmem:[%s5733 + $0x1e0] sm:$0xff]
        %v5795 = vld [vmem:[%s5733 + $0x1e8] sm:$0xff]
        %v5796 = vld [vmem:[%s5733 + $0x1f0] sm:$0xff]
        %v5797 = vld [vmem:[%s5733 + $0x1f8] sm:$0xff]
        %s5798 = scalar_lea.vmem %s541, 20 [#allocation10]
        %v5799 = vld [vmem:[%s5798] sm:$0xf]
        %v5801 = vperm.slane %v5799, 0
        %v5802 = vperm.slane %v5799, 1
        %v5803 = vperm.slane %v5799, 2
        %v5804 = vperm.slane %v5799, 3
        %v5873 = vunpack.c.l.b16 %v5734
        %v5874 = vunpack.c.h.b16 %v5734
        %v5875 = vunpack.c.l.b16 %v5735
        %v5876 = vunpack.c.h.b16 %v5735
        %v5877 = vunpack.c.l.b16 %v5736
        %v5878 = vunpack.c.h.b16 %v5736
        %v5879 = vunpack.c.l.b16 %v5737
        %v5880 = vunpack.c.h.b16 %v5737
        %v5881 = vunpack.c.l.b16 %v5738
        %v5882 = vunpack.c.h.b16 %v5738
        %v5883 = vunpack.c.l.b16 %v5739
        %v5884 = vunpack.c.h.b16 %v5739
        %v5885 = vunpack.c.l.b16 %v5740
        %v5886 = vunpack.c.h.b16 %v5740
        %v5887 = vunpack.c.l.b16 %v5741
        %v5888 = vunpack.c.h.b16 %v5741
        %v5889 = vunpack.c.l.b16 %v5742
        %v5890 = vunpack.c.h.b16 %v5742
        %v5891 = vunpack.c.l.b16 %v5743
        %v5892 = vunpack.c.h.b16 %v5743
        %v5893 = vunpack.c.l.b16 %v5744
        %v5894 = vunpack.c.h.b16 %v5744
        %v5895 = vunpack.c.l.b16 %v5745
        %v5896 = vunpack.c.h.b16 %v5745
        %v5897 = vunpack.c.l.b16 %v5746
        %v5898 = vunpack.c.h.b16 %v5746
        %v5899 = vunpack.c.l.b16 %v5747
        %v5900 = vunpack.c.h.b16 %v5747
        %v5901 = vunpack.c.l.b16 %v5748
        %v5902 = vunpack.c.h.b16 %v5748
        %v5903 = vunpack.c.l.b16 %v5749
        %v5904 = vunpack.c.h.b16 %v5749
        %v5905 = vunpack.c.l.b16 %v5750
        %v5906 = vunpack.c.h.b16 %v5750
        %v5907 = vunpack.c.l.b16 %v5751
        %v5908 = vunpack.c.h.b16 %v5751
        %v5909 = vunpack.c.l.b16 %v5752
        %v5910 = vunpack.c.h.b16 %v5752
        %v5911 = vunpack.c.l.b16 %v5753
        %v5912 = vunpack.c.h.b16 %v5753
        %v5913 = vunpack.c.l.b16 %v5754
        %v5914 = vunpack.c.h.b16 %v5754
        %v5915 = vunpack.c.l.b16 %v5755
        %v5916 = vunpack.c.h.b16 %v5755
        %v5917 = vunpack.c.l.b16 %v5756
        %v5918 = vunpack.c.h.b16 %v5756
        %v5919 = vunpack.c.l.b16 %v5757
        %v5920 = vunpack.c.h.b16 %v5757
        %v5921 = vunpack.c.l.b16 %v5758
        %v5922 = vunpack.c.h.b16 %v5758
        %v5923 = vunpack.c.l.b16 %v5759
        %v5924 = vunpack.c.h.b16 %v5759
        %v5925 = vunpack.c.l.b16 %v5760
        %v5926 = vunpack.c.h.b16 %v5760
        %v5927 = vunpack.c.l.b16 %v5761
        %v5928 = vunpack.c.h.b16 %v5761
        %v5929 = vunpack.c.l.b16 %v5762
        %v5930 = vunpack.c.h.b16 %v5762
        %v5931 = vunpack.c.l.b16 %v5763
        %v5932 = vunpack.c.h.b16 %v5763
        %v5933 = vunpack.c.l.b16 %v5764
        %v5934 = vunpack.c.h.b16 %v5764
        %v5935 = vunpack.c.l.b16 %v5765
        %v5936 = vunpack.c.h.b16 %v5765
        %v5937 = vunpack.c.l.b16 %v5766
        %v5938 = vunpack.c.h.b16 %v5766
        %v5939 = vunpack.c.l.b16 %v5767
        %v5940 = vunpack.c.h.b16 %v5767
        %v5941 = vunpack.c.l.b16 %v5768
        %v5942 = vunpack.c.h.b16 %v5768
        %v5943 = vunpack.c.l.b16 %v5769
        %v5944 = vunpack.c.h.b16 %v5769
        %v5945 = vunpack.c.l.b16 %v5770
        %v5946 = vunpack.c.h.b16 %v5770
        %v5947 = vunpack.c.l.b16 %v5771
        %v5948 = vunpack.c.h.b16 %v5771
        %v5949 = vunpack.c.l.b16 %v5772
        %v5950 = vunpack.c.h.b16 %v5772
        %v5951 = vunpack.c.l.b16 %v5773
        %v5952 = vunpack.c.h.b16 %v5773
        %v5953 = vunpack.c.l.b16 %v5774
        %v5954 = vunpack.c.h.b16 %v5774
        %v5955 = vunpack.c.l.b16 %v5775
        %v5956 = vunpack.c.h.b16 %v5775
        %v5957 = vunpack.c.l.b16 %v5776
        %v5958 = vunpack.c.h.b16 %v5776
        %v5959 = vunpack.c.l.b16 %v5777
        %v5960 = vunpack.c.h.b16 %v5777
        %v5961 = vunpack.c.l.b16 %v5778
        %v5962 = vunpack.c.h.b16 %v5778
        %v5963 = vunpack.c.l.b16 %v5779
        %v5964 = vunpack.c.h.b16 %v5779
        %v5965 = vunpack.c.l.b16 %v5780
        %v5966 = vunpack.c.h.b16 %v5780
        %v5967 = vunpack.c.l.b16 %v5781
        %v5968 = vunpack.c.h.b16 %v5781
        %v5969 = vunpack.c.l.b16 %v5782
        %v5970 = vunpack.c.h.b16 %v5782
        %v5971 = vunpack.c.l.b16 %v5783
        %v5972 = vunpack.c.h.b16 %v5783
        %v5973 = vunpack.c.l.b16 %v5784
        %v5974 = vunpack.c.h.b16 %v5784
        %v5975 = vunpack.c.l.b16 %v5785
        %v5976 = vunpack.c.h.b16 %v5785
        %v5977 = vunpack.c.l.b16 %v5786
        %v5978 = vunpack.c.h.b16 %v5786
        %v5979 = vunpack.c.l.b16 %v5787
        %v5980 = vunpack.c.h.b16 %v5787
        %v5981 = vunpack.c.l.b16 %v5788
        %v5982 = vunpack.c.h.b16 %v5788
        %v5983 = vunpack.c.l.b16 %v5789
        %v5984 = vunpack.c.h.b16 %v5789
        %v5985 = vunpack.c.l.b16 %v5790
        %v5986 = vunpack.c.h.b16 %v5790
        %v5987 = vunpack.c.l.b16 %v5791
        %v5988 = vunpack.c.h.b16 %v5791
        %v5989 = vunpack.c.l.b16 %v5792
        %v5990 = vunpack.c.h.b16 %v5792
        %v5991 = vunpack.c.l.b16 %v5793
        %v5992 = vunpack.c.h.b16 %v5793
        %v5993 = vunpack.c.l.b16 %v5794
        %v5994 = vunpack.c.h.b16 %v5794
        %v5995 = vunpack.c.l.b16 %v5795
        %v5996 = vunpack.c.h.b16 %v5795
        %v5997 = vunpack.c.l.b16 %v5796
        %v5998 = vunpack.c.h.b16 %v5796
        %v5999 = vunpack.c.l.b16 %v5797
        %v6000 = vunpack.c.h.b16 %v5797
        %v6001 = vpack.c.b16 %v5877, %v5873
        %v6002 = vpack.c.b16 %v5878, %v5874
        %v6003 = vpack.c.b16 %v5879, %v5875
        %v6004 = vpack.c.b16 %v5880, %v5876
        %v6005 = vpack.c.b16 %v5885, %v5881
        %v6006 = vpack.c.b16 %v5886, %v5882
        %v6007 = vpack.c.b16 %v5887, %v5883
        %v6008 = vpack.c.b16 %v5888, %v5884
        %v6009 = vpack.c.b16 %v5893, %v5889
        %v6010 = vpack.c.b16 %v5894, %v5890
        %v6011 = vpack.c.b16 %v5895, %v5891
        %v6012 = vpack.c.b16 %v5896, %v5892
        %v6013 = vpack.c.b16 %v5901, %v5897
        %v6014 = vpack.c.b16 %v5902, %v5898
        %v6015 = vpack.c.b16 %v5903, %v5899
        %v6016 = vpack.c.b16 %v5904, %v5900
        %v6017 = vpack.c.b16 %v5909, %v5905
        %v6018 = vpack.c.b16 %v5910, %v5906
        %v6019 = vpack.c.b16 %v5911, %v5907
        %v6020 = vpack.c.b16 %v5912, %v5908
        %v6021 = vpack.c.b16 %v5917, %v5913
        %v6022 = vpack.c.b16 %v5918, %v5914
        %v6023 = vpack.c.b16 %v5919, %v5915
        %v6024 = vpack.c.b16 %v5920, %v5916
        %v6025 = vpack.c.b16 %v5925, %v5921
        %v6026 = vpack.c.b16 %v5926, %v5922
        %v6027 = vpack.c.b16 %v5927, %v5923
        %v6028 = vpack.c.b16 %v5928, %v5924
        %v6029 = vpack.c.b16 %v5933, %v5929
        %v6030 = vpack.c.b16 %v5934, %v5930
        %v6031 = vpack.c.b16 %v5935, %v5931
        %v6032 = vpack.c.b16 %v5936, %v5932
        %v6033 = vpack.c.b16 %v5941, %v5937
        %v6034 = vpack.c.b16 %v5942, %v5938
        %v6035 = vpack.c.b16 %v5943, %v5939
        %v6036 = vpack.c.b16 %v5944, %v5940
        %v6037 = vpack.c.b16 %v5949, %v5945
        %v6038 = vpack.c.b16 %v5950, %v5946
        %v6039 = vpack.c.b16 %v5951, %v5947
        %v6040 = vpack.c.b16 %v5952, %v5948
        %v6041 = vpack.c.b16 %v5957, %v5953
        %v6042 = vpack.c.b16 %v5958, %v5954
        %v6043 = vpack.c.b16 %v5959, %v5955
        %v6044 = vpack.c.b16 %v5960, %v5956
        %v6045 = vpack.c.b16 %v5965, %v5961
        %v6046 = vpack.c.b16 %v5966, %v5962
        %v6047 = vpack.c.b16 %v5967, %v5963
        %v6048 = vpack.c.b16 %v5968, %v5964
        %v6049 = vpack.c.b16 %v5973, %v5969
        %v6050 = vpack.c.b16 %v5974, %v5970
        %v6051 = vpack.c.b16 %v5975, %v5971
        %v6052 = vpack.c.b16 %v5976, %v5972
        %v6053 = vpack.c.b16 %v5981, %v5977
        %v6054 = vpack.c.b16 %v5982, %v5978
        %v6055 = vpack.c.b16 %v5983, %v5979
        %v6056 = vpack.c.b16 %v5984, %v5980
        %v6057 = vpack.c.b16 %v5989, %v5985
        %v6058 = vpack.c.b16 %v5990, %v5986
        %v6059 = vpack.c.b16 %v5991, %v5987
        %v6060 = vpack.c.b16 %v5992, %v5988
        %v6061 = vpack.c.b16 %v5997, %v5993
        %v6062 = vpack.c.b16 %v5998, %v5994
        %v6063 = vpack.c.b16 %v5999, %v5995
        %v6064 = vpack.c.b16 %v6000, %v5996
        %6129 = vmatpush.bf16.msra.mxu0 %v6029
        %6130 = vmatpush.bf16.msra.mxu0 %v6025
        %6131 = vmatpush.bf16.msra.mxu0 %v6021
        %6132 = vmatpush.bf16.msra.mxu0 %v6017
        %6133 = vmatpush.bf16.msra.mxu0 %v6013
        %6134 = vmatpush.bf16.msra.mxu0 %v6009
        %6135 = vmatpush.bf16.msra.mxu0 %v6005
        %6136 = vmatpush.bf16.msra.mxu0 %v6001
        %6137 = vmatmul.bf16.gmra.mxu0 %v5731
        %v6138 = vpop.f32.mrf.mxu0
        %v6139 = vadd.f32 %v5801, %v6138
        %v6140 = vpop.f32.mrf.mxu0
        %6141 = vdwg.mxu0
        %6142 = vmatpush.bf16.msra.mxu0 %v6061
        %6143 = vmatpush.bf16.msra.mxu0 %v6057
        %6144 = vmatpush.bf16.msra.mxu0 %v6053
        %6145 = vmatpush.bf16.msra.mxu0 %v6049
        %6146 = vmatpush.bf16.msra.mxu0 %v6045
        %6147 = vmatpush.bf16.msra.mxu0 %v6041
        %6148 = vmatpush.bf16.msra.mxu0 %v6037
        %6149 = vmatpush.bf16.msra.mxu0 %v6033
        %6150 = vmatmul.bf16.gmra.mxu0 %v5732
        %v6151 = vpop.f32.mrf.mxu0
        %v6152 = vadd.f32 %v6139, %v6151
        %v6153 = vpop.f32.mrf.mxu0
        %6154 = vdwg.mxu0
        %6155 = vmatpush.bf16.msra.mxu0 %v6030
        %6156 = vmatpush.bf16.msra.mxu0 %v6026
        %6157 = vmatpush.bf16.msra.mxu0 %v6022
        %6158 = vmatpush.bf16.msra.mxu0 %v6018
        %6159 = vmatpush.bf16.msra.mxu0 %v6014
        %6160 = vmatpush.bf16.msra.mxu0 %v6010
        %6161 = vmatpush.bf16.msra.mxu0 %v6006
        %6162 = vmatpush.bf16.msra.mxu0 %v6002
        %6163 = vmatmul.bf16.gmra.mxu0 %v5731
        %v6164 = vpop.f32.mrf.mxu0
        %v6165 = vadd.f32 %v5802, %v6164
        %v6166 = vpop.f32.mrf.mxu0
        %6167 = vdwg.mxu0
        %6168 = vmatpush.bf16.msra.mxu0 %v6062
        %6169 = vmatpush.bf16.msra.mxu0 %v6058
        %6170 = vmatpush.bf16.msra.mxu0 %v6054
        %6171 = vmatpush.bf16.msra.mxu0 %v6050
        %6172 = vmatpush.bf16.msra.mxu0 %v6046
        %6173 = vmatpush.bf16.msra.mxu0 %v6042
        %6174 = vmatpush.bf16.msra.mxu0 %v6038
        %6175 = vmatpush.bf16.msra.mxu0 %v6034
        %6176 = vmatmul.bf16.gmra.mxu0 %v5732
        %v6177 = vpop.f32.mrf.mxu0
        %v6178 = vadd.f32 %v6165, %v6177
        %v6179 = vpop.f32.mrf.mxu0
        %6180 = vdwg.mxu0
        %6181 = vmatpush.bf16.msra.mxu0 %v6031
        %6182 = vmatpush.bf16.msra.mxu0 %v6027
        %6183 = vmatpush.bf16.msra.mxu0 %v6023
        %6184 = vmatpush.bf16.msra.mxu0 %v6019
        %6185 = vmatpush.bf16.msra.mxu0 %v6015
        %6186 = vmatpush.bf16.msra.mxu0 %v6011
        %6187 = vmatpush.bf16.msra.mxu0 %v6007
        %6188 = vmatpush.bf16.msra.mxu0 %v6003
        %6189 = vmatmul.bf16.gmra.mxu0 %v5731
        %v6190 = vpop.f32.mrf.mxu0
        %v6191 = vadd.f32 %v5803, %v6190
        %v6192 = vpop.f32.mrf.mxu0
        %6193 = vdwg.mxu0
        %6194 = vmatpush.bf16.msra.mxu0 %v6063
        %6195 = vmatpush.bf16.msra.mxu0 %v6059
        %6196 = vmatpush.bf16.msra.mxu0 %v6055
        %6197 = vmatpush.bf16.msra.mxu0 %v6051
        %6198 = vmatpush.bf16.msra.mxu0 %v6047
        %6199 = vmatpush.bf16.msra.mxu0 %v6043
        %6200 = vmatpush.bf16.msra.mxu0 %v6039
        %6201 = vmatpush.bf16.msra.mxu0 %v6035
        %6202 = vmatmul.bf16.gmra.mxu0 %v5732
        %v6203 = vpop.f32.mrf.mxu0
        %v6204 = vadd.f32 %v6191, %v6203
        %v6205 = vpop.f32.mrf.mxu0
        %6206 = vdwg.mxu0
        %6207 = vmatpush.bf16.msra.mxu0 %v6032
        %6208 = vmatpush.bf16.msra.mxu0 %v6028
        %6209 = vmatpush.bf16.msra.mxu0 %v6024
        %6210 = vmatpush.bf16.msra.mxu0 %v6020
        %6211 = vmatpush.bf16.msra.mxu0 %v6016
        %6212 = vmatpush.bf16.msra.mxu0 %v6012
        %6213 = vmatpush.bf16.msra.mxu0 %v6008
        %6214 = vmatpush.bf16.msra.mxu0 %v6004
        %6215 = vmatmul.bf16.gmra.mxu0 %v5731
        %v6216 = vpop.f32.mrf.mxu0
        %v6217 = vadd.f32 %v5804, %v6216
        %v6218 = vpop.f32.mrf.mxu0
        %6219 = vdwg.mxu0
        %6220 = vmatpush.bf16.msra.mxu0 %v6064
        %6221 = vmatpush.bf16.msra.mxu0 %v6060
        %6222 = vmatpush.bf16.msra.mxu0 %v6056
        %6223 = vmatpush.bf16.msra.mxu0 %v6052
        %6224 = vmatpush.bf16.msra.mxu0 %v6048
        %6225 = vmatpush.bf16.msra.mxu0 %v6044
        %6226 = vmatpush.bf16.msra.mxu0 %v6040
        %6227 = vmatpush.bf16.msra.mxu0 %v6036
        %6228 = vmatmul.bf16.gmra.mxu0 %v5732
        %v6229 = vpop.f32.mrf.mxu0
        %v6230 = vadd.f32 %v6217, %v6229
        %v6231 = vpop.f32.mrf.mxu0
        %6232 = vdwg.mxu0
        %v6233 = vmax.f32 %v6152, 0.0
        %v6234 = vmax.f32 %v6178, 0.0
        %v6235 = vmax.f32 %v6204, 0.0
        %v6236 = vmax.f32 %v6230, 0.0
        %v6237 = vpack.c.bf16 %v6233, %v6233
        %v6238 = vpack.c.bf16 %v6234, %v6234
        %v6239 = vpack.c.bf16 %v6235, %v6235
        %v6240 = vpack.c.bf16 %v6236, %v6236
        %s6241 = scalar_lea.vmem %s551, 1280 [#allocation12]
        %v6242 = vld [vmem:[%s6241] sm:$0xf]
        %v6243 = vld [vmem:[%s6241 + $0x4] sm:$0xf]
        %v6244 = vld [vmem:[%s6241 + $0x8] sm:$0xf]
        %v6245 = vld [vmem:[%s6241 + $0xc] sm:$0xf]
        %v6246 = vld [vmem:[%s6241 + $0x10] sm:$0xf]
        %v6247 = vld [vmem:[%s6241 + $0x14] sm:$0xf]
        %v6248 = vld [vmem:[%s6241 + $0x18] sm:$0xf]
        %v6249 = vld [vmem:[%s6241 + $0x1c] sm:$0xf]
        %v6250 = vld [vmem:[%s6241 + $0x20] sm:$0xf]
        %v6251 = vld [vmem:[%s6241 + $0x24] sm:$0xf]
        %v6252 = vld [vmem:[%s6241 + $0x28] sm:$0xf]
        %v6253 = vld [vmem:[%s6241 + $0x2c] sm:$0xf]
        %v6254 = vld [vmem:[%s6241 + $0x30] sm:$0xf]
        %v6255 = vld [vmem:[%s6241 + $0x34] sm:$0xf]
        %v6256 = vld [vmem:[%s6241 + $0x38] sm:$0xf]
        %v6257 = vld [vmem:[%s6241 + $0x3c] sm:$0xf]
        %v6258 = vld [vmem:[%s6241 + $0x40] sm:$0xf]
        %v6259 = vld [vmem:[%s6241 + $0x44] sm:$0xf]
        %v6260 = vld [vmem:[%s6241 + $0x48] sm:$0xf]
        %v6261 = vld [vmem:[%s6241 + $0x4c] sm:$0xf]
        %v6262 = vld [vmem:[%s6241 + $0x50] sm:$0xf]
        %v6263 = vld [vmem:[%s6241 + $0x54] sm:$0xf]
        %v6264 = vld [vmem:[%s6241 + $0x58] sm:$0xf]
        %v6265 = vld [vmem:[%s6241 + $0x5c] sm:$0xf]
        %v6266 = vld [vmem:[%s6241 + $0x60] sm:$0xf]
        %v6267 = vld [vmem:[%s6241 + $0x64] sm:$0xf]
        %v6268 = vld [vmem:[%s6241 + $0x68] sm:$0xf]
        %v6269 = vld [vmem:[%s6241 + $0x6c] sm:$0xf]
        %v6270 = vld [vmem:[%s6241 + $0x70] sm:$0xf]
        %v6271 = vld [vmem:[%s6241 + $0x74] sm:$0xf]
        %v6272 = vld [vmem:[%s6241 + $0x78] sm:$0xf]
        %v6273 = vld [vmem:[%s6241 + $0x7c] sm:$0xf]
        %v6274 = vld [vmem:[%s6241 + $0x80] sm:$0xf]
        %v6275 = vld [vmem:[%s6241 + $0x84] sm:$0xf]
        %v6276 = vld [vmem:[%s6241 + $0x88] sm:$0xf]
        %v6277 = vld [vmem:[%s6241 + $0x8c] sm:$0xf]
        %v6278 = vld [vmem:[%s6241 + $0x90] sm:$0xf]
        %v6279 = vld [vmem:[%s6241 + $0x94] sm:$0xf]
        %v6280 = vld [vmem:[%s6241 + $0x98] sm:$0xf]
        %v6281 = vld [vmem:[%s6241 + $0x9c] sm:$0xf]
        %v6282 = vld [vmem:[%s6241 + $0xa0] sm:$0xf]
        %v6283 = vld [vmem:[%s6241 + $0xa4] sm:$0xf]
        %v6284 = vld [vmem:[%s6241 + $0xa8] sm:$0xf]
        %v6285 = vld [vmem:[%s6241 + $0xac] sm:$0xf]
        %v6286 = vld [vmem:[%s6241 + $0xb0] sm:$0xf]
        %v6287 = vld [vmem:[%s6241 + $0xb4] sm:$0xf]
        %v6288 = vld [vmem:[%s6241 + $0xb8] sm:$0xf]
        %v6289 = vld [vmem:[%s6241 + $0xbc] sm:$0xf]
        %v6290 = vld [vmem:[%s6241 + $0xc0] sm:$0xf]
        %v6291 = vld [vmem:[%s6241 + $0xc4] sm:$0xf]
        %v6292 = vld [vmem:[%s6241 + $0xc8] sm:$0xf]
        %v6293 = vld [vmem:[%s6241 + $0xcc] sm:$0xf]
        %v6294 = vld [vmem:[%s6241 + $0xd0] sm:$0xf]
        %v6295 = vld [vmem:[%s6241 + $0xd4] sm:$0xf]
        %v6296 = vld [vmem:[%s6241 + $0xd8] sm:$0xf]
        %v6297 = vld [vmem:[%s6241 + $0xdc] sm:$0xf]
        %v6298 = vld [vmem:[%s6241 + $0xe0] sm:$0xf]
        %v6299 = vld [vmem:[%s6241 + $0xe4] sm:$0xf]
        %v6300 = vld [vmem:[%s6241 + $0xe8] sm:$0xf]
        %v6301 = vld [vmem:[%s6241 + $0xec] sm:$0xf]
        %v6302 = vld [vmem:[%s6241 + $0xf0] sm:$0xf]
        %v6303 = vld [vmem:[%s6241 + $0xf4] sm:$0xf]
        %v6304 = vld [vmem:[%s6241 + $0xf8] sm:$0xf]
        %v6305 = vld [vmem:[%s6241 + $0xfc] sm:$0xf]
        %s6306 = scalar_lea.vmem %s561, 5 [#allocation13]
        %v6307 = vld [vmem:[%s6306] sm:$0x1]
        %v6309 = vperm.slane %v6307, 0
        %v6375 = vunpack.c.l.b16 %v6242
        %v6376 = vunpack.c.l.b16 %v6243
        %v6377 = vunpack.c.l.b16 %v6244
        %v6378 = vunpack.c.l.b16 %v6245
        %v6379 = vunpack.c.l.b16 %v6246
        %v6380 = vunpack.c.l.b16 %v6247
        %v6381 = vunpack.c.l.b16 %v6248
        %v6382 = vunpack.c.l.b16 %v6249
        %v6383 = vunpack.c.l.b16 %v6250
        %v6384 = vunpack.c.l.b16 %v6251
        %v6385 = vunpack.c.l.b16 %v6252
        %v6386 = vunpack.c.l.b16 %v6253
        %v6387 = vunpack.c.l.b16 %v6254
        %v6388 = vunpack.c.l.b16 %v6255
        %v6389 = vunpack.c.l.b16 %v6256
        %v6390 = vunpack.c.l.b16 %v6257
        %v6391 = vunpack.c.l.b16 %v6258
        %v6392 = vunpack.c.l.b16 %v6259
        %v6393 = vunpack.c.l.b16 %v6260
        %v6394 = vunpack.c.l.b16 %v6261
        %v6395 = vunpack.c.l.b16 %v6262
        %v6396 = vunpack.c.l.b16 %v6263
        %v6397 = vunpack.c.l.b16 %v6264
        %v6398 = vunpack.c.l.b16 %v6265
        %v6399 = vunpack.c.l.b16 %v6266
        %v6400 = vunpack.c.l.b16 %v6267
        %v6401 = vunpack.c.l.b16 %v6268
        %v6402 = vunpack.c.l.b16 %v6269
        %v6403 = vunpack.c.l.b16 %v6270
        %v6404 = vunpack.c.l.b16 %v6271
        %v6405 = vunpack.c.l.b16 %v6272
        %v6406 = vunpack.c.l.b16 %v6273
        %v6407 = vunpack.c.l.b16 %v6274
        %v6408 = vunpack.c.l.b16 %v6275
        %v6409 = vunpack.c.l.b16 %v6276
        %v6410 = vunpack.c.l.b16 %v6277
        %v6411 = vunpack.c.l.b16 %v6278
        %v6412 = vunpack.c.l.b16 %v6279
        %v6413 = vunpack.c.l.b16 %v6280
        %v6414 = vunpack.c.l.b16 %v6281
        %v6415 = vunpack.c.l.b16 %v6282
        %v6416 = vunpack.c.l.b16 %v6283
        %v6417 = vunpack.c.l.b16 %v6284
        %v6418 = vunpack.c.l.b16 %v6285
        %v6419 = vunpack.c.l.b16 %v6286
        %v6420 = vunpack.c.l.b16 %v6287
        %v6421 = vunpack.c.l.b16 %v6288
        %v6422 = vunpack.c.l.b16 %v6289
        %v6423 = vunpack.c.l.b16 %v6290
        %v6424 = vunpack.c.l.b16 %v6291
        %v6425 = vunpack.c.l.b16 %v6292
        %v6426 = vunpack.c.l.b16 %v6293
        %v6427 = vunpack.c.l.b16 %v6294
        %v6428 = vunpack.c.l.b16 %v6295
        %v6429 = vunpack.c.l.b16 %v6296
        %v6430 = vunpack.c.l.b16 %v6297
        %v6431 = vunpack.c.l.b16 %v6298
        %v6432 = vunpack.c.l.b16 %v6299
        %v6433 = vunpack.c.l.b16 %v6300
        %v6434 = vunpack.c.l.b16 %v6301
        %v6435 = vunpack.c.l.b16 %v6302
        %v6436 = vunpack.c.l.b16 %v6303
        %v6437 = vunpack.c.l.b16 %v6304
        %v6438 = vunpack.c.l.b16 %v6305
        %v6439 = vpack.c.b16 %v6376, %v6375
        %v6440 = vpack.c.b16 %v6378, %v6377
        %v6441 = vpack.c.b16 %v6380, %v6379
        %v6442 = vpack.c.b16 %v6382, %v6381
        %v6443 = vpack.c.b16 %v6384, %v6383
        %v6444 = vpack.c.b16 %v6386, %v6385
        %v6445 = vpack.c.b16 %v6388, %v6387
        %v6446 = vpack.c.b16 %v6390, %v6389
        %v6447 = vpack.c.b16 %v6392, %v6391
        %v6448 = vpack.c.b16 %v6394, %v6393
        %v6449 = vpack.c.b16 %v6396, %v6395
        %v6450 = vpack.c.b16 %v6398, %v6397
        %v6451 = vpack.c.b16 %v6400, %v6399
        %v6452 = vpack.c.b16 %v6402, %v6401
        %v6453 = vpack.c.b16 %v6404, %v6403
        %v6454 = vpack.c.b16 %v6406, %v6405
        %v6455 = vpack.c.b16 %v6408, %v6407
        %v6456 = vpack.c.b16 %v6410, %v6409
        %v6457 = vpack.c.b16 %v6412, %v6411
        %v6458 = vpack.c.b16 %v6414, %v6413
        %v6459 = vpack.c.b16 %v6416, %v6415
        %v6460 = vpack.c.b16 %v6418, %v6417
        %v6461 = vpack.c.b16 %v6420, %v6419
        %v6462 = vpack.c.b16 %v6422, %v6421
        %v6463 = vpack.c.b16 %v6424, %v6423
        %v6464 = vpack.c.b16 %v6426, %v6425
        %v6465 = vpack.c.b16 %v6428, %v6427
        %v6466 = vpack.c.b16 %v6430, %v6429
        %v6467 = vpack.c.b16 %v6432, %v6431
        %v6468 = vpack.c.b16 %v6434, %v6433
        %v6469 = vpack.c.b16 %v6436, %v6435
        %v6470 = vpack.c.b16 %v6438, %v6437
        %6503 = vmatpush.bf16.msra.mxu0 %v6446
        %6504 = vmatpush.bf16.msra.mxu0 %v6445
        %6505 = vmatpush.bf16.msra.mxu0 %v6444
        %6506 = vmatpush.bf16.msra.mxu0 %v6443
        %6507 = vmatpush.bf16.msra.mxu0 %v6442
        %6508 = vmatpush.bf16.msra.mxu0 %v6441
        %6509 = vmatpush.bf16.msra.mxu0 %v6440
        %6510 = vmatpush.bf16.msra.mxu0 %v6439
        %6511 = vmatmul.bf16.gmra.mxu0 %v6237
        %v6512 = vpop.f32.mrf.mxu0
        %v6513 = vadd.f32 %v6309, %v6512
        %v6514 = vpop.f32.mrf.mxu0
        %6515 = vdwg.mxu0
        %6516 = vmatpush.bf16.msra.mxu0 %v6454
        %6517 = vmatpush.bf16.msra.mxu0 %v6453
        %6518 = vmatpush.bf16.msra.mxu0 %v6452
        %6519 = vmatpush.bf16.msra.mxu0 %v6451
        %6520 = vmatpush.bf16.msra.mxu0 %v6450
        %6521 = vmatpush.bf16.msra.mxu0 %v6449
        %6522 = vmatpush.bf16.msra.mxu0 %v6448
        %6523 = vmatpush.bf16.msra.mxu0 %v6447
        %6524 = vmatmul.bf16.gmra.mxu0 %v6238
        %v6525 = vpop.f32.mrf.mxu0
        %v6526 = vadd.f32 %v6513, %v6525
        %v6527 = vpop.f32.mrf.mxu0
        %6528 = vdwg.mxu0
        %6529 = vmatpush.bf16.msra.mxu0 %v6462
        %6530 = vmatpush.bf16.msra.mxu0 %v6461
        %6531 = vmatpush.bf16.msra.mxu0 %v6460
        %6532 = vmatpush.bf16.msra.mxu0 %v6459
        %6533 = vmatpush.bf16.msra.mxu0 %v6458
        %6534 = vmatpush.bf16.msra.mxu0 %v6457
        %6535 = vmatpush.bf16.msra.mxu0 %v6456
        %6536 = vmatpush.bf16.msra.mxu0 %v6455
        %6537 = vmatmul.bf16.gmra.mxu0 %v6239
        %v6538 = vpop.f32.mrf.mxu0
        %v6539 = vadd.f32 %v6526, %v6538
        %v6540 = vpop.f32.mrf.mxu0
        %6541 = vdwg.mxu0
        %6542 = vmatpush.bf16.msra.mxu0 %v6470
        %6543 = vmatpush.bf16.msra.mxu0 %v6469
        %6544 = vmatpush.bf16.msra.mxu0 %v6468
        %6545 = vmatpush.bf16.msra.mxu0 %v6467
        %6546 = vmatpush.bf16.msra.mxu0 %v6466
        %6547 = vmatpush.bf16.msra.mxu0 %v6465
        %6548 = vmatpush.bf16.msra.mxu0 %v6464
        %6549 = vmatpush.bf16.msra.mxu0 %v6463
        %6550 = vmatmul.bf16.gmra.mxu0 %v6240
        %v6551 = vpop.f32.mrf.mxu0
        %v6552 = vadd.f32 %v6539, %v6551
        %v6553 = vpop.f32.mrf.mxu0
        %6554 = vdwg.mxu0
        %s6555 = scalar_lea.vmem %s642, 40
        %6556 = vst.msk [vmem:[%s6555] sm:$0xff] %vm1760, %v6552
        %v6557 = vpack.c.bf16 %v808, %v808
        %s6558 = scalar_lea.vmem %s511, 768 [#allocation6]
        %v6559 = vld [vmem:[%s6558] sm:$0xff]
        %v6560 = vld [vmem:[%s6558 + $0x8] sm:$0xff]
        %v6561 = vld [vmem:[%s6558 + $0x10] sm:$0xff]
        %v6562 = vld [vmem:[%s6558 + $0x18] sm:$0xff]
        %v6563 = vld [vmem:[%s6558 + $0x20] sm:$0xff]
        %v6564 = vld [vmem:[%s6558 + $0x28] sm:$0xff]
        %v6565 = vld [vmem:[%s6558 + $0x30] sm:$0xff]
        %v6566 = vld [vmem:[%s6558 + $0x38] sm:$0xff]
        %v6567 = vld [vmem:[%s6558 + $0x40] sm:$0xff]
        %v6568 = vld [vmem:[%s6558 + $0x48] sm:$0xff]
        %v6569 = vld [vmem:[%s6558 + $0x50] sm:$0xff]
        %v6570 = vld [vmem:[%s6558 + $0x58] sm:$0xff]
        %v6571 = vld [vmem:[%s6558 + $0x60] sm:$0xff]
        %v6572 = vld [vmem:[%s6558 + $0x68] sm:$0xff]
        %v6573 = vld [vmem:[%s6558 + $0x70] sm:$0xff]
        %v6574 = vld [vmem:[%s6558 + $0x78] sm:$0xff]
        %s6575 = scalar_lea.vmem %s521, 12 [#allocation7]
        %v6576 = vld [vmem:[%s6575] sm:$0x3]
        %v6578 = vperm.slane %v6576, 0
        %v6579 = vperm.slane %v6576, 1
        %v6598 = vunpack.c.l.b16 %v6559
        %v6599 = vunpack.c.h.b16 %v6559
        %v6600 = vunpack.c.l.b16 %v6560
        %v6601 = vunpack.c.h.b16 %v6560
        %v6602 = vunpack.c.l.b16 %v6561
        %v6603 = vunpack.c.h.b16 %v6561
        %v6604 = vunpack.c.l.b16 %v6562
        %v6605 = vunpack.c.h.b16 %v6562
        %v6606 = vunpack.c.l.b16 %v6563
        %v6607 = vunpack.c.h.b16 %v6563
        %v6608 = vunpack.c.l.b16 %v6564
        %v6609 = vunpack.c.h.b16 %v6564
        %v6610 = vunpack.c.l.b16 %v6565
        %v6611 = vunpack.c.h.b16 %v6565
        %v6612 = vunpack.c.l.b16 %v6566
        %v6613 = vunpack.c.h.b16 %v6566
        %v6614 = vunpack.c.l.b16 %v6567
        %v6615 = vunpack.c.h.b16 %v6567
        %v6616 = vunpack.c.l.b16 %v6568
        %v6617 = vunpack.c.h.b16 %v6568
        %v6618 = vunpack.c.l.b16 %v6569
        %v6619 = vunpack.c.h.b16 %v6569
        %v6620 = vunpack.c.l.b16 %v6570
        %v6621 = vunpack.c.h.b16 %v6570
        %v6622 = vunpack.c.l.b16 %v6571
        %v6623 = vunpack.c.h.b16 %v6571
        %v6624 = vunpack.c.l.b16 %v6572
        %v6625 = vunpack.c.h.b16 %v6572
        %v6626 = vunpack.c.l.b16 %v6573
        %v6627 = vunpack.c.h.b16 %v6573
        %v6628 = vunpack.c.l.b16 %v6574
        %v6629 = vunpack.c.h.b16 %v6574
        %v6630 = vpack.c.b16 %v6600, %v6598
        %v6631 = vpack.c.b16 %v6601, %v6599
        %v6632 = vpack.c.b16 %v6604, %v6602
        %v6633 = vpack.c.b16 %v6605, %v6603
        %v6634 = vpack.c.b16 %v6608, %v6606
        %v6635 = vpack.c.b16 %v6609, %v6607
        %v6636 = vpack.c.b16 %v6612, %v6610
        %v6637 = vpack.c.b16 %v6613, %v6611
        %v6638 = vpack.c.b16 %v6616, %v6614
        %v6639 = vpack.c.b16 %v6617, %v6615
        %v6640 = vpack.c.b16 %v6620, %v6618
        %v6641 = vpack.c.b16 %v6621, %v6619
        %v6642 = vpack.c.b16 %v6624, %v6622
        %v6643 = vpack.c.b16 %v6625, %v6623
        %v6644 = vpack.c.b16 %v6628, %v6626
        %v6645 = vpack.c.b16 %v6629, %v6627
        %6662 = vmatpush.bf16.msra.mxu0 %v6644
        %6663 = vmatpush.bf16.msra.mxu0 %v6642
        %6664 = vmatpush.bf16.msra.mxu0 %v6640
        %6665 = vmatpush.bf16.msra.mxu0 %v6638
        %6666 = vmatpush.bf16.msra.mxu0 %v6636
        %6667 = vmatpush.bf16.msra.mxu0 %v6634
        %6668 = vmatpush.bf16.msra.mxu0 %v6632
        %6669 = vmatpush.bf16.msra.mxu0 %v6630
        %6670 = vmatmul.bf16.gmra.mxu0 %v6557
        %v6671 = vpop.f32.mrf.mxu0
        %v6672 = vadd.f32 %v6578, %v6671
        %v6673 = vpop.f32.mrf.mxu0
        %6674 = vdwg.mxu0
        %6675 = vmatpush.bf16.msra.mxu0 %v6645
        %6676 = vmatpush.bf16.msra.mxu0 %v6643
        %6677 = vmatpush.bf16.msra.mxu0 %v6641
        %6678 = vmatpush.bf16.msra.mxu0 %v6639
        %6679 = vmatpush.bf16.msra.mxu0 %v6637
        %6680 = vmatpush.bf16.msra.mxu0 %v6635
        %6681 = vmatpush.bf16.msra.mxu0 %v6633
        %6682 = vmatpush.bf16.msra.mxu0 %v6631
        %6683 = vmatmul.bf16.gmra.mxu0 %v6557
        %v6684 = vpop.f32.mrf.mxu0
        %v6685 = vadd.f32 %v6579, %v6684
        %v6686 = vpop.f32.mrf.mxu0
        %6687 = vdwg.mxu0
        %v6688 = vmax.f32 %v6672, 0.0
        %v6689 = vmax.f32 %v6685, 0.0
        %v6690 = vpack.c.bf16 %v6688, %v6688
        %v6691 = vpack.c.bf16 %v6689, %v6689
        %s6692 = scalar_lea.vmem %s531, 3072 [#allocation9]
        %v6693 = vld [vmem:[%s6692] sm:$0xff]
        %v6694 = vld [vmem:[%s6692 + $0x8] sm:$0xff]
        %v6695 = vld [vmem:[%s6692 + $0x10] sm:$0xff]
        %v6696 = vld [vmem:[%s6692 + $0x18] sm:$0xff]
        %v6697 = vld [vmem:[%s6692 + $0x20] sm:$0xff]
        %v6698 = vld [vmem:[%s6692 + $0x28] sm:$0xff]
        %v6699 = vld [vmem:[%s6692 + $0x30] sm:$0xff]
        %v6700 = vld [vmem:[%s6692 + $0x38] sm:$0xff]
        %v6701 = vld [vmem:[%s6692 + $0x40] sm:$0xff]
        %v6702 = vld [vmem:[%s6692 + $0x48] sm:$0xff]
        %v6703 = vld [vmem:[%s6692 + $0x50] sm:$0xff]
        %v6704 = vld [vmem:[%s6692 + $0x58] sm:$0xff]
        %v6705 = vld [vmem:[%s6692 + $0x60] sm:$0xff]
        %v6706 = vld [vmem:[%s6692 + $0x68] sm:$0xff]
        %v6707 = vld [vmem:[%s6692 + $0x70] sm:$0xff]
        %v6708 = vld [vmem:[%s6692 + $0x78] sm:$0xff]
        %v6709 = vld [vmem:[%s6692 + $0x80] sm:$0xff]
        %v6710 = vld [vmem:[%s6692 + $0x88] sm:$0xff]
        %v6711 = vld [vmem:[%s6692 + $0x90] sm:$0xff]
        %v6712 = vld [vmem:[%s6692 + $0x98] sm:$0xff]
        %v6713 = vld [vmem:[%s6692 + $0xa0] sm:$0xff]
        %v6714 = vld [vmem:[%s6692 + $0xa8] sm:$0xff]
        %v6715 = vld [vmem:[%s6692 + $0xb0] sm:$0xff]
        %v6716 = vld [vmem:[%s6692 + $0xb8] sm:$0xff]
        %v6717 = vld [vmem:[%s6692 + $0xc0] sm:$0xff]
        %v6718 = vld [vmem:[%s6692 + $0xc8] sm:$0xff]
        %v6719 = vld [vmem:[%s6692 + $0xd0] sm:$0xff]
        %v6720 = vld [vmem:[%s6692 + $0xd8] sm:$0xff]
        %v6721 = vld [vmem:[%s6692 + $0xe0] sm:$0xff]
        %v6722 = vld [vmem:[%s6692 + $0xe8] sm:$0xff]
        %v6723 = vld [vmem:[%s6692 + $0xf0] sm:$0xff]
        %v6724 = vld [vmem:[%s6692 + $0xf8] sm:$0xff]
        %v6725 = vld [vmem:[%s6692 + $0x100] sm:$0xff]
        %v6726 = vld [vmem:[%s6692 + $0x108] sm:$0xff]
        %v6727 = vld [vmem:[%s6692 + $0x110] sm:$0xff]
        %v6728 = vld [vmem:[%s6692 + $0x118] sm:$0xff]
        %v6729 = vld [vmem:[%s6692 + $0x120] sm:$0xff]
        %v6730 = vld [vmem:[%s6692 + $0x128] sm:$0xff]
        %v6731 = vld [vmem:[%s6692 + $0x130] sm:$0xff]
        %v6732 = vld [vmem:[%s6692 + $0x138] sm:$0xff]
        %v6733 = vld [vmem:[%s6692 + $0x140] sm:$0xff]
        %v6734 = vld [vmem:[%s6692 + $0x148] sm:$0xff]
        %v6735 = vld [vmem:[%s6692 + $0x150] sm:$0xff]
        %v6736 = vld [vmem:[%s6692 + $0x158] sm:$0xff]
        %v6737 = vld [vmem:[%s6692 + $0x160] sm:$0xff]
        %v6738 = vld [vmem:[%s6692 + $0x168] sm:$0xff]
        %v6739 = vld [vmem:[%s6692 + $0x170] sm:$0xff]
        %v6740 = vld [vmem:[%s6692 + $0x178] sm:$0xff]
        %v6741 = vld [vmem:[%s6692 + $0x180] sm:$0xff]
        %v6742 = vld [vmem:[%s6692 + $0x188] sm:$0xff]
        %v6743 = vld [vmem:[%s6692 + $0x190] sm:$0xff]
        %v6744 = vld [vmem:[%s6692 + $0x198] sm:$0xff]
        %v6745 = vld [vmem:[%s6692 + $0x1a0] sm:$0xff]
        %v6746 = vld [vmem:[%s6692 + $0x1a8] sm:$0xff]
        %v6747 = vld [vmem:[%s6692 + $0x1b0] sm:$0xff]
        %v6748 = vld [vmem:[%s6692 + $0x1b8] sm:$0xff]
        %v6749 = vld [vmem:[%s6692 + $0x1c0] sm:$0xff]
        %v6750 = vld [vmem:[%s6692 + $0x1c8] sm:$0xff]
        %v6751 = vld [vmem:[%s6692 + $0x1d0] sm:$0xff]
        %v6752 = vld [vmem:[%s6692 + $0x1d8] sm:$0xff]
        %v6753 = vld [vmem:[%s6692 + $0x1e0] sm:$0xff]
        %v6754 = vld [vmem:[%s6692 + $0x1e8] sm:$0xff]
        %v6755 = vld [vmem:[%s6692 + $0x1f0] sm:$0xff]
        %v6756 = vld [vmem:[%s6692 + $0x1f8] sm:$0xff]
        %s6757 = scalar_lea.vmem %s541, 24 [#allocation10]
        %v6758 = vld [vmem:[%s6757] sm:$0xf]
        %v6760 = vperm.slane %v6758, 0
        %v6761 = vperm.slane %v6758, 1
        %v6762 = vperm.slane %v6758, 2
        %v6763 = vperm.slane %v6758, 3
        %v6832 = vunpack.c.l.b16 %v6693
        %v6833 = vunpack.c.h.b16 %v6693
        %v6834 = vunpack.c.l.b16 %v6694
        %v6835 = vunpack.c.h.b16 %v6694
        %v6836 = vunpack.c.l.b16 %v6695
        %v6837 = vunpack.c.h.b16 %v6695
        %v6838 = vunpack.c.l.b16 %v6696
        %v6839 = vunpack.c.h.b16 %v6696
        %v6840 = vunpack.c.l.b16 %v6697
        %v6841 = vunpack.c.h.b16 %v6697
        %v6842 = vunpack.c.l.b16 %v6698
        %v6843 = vunpack.c.h.b16 %v6698
        %v6844 = vunpack.c.l.b16 %v6699
        %v6845 = vunpack.c.h.b16 %v6699
        %v6846 = vunpack.c.l.b16 %v6700
        %v6847 = vunpack.c.h.b16 %v6700
        %v6848 = vunpack.c.l.b16 %v6701
        %v6849 = vunpack.c.h.b16 %v6701
        %v6850 = vunpack.c.l.b16 %v6702
        %v6851 = vunpack.c.h.b16 %v6702
        %v6852 = vunpack.c.l.b16 %v6703
        %v6853 = vunpack.c.h.b16 %v6703
        %v6854 = vunpack.c.l.b16 %v6704
        %v6855 = vunpack.c.h.b16 %v6704
        %v6856 = vunpack.c.l.b16 %v6705
        %v6857 = vunpack.c.h.b16 %v6705
        %v6858 = vunpack.c.l.b16 %v6706
        %v6859 = vunpack.c.h.b16 %v6706
        %v6860 = vunpack.c.l.b16 %v6707
        %v6861 = vunpack.c.h.b16 %v6707
        %v6862 = vunpack.c.l.b16 %v6708
        %v6863 = vunpack.c.h.b16 %v6708
        %v6864 = vunpack.c.l.b16 %v6709
        %v6865 = vunpack.c.h.b16 %v6709
        %v6866 = vunpack.c.l.b16 %v6710
        %v6867 = vunpack.c.h.b16 %v6710
        %v6868 = vunpack.c.l.b16 %v6711
        %v6869 = vunpack.c.h.b16 %v6711
        %v6870 = vunpack.c.l.b16 %v6712
        %v6871 = vunpack.c.h.b16 %v6712
        %v6872 = vunpack.c.l.b16 %v6713
        %v6873 = vunpack.c.h.b16 %v6713
        %v6874 = vunpack.c.l.b16 %v6714
        %v6875 = vunpack.c.h.b16 %v6714
        %v6876 = vunpack.c.l.b16 %v6715
        %v6877 = vunpack.c.h.b16 %v6715
        %v6878 = vunpack.c.l.b16 %v6716
        %v6879 = vunpack.c.h.b16 %v6716
        %v6880 = vunpack.c.l.b16 %v6717
        %v6881 = vunpack.c.h.b16 %v6717
        %v6882 = vunpack.c.l.b16 %v6718
        %v6883 = vunpack.c.h.b16 %v6718
        %v6884 = vunpack.c.l.b16 %v6719
        %v6885 = vunpack.c.h.b16 %v6719
        %v6886 = vunpack.c.l.b16 %v6720
        %v6887 = vunpack.c.h.b16 %v6720
        %v6888 = vunpack.c.l.b16 %v6721
        %v6889 = vunpack.c.h.b16 %v6721
        %v6890 = vunpack.c.l.b16 %v6722
        %v6891 = vunpack.c.h.b16 %v6722
        %v6892 = vunpack.c.l.b16 %v6723
        %v6893 = vunpack.c.h.b16 %v6723
        %v6894 = vunpack.c.l.b16 %v6724
        %v6895 = vunpack.c.h.b16 %v6724
        %v6896 = vunpack.c.l.b16 %v6725
        %v6897 = vunpack.c.h.b16 %v6725
        %v6898 = vunpack.c.l.b16 %v6726
        %v6899 = vunpack.c.h.b16 %v6726
        %v6900 = vunpack.c.l.b16 %v6727
        %v6901 = vunpack.c.h.b16 %v6727
        %v6902 = vunpack.c.l.b16 %v6728
        %v6903 = vunpack.c.h.b16 %v6728
        %v6904 = vunpack.c.l.b16 %v6729
        %v6905 = vunpack.c.h.b16 %v6729
        %v6906 = vunpack.c.l.b16 %v6730
        %v6907 = vunpack.c.h.b16 %v6730
        %v6908 = vunpack.c.l.b16 %v6731
        %v6909 = vunpack.c.h.b16 %v6731
        %v6910 = vunpack.c.l.b16 %v6732
        %v6911 = vunpack.c.h.b16 %v6732
        %v6912 = vunpack.c.l.b16 %v6733
        %v6913 = vunpack.c.h.b16 %v6733
        %v6914 = vunpack.c.l.b16 %v6734
        %v6915 = vunpack.c.h.b16 %v6734
        %v6916 = vunpack.c.l.b16 %v6735
        %v6917 = vunpack.c.h.b16 %v6735
        %v6918 = vunpack.c.l.b16 %v6736
        %v6919 = vunpack.c.h.b16 %v6736
        %v6920 = vunpack.c.l.b16 %v6737
        %v6921 = vunpack.c.h.b16 %v6737
        %v6922 = vunpack.c.l.b16 %v6738
        %v6923 = vunpack.c.h.b16 %v6738
        %v6924 = vunpack.c.l.b16 %v6739
        %v6925 = vunpack.c.h.b16 %v6739
        %v6926 = vunpack.c.l.b16 %v6740
        %v6927 = vunpack.c.h.b16 %v6740
        %v6928 = vunpack.c.l.b16 %v6741
        %v6929 = vunpack.c.h.b16 %v6741
        %v6930 = vunpack.c.l.b16 %v6742
        %v6931 = vunpack.c.h.b16 %v6742
        %v6932 = vunpack.c.l.b16 %v6743
        %v6933 = vunpack.c.h.b16 %v6743
        %v6934 = vunpack.c.l.b16 %v6744
        %v6935 = vunpack.c.h.b16 %v6744
        %v6936 = vunpack.c.l.b16 %v6745
        %v6937 = vunpack.c.h.b16 %v6745
        %v6938 = vunpack.c.l.b16 %v6746
        %v6939 = vunpack.c.h.b16 %v6746
        %v6940 = vunpack.c.l.b16 %v6747
        %v6941 = vunpack.c.h.b16 %v6747
        %v6942 = vunpack.c.l.b16 %v6748
        %v6943 = vunpack.c.h.b16 %v6748
        %v6944 = vunpack.c.l.b16 %v6749
        %v6945 = vunpack.c.h.b16 %v6749
        %v6946 = vunpack.c.l.b16 %v6750
        %v6947 = vunpack.c.h.b16 %v6750
        %v6948 = vunpack.c.l.b16 %v6751
        %v6949 = vunpack.c.h.b16 %v6751
        %v6950 = vunpack.c.l.b16 %v6752
        %v6951 = vunpack.c.h.b16 %v6752
        %v6952 = vunpack.c.l.b16 %v6753
        %v6953 = vunpack.c.h.b16 %v6753
        %v6954 = vunpack.c.l.b16 %v6754
        %v6955 = vunpack.c.h.b16 %v6754
        %v6956 = vunpack.c.l.b16 %v6755
        %v6957 = vunpack.c.h.b16 %v6755
        %v6958 = vunpack.c.l.b16 %v6756
        %v6959 = vunpack.c.h.b16 %v6756
        %v6960 = vpack.c.b16 %v6836, %v6832
        %v6961 = vpack.c.b16 %v6837, %v6833
        %v6962 = vpack.c.b16 %v6838, %v6834
        %v6963 = vpack.c.b16 %v6839, %v6835
        %v6964 = vpack.c.b16 %v6844, %v6840
        %v6965 = vpack.c.b16 %v6845, %v6841
        %v6966 = vpack.c.b16 %v6846, %v6842
        %v6967 = vpack.c.b16 %v6847, %v6843
        %v6968 = vpack.c.b16 %v6852, %v6848
        %v6969 = vpack.c.b16 %v6853, %v6849
        %v6970 = vpack.c.b16 %v6854, %v6850
        %v6971 = vpack.c.b16 %v6855, %v6851
        %v6972 = vpack.c.b16 %v6860, %v6856
        %v6973 = vpack.c.b16 %v6861, %v6857
        %v6974 = vpack.c.b16 %v6862, %v6858
        %v6975 = vpack.c.b16 %v6863, %v6859
        %v6976 = vpack.c.b16 %v6868, %v6864
        %v6977 = vpack.c.b16 %v6869, %v6865
        %v6978 = vpack.c.b16 %v6870, %v6866
        %v6979 = vpack.c.b16 %v6871, %v6867
        %v6980 = vpack.c.b16 %v6876, %v6872
        %v6981 = vpack.c.b16 %v6877, %v6873
        %v6982 = vpack.c.b16 %v6878, %v6874
        %v6983 = vpack.c.b16 %v6879, %v6875
        %v6984 = vpack.c.b16 %v6884, %v6880
        %v6985 = vpack.c.b16 %v6885, %v6881
        %v6986 = vpack.c.b16 %v6886, %v6882
        %v6987 = vpack.c.b16 %v6887, %v6883
        %v6988 = vpack.c.b16 %v6892, %v6888
        %v6989 = vpack.c.b16 %v6893, %v6889
        %v6990 = vpack.c.b16 %v6894, %v6890
        %v6991 = vpack.c.b16 %v6895, %v6891
        %v6992 = vpack.c.b16 %v6900, %v6896
        %v6993 = vpack.c.b16 %v6901, %v6897
        %v6994 = vpack.c.b16 %v6902, %v6898
        %v6995 = vpack.c.b16 %v6903, %v6899
        %v6996 = vpack.c.b16 %v6908, %v6904
        %v6997 = vpack.c.b16 %v6909, %v6905
        %v6998 = vpack.c.b16 %v6910, %v6906
        %v6999 = vpack.c.b16 %v6911, %v6907
        %v7000 = vpack.c.b16 %v6916, %v6912
        %v7001 = vpack.c.b16 %v6917, %v6913
        %v7002 = vpack.c.b16 %v6918, %v6914
        %v7003 = vpack.c.b16 %v6919, %v6915
        %v7004 = vpack.c.b16 %v6924, %v6920
        %v7005 = vpack.c.b16 %v6925, %v6921
        %v7006 = vpack.c.b16 %v6926, %v6922
        %v7007 = vpack.c.b16 %v6927, %v6923
        %v7008 = vpack.c.b16 %v6932, %v6928
        %v7009 = vpack.c.b16 %v6933, %v6929
        %v7010 = vpack.c.b16 %v6934, %v6930
        %v7011 = vpack.c.b16 %v6935, %v6931
        %v7012 = vpack.c.b16 %v6940, %v6936
        %v7013 = vpack.c.b16 %v6941, %v6937
        %v7014 = vpack.c.b16 %v6942, %v6938
        %v7015 = vpack.c.b16 %v6943, %v6939
        %v7016 = vpack.c.b16 %v6948, %v6944
        %v7017 = vpack.c.b16 %v6949, %v6945
        %v7018 = vpack.c.b16 %v6950, %v6946
        %v7019 = vpack.c.b16 %v6951, %v6947
        %v7020 = vpack.c.b16 %v6956, %v6952
        %v7021 = vpack.c.b16 %v6957, %v6953
        %v7022 = vpack.c.b16 %v6958, %v6954
        %v7023 = vpack.c.b16 %v6959, %v6955
        %7088 = vmatpush.bf16.msra.mxu0 %v6988
        %7089 = vmatpush.bf16.msra.mxu0 %v6984
        %7090 = vmatpush.bf16.msra.mxu0 %v6980
        %7091 = vmatpush.bf16.msra.mxu0 %v6976
        %7092 = vmatpush.bf16.msra.mxu0 %v6972
        %7093 = vmatpush.bf16.msra.mxu0 %v6968
        %7094 = vmatpush.bf16.msra.mxu0 %v6964
        %7095 = vmatpush.bf16.msra.mxu0 %v6960
        %7096 = vmatmul.bf16.gmra.mxu0 %v6690
        %v7097 = vpop.f32.mrf.mxu0
        %v7098 = vadd.f32 %v6760, %v7097
        %v7099 = vpop.f32.mrf.mxu0
        %7100 = vdwg.mxu0
        %7101 = vmatpush.bf16.msra.mxu0 %v7020
        %7102 = vmatpush.bf16.msra.mxu0 %v7016
        %7103 = vmatpush.bf16.msra.mxu0 %v7012
        %7104 = vmatpush.bf16.msra.mxu0 %v7008
        %7105 = vmatpush.bf16.msra.mxu0 %v7004
        %7106 = vmatpush.bf16.msra.mxu0 %v7000
        %7107 = vmatpush.bf16.msra.mxu0 %v6996
        %7108 = vmatpush.bf16.msra.mxu0 %v6992
        %7109 = vmatmul.bf16.gmra.mxu0 %v6691
        %v7110 = vpop.f32.mrf.mxu0
        %v7111 = vadd.f32 %v7098, %v7110
        %v7112 = vpop.f32.mrf.mxu0
        %7113 = vdwg.mxu0
        %7114 = vmatpush.bf16.msra.mxu0 %v6989
        %7115 = vmatpush.bf16.msra.mxu0 %v6985
        %7116 = vmatpush.bf16.msra.mxu0 %v6981
        %7117 = vmatpush.bf16.msra.mxu0 %v6977
        %7118 = vmatpush.bf16.msra.mxu0 %v6973
        %7119 = vmatpush.bf16.msra.mxu0 %v6969
        %7120 = vmatpush.bf16.msra.mxu0 %v6965
        %7121 = vmatpush.bf16.msra.mxu0 %v6961
        %7122 = vmatmul.bf16.gmra.mxu0 %v6690
        %v7123 = vpop.f32.mrf.mxu0
        %v7124 = vadd.f32 %v6761, %v7123
        %v7125 = vpop.f32.mrf.mxu0
        %7126 = vdwg.mxu0
        %7127 = vmatpush.bf16.msra.mxu0 %v7021
        %7128 = vmatpush.bf16.msra.mxu0 %v7017
        %7129 = vmatpush.bf16.msra.mxu0 %v7013
        %7130 = vmatpush.bf16.msra.mxu0 %v7009
        %7131 = vmatpush.bf16.msra.mxu0 %v7005
        %7132 = vmatpush.bf16.msra.mxu0 %v7001
        %7133 = vmatpush.bf16.msra.mxu0 %v6997
        %7134 = vmatpush.bf16.msra.mxu0 %v6993
        %7135 = vmatmul.bf16.gmra.mxu0 %v6691
        %v7136 = vpop.f32.mrf.mxu0
        %v7137 = vadd.f32 %v7124, %v7136
        %v7138 = vpop.f32.mrf.mxu0
        %7139 = vdwg.mxu0
        %7140 = vmatpush.bf16.msra.mxu0 %v6990
        %7141 = vmatpush.bf16.msra.mxu0 %v6986
        %7142 = vmatpush.bf16.msra.mxu0 %v6982
        %7143 = vmatpush.bf16.msra.mxu0 %v6978
        %7144 = vmatpush.bf16.msra.mxu0 %v6974
        %7145 = vmatpush.bf16.msra.mxu0 %v6970
        %7146 = vmatpush.bf16.msra.mxu0 %v6966
        %7147 = vmatpush.bf16.msra.mxu0 %v6962
        %7148 = vmatmul.bf16.gmra.mxu0 %v6690
        %v7149 = vpop.f32.mrf.mxu0
        %v7150 = vadd.f32 %v6762, %v7149
        %v7151 = vpop.f32.mrf.mxu0
        %7152 = vdwg.mxu0
        %7153 = vmatpush.bf16.msra.mxu0 %v7022
        %7154 = vmatpush.bf16.msra.mxu0 %v7018
        %7155 = vmatpush.bf16.msra.mxu0 %v7014
        %7156 = vmatpush.bf16.msra.mxu0 %v7010
        %7157 = vmatpush.bf16.msra.mxu0 %v7006
        %7158 = vmatpush.bf16.msra.mxu0 %v7002
        %7159 = vmatpush.bf16.msra.mxu0 %v6998
        %7160 = vmatpush.bf16.msra.mxu0 %v6994
        %7161 = vmatmul.bf16.gmra.mxu0 %v6691
        %v7162 = vpop.f32.mrf.mxu0
        %v7163 = vadd.f32 %v7150, %v7162
        %v7164 = vpop.f32.mrf.mxu0
        %7165 = vdwg.mxu0
        %7166 = vmatpush.bf16.msra.mxu0 %v6991
        %7167 = vmatpush.bf16.msra.mxu0 %v6987
        %7168 = vmatpush.bf16.msra.mxu0 %v6983
        %7169 = vmatpush.bf16.msra.mxu0 %v6979
        %7170 = vmatpush.bf16.msra.mxu0 %v6975
        %7171 = vmatpush.bf16.msra.mxu0 %v6971
        %7172 = vmatpush.bf16.msra.mxu0 %v6967
        %7173 = vmatpush.bf16.msra.mxu0 %v6963
        %7174 = vmatmul.bf16.gmra.mxu0 %v6690
        %v7175 = vpop.f32.mrf.mxu0
        %v7176 = vadd.f32 %v6763, %v7175
        %v7177 = vpop.f32.mrf.mxu0
        %7178 = vdwg.mxu0
        %7179 = vmatpush.bf16.msra.mxu0 %v7023
        %7180 = vmatpush.bf16.msra.mxu0 %v7019
        %7181 = vmatpush.bf16.msra.mxu0 %v7015
        %7182 = vmatpush.bf16.msra.mxu0 %v7011
        %7183 = vmatpush.bf16.msra.mxu0 %v7007
        %7184 = vmatpush.bf16.msra.mxu0 %v7003
        %7185 = vmatpush.bf16.msra.mxu0 %v6999
        %7186 = vmatpush.bf16.msra.mxu0 %v6995
        %7187 = vmatmul.bf16.gmra.mxu0 %v6691
        %v7188 = vpop.f32.mrf.mxu0
        %v7189 = vadd.f32 %v7176, %v7188
        %v7190 = vpop.f32.mrf.mxu0
        %7191 = vdwg.mxu0
        %v7192 = vmax.f32 %v7111, 0.0
        %v7193 = vmax.f32 %v7137, 0.0
        %v7194 = vmax.f32 %v7163, 0.0
        %v7195 = vmax.f32 %v7189, 0.0
        %v7196 = vpack.c.bf16 %v7192, %v7192
        %v7197 = vpack.c.bf16 %v7193, %v7193
        %v7198 = vpack.c.bf16 %v7194, %v7194
        %v7199 = vpack.c.bf16 %v7195, %v7195
        %s7200 = scalar_lea.vmem %s551, 1536 [#allocation12]
        %v7201 = vld [vmem:[%s7200] sm:$0xf]
        %v7202 = vld [vmem:[%s7200 + $0x4] sm:$0xf]
        %v7203 = vld [vmem:[%s7200 + $0x8] sm:$0xf]
        %v7204 = vld [vmem:[%s7200 + $0xc] sm:$0xf]
        %v7205 = vld [vmem:[%s7200 + $0x10] sm:$0xf]
        %v7206 = vld [vmem:[%s7200 + $0x14] sm:$0xf]
        %v7207 = vld [vmem:[%s7200 + $0x18] sm:$0xf]
        %v7208 = vld [vmem:[%s7200 + $0x1c] sm:$0xf]
        %v7209 = vld [vmem:[%s7200 + $0x20] sm:$0xf]
        %v7210 = vld [vmem:[%s7200 + $0x24] sm:$0xf]
        %v7211 = vld [vmem:[%s7200 + $0x28] sm:$0xf]
        %v7212 = vld [vmem:[%s7200 + $0x2c] sm:$0xf]
        %v7213 = vld [vmem:[%s7200 + $0x30] sm:$0xf]
        %v7214 = vld [vmem:[%s7200 + $0x34] sm:$0xf]
        %v7215 = vld [vmem:[%s7200 + $0x38] sm:$0xf]
        %v7216 = vld [vmem:[%s7200 + $0x3c] sm:$0xf]
        %v7217 = vld [vmem:[%s7200 + $0x40] sm:$0xf]
        %v7218 = vld [vmem:[%s7200 + $0x44] sm:$0xf]
        %v7219 = vld [vmem:[%s7200 + $0x48] sm:$0xf]
        %v7220 = vld [vmem:[%s7200 + $0x4c] sm:$0xf]
        %v7221 = vld [vmem:[%s7200 + $0x50] sm:$0xf]
        %v7222 = vld [vmem:[%s7200 + $0x54] sm:$0xf]
        %v7223 = vld [vmem:[%s7200 + $0x58] sm:$0xf]
        %v7224 = vld [vmem:[%s7200 + $0x5c] sm:$0xf]
        %v7225 = vld [vmem:[%s7200 + $0x60] sm:$0xf]
        %v7226 = vld [vmem:[%s7200 + $0x64] sm:$0xf]
        %v7227 = vld [vmem:[%s7200 + $0x68] sm:$0xf]
        %v7228 = vld [vmem:[%s7200 + $0x6c] sm:$0xf]
        %v7229 = vld [vmem:[%s7200 + $0x70] sm:$0xf]
        %v7230 = vld [vmem:[%s7200 + $0x74] sm:$0xf]
        %v7231 = vld [vmem:[%s7200 + $0x78] sm:$0xf]
        %v7232 = vld [vmem:[%s7200 + $0x7c] sm:$0xf]
        %v7233 = vld [vmem:[%s7200 + $0x80] sm:$0xf]
        %v7234 = vld [vmem:[%s7200 + $0x84] sm:$0xf]
        %v7235 = vld [vmem:[%s7200 + $0x88] sm:$0xf]
        %v7236 = vld [vmem:[%s7200 + $0x8c] sm:$0xf]
        %v7237 = vld [vmem:[%s7200 + $0x90] sm:$0xf]
        %v7238 = vld [vmem:[%s7200 + $0x94] sm:$0xf]
        %v7239 = vld [vmem:[%s7200 + $0x98] sm:$0xf]
        %v7240 = vld [vmem:[%s7200 + $0x9c] sm:$0xf]
        %v7241 = vld [vmem:[%s7200 + $0xa0] sm:$0xf]
        %v7242 = vld [vmem:[%s7200 + $0xa4] sm:$0xf]
        %v7243 = vld [vmem:[%s7200 + $0xa8] sm:$0xf]
        %v7244 = vld [vmem:[%s7200 + $0xac] sm:$0xf]
        %v7245 = vld [vmem:[%s7200 + $0xb0] sm:$0xf]
        %v7246 = vld [vmem:[%s7200 + $0xb4] sm:$0xf]
        %v7247 = vld [vmem:[%s7200 + $0xb8] sm:$0xf]
        %v7248 = vld [vmem:[%s7200 + $0xbc] sm:$0xf]
        %v7249 = vld [vmem:[%s7200 + $0xc0] sm:$0xf]
        %v7250 = vld [vmem:[%s7200 + $0xc4] sm:$0xf]
        %v7251 = vld [vmem:[%s7200 + $0xc8] sm:$0xf]
        %v7252 = vld [vmem:[%s7200 + $0xcc] sm:$0xf]
        %v7253 = vld [vmem:[%s7200 + $0xd0] sm:$0xf]
        %v7254 = vld [vmem:[%s7200 + $0xd4] sm:$0xf]
        %v7255 = vld [vmem:[%s7200 + $0xd8] sm:$0xf]
        %v7256 = vld [vmem:[%s7200 + $0xdc] sm:$0xf]
        %v7257 = vld [vmem:[%s7200 + $0xe0] sm:$0xf]
        %v7258 = vld [vmem:[%s7200 + $0xe4] sm:$0xf]
        %v7259 = vld [vmem:[%s7200 + $0xe8] sm:$0xf]
        %v7260 = vld [vmem:[%s7200 + $0xec] sm:$0xf]
        %v7261 = vld [vmem:[%s7200 + $0xf0] sm:$0xf]
        %v7262 = vld [vmem:[%s7200 + $0xf4] sm:$0xf]
        %v7263 = vld [vmem:[%s7200 + $0xf8] sm:$0xf]
        %v7264 = vld [vmem:[%s7200 + $0xfc] sm:$0xf]
        %s7265 = scalar_lea.vmem %s561, 6 [#allocation13]
        %v7266 = vld [vmem:[%s7265] sm:$0x1]
        %v7268 = vperm.slane %v7266, 0
        %v7334 = vunpack.c.l.b16 %v7201
        %v7335 = vunpack.c.l.b16 %v7202
        %v7336 = vunpack.c.l.b16 %v7203
        %v7337 = vunpack.c.l.b16 %v7204
        %v7338 = vunpack.c.l.b16 %v7205
        %v7339 = vunpack.c.l.b16 %v7206
        %v7340 = vunpack.c.l.b16 %v7207
        %v7341 = vunpack.c.l.b16 %v7208
        %v7342 = vunpack.c.l.b16 %v7209
        %v7343 = vunpack.c.l.b16 %v7210
        %v7344 = vunpack.c.l.b16 %v7211
        %v7345 = vunpack.c.l.b16 %v7212
        %v7346 = vunpack.c.l.b16 %v7213
        %v7347 = vunpack.c.l.b16 %v7214
        %v7348 = vunpack.c.l.b16 %v7215
        %v7349 = vunpack.c.l.b16 %v7216
        %v7350 = vunpack.c.l.b16 %v7217
        %v7351 = vunpack.c.l.b16 %v7218
        %v7352 = vunpack.c.l.b16 %v7219
        %v7353 = vunpack.c.l.b16 %v7220
        %v7354 = vunpack.c.l.b16 %v7221
        %v7355 = vunpack.c.l.b16 %v7222
        %v7356 = vunpack.c.l.b16 %v7223
        %v7357 = vunpack.c.l.b16 %v7224
        %v7358 = vunpack.c.l.b16 %v7225
        %v7359 = vunpack.c.l.b16 %v7226
        %v7360 = vunpack.c.l.b16 %v7227
        %v7361 = vunpack.c.l.b16 %v7228
        %v7362 = vunpack.c.l.b16 %v7229
        %v7363 = vunpack.c.l.b16 %v7230
        %v7364 = vunpack.c.l.b16 %v7231
        %v7365 = vunpack.c.l.b16 %v7232
        %v7366 = vunpack.c.l.b16 %v7233
        %v7367 = vunpack.c.l.b16 %v7234
        %v7368 = vunpack.c.l.b16 %v7235
        %v7369 = vunpack.c.l.b16 %v7236
        %v7370 = vunpack.c.l.b16 %v7237
        %v7371 = vunpack.c.l.b16 %v7238
        %v7372 = vunpack.c.l.b16 %v7239
        %v7373 = vunpack.c.l.b16 %v7240
        %v7374 = vunpack.c.l.b16 %v7241
        %v7375 = vunpack.c.l.b16 %v7242
        %v7376 = vunpack.c.l.b16 %v7243
        %v7377 = vunpack.c.l.b16 %v7244
        %v7378 = vunpack.c.l.b16 %v7245
        %v7379 = vunpack.c.l.b16 %v7246
        %v7380 = vunpack.c.l.b16 %v7247
        %v7381 = vunpack.c.l.b16 %v7248
        %v7382 = vunpack.c.l.b16 %v7249
        %v7383 = vunpack.c.l.b16 %v7250
        %v7384 = vunpack.c.l.b16 %v7251
        %v7385 = vunpack.c.l.b16 %v7252
        %v7386 = vunpack.c.l.b16 %v7253
        %v7387 = vunpack.c.l.b16 %v7254
        %v7388 = vunpack.c.l.b16 %v7255
        %v7389 = vunpack.c.l.b16 %v7256
        %v7390 = vunpack.c.l.b16 %v7257
        %v7391 = vunpack.c.l.b16 %v7258
        %v7392 = vunpack.c.l.b16 %v7259
        %v7393 = vunpack.c.l.b16 %v7260
        %v7394 = vunpack.c.l.b16 %v7261
        %v7395 = vunpack.c.l.b16 %v7262
        %v7396 = vunpack.c.l.b16 %v7263
        %v7397 = vunpack.c.l.b16 %v7264
        %v7398 = vpack.c.b16 %v7335, %v7334
        %v7399 = vpack.c.b16 %v7337, %v7336
        %v7400 = vpack.c.b16 %v7339, %v7338
        %v7401 = vpack.c.b16 %v7341, %v7340
        %v7402 = vpack.c.b16 %v7343, %v7342
        %v7403 = vpack.c.b16 %v7345, %v7344
        %v7404 = vpack.c.b16 %v7347, %v7346
        %v7405 = vpack.c.b16 %v7349, %v7348
        %v7406 = vpack.c.b16 %v7351, %v7350
        %v7407 = vpack.c.b16 %v7353, %v7352
        %v7408 = vpack.c.b16 %v7355, %v7354
        %v7409 = vpack.c.b16 %v7357, %v7356
        %v7410 = vpack.c.b16 %v7359, %v7358
        %v7411 = vpack.c.b16 %v7361, %v7360
        %v7412 = vpack.c.b16 %v7363, %v7362
        %v7413 = vpack.c.b16 %v7365, %v7364
        %v7414 = vpack.c.b16 %v7367, %v7366
        %v7415 = vpack.c.b16 %v7369, %v7368
        %v7416 = vpack.c.b16 %v7371, %v7370
        %v7417 = vpack.c.b16 %v7373, %v7372
        %v7418 = vpack.c.b16 %v7375, %v7374
        %v7419 = vpack.c.b16 %v7377, %v7376
        %v7420 = vpack.c.b16 %v7379, %v7378
        %v7421 = vpack.c.b16 %v7381, %v7380
        %v7422 = vpack.c.b16 %v7383, %v7382
        %v7423 = vpack.c.b16 %v7385, %v7384
        %v7424 = vpack.c.b16 %v7387, %v7386
        %v7425 = vpack.c.b16 %v7389, %v7388
        %v7426 = vpack.c.b16 %v7391, %v7390
        %v7427 = vpack.c.b16 %v7393, %v7392
        %v7428 = vpack.c.b16 %v7395, %v7394
        %v7429 = vpack.c.b16 %v7397, %v7396
        %7462 = vmatpush.bf16.msra.mxu0 %v7405
        %7463 = vmatpush.bf16.msra.mxu0 %v7404
        %7464 = vmatpush.bf16.msra.mxu0 %v7403
        %7465 = vmatpush.bf16.msra.mxu0 %v7402
        %7466 = vmatpush.bf16.msra.mxu0 %v7401
        %7467 = vmatpush.bf16.msra.mxu0 %v7400
        %7468 = vmatpush.bf16.msra.mxu0 %v7399
        %7469 = vmatpush.bf16.msra.mxu0 %v7398
        %7470 = vmatmul.bf16.gmra.mxu0 %v7196
        %v7471 = vpop.f32.mrf.mxu0
        %v7472 = vadd.f32 %v7268, %v7471
        %v7473 = vpop.f32.mrf.mxu0
        %7474 = vdwg.mxu0
        %7475 = vmatpush.bf16.msra.mxu0 %v7413
        %7476 = vmatpush.bf16.msra.mxu0 %v7412
        %7477 = vmatpush.bf16.msra.mxu0 %v7411
        %7478 = vmatpush.bf16.msra.mxu0 %v7410
        %7479 = vmatpush.bf16.msra.mxu0 %v7409
        %7480 = vmatpush.bf16.msra.mxu0 %v7408
        %7481 = vmatpush.bf16.msra.mxu0 %v7407
        %7482 = vmatpush.bf16.msra.mxu0 %v7406
        %7483 = vmatmul.bf16.gmra.mxu0 %v7197
        %v7484 = vpop.f32.mrf.mxu0
        %v7485 = vadd.f32 %v7472, %v7484
        %v7486 = vpop.f32.mrf.mxu0
        %7487 = vdwg.mxu0
        %7488 = vmatpush.bf16.msra.mxu0 %v7421
        %7489 = vmatpush.bf16.msra.mxu0 %v7420
        %7490 = vmatpush.bf16.msra.mxu0 %v7419
        %7491 = vmatpush.bf16.msra.mxu0 %v7418
        %7492 = vmatpush.bf16.msra.mxu0 %v7417
        %7493 = vmatpush.bf16.msra.mxu0 %v7416
        %7494 = vmatpush.bf16.msra.mxu0 %v7415
        %7495 = vmatpush.bf16.msra.mxu0 %v7414
        %7496 = vmatmul.bf16.gmra.mxu0 %v7198
        %v7497 = vpop.f32.mrf.mxu0
        %v7498 = vadd.f32 %v7485, %v7497
        %v7499 = vpop.f32.mrf.mxu0
        %7500 = vdwg.mxu0
        %7501 = vmatpush.bf16.msra.mxu0 %v7429
        %7502 = vmatpush.bf16.msra.mxu0 %v7428
        %7503 = vmatpush.bf16.msra.mxu0 %v7427
        %7504 = vmatpush.bf16.msra.mxu0 %v7426
        %7505 = vmatpush.bf16.msra.mxu0 %v7425
        %7506 = vmatpush.bf16.msra.mxu0 %v7424
        %7507 = vmatpush.bf16.msra.mxu0 %v7423
        %7508 = vmatpush.bf16.msra.mxu0 %v7422
        %7509 = vmatmul.bf16.gmra.mxu0 %v7199
        %v7510 = vpop.f32.mrf.mxu0
        %v7511 = vadd.f32 %v7498, %v7510
        %v7512 = vpop.f32.mrf.mxu0
        %7513 = vdwg.mxu0
        %s7514 = scalar_lea.vmem %s642, 48
        %7515 = vst.msk [vmem:[%s7514] sm:$0xff] %vm1760, %v7511
        %s7516 = smul.u32 7, %s35
        %p7517 = scmp.lt.s32.totalorder %s7516, 13
        %s7518 = scalar_select %p7517, %s7516, 13
        %s7519 = smul.addr %s7518, 8
        %s7520 = scalar_lea.vmem %s9, %s7519
        // Predicated region
        $region89: #{hypernetwork_forward.1} parent=55 // pred_check
          %p7521 = pneg %p282
        $region90: #{hypernetwork_forward.1} parent=55 // pred_check_branch
          %7523 = sbr.rel (%p7521) target = $region92
        $region91: #{hypernetwork_forward.1} parent=55 // pred_region
          %s7524 = smul.u32 7, %s35
        $region92: #{hypernetwork_forward.1} parent=55 // pred_fallthru
          _
      $region56: #{hypernetwork_forward.1} parent=5 // pred_fallthru
        _
      %p7525 = scmp.le.s32.totalorder 2, %s30
      // Predicated region
      $region93: #{hypernetwork_forward.1} parent=5 // pred_check
        %p7526 = pneg %p7525
      $region94: #{hypernetwork_forward.1} parent=5 // pred_check_branch
        %7528 = sbr.rel (%p7526) target = $region96
      $region95: #{hypernetwork_forward.1} parent=5 // pred_region
        %s7529 = ssub.s32 %s30, 2
        // Predicated region
        $region97: #{hypernetwork_forward.1} parent=95 // pred_check
          %p7530 = pneg %p288
        $region98: #{hypernetwork_forward.1} parent=95 // pred_check_branch
          %7532 = sbr.rel (%p7530) target = $region100
        $region99: #{hypernetwork_forward.1} parent=95 // pred_region
          %s7533 = smul.u32 7, %s36
          %p7534 = scmp.lt.s32.totalorder %s7533, 13
          %s7535 = scalar_select %p7534, %s7533, 13
          %s7536 = smul.addr %s7535, 8
          %s7537 = scalar_lea.vmem %s9, %s7536
        $region100: #{hypernetwork_forward.1} parent=95 // pred_fallthru
          _
      $region96: #{hypernetwork_forward.1} parent=5 // pred_fallthru
        _
    $region6: #{hypernetwork_forward.1} parent=1 // loop_footer
      %s34 = sadd.s32 1, %s30
    $region7: #{hypernetwork_forward.1} parent=1 // loop_footer_branch
      %29 = sbr.rel target = $region3
    $region8: #{hypernetwork_forward.1} parent=1 // loop_exit
      _
    %7538 = vsyncpa [#allocation3], 1
    %s7539 = scalar_lea.sflag [#allocation3], 1
    %7540 = vsyncpa %s7539, 1
    %7541 = vsyncpa [#allocation5], 1
    %s7542 = scalar_lea.sflag [#allocation5], 1
    %7543 = vsyncpa %s7542, 1
    %7544 = vsyncpa [#allocation8], 1
    %s7545 = scalar_lea.sflag [#allocation8], 1
    %7546 = vsyncpa %s7545, 1
    %7547 = vsyncpa [#allocation11], 1
    %s7548 = scalar_lea.sflag [#allocation11], 1
    %7549 = vsyncpa %s7548, 1
    %7550 = vsyncpa [#allocation14], 1
    %s7551 = scalar_lea.sflag [#allocation14], 1
    %7552 = vsyncpa %s7551, 1

</llo_original>
